<compile_context>
chip_gen: v7x
topology: tpu7x:2x2x1
jax: 0.10.0
libtpu: 0.0.40
codegen_flags: <defaults>
</compile_context>

<pallas_src>
import functools

import jax
import jax.numpy as jnp
from jax import lax
from jax.experimental import pallas as pl
from jax.experimental.pallas import tpu as pltpu

H_IN, W_IN = 28, 28
K = 3
H_OUT, W_OUT = H_IN - K + 1, W_IN - K + 1    # 26, 26
C_OUT = 8
FC_IN = C_OUT * H_OUT * W_OUT                # 8 * 26 * 26 = 5408
ACT_COLS = C_OUT * W_OUT                     # 208 (multiple of 8 -> free reshape)
NB = 128                                     # images per grid step (batch in lanes)
LANES = 128


# ---------------- fused kernel: conv3x3 + bias + ReLU + flatten + FC ----------------
def _fused_kernel(x_ref, wconv_ref, bconv_ref, wfc_ref, bfc_ref, o_ref, act_ref):
    # x_ref:     (C, 28, 28, NB)        f32  VMEM  (batch-in-lanes block)
    # wconv_ref: (C_OUT*C*K*K,)         f32  SMEM  (PyTorch OIHW order, flattened)
    # bconv_ref: (C_OUT,)               f32  SMEM
    # wfc_ref:   (NC_PAD, FC_IN)        f32  VMEM  (permuted to kernel act order, resident)
    # bfc_ref:   (NC_PAD, 1)            f32  VMEM
    # o_ref:     (NC_PAD, NB)           f32  (lane-dense output block)
    # act_ref:   (H_OUT, ACT_COLS, NB)  f32  VMEM scratch; feature order (h, co, w)
    C = x_ref.shape[0]
    nb = x_ref.shape[-1]

    def row_body(h, carry):
        # 8 accumulators of (26, NB): ~32 vregs, fits in the 64-vreg file.
        accs = [jnp.zeros((W_OUT, nb), jnp.float32) for _ in range(C_OUT)]
        for c in range(C):
            for kh in range(K):
                for kw in range(K):
                    # One shifted patch load, reused by all 8 output channels.
                    patch = x_ref[c, h + kh, pl.ds(kw, W_OUT), :]        # (26, NB)
                    for co in range(C_OUT):
                        w = wconv_ref[((co * C + c) * K + kh) * K + kw]  # SMEM scalar
                        accs[co] = accs[co] + patch * w
        for co in range(C_OUT):
            act = jnp.maximum(accs[co] + bconv_ref[co], 0.0)             # (26, NB)
            # dynamic index only on the leading dim; full-lane-width store
            act_ref[h, pl.ds(co * W_OUT, W_OUT), :] = act
        return carry

    lax.fori_loop(0, H_OUT, row_body, 0)

    # FC on the MXU: (NC_PAD, 5408) @ (5408, NB), f32 with f32 accumulate.
    act2d = act_ref[...].reshape(FC_IN, nb)          # layout-preserving (208 % 8 == 0)
    o_ref[...] = (
        jnp.dot(wfc_ref[...], act2d, preferred_element_type=jnp.float32)
        + bfc_ref[...]
    )


# ---------------- one-time parameter re-layout (kept out of the forward path) ----------------
def prepare_params(params):
    conv_w, conv_b, fc_w, fc_b = params
    num_classes = fc_w.shape[0]
    nc_pad = ((num_classes + LANES - 1) // LANES) * LANES

    wconv_flat = conv_w.astype(jnp.float32).reshape(-1)       # (C_OUT*C*9,), OIHW order
    bconv = conv_b.astype(jnp.float32)                        # (C_OUT,)

    # Permute FC columns from PyTorch flatten order (co, h, w) to the kernel's
    # activation order (h, co, w), and pad classes to a full 128-lane tile.
    w = fc_w.astype(jnp.float32).reshape(num_classes, C_OUT, H_OUT, W_OUT)
    w = jnp.transpose(w, (0, 2, 1, 3)).reshape(num_classes, FC_IN)
    wfc_p = jnp.zeros((nc_pad, FC_IN), jnp.float32).at[:num_classes].set(w)
    bfc_p = jnp.zeros((nc_pad, 1), jnp.float32).at[:num_classes, 0].set(
        fc_b.astype(jnp.float32))
    return wconv_flat, bconv, wfc_p, bfc_p


# ---------------- forward wrapper ----------------
@functools.partial(jax.jit, static_argnames=("num_classes",))
def simple_cnn_forward(x, prepared, *, num_classes):
    wconv_flat, bconv, wfc_p, bfc_p = prepared
    x = x.astype(jnp.float32)
    N, C = x.shape[0], x.shape[1]
    nc_pad = wfc_p.shape[0]

    n_pad = ((N + NB - 1) // NB) * NB
    if n_pad != N:                                  # tail padding; sliced off below
        x = jnp.pad(x, ((0, n_pad - N), (0, 0), (0, 0), (0, 0)))
    xt = jnp.transpose(x, (1, 2, 3, 0))             # (C, 28, 28, n_pad): batch in lanes

    flops = (n_pad * H_OUT * W_OUT * C_OUT * C * K * K * 2     # conv MACs * 2
             + n_pad * FC_IN * nc_pad * 2)                     # FC
    bytes_accessed = ((C * H_IN * W_IN * n_pad + wfc_p.size + bfc_p.size
                       + nc_pad * n_pad + wconv_flat.size + bconv.size) * 4)

    out = pl.pallas_call(
        _fused_kernel,
        out_shape=jax.ShapeDtypeStruct((nc_pad, n_pad), jnp.float32),
        grid_spec=pltpu.PrefetchScalarGridSpec(
            num_scalar_prefetch=0,
            grid=(n_pad // NB,),
            in_specs=[
                pl.BlockSpec((C, H_IN, W_IN, NB), lambda n: (0, 0, 0, n)),
                pl.BlockSpec(memory_space=pltpu.MemorySpace.SMEM),   # conv weights
                pl.BlockSpec(memory_space=pltpu.MemorySpace.SMEM),   # conv bias
                pl.BlockSpec((nc_pad, FC_IN), lambda n: (0, 0)),     # FC weight, resident
                pl.BlockSpec((nc_pad, 1), lambda n: (0, 0)),         # FC bias
            ],
            out_specs=pl.BlockSpec((nc_pad, NB), lambda n: (0, n)),
            scratch_shapes=[pltpu.VMEM((H_OUT, ACT_COLS, NB), jnp.float32)],
        ),
        compiler_params=pltpu.CompilerParams(
            dimension_semantics=("parallel",)),
        cost_estimate=pl.CostEstimate(flops=flops, transcendentals=0,
                                      bytes_accessed=bytes_accessed),
    )(xt, wconv_flat, bconv, wfc_p, bfc_p)

    # (nc_pad, n_pad) -> (N, num_classes); tiny XLA slice + transpose.
    return out[:num_classes, :N].T


# ---------------- init + pure-JAX reference ----------------
def init_params(key, input_channels, num_classes):
    k1, k2, k3, k4 = jax.random.split(key, 4)
    conv_w = 0.05 * jax.random.normal(k1, (C_OUT, input_channels, K, K), jnp.float32)
    conv_b = 0.05 * jax.random.normal(k2, (C_OUT,), jnp.float32)
    fc_w = 0.01 * jax.random.normal(k3, (num_classes, FC_IN), jnp.float32)
    fc_b = 0.01 * jax.random.normal(k4, (num_classes,), jnp.float32)
    return conv_w, conv_b, fc_w, fc_b


def reference_forward(x, params):
    conv_w, conv_b, fc_w, fc_b = params
    y = lax.conv_general_dilated(
        x, conv_w, window_strides=(1, 1), padding="VALID",
        dimension_numbers=("NCHW", "OIHW", "NCHW"))
    y = jnp.maximum(y + conv_b[None, :, None, None], 0.0)
    y = y.reshape(y.shape[0], -1)
    return y @ fc_w.T + fc_b[None, :]


if __name__ == "__main__":
    key = jax.random.PRNGKey(0)
    kx, kp = jax.random.split(key)

    batch, input_channels, num_classes = 5, 3, 10   # 28x28 spatial forced by fc = 8*26*26
    x = jax.random.normal(kx, (batch, input_channels, H_IN, W_IN), jnp.float32)
    params = init_params(kp, input_channels, num_classes)
    prepared = prepare_params(params)               # one-time weight re-layout

    out = simple_cnn_forward(x, prepared, num_classes=num_classes)
    out = jax.block_until_ready(out)
    assert out.shape == (batch, num_classes), out.shape

    ref = jax.block_until_ready(reference_forward(x, params))
    assert jnp.allclose(out, ref, atol=1e-2, rtol=1e-2), (out, ref)

    print("KERNEL_OK")
</pallas_src>

<mosaic_0001>
module attributes {stable_mosaic.version = 11 : i64} {
  func.func @_fused_kernel(%arg0: i32, %arg1: memref<3x28x28x128xf32, #tpu.memory_space<vmem>>, %arg2: memref<216xf32, #tpu.memory_space<smem>>, %arg3: memref<8xf32, #tpu.memory_space<smem>>, %arg4: memref<128x5408xf32, #tpu.memory_space<vmem>>, %arg5: memref<128x1xf32, #tpu.memory_space<vmem>>, %arg6: memref<128x128xf32, #tpu.memory_space<vmem>>, %arg7: memref<26x208x128xf32, #tpu.memory_space<vmem>>) attributes {dimension_semantics = [#tpu.dimension_semantics<parallel>], iteration_bounds = array<i64: 1>, scalar_prefetch = 0 : i64, scratch_operands = 1 : i64, tpu.core_type = #tpu.core_type<tc>, window_params = [{transform_indices = @transform_0, window_bounds = array<i64: 3, 28, 28, 128>}, {transform_indices = @transform_1, window_bounds = array<i64: 216>}, {transform_indices = @transform_2, window_bounds = array<i64: 8>}, {pipeline_mode = #tpu.pipeline_mode<synchronous>, transform_indices = @transform_3, window_bounds = array<i64: 128, 5408>}, {pipeline_mode = #tpu.pipeline_mode<synchronous>, transform_indices = @transform_4, window_bounds = array<i64: 128, 1>}, {transform_indices = @transform_5, window_bounds = array<i64: 128, 128>}]} {
    %c0_i32 = arith.constant 0 : i32
    %c26_i32 = arith.constant 26 : i32
    %0 = arith.addi %c0_i32, %c26_i32 : i32
    %c1_i32 = arith.constant 1 : i32
    scf.for %arg8 = %c0_i32 to %0 step %c1_i32  : i32 {
      %cst_9 = arith.constant 0.000000e+00 : f32
      %9 = vector.broadcast %cst_9 : f32 to vector<26x128xf32>
      %cst_10 = arith.constant 0.000000e+00 : f32
      %10 = vector.broadcast %cst_10 : f32 to vector<26x128xf32>
      %cst_11 = arith.constant 0.000000e+00 : f32
      %11 = vector.broadcast %cst_11 : f32 to vector<26x128xf32>
      %cst_12 = arith.constant 0.000000e+00 : f32
      %12 = vector.broadcast %cst_12 : f32 to vector<26x128xf32>
      %cst_13 = arith.constant 0.000000e+00 : f32
      %13 = vector.broadcast %cst_13 : f32 to vector<26x128xf32>
      %cst_14 = arith.constant 0.000000e+00 : f32
      %14 = vector.broadcast %cst_14 : f32 to vector<26x128xf32>
      %cst_15 = arith.constant 0.000000e+00 : f32
      %15 = vector.broadcast %cst_15 : f32 to vector<26x128xf32>
      %cst_16 = arith.constant 0.000000e+00 : f32
      %16 = vector.broadcast %cst_16 : f32 to vector<26x128xf32>
      %c0_i32_17 = arith.constant 0 : i32
      %17 = arith.addi %arg8, %c0_i32_17 : i32
      %c0_18 = arith.constant 0 : index
      %18 = arith.index_cast %17 : i32 to index
      %c0_19 = arith.constant 0 : index
      %c0_20 = arith.constant 0 : index
      %19 = vector.load %arg1[%c0_18, %18, %c0_19, %c0_20] : memref<3x28x28x128xf32, #tpu.memory_space<vmem>>, vector<1x1x26x128xf32>
      %20 = vector.shape_cast %19 : vector<1x1x26x128xf32> to vector<26x128xf32>
      %c0_21 = arith.constant 0 : index
      %21 = memref.load %arg2[%c0_21] : memref<216xf32, #tpu.memory_space<smem>>
      %22 = vector.broadcast %21 : f32 to vector<26x128xf32>
      %23 = arith.mulf %20, %22 : vector<26x128xf32>
      %24 = arith.addf %9, %23 : vector<26x128xf32>
      %c27 = arith.constant 27 : index
      %25 = memref.load %arg2[%c27] : memref<216xf32, #tpu.memory_space<smem>>
      %26 = vector.broadcast %25 : f32 to vector<26x128xf32>
      %27 = arith.mulf %20, %26 : vector<26x128xf32>
      %28 = arith.addf %10, %27 : vector<26x128xf32>
      %c54 = arith.constant 54 : index
      %29 = memref.load %arg2[%c54] : memref<216xf32, #tpu.memory_space<smem>>
      %30 = vector.broadcast %29 : f32 to vector<26x128xf32>
      %31 = arith.mulf %20, %30 : vector<26x128xf32>
      %32 = arith.addf %11, %31 : vector<26x128xf32>
      %c81 = arith.constant 81 : index
      %33 = memref.load %arg2[%c81] : memref<216xf32, #tpu.memory_space<smem>>
      %34 = vector.broadcast %33 : f32 to vector<26x128xf32>
      %35 = arith.mulf %20, %34 : vector<26x128xf32>
      %36 = arith.addf %12, %35 : vector<26x128xf32>
      %c108 = arith.constant 108 : index
      %37 = memref.load %arg2[%c108] : memref<216xf32, #tpu.memory_space<smem>>
      %38 = vector.broadcast %37 : f32 to vector<26x128xf32>
      %39 = arith.mulf %20, %38 : vector<26x128xf32>
      %40 = arith.addf %13, %39 : vector<26x128xf32>
      %c135 = arith.constant 135 : index
      %41 = memref.load %arg2[%c135] : memref<216xf32, #tpu.memory_space<smem>>
      %42 = vector.broadcast %41 : f32 to vector<26x128xf32>
      %43 = arith.mulf %20, %42 : vector<26x128xf32>
      %44 = arith.addf %14, %43 : vector<26x128xf32>
      %c162 = arith.constant 162 : index
      %45 = memref.load %arg2[%c162] : memref<216xf32, #tpu.memory_space<smem>>
      %46 = vector.broadcast %45 : f32 to vector<26x128xf32>
      %47 = arith.mulf %20, %46 : vector<26x128xf32>
      %48 = arith.addf %15, %47 : vector<26x128xf32>
      %c189 = arith.constant 189 : index
      %49 = memref.load %arg2[%c189] : memref<216xf32, #tpu.memory_space<smem>>
      %50 = vector.broadcast %49 : f32 to vector<26x128xf32>
      %51 = arith.mulf %20, %50 : vector<26x128xf32>
      %52 = arith.addf %16, %51 : vector<26x128xf32>
      %c0_i32_22 = arith.constant 0 : i32
      %53 = arith.addi %arg8, %c0_i32_22 : i32
      %c0_23 = arith.constant 0 : index
      %54 = arith.index_cast %53 : i32 to index
      %c1 = arith.constant 1 : index
      %c0_24 = arith.constant 0 : index
      %55 = vector.load %arg1[%c0_23, %54, %c1, %c0_24] : memref<3x28x28x128xf32, #tpu.memory_space<vmem>>, vector<1x1x26x128xf32>
      %56 = vector.shape_cast %55 : vector<1x1x26x128xf32> to vector<26x128xf32>
      %c1_25 = arith.constant 1 : index
      %57 = memref.load %arg2[%c1_25] : memref<216xf32, #tpu.memory_space<smem>>
      %58 = vector.broadcast %57 : f32 to vector<26x128xf32>
      %59 = arith.mulf %56, %58 : vector<26x128xf32>
      %60 = arith.addf %24, %59 : vector<26x128xf32>
      %c28 = arith.constant 28 : index
      %61 = memref.load %arg2[%c28] : memref<216xf32, #tpu.memory_space<smem>>
      %62 = vector.broadcast %61 : f32 to vector<26x128xf32>
      %63 = arith.mulf %56, %62 : vector<26x128xf32>
      %64 = arith.addf %28, %63 : vector<26x128xf32>
      %c55 = arith.constant 55 : index
      %65 = memref.load %arg2[%c55] : memref<216xf32, #tpu.memory_space<smem>>
      %66 = vector.broadcast %65 : f32 to vector<26x128xf32>
      %67 = arith.mulf %56, %66 : vector<26x128xf32>
      %68 = arith.addf %32, %67 : vector<26x128xf32>
      %c82 = arith.constant 82 : index
      %69 = memref.load %arg2[%c82] : memref<216xf32, #tpu.memory_space<smem>>
      %70 = vector.broadcast %69 : f32 to vector<26x128xf32>
      %71 = arith.mulf %56, %70 : vector<26x128xf32>
      %72 = arith.addf %36, %71 : vector<26x128xf32>
      %c109 = arith.constant 109 : index
      %73 = memref.load %arg2[%c109] : memref<216xf32, #tpu.memory_space<smem>>
      %74 = vector.broadcast %73 : f32 to vector<26x128xf32>
      %75 = arith.mulf %56, %74 : vector<26x128xf32>
      %76 = arith.addf %40, %75 : vector<26x128xf32>
      %c136 = arith.constant 136 : index
      %77 = memref.load %arg2[%c136] : memref<216xf32, #tpu.memory_space<smem>>
      %78 = vector.broadcast %77 : f32 to vector<26x128xf32>
      %79 = arith.mulf %56, %78 : vector<26x128xf32>
      %80 = arith.addf %44, %79 : vector<26x128xf32>
      %c163 = arith.constant 163 : index
      %81 = memref.load %arg2[%c163] : memref<216xf32, #tpu.memory_space<smem>>
      %82 = vector.broadcast %81 : f32 to vector<26x128xf32>
      %83 = arith.mulf %56, %82 : vector<26x128xf32>
      %84 = arith.addf %48, %83 : vector<26x128xf32>
      %c190 = arith.constant 190 : index
      %85 = memref.load %arg2[%c190] : memref<216xf32, #tpu.memory_space<smem>>
      %86 = vector.broadcast %85 : f32 to vector<26x128xf32>
      %87 = arith.mulf %56, %86 : vector<26x128xf32>
      %88 = arith.addf %52, %87 : vector<26x128xf32>
      %c0_i32_26 = arith.constant 0 : i32
      %89 = arith.addi %arg8, %c0_i32_26 : i32
      %c0_27 = arith.constant 0 : index
      %90 = arith.index_cast %89 : i32 to index
      %c2 = arith.constant 2 : index
      %c0_28 = arith.constant 0 : index
      %91 = vector.load %arg1[%c0_27, %90, %c2, %c0_28] : memref<3x28x28x128xf32, #tpu.memory_space<vmem>>, vector<1x1x26x128xf32>
      %92 = vector.shape_cast %91 : vector<1x1x26x128xf32> to vector<26x128xf32>
      %c2_29 = arith.constant 2 : index
      %93 = memref.load %arg2[%c2_29] : memref<216xf32, #tpu.memory_space<smem>>
      %94 = vector.broadcast %93 : f32 to vector<26x128xf32>
      %95 = arith.mulf %92, %94 : vector<26x128xf32>
      %96 = arith.addf %60, %95 : vector<26x128xf32>
      %c29 = arith.constant 29 : index
      %97 = memref.load %arg2[%c29] : memref<216xf32, #tpu.memory_space<smem>>
      %98 = vector.broadcast %97 : f32 to vector<26x128xf32>
      %99 = arith.mulf %92, %98 : vector<26x128xf32>
      %100 = arith.addf %64, %99 : vector<26x128xf32>
      %c56 = arith.constant 56 : index
      %101 = memref.load %arg2[%c56] : memref<216xf32, #tpu.memory_space<smem>>
      %102 = vector.broadcast %101 : f32 to vector<26x128xf32>
      %103 = arith.mulf %92, %102 : vector<26x128xf32>
      %104 = arith.addf %68, %103 : vector<26x128xf32>
      %c83 = arith.constant 83 : index
      %105 = memref.load %arg2[%c83] : memref<216xf32, #tpu.memory_space<smem>>
      %106 = vector.broadcast %105 : f32 to vector<26x128xf32>
      %107 = arith.mulf %92, %106 : vector<26x128xf32>
      %108 = arith.addf %72, %107 : vector<26x128xf32>
      %c110 = arith.constant 110 : index
      %109 = memref.load %arg2[%c110] : memref<216xf32, #tpu.memory_space<smem>>
      %110 = vector.broadcast %109 : f32 to vector<26x128xf32>
      %111 = arith.mulf %92, %110 : vector<26x128xf32>
      %112 = arith.addf %76, %111 : vector<26x128xf32>
      %c137 = arith.constant 137 : index
      %113 = memref.load %arg2[%c137] : memref<216xf32, #tpu.memory_space<smem>>
      %114 = vector.broadcast %113 : f32 to vector<26x128xf32>
      %115 = arith.mulf %92, %114 : vector<26x128xf32>
      %116 = arith.addf %80, %115 : vector<26x128xf32>
      %c164 = arith.constant 164 : index
      %117 = memref.load %arg2[%c164] : memref<216xf32, #tpu.memory_space<smem>>
      %118 = vector.broadcast %117 : f32 to vector<26x128xf32>
      %119 = arith.mulf %92, %118 : vector<26x128xf32>
      %120 = arith.addf %84, %119 : vector<26x128xf32>
      %c191 = arith.constant 191 : index
      %121 = memref.load %arg2[%c191] : memref<216xf32, #tpu.memory_space<smem>>
      %122 = vector.broadcast %121 : f32 to vector<26x128xf32>
      %123 = arith.mulf %92, %122 : vector<26x128xf32>
      %124 = arith.addf %88, %123 : vector<26x128xf32>
      %c1_i32_30 = arith.constant 1 : i32
      %125 = arith.addi %arg8, %c1_i32_30 : i32
      %c0_31 = arith.constant 0 : index
      %126 = arith.index_cast %125 : i32 to index
      %c0_32 = arith.constant 0 : index
      %c0_33 = arith.constant 0 : index
      %127 = vector.load %arg1[%c0_31, %126, %c0_32, %c0_33] : memref<3x28x28x128xf32, #tpu.memory_space<vmem>>, vector<1x1x26x128xf32>
      %128 = vector.shape_cast %127 : vector<1x1x26x128xf32> to vector<26x128xf32>
      %c3 = arith.constant 3 : index
      %129 = memref.load %arg2[%c3] : memref<216xf32, #tpu.memory_space<smem>>
      %130 = vector.broadcast %129 : f32 to vector<26x128xf32>
      %131 = arith.mulf %128, %130 : vector<26x128xf32>
      %132 = arith.addf %96, %131 : vector<26x128xf32>
      %c30 = arith.constant 30 : index
      %133 = memref.load %arg2[%c30] : memref<216xf32, #tpu.memory_space<smem>>
      %134 = vector.broadcast %133 : f32 to vector<26x128xf32>
      %135 = arith.mulf %128, %134 : vector<26x128xf32>
      %136 = arith.addf %100, %135 : vector<26x128xf32>
      %c57 = arith.constant 57 : index
      %137 = memref.load %arg2[%c57] : memref<216xf32, #tpu.memory_space<smem>>
      %138 = vector.broadcast %137 : f32 to vector<26x128xf32>
      %139 = arith.mulf %128, %138 : vector<26x128xf32>
      %140 = arith.addf %104, %139 : vector<26x128xf32>
      %c84 = arith.constant 84 : index
      %141 = memref.load %arg2[%c84] : memref<216xf32, #tpu.memory_space<smem>>
      %142 = vector.broadcast %141 : f32 to vector<26x128xf32>
      %143 = arith.mulf %128, %142 : vector<26x128xf32>
      %144 = arith.addf %108, %143 : vector<26x128xf32>
      %c111 = arith.constant 111 : index
      %145 = memref.load %arg2[%c111] : memref<216xf32, #tpu.memory_space<smem>>
      %146 = vector.broadcast %145 : f32 to vector<26x128xf32>
      %147 = arith.mulf %128, %146 : vector<26x128xf32>
      %148 = arith.addf %112, %147 : vector<26x128xf32>
      %c138 = arith.constant 138 : index
      %149 = memref.load %arg2[%c138] : memref<216xf32, #tpu.memory_space<smem>>
      %150 = vector.broadcast %149 : f32 to vector<26x128xf32>
      %151 = arith.mulf %128, %150 : vector<26x128xf32>
      %152 = arith.addf %116, %151 : vector<26x128xf32>
      %c165 = arith.constant 165 : index
      %153 = memref.load %arg2[%c165] : memref<216xf32, #tpu.memory_space<smem>>
      %154 = vector.broadcast %153 : f32 to vector<26x128xf32>
      %155 = arith.mulf %128, %154 : vector<26x128xf32>
      %156 = arith.addf %120, %155 : vector<26x128xf32>
      %c192 = arith.constant 192 : index
      %157 = memref.load %arg2[%c192] : memref<216xf32, #tpu.memory_space<smem>>
      %158 = vector.broadcast %157 : f32 to vector<26x128xf32>
      %159 = arith.mulf %128, %158 : vector<26x128xf32>
      %160 = arith.addf %124, %159 : vector<26x128xf32>
      %c1_i32_34 = arith.constant 1 : i32
      %161 = arith.addi %arg8, %c1_i32_34 : i32
      %c0_35 = arith.constant 0 : index
      %162 = arith.index_cast %161 : i32 to index
      %c1_36 = arith.constant 1 : index
      %c0_37 = arith.constant 0 : index
      %163 = vector.load %arg1[%c0_35, %162, %c1_36, %c0_37] : memref<3x28x28x128xf32, #tpu.memory_space<vmem>>, vector<1x1x26x128xf32>
      %164 = vector.shape_cast %163 : vector<1x1x26x128xf32> to vector<26x128xf32>
      %c4 = arith.constant 4 : index
      %165 = memref.load %arg2[%c4] : memref<216xf32, #tpu.memory_space<smem>>
      %166 = vector.broadcast %165 : f32 to vector<26x128xf32>
      %167 = arith.mulf %164, %166 : vector<26x128xf32>
      %168 = arith.addf %132, %167 : vector<26x128xf32>
      %c31 = arith.constant 31 : index
      %169 = memref.load %arg2[%c31] : memref<216xf32, #tpu.memory_space<smem>>
      %170 = vector.broadcast %169 : f32 to vector<26x128xf32>
      %171 = arith.mulf %164, %170 : vector<26x128xf32>
      %172 = arith.addf %136, %171 : vector<26x128xf32>
      %c58 = arith.constant 58 : index
      %173 = memref.load %arg2[%c58] : memref<216xf32, #tpu.memory_space<smem>>
      %174 = vector.broadcast %173 : f32 to vector<26x128xf32>
      %175 = arith.mulf %164, %174 : vector<26x128xf32>
      %176 = arith.addf %140, %175 : vector<26x128xf32>
      %c85 = arith.constant 85 : index
      %177 = memref.load %arg2[%c85] : memref<216xf32, #tpu.memory_space<smem>>
      %178 = vector.broadcast %177 : f32 to vector<26x128xf32>
      %179 = arith.mulf %164, %178 : vector<26x128xf32>
      %180 = arith.addf %144, %179 : vector<26x128xf32>
      %c112 = arith.constant 112 : index
      %181 = memref.load %arg2[%c112] : memref<216xf32, #tpu.memory_space<smem>>
      %182 = vector.broadcast %181 : f32 to vector<26x128xf32>
      %183 = arith.mulf %164, %182 : vector<26x128xf32>
      %184 = arith.addf %148, %183 : vector<26x128xf32>
      %c139 = arith.constant 139 : index
      %185 = memref.load %arg2[%c139] : memref<216xf32, #tpu.memory_space<smem>>
      %186 = vector.broadcast %185 : f32 to vector<26x128xf32>
      %187 = arith.mulf %164, %186 : vector<26x128xf32>
      %188 = arith.addf %152, %187 : vector<26x128xf32>
      %c166 = arith.constant 166 : index
      %189 = memref.load %arg2[%c166] : memref<216xf32, #tpu.memory_space<smem>>
      %190 = vector.broadcast %189 : f32 to vector<26x128xf32>
      %191 = arith.mulf %164, %190 : vector<26x128xf32>
      %192 = arith.addf %156, %191 : vector<26x128xf32>
      %c193 = arith.constant 193 : index
      %193 = memref.load %arg2[%c193] : memref<216xf32, #tpu.memory_space<smem>>
      %194 = vector.broadcast %193 : f32 to vector<26x128xf32>
      %195 = arith.mulf %164, %194 : vector<26x128xf32>
      %196 = arith.addf %160, %195 : vector<26x128xf32>
      %c1_i32_38 = arith.constant 1 : i32
      %197 = arith.addi %arg8, %c1_i32_38 : i32
      %c0_39 = arith.constant 0 : index
      %198 = arith.index_cast %197 : i32 to index
      %c2_40 = arith.constant 2 : index
      %c0_41 = arith.constant 0 : index
      %199 = vector.load %arg1[%c0_39, %198, %c2_40, %c0_41] : memref<3x28x28x128xf32, #tpu.memory_space<vmem>>, vector<1x1x26x128xf32>
      %200 = vector.shape_cast %199 : vector<1x1x26x128xf32> to vector<26x128xf32>
      %c5 = arith.constant 5 : index
      %201 = memref.load %arg2[%c5] : memref<216xf32, #tpu.memory_space<smem>>
      %202 = vector.broadcast %201 : f32 to vector<26x128xf32>
      %203 = arith.mulf %200, %202 : vector<26x128xf32>
      %204 = arith.addf %168, %203 : vector<26x128xf32>
      %c32 = arith.constant 32 : index
      %205 = memref.load %arg2[%c32] : memref<216xf32, #tpu.memory_space<smem>>
      %206 = vector.broadcast %205 : f32 to vector<26x128xf32>
      %207 = arith.mulf %200, %206 : vector<26x128xf32>
      %208 = arith.addf %172, %207 : vector<26x128xf32>
      %c59 = arith.constant 59 : index
      %209 = memref.load %arg2[%c59] : memref<216xf32, #tpu.memory_space<smem>>
      %210 = vector.broadcast %209 : f32 to vector<26x128xf32>
      %211 = arith.mulf %200, %210 : vector<26x128xf32>
      %212 = arith.addf %176, %211 : vector<26x128xf32>
      %c86 = arith.constant 86 : index
      %213 = memref.load %arg2[%c86] : memref<216xf32, #tpu.memory_space<smem>>
      %214 = vector.broadcast %213 : f32 to vector<26x128xf32>
      %215 = arith.mulf %200, %214 : vector<26x128xf32>
      %216 = arith.addf %180, %215 : vector<26x128xf32>
      %c113 = arith.constant 113 : index
      %217 = memref.load %arg2[%c113] : memref<216xf32, #tpu.memory_space<smem>>
      %218 = vector.broadcast %217 : f32 to vector<26x128xf32>
      %219 = arith.mulf %200, %218 : vector<26x128xf32>
      %220 = arith.addf %184, %219 : vector<26x128xf32>
      %c140 = arith.constant 140 : index
      %221 = memref.load %arg2[%c140] : memref<216xf32, #tpu.memory_space<smem>>
      %222 = vector.broadcast %221 : f32 to vector<26x128xf32>
      %223 = arith.mulf %200, %222 : vector<26x128xf32>
      %224 = arith.addf %188, %223 : vector<26x128xf32>
      %c167 = arith.constant 167 : index
      %225 = memref.load %arg2[%c167] : memref<216xf32, #tpu.memory_space<smem>>
      %226 = vector.broadcast %225 : f32 to vector<26x128xf32>
      %227 = arith.mulf %200, %226 : vector<26x128xf32>
      %228 = arith.addf %192, %227 : vector<26x128xf32>
      %c194 = arith.constant 194 : index
      %229 = memref.load %arg2[%c194] : memref<216xf32, #tpu.memory_space<smem>>
      %230 = vector.broadcast %229 : f32 to vector<26x128xf32>
      %231 = arith.mulf %200, %230 : vector<26x128xf32>
      %232 = arith.addf %196, %231 : vector<26x128xf32>
      %c2_i32 = arith.constant 2 : i32
      %233 = arith.addi %arg8, %c2_i32 : i32
      %c0_42 = arith.constant 0 : index
      %234 = arith.index_cast %233 : i32 to index
      %c0_43 = arith.constant 0 : index
      %c0_44 = arith.constant 0 : index
      %235 = vector.load %arg1[%c0_42, %234, %c0_43, %c0_44] : memref<3x28x28x128xf32, #tpu.memory_space<vmem>>, vector<1x1x26x128xf32>
      %236 = vector.shape_cast %235 : vector<1x1x26x128xf32> to vector<26x128xf32>
      %c6 = arith.constant 6 : index
      %237 = memref.load %arg2[%c6] : memref<216xf32, #tpu.memory_space<smem>>
      %238 = vector.broadcast %237 : f32 to vector<26x128xf32>
      %239 = arith.mulf %236, %238 : vector<26x128xf32>
      %240 = arith.addf %204, %239 : vector<26x128xf32>
      %c33 = arith.constant 33 : index
      %241 = memref.load %arg2[%c33] : memref<216xf32, #tpu.memory_space<smem>>
      %242 = vector.broadcast %241 : f32 to vector<26x128xf32>
      %243 = arith.mulf %236, %242 : vector<26x128xf32>
      %244 = arith.addf %208, %243 : vector<26x128xf32>
      %c60 = arith.constant 60 : index
      %245 = memref.load %arg2[%c60] : memref<216xf32, #tpu.memory_space<smem>>
      %246 = vector.broadcast %245 : f32 to vector<26x128xf32>
      %247 = arith.mulf %236, %246 : vector<26x128xf32>
      %248 = arith.addf %212, %247 : vector<26x128xf32>
      %c87 = arith.constant 87 : index
      %249 = memref.load %arg2[%c87] : memref<216xf32, #tpu.memory_space<smem>>
      %250 = vector.broadcast %249 : f32 to vector<26x128xf32>
      %251 = arith.mulf %236, %250 : vector<26x128xf32>
      %252 = arith.addf %216, %251 : vector<26x128xf32>
      %c114 = arith.constant 114 : index
      %253 = memref.load %arg2[%c114] : memref<216xf32, #tpu.memory_space<smem>>
      %254 = vector.broadcast %253 : f32 to vector<26x128xf32>
      %255 = arith.mulf %236, %254 : vector<26x128xf32>
      %256 = arith.addf %220, %255 : vector<26x128xf32>
      %c141 = arith.constant 141 : index
      %257 = memref.load %arg2[%c141] : memref<216xf32, #tpu.memory_space<smem>>
      %258 = vector.broadcast %257 : f32 to vector<26x128xf32>
      %259 = arith.mulf %236, %258 : vector<26x128xf32>
      %260 = arith.addf %224, %259 : vector<26x128xf32>
      %c168 = arith.constant 168 : index
      %261 = memref.load %arg2[%c168] : memref<216xf32, #tpu.memory_space<smem>>
      %262 = vector.broadcast %261 : f32 to vector<26x128xf32>
      %263 = arith.mulf %236, %262 : vector<26x128xf32>
      %264 = arith.addf %228, %263 : vector<26x128xf32>
      %c195 = arith.constant 195 : index
      %265 = memref.load %arg2[%c195] : memref<216xf32, #tpu.memory_space<smem>>
      %266 = vector.broadcast %265 : f32 to vector<26x128xf32>
      %267 = arith.mulf %236, %266 : vector<26x128xf32>
      %268 = arith.addf %232, %267 : vector<26x128xf32>
      %c2_i32_45 = arith.constant 2 : i32
      %269 = arith.addi %arg8, %c2_i32_45 : i32
      %c0_46 = arith.constant 0 : index
      %270 = arith.index_cast %269 : i32 to index
      %c1_47 = arith.constant 1 : index
      %c0_48 = arith.constant 0 : index
      %271 = vector.load %arg1[%c0_46, %270, %c1_47, %c0_48] : memref<3x28x28x128xf32, #tpu.memory_space<vmem>>, vector<1x1x26x128xf32>
      %272 = vector.shape_cast %271 : vector<1x1x26x128xf32> to vector<26x128xf32>
      %c7 = arith.constant 7 : index
      %273 = memref.load %arg2[%c7] : memref<216xf32, #tpu.memory_space<smem>>
      %274 = vector.broadcast %273 : f32 to vector<26x128xf32>
      %275 = arith.mulf %272, %274 : vector<26x128xf32>
      %276 = arith.addf %240, %275 : vector<26x128xf32>
      %c34 = arith.constant 34 : index
      %277 = memref.load %arg2[%c34] : memref<216xf32, #tpu.memory_space<smem>>
      %278 = vector.broadcast %277 : f32 to vector<26x128xf32>
      %279 = arith.mulf %272, %278 : vector<26x128xf32>
      %280 = arith.addf %244, %279 : vector<26x128xf32>
      %c61 = arith.constant 61 : index
      %281 = memref.load %arg2[%c61] : memref<216xf32, #tpu.memory_space<smem>>
      %282 = vector.broadcast %281 : f32 to vector<26x128xf32>
      %283 = arith.mulf %272, %282 : vector<26x128xf32>
      %284 = arith.addf %248, %283 : vector<26x128xf32>
      %c88 = arith.constant 88 : index
      %285 = memref.load %arg2[%c88] : memref<216xf32, #tpu.memory_space<smem>>
      %286 = vector.broadcast %285 : f32 to vector<26x128xf32>
      %287 = arith.mulf %272, %286 : vector<26x128xf32>
      %288 = arith.addf %252, %287 : vector<26x128xf32>
      %c115 = arith.constant 115 : index
      %289 = memref.load %arg2[%c115] : memref<216xf32, #tpu.memory_space<smem>>
      %290 = vector.broadcast %289 : f32 to vector<26x128xf32>
      %291 = arith.mulf %272, %290 : vector<26x128xf32>
      %292 = arith.addf %256, %291 : vector<26x128xf32>
      %c142 = arith.constant 142 : index
      %293 = memref.load %arg2[%c142] : memref<216xf32, #tpu.memory_space<smem>>
      %294 = vector.broadcast %293 : f32 to vector<26x128xf32>
      %295 = arith.mulf %272, %294 : vector<26x128xf32>
      %296 = arith.addf %260, %295 : vector<26x128xf32>
      %c169 = arith.constant 169 : index
      %297 = memref.load %arg2[%c169] : memref<216xf32, #tpu.memory_space<smem>>
      %298 = vector.broadcast %297 : f32 to vector<26x128xf32>
      %299 = arith.mulf %272, %298 : vector<26x128xf32>
      %300 = arith.addf %264, %299 : vector<26x128xf32>
      %c196 = arith.constant 196 : index
      %301 = memref.load %arg2[%c196] : memref<216xf32, #tpu.memory_space<smem>>
      %302 = vector.broadcast %301 : f32 to vector<26x128xf32>
      %303 = arith.mulf %272, %302 : vector<26x128xf32>
      %304 = arith.addf %268, %303 : vector<26x128xf32>
      %c2_i32_49 = arith.constant 2 : i32
      %305 = arith.addi %arg8, %c2_i32_49 : i32
      %c0_50 = arith.constant 0 : index
      %306 = arith.index_cast %305 : i32 to index
      %c2_51 = arith.constant 2 : index
      %c0_52 = arith.constant 0 : index
      %307 = vector.load %arg1[%c0_50, %306, %c2_51, %c0_52] : memref<3x28x28x128xf32, #tpu.memory_space<vmem>>, vector<1x1x26x128xf32>
      %308 = vector.shape_cast %307 : vector<1x1x26x128xf32> to vector<26x128xf32>
      %c8 = arith.constant 8 : index
      %309 = memref.load %arg2[%c8] : memref<216xf32, #tpu.memory_space<smem>>
      %310 = vector.broadcast %309 : f32 to vector<26x128xf32>
      %311 = arith.mulf %308, %310 : vector<26x128xf32>
      %312 = arith.addf %276, %311 : vector<26x128xf32>
      %c35 = arith.constant 35 : index
      %313 = memref.load %arg2[%c35] : memref<216xf32, #tpu.memory_space<smem>>
      %314 = vector.broadcast %313 : f32 to vector<26x128xf32>
      %315 = arith.mulf %308, %314 : vector<26x128xf32>
      %316 = arith.addf %280, %315 : vector<26x128xf32>
      %c62 = arith.constant 62 : index
      %317 = memref.load %arg2[%c62] : memref<216xf32, #tpu.memory_space<smem>>
      %318 = vector.broadcast %317 : f32 to vector<26x128xf32>
      %319 = arith.mulf %308, %318 : vector<26x128xf32>
      %320 = arith.addf %284, %319 : vector<26x128xf32>
      %c89 = arith.constant 89 : index
      %321 = memref.load %arg2[%c89] : memref<216xf32, #tpu.memory_space<smem>>
      %322 = vector.broadcast %321 : f32 to vector<26x128xf32>
      %323 = arith.mulf %308, %322 : vector<26x128xf32>
      %324 = arith.addf %288, %323 : vector<26x128xf32>
      %c116 = arith.constant 116 : index
      %325 = memref.load %arg2[%c116] : memref<216xf32, #tpu.memory_space<smem>>
      %326 = vector.broadcast %325 : f32 to vector<26x128xf32>
      %327 = arith.mulf %308, %326 : vector<26x128xf32>
      %328 = arith.addf %292, %327 : vector<26x128xf32>
      %c143 = arith.constant 143 : index
      %329 = memref.load %arg2[%c143] : memref<216xf32, #tpu.memory_space<smem>>
      %330 = vector.broadcast %329 : f32 to vector<26x128xf32>
      %331 = arith.mulf %308, %330 : vector<26x128xf32>
      %332 = arith.addf %296, %331 : vector<26x128xf32>
      %c170 = arith.constant 170 : index
      %333 = memref.load %arg2[%c170] : memref<216xf32, #tpu.memory_space<smem>>
      %334 = vector.broadcast %333 : f32 to vector<26x128xf32>
      %335 = arith.mulf %308, %334 : vector<26x128xf32>
      %336 = arith.addf %300, %335 : vector<26x128xf32>
      %c197 = arith.constant 197 : index
      %337 = memref.load %arg2[%c197] : memref<216xf32, #tpu.memory_space<smem>>
      %338 = vector.broadcast %337 : f32 to vector<26x128xf32>
      %339 = arith.mulf %308, %338 : vector<26x128xf32>
      %340 = arith.addf %304, %339 : vector<26x128xf32>
      %c0_i32_53 = arith.constant 0 : i32
      %341 = arith.addi %arg8, %c0_i32_53 : i32
      %c1_54 = arith.constant 1 : index
      %342 = arith.index_cast %341 : i32 to index
      %c0_55 = arith.constant 0 : index
      %c0_56 = arith.constant 0 : index
      %343 = vector.load %arg1[%c1_54, %342, %c0_55, %c0_56] : memref<3x28x28x128xf32, #tpu.memory_space<vmem>>, vector<1x1x26x128xf32>
      %344 = vector.shape_cast %343 : vector<1x1x26x128xf32> to vector<26x128xf32>
      %c9 = arith.constant 9 : index
      %345 = memref.load %arg2[%c9] : memref<216xf32, #tpu.memory_space<smem>>
      %346 = vector.broadcast %345 : f32 to vector<26x128xf32>
      %347 = arith.mulf %344, %346 : vector<26x128xf32>
      %348 = arith.addf %312, %347 : vector<26x128xf32>
      %c36 = arith.constant 36 : index
      %349 = memref.load %arg2[%c36] : memref<216xf32, #tpu.memory_space<smem>>
      %350 = vector.broadcast %349 : f32 to vector<26x128xf32>
      %351 = arith.mulf %344, %350 : vector<26x128xf32>
      %352 = arith.addf %316, %351 : vector<26x128xf32>
      %c63 = arith.constant 63 : index
      %353 = memref.load %arg2[%c63] : memref<216xf32, #tpu.memory_space<smem>>
      %354 = vector.broadcast %353 : f32 to vector<26x128xf32>
      %355 = arith.mulf %344, %354 : vector<26x128xf32>
      %356 = arith.addf %320, %355 : vector<26x128xf32>
      %c90 = arith.constant 90 : index
      %357 = memref.load %arg2[%c90] : memref<216xf32, #tpu.memory_space<smem>>
      %358 = vector.broadcast %357 : f32 to vector<26x128xf32>
      %359 = arith.mulf %344, %358 : vector<26x128xf32>
      %360 = arith.addf %324, %359 : vector<26x128xf32>
      %c117 = arith.constant 117 : index
      %361 = memref.load %arg2[%c117] : memref<216xf32, #tpu.memory_space<smem>>
      %362 = vector.broadcast %361 : f32 to vector<26x128xf32>
      %363 = arith.mulf %344, %362 : vector<26x128xf32>
      %364 = arith.addf %328, %363 : vector<26x128xf32>
      %c144 = arith.constant 144 : index
      %365 = memref.load %arg2[%c144] : memref<216xf32, #tpu.memory_space<smem>>
      %366 = vector.broadcast %365 : f32 to vector<26x128xf32>
      %367 = arith.mulf %344, %366 : vector<26x128xf32>
      %368 = arith.addf %332, %367 : vector<26x128xf32>
      %c171 = arith.constant 171 : index
      %369 = memref.load %arg2[%c171] : memref<216xf32, #tpu.memory_space<smem>>
      %370 = vector.broadcast %369 : f32 to vector<26x128xf32>
      %371 = arith.mulf %344, %370 : vector<26x128xf32>
      %372 = arith.addf %336, %371 : vector<26x128xf32>
      %c198 = arith.constant 198 : index
      %373 = memref.load %arg2[%c198] : memref<216xf32, #tpu.memory_space<smem>>
      %374 = vector.broadcast %373 : f32 to vector<26x128xf32>
      %375 = arith.mulf %344, %374 : vector<26x128xf32>
      %376 = arith.addf %340, %375 : vector<26x128xf32>
      %c0_i32_57 = arith.constant 0 : i32
      %377 = arith.addi %arg8, %c0_i32_57 : i32
      %c1_58 = arith.constant 1 : index
      %378 = arith.index_cast %377 : i32 to index
      %c1_59 = arith.constant 1 : index
      %c0_60 = arith.constant 0 : index
      %379 = vector.load %arg1[%c1_58, %378, %c1_59, %c0_60] : memref<3x28x28x128xf32, #tpu.memory_space<vmem>>, vector<1x1x26x128xf32>
      %380 = vector.shape_cast %379 : vector<1x1x26x128xf32> to vector<26x128xf32>
      %c10 = arith.constant 10 : index
      %381 = memref.load %arg2[%c10] : memref<216xf32, #tpu.memory_space<smem>>
      %382 = vector.broadcast %381 : f32 to vector<26x128xf32>
      %383 = arith.mulf %380, %382 : vector<26x128xf32>
      %384 = arith.addf %348, %383 : vector<26x128xf32>
      %c37 = arith.constant 37 : index
      %385 = memref.load %arg2[%c37] : memref<216xf32, #tpu.memory_space<smem>>
      %386 = vector.broadcast %385 : f32 to vector<26x128xf32>
      %387 = arith.mulf %380, %386 : vector<26x128xf32>
      %388 = arith.addf %352, %387 : vector<26x128xf32>
      %c64 = arith.constant 64 : index
      %389 = memref.load %arg2[%c64] : memref<216xf32, #tpu.memory_space<smem>>
      %390 = vector.broadcast %389 : f32 to vector<26x128xf32>
      %391 = arith.mulf %380, %390 : vector<26x128xf32>
      %392 = arith.addf %356, %391 : vector<26x128xf32>
      %c91 = arith.constant 91 : index
      %393 = memref.load %arg2[%c91] : memref<216xf32, #tpu.memory_space<smem>>
      %394 = vector.broadcast %393 : f32 to vector<26x128xf32>
      %395 = arith.mulf %380, %394 : vector<26x128xf32>
      %396 = arith.addf %360, %395 : vector<26x128xf32>
      %c118 = arith.constant 118 : index
      %397 = memref.load %arg2[%c118] : memref<216xf32, #tpu.memory_space<smem>>
      %398 = vector.broadcast %397 : f32 to vector<26x128xf32>
      %399 = arith.mulf %380, %398 : vector<26x128xf32>
      %400 = arith.addf %364, %399 : vector<26x128xf32>
      %c145 = arith.constant 145 : index
      %401 = memref.load %arg2[%c145] : memref<216xf32, #tpu.memory_space<smem>>
      %402 = vector.broadcast %401 : f32 to vector<26x128xf32>
      %403 = arith.mulf %380, %402 : vector<26x128xf32>
      %404 = arith.addf %368, %403 : vector<26x128xf32>
      %c172 = arith.constant 172 : index
      %405 = memref.load %arg2[%c172] : memref<216xf32, #tpu.memory_space<smem>>
      %406 = vector.broadcast %405 : f32 to vector<26x128xf32>
      %407 = arith.mulf %380, %406 : vector<26x128xf32>
      %408 = arith.addf %372, %407 : vector<26x128xf32>
      %c199 = arith.constant 199 : index
      %409 = memref.load %arg2[%c199] : memref<216xf32, #tpu.memory_space<smem>>
      %410 = vector.broadcast %409 : f32 to vector<26x128xf32>
      %411 = arith.mulf %380, %410 : vector<26x128xf32>
      %412 = arith.addf %376, %411 : vector<26x128xf32>
      %c0_i32_61 = arith.constant 0 : i32
      %413 = arith.addi %arg8, %c0_i32_61 : i32
      %c1_62 = arith.constant 1 : index
      %414 = arith.index_cast %413 : i32 to index
      %c2_63 = arith.constant 2 : index
      %c0_64 = arith.constant 0 : index
      %415 = vector.load %arg1[%c1_62, %414, %c2_63, %c0_64] : memref<3x28x28x128xf32, #tpu.memory_space<vmem>>, vector<1x1x26x128xf32>
      %416 = vector.shape_cast %415 : vector<1x1x26x128xf32> to vector<26x128xf32>
      %c11 = arith.constant 11 : index
      %417 = memref.load %arg2[%c11] : memref<216xf32, #tpu.memory_space<smem>>
      %418 = vector.broadcast %417 : f32 to vector<26x128xf32>
      %419 = arith.mulf %416, %418 : vector<26x128xf32>
      %420 = arith.addf %384, %419 : vector<26x128xf32>
      %c38 = arith.constant 38 : index
      %421 = memref.load %arg2[%c38] : memref<216xf32, #tpu.memory_space<smem>>
      %422 = vector.broadcast %421 : f32 to vector<26x128xf32>
      %423 = arith.mulf %416, %422 : vector<26x128xf32>
      %424 = arith.addf %388, %423 : vector<26x128xf32>
      %c65 = arith.constant 65 : index
      %425 = memref.load %arg2[%c65] : memref<216xf32, #tpu.memory_space<smem>>
      %426 = vector.broadcast %425 : f32 to vector<26x128xf32>
      %427 = arith.mulf %416, %426 : vector<26x128xf32>
      %428 = arith.addf %392, %427 : vector<26x128xf32>
      %c92 = arith.constant 92 : index
      %429 = memref.load %arg2[%c92] : memref<216xf32, #tpu.memory_space<smem>>
      %430 = vector.broadcast %429 : f32 to vector<26x128xf32>
      %431 = arith.mulf %416, %430 : vector<26x128xf32>
      %432 = arith.addf %396, %431 : vector<26x128xf32>
      %c119 = arith.constant 119 : index
      %433 = memref.load %arg2[%c119] : memref<216xf32, #tpu.memory_space<smem>>
      %434 = vector.broadcast %433 : f32 to vector<26x128xf32>
      %435 = arith.mulf %416, %434 : vector<26x128xf32>
      %436 = arith.addf %400, %435 : vector<26x128xf32>
      %c146 = arith.constant 146 : index
      %437 = memref.load %arg2[%c146] : memref<216xf32, #tpu.memory_space<smem>>
      %438 = vector.broadcast %437 : f32 to vector<26x128xf32>
      %439 = arith.mulf %416, %438 : vector<26x128xf32>
      %440 = arith.addf %404, %439 : vector<26x128xf32>
      %c173 = arith.constant 173 : index
      %441 = memref.load %arg2[%c173] : memref<216xf32, #tpu.memory_space<smem>>
      %442 = vector.broadcast %441 : f32 to vector<26x128xf32>
      %443 = arith.mulf %416, %442 : vector<26x128xf32>
      %444 = arith.addf %408, %443 : vector<26x128xf32>
      %c200 = arith.constant 200 : index
      %445 = memref.load %arg2[%c200] : memref<216xf32, #tpu.memory_space<smem>>
      %446 = vector.broadcast %445 : f32 to vector<26x128xf32>
      %447 = arith.mulf %416, %446 : vector<26x128xf32>
      %448 = arith.addf %412, %447 : vector<26x128xf32>
      %c1_i32_65 = arith.constant 1 : i32
      %449 = arith.addi %arg8, %c1_i32_65 : i32
      %c1_66 = arith.constant 1 : index
      %450 = arith.index_cast %449 : i32 to index
      %c0_67 = arith.constant 0 : index
      %c0_68 = arith.constant 0 : index
      %451 = vector.load %arg1[%c1_66, %450, %c0_67, %c0_68] : memref<3x28x28x128xf32, #tpu.memory_space<vmem>>, vector<1x1x26x128xf32>
      %452 = vector.shape_cast %451 : vector<1x1x26x128xf32> to vector<26x128xf32>
      %c12 = arith.constant 12 : index
      %453 = memref.load %arg2[%c12] : memref<216xf32, #tpu.memory_space<smem>>
      %454 = vector.broadcast %453 : f32 to vector<26x128xf32>
      %455 = arith.mulf %452, %454 : vector<26x128xf32>
      %456 = arith.addf %420, %455 : vector<26x128xf32>
      %c39 = arith.constant 39 : index
      %457 = memref.load %arg2[%c39] : memref<216xf32, #tpu.memory_space<smem>>
      %458 = vector.broadcast %457 : f32 to vector<26x128xf32>
      %459 = arith.mulf %452, %458 : vector<26x128xf32>
      %460 = arith.addf %424, %459 : vector<26x128xf32>
      %c66 = arith.constant 66 : index
      %461 = memref.load %arg2[%c66] : memref<216xf32, #tpu.memory_space<smem>>
      %462 = vector.broadcast %461 : f32 to vector<26x128xf32>
      %463 = arith.mulf %452, %462 : vector<26x128xf32>
      %464 = arith.addf %428, %463 : vector<26x128xf32>
      %c93 = arith.constant 93 : index
      %465 = memref.load %arg2[%c93] : memref<216xf32, #tpu.memory_space<smem>>
      %466 = vector.broadcast %465 : f32 to vector<26x128xf32>
      %467 = arith.mulf %452, %466 : vector<26x128xf32>
      %468 = arith.addf %432, %467 : vector<26x128xf32>
      %c120 = arith.constant 120 : index
      %469 = memref.load %arg2[%c120] : memref<216xf32, #tpu.memory_space<smem>>
      %470 = vector.broadcast %469 : f32 to vector<26x128xf32>
      %471 = arith.mulf %452, %470 : vector<26x128xf32>
      %472 = arith.addf %436, %471 : vector<26x128xf32>
      %c147 = arith.constant 147 : index
      %473 = memref.load %arg2[%c147] : memref<216xf32, #tpu.memory_space<smem>>
      %474 = vector.broadcast %473 : f32 to vector<26x128xf32>
      %475 = arith.mulf %452, %474 : vector<26x128xf32>
      %476 = arith.addf %440, %475 : vector<26x128xf32>
      %c174 = arith.constant 174 : index
      %477 = memref.load %arg2[%c174] : memref<216xf32, #tpu.memory_space<smem>>
      %478 = vector.broadcast %477 : f32 to vector<26x128xf32>
      %479 = arith.mulf %452, %478 : vector<26x128xf32>
      %480 = arith.addf %444, %479 : vector<26x128xf32>
      %c201 = arith.constant 201 : index
      %481 = memref.load %arg2[%c201] : memref<216xf32, #tpu.memory_space<smem>>
      %482 = vector.broadcast %481 : f32 to vector<26x128xf32>
      %483 = arith.mulf %452, %482 : vector<26x128xf32>
      %484 = arith.addf %448, %483 : vector<26x128xf32>
      %c1_i32_69 = arith.constant 1 : i32
      %485 = arith.addi %arg8, %c1_i32_69 : i32
      %c1_70 = arith.constant 1 : index
      %486 = arith.index_cast %485 : i32 to index
      %c1_71 = arith.constant 1 : index
      %c0_72 = arith.constant 0 : index
      %487 = vector.load %arg1[%c1_70, %486, %c1_71, %c0_72] : memref<3x28x28x128xf32, #tpu.memory_space<vmem>>, vector<1x1x26x128xf32>
      %488 = vector.shape_cast %487 : vector<1x1x26x128xf32> to vector<26x128xf32>
      %c13 = arith.constant 13 : index
      %489 = memref.load %arg2[%c13] : memref<216xf32, #tpu.memory_space<smem>>
      %490 = vector.broadcast %489 : f32 to vector<26x128xf32>
      %491 = arith.mulf %488, %490 : vector<26x128xf32>
      %492 = arith.addf %456, %491 : vector<26x128xf32>
      %c40 = arith.constant 40 : index
      %493 = memref.load %arg2[%c40] : memref<216xf32, #tpu.memory_space<smem>>
      %494 = vector.broadcast %493 : f32 to vector<26x128xf32>
      %495 = arith.mulf %488, %494 : vector<26x128xf32>
      %496 = arith.addf %460, %495 : vector<26x128xf32>
      %c67 = arith.constant 67 : index
      %497 = memref.load %arg2[%c67] : memref<216xf32, #tpu.memory_space<smem>>
      %498 = vector.broadcast %497 : f32 to vector<26x128xf32>
      %499 = arith.mulf %488, %498 : vector<26x128xf32>
      %500 = arith.addf %464, %499 : vector<26x128xf32>
      %c94 = arith.constant 94 : index
      %501 = memref.load %arg2[%c94] : memref<216xf32, #tpu.memory_space<smem>>
      %502 = vector.broadcast %501 : f32 to vector<26x128xf32>
      %503 = arith.mulf %488, %502 : vector<26x128xf32>
      %504 = arith.addf %468, %503 : vector<26x128xf32>
      %c121 = arith.constant 121 : index
      %505 = memref.load %arg2[%c121] : memref<216xf32, #tpu.memory_space<smem>>
      %506 = vector.broadcast %505 : f32 to vector<26x128xf32>
      %507 = arith.mulf %488, %506 : vector<26x128xf32>
      %508 = arith.addf %472, %507 : vector<26x128xf32>
      %c148 = arith.constant 148 : index
      %509 = memref.load %arg2[%c148] : memref<216xf32, #tpu.memory_space<smem>>
      %510 = vector.broadcast %509 : f32 to vector<26x128xf32>
      %511 = arith.mulf %488, %510 : vector<26x128xf32>
      %512 = arith.addf %476, %511 : vector<26x128xf32>
      %c175 = arith.constant 175 : index
      %513 = memref.load %arg2[%c175] : memref<216xf32, #tpu.memory_space<smem>>
      %514 = vector.broadcast %513 : f32 to vector<26x128xf32>
      %515 = arith.mulf %488, %514 : vector<26x128xf32>
      %516 = arith.addf %480, %515 : vector<26x128xf32>
      %c202 = arith.constant 202 : index
      %517 = memref.load %arg2[%c202] : memref<216xf32, #tpu.memory_space<smem>>
      %518 = vector.broadcast %517 : f32 to vector<26x128xf32>
      %519 = arith.mulf %488, %518 : vector<26x128xf32>
      %520 = arith.addf %484, %519 : vector<26x128xf32>
      %c1_i32_73 = arith.constant 1 : i32
      %521 = arith.addi %arg8, %c1_i32_73 : i32
      %c1_74 = arith.constant 1 : index
      %522 = arith.index_cast %521 : i32 to index
      %c2_75 = arith.constant 2 : index
      %c0_76 = arith.constant 0 : index
      %523 = vector.load %arg1[%c1_74, %522, %c2_75, %c0_76] : memref<3x28x28x128xf32, #tpu.memory_space<vmem>>, vector<1x1x26x128xf32>
      %524 = vector.shape_cast %523 : vector<1x1x26x128xf32> to vector<26x128xf32>
      %c14 = arith.constant 14 : index
      %525 = memref.load %arg2[%c14] : memref<216xf32, #tpu.memory_space<smem>>
      %526 = vector.broadcast %525 : f32 to vector<26x128xf32>
      %527 = arith.mulf %524, %526 : vector<26x128xf32>
      %528 = arith.addf %492, %527 : vector<26x128xf32>
      %c41 = arith.constant 41 : index
      %529 = memref.load %arg2[%c41] : memref<216xf32, #tpu.memory_space<smem>>
      %530 = vector.broadcast %529 : f32 to vector<26x128xf32>
      %531 = arith.mulf %524, %530 : vector<26x128xf32>
      %532 = arith.addf %496, %531 : vector<26x128xf32>
      %c68 = arith.constant 68 : index
      %533 = memref.load %arg2[%c68] : memref<216xf32, #tpu.memory_space<smem>>
      %534 = vector.broadcast %533 : f32 to vector<26x128xf32>
      %535 = arith.mulf %524, %534 : vector<26x128xf32>
      %536 = arith.addf %500, %535 : vector<26x128xf32>
      %c95 = arith.constant 95 : index
      %537 = memref.load %arg2[%c95] : memref<216xf32, #tpu.memory_space<smem>>
      %538 = vector.broadcast %537 : f32 to vector<26x128xf32>
      %539 = arith.mulf %524, %538 : vector<26x128xf32>
      %540 = arith.addf %504, %539 : vector<26x128xf32>
      %c122 = arith.constant 122 : index
      %541 = memref.load %arg2[%c122] : memref<216xf32, #tpu.memory_space<smem>>
      %542 = vector.broadcast %541 : f32 to vector<26x128xf32>
      %543 = arith.mulf %524, %542 : vector<26x128xf32>
      %544 = arith.addf %508, %543 : vector<26x128xf32>
      %c149 = arith.constant 149 : index
      %545 = memref.load %arg2[%c149] : memref<216xf32, #tpu.memory_space<smem>>
      %546 = vector.broadcast %545 : f32 to vector<26x128xf32>
      %547 = arith.mulf %524, %546 : vector<26x128xf32>
      %548 = arith.addf %512, %547 : vector<26x128xf32>
      %c176 = arith.constant 176 : index
      %549 = memref.load %arg2[%c176] : memref<216xf32, #tpu.memory_space<smem>>
      %550 = vector.broadcast %549 : f32 to vector<26x128xf32>
      %551 = arith.mulf %524, %550 : vector<26x128xf32>
      %552 = arith.addf %516, %551 : vector<26x128xf32>
      %c203 = arith.constant 203 : index
      %553 = memref.load %arg2[%c203] : memref<216xf32, #tpu.memory_space<smem>>
      %554 = vector.broadcast %553 : f32 to vector<26x128xf32>
      %555 = arith.mulf %524, %554 : vector<26x128xf32>
      %556 = arith.addf %520, %555 : vector<26x128xf32>
      %c2_i32_77 = arith.constant 2 : i32
      %557 = arith.addi %arg8, %c2_i32_77 : i32
      %c1_78 = arith.constant 1 : index
      %558 = arith.index_cast %557 : i32 to index
      %c0_79 = arith.constant 0 : index
      %c0_80 = arith.constant 0 : index
      %559 = vector.load %arg1[%c1_78, %558, %c0_79, %c0_80] : memref<3x28x28x128xf32, #tpu.memory_space<vmem>>, vector<1x1x26x128xf32>
      %560 = vector.shape_cast %559 : vector<1x1x26x128xf32> to vector<26x128xf32>
      %c15 = arith.constant 15 : index
      %561 = memref.load %arg2[%c15] : memref<216xf32, #tpu.memory_space<smem>>
      %562 = vector.broadcast %561 : f32 to vector<26x128xf32>
      %563 = arith.mulf %560, %562 : vector<26x128xf32>
      %564 = arith.addf %528, %563 : vector<26x128xf32>
      %c42 = arith.constant 42 : index
      %565 = memref.load %arg2[%c42] : memref<216xf32, #tpu.memory_space<smem>>
      %566 = vector.broadcast %565 : f32 to vector<26x128xf32>
      %567 = arith.mulf %560, %566 : vector<26x128xf32>
      %568 = arith.addf %532, %567 : vector<26x128xf32>
      %c69 = arith.constant 69 : index
      %569 = memref.load %arg2[%c69] : memref<216xf32, #tpu.memory_space<smem>>
      %570 = vector.broadcast %569 : f32 to vector<26x128xf32>
      %571 = arith.mulf %560, %570 : vector<26x128xf32>
      %572 = arith.addf %536, %571 : vector<26x128xf32>
      %c96 = arith.constant 96 : index
      %573 = memref.load %arg2[%c96] : memref<216xf32, #tpu.memory_space<smem>>
      %574 = vector.broadcast %573 : f32 to vector<26x128xf32>
      %575 = arith.mulf %560, %574 : vector<26x128xf32>
      %576 = arith.addf %540, %575 : vector<26x128xf32>
      %c123 = arith.constant 123 : index
      %577 = memref.load %arg2[%c123] : memref<216xf32, #tpu.memory_space<smem>>
      %578 = vector.broadcast %577 : f32 to vector<26x128xf32>
      %579 = arith.mulf %560, %578 : vector<26x128xf32>
      %580 = arith.addf %544, %579 : vector<26x128xf32>
      %c150 = arith.constant 150 : index
      %581 = memref.load %arg2[%c150] : memref<216xf32, #tpu.memory_space<smem>>
      %582 = vector.broadcast %581 : f32 to vector<26x128xf32>
      %583 = arith.mulf %560, %582 : vector<26x128xf32>
      %584 = arith.addf %548, %583 : vector<26x128xf32>
      %c177 = arith.constant 177 : index
      %585 = memref.load %arg2[%c177] : memref<216xf32, #tpu.memory_space<smem>>
      %586 = vector.broadcast %585 : f32 to vector<26x128xf32>
      %587 = arith.mulf %560, %586 : vector<26x128xf32>
      %588 = arith.addf %552, %587 : vector<26x128xf32>
      %c204 = arith.constant 204 : index
      %589 = memref.load %arg2[%c204] : memref<216xf32, #tpu.memory_space<smem>>
      %590 = vector.broadcast %589 : f32 to vector<26x128xf32>
      %591 = arith.mulf %560, %590 : vector<26x128xf32>
      %592 = arith.addf %556, %591 : vector<26x128xf32>
      %c2_i32_81 = arith.constant 2 : i32
      %593 = arith.addi %arg8, %c2_i32_81 : i32
      %c1_82 = arith.constant 1 : index
      %594 = arith.index_cast %593 : i32 to index
      %c1_83 = arith.constant 1 : index
      %c0_84 = arith.constant 0 : index
      %595 = vector.load %arg1[%c1_82, %594, %c1_83, %c0_84] : memref<3x28x28x128xf32, #tpu.memory_space<vmem>>, vector<1x1x26x128xf32>
      %596 = vector.shape_cast %595 : vector<1x1x26x128xf32> to vector<26x128xf32>
      %c16 = arith.constant 16 : index
      %597 = memref.load %arg2[%c16] : memref<216xf32, #tpu.memory_space<smem>>
      %598 = vector.broadcast %597 : f32 to vector<26x128xf32>
      %599 = arith.mulf %596, %598 : vector<26x128xf32>
      %600 = arith.addf %564, %599 : vector<26x128xf32>
      %c43 = arith.constant 43 : index
      %601 = memref.load %arg2[%c43] : memref<216xf32, #tpu.memory_space<smem>>
      %602 = vector.broadcast %601 : f32 to vector<26x128xf32>
      %603 = arith.mulf %596, %602 : vector<26x128xf32>
      %604 = arith.addf %568, %603 : vector<26x128xf32>
      %c70 = arith.constant 70 : index
      %605 = memref.load %arg2[%c70] : memref<216xf32, #tpu.memory_space<smem>>
      %606 = vector.broadcast %605 : f32 to vector<26x128xf32>
      %607 = arith.mulf %596, %606 : vector<26x128xf32>
      %608 = arith.addf %572, %607 : vector<26x128xf32>
      %c97 = arith.constant 97 : index
      %609 = memref.load %arg2[%c97] : memref<216xf32, #tpu.memory_space<smem>>
      %610 = vector.broadcast %609 : f32 to vector<26x128xf32>
      %611 = arith.mulf %596, %610 : vector<26x128xf32>
      %612 = arith.addf %576, %611 : vector<26x128xf32>
      %c124 = arith.constant 124 : index
      %613 = memref.load %arg2[%c124] : memref<216xf32, #tpu.memory_space<smem>>
      %614 = vector.broadcast %613 : f32 to vector<26x128xf32>
      %615 = arith.mulf %596, %614 : vector<26x128xf32>
      %616 = arith.addf %580, %615 : vector<26x128xf32>
      %c151 = arith.constant 151 : index
      %617 = memref.load %arg2[%c151] : memref<216xf32, #tpu.memory_space<smem>>
      %618 = vector.broadcast %617 : f32 to vector<26x128xf32>
      %619 = arith.mulf %596, %618 : vector<26x128xf32>
      %620 = arith.addf %584, %619 : vector<26x128xf32>
      %c178 = arith.constant 178 : index
      %621 = memref.load %arg2[%c178] : memref<216xf32, #tpu.memory_space<smem>>
      %622 = vector.broadcast %621 : f32 to vector<26x128xf32>
      %623 = arith.mulf %596, %622 : vector<26x128xf32>
      %624 = arith.addf %588, %623 : vector<26x128xf32>
      %c205 = arith.constant 205 : index
      %625 = memref.load %arg2[%c205] : memref<216xf32, #tpu.memory_space<smem>>
      %626 = vector.broadcast %625 : f32 to vector<26x128xf32>
      %627 = arith.mulf %596, %626 : vector<26x128xf32>
      %628 = arith.addf %592, %627 : vector<26x128xf32>
      %c2_i32_85 = arith.constant 2 : i32
      %629 = arith.addi %arg8, %c2_i32_85 : i32
      %c1_86 = arith.constant 1 : index
      %630 = arith.index_cast %629 : i32 to index
      %c2_87 = arith.constant 2 : index
      %c0_88 = arith.constant 0 : index
      %631 = vector.load %arg1[%c1_86, %630, %c2_87, %c0_88] : memref<3x28x28x128xf32, #tpu.memory_space<vmem>>, vector<1x1x26x128xf32>
      %632 = vector.shape_cast %631 : vector<1x1x26x128xf32> to vector<26x128xf32>
      %c17 = arith.constant 17 : index
      %633 = memref.load %arg2[%c17] : memref<216xf32, #tpu.memory_space<smem>>
      %634 = vector.broadcast %633 : f32 to vector<26x128xf32>
      %635 = arith.mulf %632, %634 : vector<26x128xf32>
      %636 = arith.addf %600, %635 : vector<26x128xf32>
      %c44 = arith.constant 44 : index
      %637 = memref.load %arg2[%c44] : memref<216xf32, #tpu.memory_space<smem>>
      %638 = vector.broadcast %637 : f32 to vector<26x128xf32>
      %639 = arith.mulf %632, %638 : vector<26x128xf32>
      %640 = arith.addf %604, %639 : vector<26x128xf32>
      %c71 = arith.constant 71 : index
      %641 = memref.load %arg2[%c71] : memref<216xf32, #tpu.memory_space<smem>>
      %642 = vector.broadcast %641 : f32 to vector<26x128xf32>
      %643 = arith.mulf %632, %642 : vector<26x128xf32>
      %644 = arith.addf %608, %643 : vector<26x128xf32>
      %c98 = arith.constant 98 : index
      %645 = memref.load %arg2[%c98] : memref<216xf32, #tpu.memory_space<smem>>
      %646 = vector.broadcast %645 : f32 to vector<26x128xf32>
      %647 = arith.mulf %632, %646 : vector<26x128xf32>
      %648 = arith.addf %612, %647 : vector<26x128xf32>
      %c125 = arith.constant 125 : index
      %649 = memref.load %arg2[%c125] : memref<216xf32, #tpu.memory_space<smem>>
      %650 = vector.broadcast %649 : f32 to vector<26x128xf32>
      %651 = arith.mulf %632, %650 : vector<26x128xf32>
      %652 = arith.addf %616, %651 : vector<26x128xf32>
      %c152 = arith.constant 152 : index
      %653 = memref.load %arg2[%c152] : memref<216xf32, #tpu.memory_space<smem>>
      %654 = vector.broadcast %653 : f32 to vector<26x128xf32>
      %655 = arith.mulf %632, %654 : vector<26x128xf32>
      %656 = arith.addf %620, %655 : vector<26x128xf32>
      %c179 = arith.constant 179 : index
      %657 = memref.load %arg2[%c179] : memref<216xf32, #tpu.memory_space<smem>>
      %658 = vector.broadcast %657 : f32 to vector<26x128xf32>
      %659 = arith.mulf %632, %658 : vector<26x128xf32>
      %660 = arith.addf %624, %659 : vector<26x128xf32>
      %c206 = arith.constant 206 : index
      %661 = memref.load %arg2[%c206] : memref<216xf32, #tpu.memory_space<smem>>
      %662 = vector.broadcast %661 : f32 to vector<26x128xf32>
      %663 = arith.mulf %632, %662 : vector<26x128xf32>
      %664 = arith.addf %628, %663 : vector<26x128xf32>
      %c0_i32_89 = arith.constant 0 : i32
      %665 = arith.addi %arg8, %c0_i32_89 : i32
      %c2_90 = arith.constant 2 : index
      %666 = arith.index_cast %665 : i32 to index
      %c0_91 = arith.constant 0 : index
      %c0_92 = arith.constant 0 : index
      %667 = vector.load %arg1[%c2_90, %666, %c0_91, %c0_92] : memref<3x28x28x128xf32, #tpu.memory_space<vmem>>, vector<1x1x26x128xf32>
      %668 = vector.shape_cast %667 : vector<1x1x26x128xf32> to vector<26x128xf32>
      %c18 = arith.constant 18 : index
      %669 = memref.load %arg2[%c18] : memref<216xf32, #tpu.memory_space<smem>>
      %670 = vector.broadcast %669 : f32 to vector<26x128xf32>
      %671 = arith.mulf %668, %670 : vector<26x128xf32>
      %672 = arith.addf %636, %671 : vector<26x128xf32>
      %c45 = arith.constant 45 : index
      %673 = memref.load %arg2[%c45] : memref<216xf32, #tpu.memory_space<smem>>
      %674 = vector.broadcast %673 : f32 to vector<26x128xf32>
      %675 = arith.mulf %668, %674 : vector<26x128xf32>
      %676 = arith.addf %640, %675 : vector<26x128xf32>
      %c72 = arith.constant 72 : index
      %677 = memref.load %arg2[%c72] : memref<216xf32, #tpu.memory_space<smem>>
      %678 = vector.broadcast %677 : f32 to vector<26x128xf32>
      %679 = arith.mulf %668, %678 : vector<26x128xf32>
      %680 = arith.addf %644, %679 : vector<26x128xf32>
      %c99 = arith.constant 99 : index
      %681 = memref.load %arg2[%c99] : memref<216xf32, #tpu.memory_space<smem>>
      %682 = vector.broadcast %681 : f32 to vector<26x128xf32>
      %683 = arith.mulf %668, %682 : vector<26x128xf32>
      %684 = arith.addf %648, %683 : vector<26x128xf32>
      %c126 = arith.constant 126 : index
      %685 = memref.load %arg2[%c126] : memref<216xf32, #tpu.memory_space<smem>>
      %686 = vector.broadcast %685 : f32 to vector<26x128xf32>
      %687 = arith.mulf %668, %686 : vector<26x128xf32>
      %688 = arith.addf %652, %687 : vector<26x128xf32>
      %c153 = arith.constant 153 : index
      %689 = memref.load %arg2[%c153] : memref<216xf32, #tpu.memory_space<smem>>
      %690 = vector.broadcast %689 : f32 to vector<26x128xf32>
      %691 = arith.mulf %668, %690 : vector<26x128xf32>
      %692 = arith.addf %656, %691 : vector<26x128xf32>
      %c180 = arith.constant 180 : index
      %693 = memref.load %arg2[%c180] : memref<216xf32, #tpu.memory_space<smem>>
      %694 = vector.broadcast %693 : f32 to vector<26x128xf32>
      %695 = arith.mulf %668, %694 : vector<26x128xf32>
      %696 = arith.addf %660, %695 : vector<26x128xf32>
      %c207 = arith.constant 207 : index
      %697 = memref.load %arg2[%c207] : memref<216xf32, #tpu.memory_space<smem>>
      %698 = vector.broadcast %697 : f32 to vector<26x128xf32>
      %699 = arith.mulf %668, %698 : vector<26x128xf32>
      %700 = arith.addf %664, %699 : vector<26x128xf32>
      %c0_i32_93 = arith.constant 0 : i32
      %701 = arith.addi %arg8, %c0_i32_93 : i32
      %c2_94 = arith.constant 2 : index
      %702 = arith.index_cast %701 : i32 to index
      %c1_95 = arith.constant 1 : index
      %c0_96 = arith.constant 0 : index
      %703 = vector.load %arg1[%c2_94, %702, %c1_95, %c0_96] : memref<3x28x28x128xf32, #tpu.memory_space<vmem>>, vector<1x1x26x128xf32>
      %704 = vector.shape_cast %703 : vector<1x1x26x128xf32> to vector<26x128xf32>
      %c19 = arith.constant 19 : index
      %705 = memref.load %arg2[%c19] : memref<216xf32, #tpu.memory_space<smem>>
      %706 = vector.broadcast %705 : f32 to vector<26x128xf32>
      %707 = arith.mulf %704, %706 : vector<26x128xf32>
      %708 = arith.addf %672, %707 : vector<26x128xf32>
      %c46 = arith.constant 46 : index
      %709 = memref.load %arg2[%c46] : memref<216xf32, #tpu.memory_space<smem>>
      %710 = vector.broadcast %709 : f32 to vector<26x128xf32>
      %711 = arith.mulf %704, %710 : vector<26x128xf32>
      %712 = arith.addf %676, %711 : vector<26x128xf32>
      %c73 = arith.constant 73 : index
      %713 = memref.load %arg2[%c73] : memref<216xf32, #tpu.memory_space<smem>>
      %714 = vector.broadcast %713 : f32 to vector<26x128xf32>
      %715 = arith.mulf %704, %714 : vector<26x128xf32>
      %716 = arith.addf %680, %715 : vector<26x128xf32>
      %c100 = arith.constant 100 : index
      %717 = memref.load %arg2[%c100] : memref<216xf32, #tpu.memory_space<smem>>
      %718 = vector.broadcast %717 : f32 to vector<26x128xf32>
      %719 = arith.mulf %704, %718 : vector<26x128xf32>
      %720 = arith.addf %684, %719 : vector<26x128xf32>
      %c127 = arith.constant 127 : index
      %721 = memref.load %arg2[%c127] : memref<216xf32, #tpu.memory_space<smem>>
      %722 = vector.broadcast %721 : f32 to vector<26x128xf32>
      %723 = arith.mulf %704, %722 : vector<26x128xf32>
      %724 = arith.addf %688, %723 : vector<26x128xf32>
      %c154 = arith.constant 154 : index
      %725 = memref.load %arg2[%c154] : memref<216xf32, #tpu.memory_space<smem>>
      %726 = vector.broadcast %725 : f32 to vector<26x128xf32>
      %727 = arith.mulf %704, %726 : vector<26x128xf32>
      %728 = arith.addf %692, %727 : vector<26x128xf32>
      %c181 = arith.constant 181 : index
      %729 = memref.load %arg2[%c181] : memref<216xf32, #tpu.memory_space<smem>>
      %730 = vector.broadcast %729 : f32 to vector<26x128xf32>
      %731 = arith.mulf %704, %730 : vector<26x128xf32>
      %732 = arith.addf %696, %731 : vector<26x128xf32>
      %c208 = arith.constant 208 : index
      %733 = memref.load %arg2[%c208] : memref<216xf32, #tpu.memory_space<smem>>
      %734 = vector.broadcast %733 : f32 to vector<26x128xf32>
      %735 = arith.mulf %704, %734 : vector<26x128xf32>
      %736 = arith.addf %700, %735 : vector<26x128xf32>
      %c0_i32_97 = arith.constant 0 : i32
      %737 = arith.addi %arg8, %c0_i32_97 : i32
      %c2_98 = arith.constant 2 : index
      %738 = arith.index_cast %737 : i32 to index
      %c2_99 = arith.constant 2 : index
      %c0_100 = arith.constant 0 : index
      %739 = vector.load %arg1[%c2_98, %738, %c2_99, %c0_100] : memref<3x28x28x128xf32, #tpu.memory_space<vmem>>, vector<1x1x26x128xf32>
      %740 = vector.shape_cast %739 : vector<1x1x26x128xf32> to vector<26x128xf32>
      %c20 = arith.constant 20 : index
      %741 = memref.load %arg2[%c20] : memref<216xf32, #tpu.memory_space<smem>>
      %742 = vector.broadcast %741 : f32 to vector<26x128xf32>
      %743 = arith.mulf %740, %742 : vector<26x128xf32>
      %744 = arith.addf %708, %743 : vector<26x128xf32>
      %c47 = arith.constant 47 : index
      %745 = memref.load %arg2[%c47] : memref<216xf32, #tpu.memory_space<smem>>
      %746 = vector.broadcast %745 : f32 to vector<26x128xf32>
      %747 = arith.mulf %740, %746 : vector<26x128xf32>
      %748 = arith.addf %712, %747 : vector<26x128xf32>
      %c74 = arith.constant 74 : index
      %749 = memref.load %arg2[%c74] : memref<216xf32, #tpu.memory_space<smem>>
      %750 = vector.broadcast %749 : f32 to vector<26x128xf32>
      %751 = arith.mulf %740, %750 : vector<26x128xf32>
      %752 = arith.addf %716, %751 : vector<26x128xf32>
      %c101 = arith.constant 101 : index
      %753 = memref.load %arg2[%c101] : memref<216xf32, #tpu.memory_space<smem>>
      %754 = vector.broadcast %753 : f32 to vector<26x128xf32>
      %755 = arith.mulf %740, %754 : vector<26x128xf32>
      %756 = arith.addf %720, %755 : vector<26x128xf32>
      %c128 = arith.constant 128 : index
      %757 = memref.load %arg2[%c128] : memref<216xf32, #tpu.memory_space<smem>>
      %758 = vector.broadcast %757 : f32 to vector<26x128xf32>
      %759 = arith.mulf %740, %758 : vector<26x128xf32>
      %760 = arith.addf %724, %759 : vector<26x128xf32>
      %c155 = arith.constant 155 : index
      %761 = memref.load %arg2[%c155] : memref<216xf32, #tpu.memory_space<smem>>
      %762 = vector.broadcast %761 : f32 to vector<26x128xf32>
      %763 = arith.mulf %740, %762 : vector<26x128xf32>
      %764 = arith.addf %728, %763 : vector<26x128xf32>
      %c182 = arith.constant 182 : index
      %765 = memref.load %arg2[%c182] : memref<216xf32, #tpu.memory_space<smem>>
      %766 = vector.broadcast %765 : f32 to vector<26x128xf32>
      %767 = arith.mulf %740, %766 : vector<26x128xf32>
      %768 = arith.addf %732, %767 : vector<26x128xf32>
      %c209 = arith.constant 209 : index
      %769 = memref.load %arg2[%c209] : memref<216xf32, #tpu.memory_space<smem>>
      %770 = vector.broadcast %769 : f32 to vector<26x128xf32>
      %771 = arith.mulf %740, %770 : vector<26x128xf32>
      %772 = arith.addf %736, %771 : vector<26x128xf32>
      %c1_i32_101 = arith.constant 1 : i32
      %773 = arith.addi %arg8, %c1_i32_101 : i32
      %c2_102 = arith.constant 2 : index
      %774 = arith.index_cast %773 : i32 to index
      %c0_103 = arith.constant 0 : index
      %c0_104 = arith.constant 0 : index
      %775 = vector.load %arg1[%c2_102, %774, %c0_103, %c0_104] : memref<3x28x28x128xf32, #tpu.memory_space<vmem>>, vector<1x1x26x128xf32>
      %776 = vector.shape_cast %775 : vector<1x1x26x128xf32> to vector<26x128xf32>
      %c21 = arith.constant 21 : index
      %777 = memref.load %arg2[%c21] : memref<216xf32, #tpu.memory_space<smem>>
      %778 = vector.broadcast %777 : f32 to vector<26x128xf32>
      %779 = arith.mulf %776, %778 : vector<26x128xf32>
      %780 = arith.addf %744, %779 : vector<26x128xf32>
      %c48 = arith.constant 48 : index
      %781 = memref.load %arg2[%c48] : memref<216xf32, #tpu.memory_space<smem>>
      %782 = vector.broadcast %781 : f32 to vector<26x128xf32>
      %783 = arith.mulf %776, %782 : vector<26x128xf32>
      %784 = arith.addf %748, %783 : vector<26x128xf32>
      %c75 = arith.constant 75 : index
      %785 = memref.load %arg2[%c75] : memref<216xf32, #tpu.memory_space<smem>>
      %786 = vector.broadcast %785 : f32 to vector<26x128xf32>
      %787 = arith.mulf %776, %786 : vector<26x128xf32>
      %788 = arith.addf %752, %787 : vector<26x128xf32>
      %c102 = arith.constant 102 : index
      %789 = memref.load %arg2[%c102] : memref<216xf32, #tpu.memory_space<smem>>
      %790 = vector.broadcast %789 : f32 to vector<26x128xf32>
      %791 = arith.mulf %776, %790 : vector<26x128xf32>
      %792 = arith.addf %756, %791 : vector<26x128xf32>
      %c129 = arith.constant 129 : index
      %793 = memref.load %arg2[%c129] : memref<216xf32, #tpu.memory_space<smem>>
      %794 = vector.broadcast %793 : f32 to vector<26x128xf32>
      %795 = arith.mulf %776, %794 : vector<26x128xf32>
      %796 = arith.addf %760, %795 : vector<26x128xf32>
      %c156 = arith.constant 156 : index
      %797 = memref.load %arg2[%c156] : memref<216xf32, #tpu.memory_space<smem>>
      %798 = vector.broadcast %797 : f32 to vector<26x128xf32>
      %799 = arith.mulf %776, %798 : vector<26x128xf32>
      %800 = arith.addf %764, %799 : vector<26x128xf32>
      %c183 = arith.constant 183 : index
      %801 = memref.load %arg2[%c183] : memref<216xf32, #tpu.memory_space<smem>>
      %802 = vector.broadcast %801 : f32 to vector<26x128xf32>
      %803 = arith.mulf %776, %802 : vector<26x128xf32>
      %804 = arith.addf %768, %803 : vector<26x128xf32>
      %c210 = arith.constant 210 : index
      %805 = memref.load %arg2[%c210] : memref<216xf32, #tpu.memory_space<smem>>
      %806 = vector.broadcast %805 : f32 to vector<26x128xf32>
      %807 = arith.mulf %776, %806 : vector<26x128xf32>
      %808 = arith.addf %772, %807 : vector<26x128xf32>
      %c1_i32_105 = arith.constant 1 : i32
      %809 = arith.addi %arg8, %c1_i32_105 : i32
      %c2_106 = arith.constant 2 : index
      %810 = arith.index_cast %809 : i32 to index
      %c1_107 = arith.constant 1 : index
      %c0_108 = arith.constant 0 : index
      %811 = vector.load %arg1[%c2_106, %810, %c1_107, %c0_108] : memref<3x28x28x128xf32, #tpu.memory_space<vmem>>, vector<1x1x26x128xf32>
      %812 = vector.shape_cast %811 : vector<1x1x26x128xf32> to vector<26x128xf32>
      %c22 = arith.constant 22 : index
      %813 = memref.load %arg2[%c22] : memref<216xf32, #tpu.memory_space<smem>>
      %814 = vector.broadcast %813 : f32 to vector<26x128xf32>
      %815 = arith.mulf %812, %814 : vector<26x128xf32>
      %816 = arith.addf %780, %815 : vector<26x128xf32>
      %c49 = arith.constant 49 : index
      %817 = memref.load %arg2[%c49] : memref<216xf32, #tpu.memory_space<smem>>
      %818 = vector.broadcast %817 : f32 to vector<26x128xf32>
      %819 = arith.mulf %812, %818 : vector<26x128xf32>
      %820 = arith.addf %784, %819 : vector<26x128xf32>
      %c76 = arith.constant 76 : index
      %821 = memref.load %arg2[%c76] : memref<216xf32, #tpu.memory_space<smem>>
      %822 = vector.broadcast %821 : f32 to vector<26x128xf32>
      %823 = arith.mulf %812, %822 : vector<26x128xf32>
      %824 = arith.addf %788, %823 : vector<26x128xf32>
      %c103 = arith.constant 103 : index
      %825 = memref.load %arg2[%c103] : memref<216xf32, #tpu.memory_space<smem>>
      %826 = vector.broadcast %825 : f32 to vector<26x128xf32>
      %827 = arith.mulf %812, %826 : vector<26x128xf32>
      %828 = arith.addf %792, %827 : vector<26x128xf32>
      %c130 = arith.constant 130 : index
      %829 = memref.load %arg2[%c130] : memref<216xf32, #tpu.memory_space<smem>>
      %830 = vector.broadcast %829 : f32 to vector<26x128xf32>
      %831 = arith.mulf %812, %830 : vector<26x128xf32>
      %832 = arith.addf %796, %831 : vector<26x128xf32>
      %c157 = arith.constant 157 : index
      %833 = memref.load %arg2[%c157] : memref<216xf32, #tpu.memory_space<smem>>
      %834 = vector.broadcast %833 : f32 to vector<26x128xf32>
      %835 = arith.mulf %812, %834 : vector<26x128xf32>
      %836 = arith.addf %800, %835 : vector<26x128xf32>
      %c184 = arith.constant 184 : index
      %837 = memref.load %arg2[%c184] : memref<216xf32, #tpu.memory_space<smem>>
      %838 = vector.broadcast %837 : f32 to vector<26x128xf32>
      %839 = arith.mulf %812, %838 : vector<26x128xf32>
      %840 = arith.addf %804, %839 : vector<26x128xf32>
      %c211 = arith.constant 211 : index
      %841 = memref.load %arg2[%c211] : memref<216xf32, #tpu.memory_space<smem>>
      %842 = vector.broadcast %841 : f32 to vector<26x128xf32>
      %843 = arith.mulf %812, %842 : vector<26x128xf32>
      %844 = arith.addf %808, %843 : vector<26x128xf32>
      %c1_i32_109 = arith.constant 1 : i32
      %845 = arith.addi %arg8, %c1_i32_109 : i32
      %c2_110 = arith.constant 2 : index
      %846 = arith.index_cast %845 : i32 to index
      %c2_111 = arith.constant 2 : index
      %c0_112 = arith.constant 0 : index
      %847 = vector.load %arg1[%c2_110, %846, %c2_111, %c0_112] : memref<3x28x28x128xf32, #tpu.memory_space<vmem>>, vector<1x1x26x128xf32>
      %848 = vector.shape_cast %847 : vector<1x1x26x128xf32> to vector<26x128xf32>
      %c23 = arith.constant 23 : index
      %849 = memref.load %arg2[%c23] : memref<216xf32, #tpu.memory_space<smem>>
      %850 = vector.broadcast %849 : f32 to vector<26x128xf32>
      %851 = arith.mulf %848, %850 : vector<26x128xf32>
      %852 = arith.addf %816, %851 : vector<26x128xf32>
      %c50 = arith.constant 50 : index
      %853 = memref.load %arg2[%c50] : memref<216xf32, #tpu.memory_space<smem>>
      %854 = vector.broadcast %853 : f32 to vector<26x128xf32>
      %855 = arith.mulf %848, %854 : vector<26x128xf32>
      %856 = arith.addf %820, %855 : vector<26x128xf32>
      %c77 = arith.constant 77 : index
      %857 = memref.load %arg2[%c77] : memref<216xf32, #tpu.memory_space<smem>>
      %858 = vector.broadcast %857 : f32 to vector<26x128xf32>
      %859 = arith.mulf %848, %858 : vector<26x128xf32>
      %860 = arith.addf %824, %859 : vector<26x128xf32>
      %c104 = arith.constant 104 : index
      %861 = memref.load %arg2[%c104] : memref<216xf32, #tpu.memory_space<smem>>
      %862 = vector.broadcast %861 : f32 to vector<26x128xf32>
      %863 = arith.mulf %848, %862 : vector<26x128xf32>
      %864 = arith.addf %828, %863 : vector<26x128xf32>
      %c131 = arith.constant 131 : index
      %865 = memref.load %arg2[%c131] : memref<216xf32, #tpu.memory_space<smem>>
      %866 = vector.broadcast %865 : f32 to vector<26x128xf32>
      %867 = arith.mulf %848, %866 : vector<26x128xf32>
      %868 = arith.addf %832, %867 : vector<26x128xf32>
      %c158 = arith.constant 158 : index
      %869 = memref.load %arg2[%c158] : memref<216xf32, #tpu.memory_space<smem>>
      %870 = vector.broadcast %869 : f32 to vector<26x128xf32>
      %871 = arith.mulf %848, %870 : vector<26x128xf32>
      %872 = arith.addf %836, %871 : vector<26x128xf32>
      %c185 = arith.constant 185 : index
      %873 = memref.load %arg2[%c185] : memref<216xf32, #tpu.memory_space<smem>>
      %874 = vector.broadcast %873 : f32 to vector<26x128xf32>
      %875 = arith.mulf %848, %874 : vector<26x128xf32>
      %876 = arith.addf %840, %875 : vector<26x128xf32>
      %c212 = arith.constant 212 : index
      %877 = memref.load %arg2[%c212] : memref<216xf32, #tpu.memory_space<smem>>
      %878 = vector.broadcast %877 : f32 to vector<26x128xf32>
      %879 = arith.mulf %848, %878 : vector<26x128xf32>
      %880 = arith.addf %844, %879 : vector<26x128xf32>
      %c2_i32_113 = arith.constant 2 : i32
      %881 = arith.addi %arg8, %c2_i32_113 : i32
      %c2_114 = arith.constant 2 : index
      %882 = arith.index_cast %881 : i32 to index
      %c0_115 = arith.constant 0 : index
      %c0_116 = arith.constant 0 : index
      %883 = vector.load %arg1[%c2_114, %882, %c0_115, %c0_116] : memref<3x28x28x128xf32, #tpu.memory_space<vmem>>, vector<1x1x26x128xf32>
      %884 = vector.shape_cast %883 : vector<1x1x26x128xf32> to vector<26x128xf32>
      %c24 = arith.constant 24 : index
      %885 = memref.load %arg2[%c24] : memref<216xf32, #tpu.memory_space<smem>>
      %886 = vector.broadcast %885 : f32 to vector<26x128xf32>
      %887 = arith.mulf %884, %886 : vector<26x128xf32>
      %888 = arith.addf %852, %887 : vector<26x128xf32>
      %c51 = arith.constant 51 : index
      %889 = memref.load %arg2[%c51] : memref<216xf32, #tpu.memory_space<smem>>
      %890 = vector.broadcast %889 : f32 to vector<26x128xf32>
      %891 = arith.mulf %884, %890 : vector<26x128xf32>
      %892 = arith.addf %856, %891 : vector<26x128xf32>
      %c78 = arith.constant 78 : index
      %893 = memref.load %arg2[%c78] : memref<216xf32, #tpu.memory_space<smem>>
      %894 = vector.broadcast %893 : f32 to vector<26x128xf32>
      %895 = arith.mulf %884, %894 : vector<26x128xf32>
      %896 = arith.addf %860, %895 : vector<26x128xf32>
      %c105 = arith.constant 105 : index
      %897 = memref.load %arg2[%c105] : memref<216xf32, #tpu.memory_space<smem>>
      %898 = vector.broadcast %897 : f32 to vector<26x128xf32>
      %899 = arith.mulf %884, %898 : vector<26x128xf32>
      %900 = arith.addf %864, %899 : vector<26x128xf32>
      %c132 = arith.constant 132 : index
      %901 = memref.load %arg2[%c132] : memref<216xf32, #tpu.memory_space<smem>>
      %902 = vector.broadcast %901 : f32 to vector<26x128xf32>
      %903 = arith.mulf %884, %902 : vector<26x128xf32>
      %904 = arith.addf %868, %903 : vector<26x128xf32>
      %c159 = arith.constant 159 : index
      %905 = memref.load %arg2[%c159] : memref<216xf32, #tpu.memory_space<smem>>
      %906 = vector.broadcast %905 : f32 to vector<26x128xf32>
      %907 = arith.mulf %884, %906 : vector<26x128xf32>
      %908 = arith.addf %872, %907 : vector<26x128xf32>
      %c186 = arith.constant 186 : index
      %909 = memref.load %arg2[%c186] : memref<216xf32, #tpu.memory_space<smem>>
      %910 = vector.broadcast %909 : f32 to vector<26x128xf32>
      %911 = arith.mulf %884, %910 : vector<26x128xf32>
      %912 = arith.addf %876, %911 : vector<26x128xf32>
      %c213 = arith.constant 213 : index
      %913 = memref.load %arg2[%c213] : memref<216xf32, #tpu.memory_space<smem>>
      %914 = vector.broadcast %913 : f32 to vector<26x128xf32>
      %915 = arith.mulf %884, %914 : vector<26x128xf32>
      %916 = arith.addf %880, %915 : vector<26x128xf32>
      %c2_i32_117 = arith.constant 2 : i32
      %917 = arith.addi %arg8, %c2_i32_117 : i32
      %c2_118 = arith.constant 2 : index
      %918 = arith.index_cast %917 : i32 to index
      %c1_119 = arith.constant 1 : index
      %c0_120 = arith.constant 0 : index
      %919 = vector.load %arg1[%c2_118, %918, %c1_119, %c0_120] : memref<3x28x28x128xf32, #tpu.memory_space<vmem>>, vector<1x1x26x128xf32>
      %920 = vector.shape_cast %919 : vector<1x1x26x128xf32> to vector<26x128xf32>
      %c25 = arith.constant 25 : index
      %921 = memref.load %arg2[%c25] : memref<216xf32, #tpu.memory_space<smem>>
      %922 = vector.broadcast %921 : f32 to vector<26x128xf32>
      %923 = arith.mulf %920, %922 : vector<26x128xf32>
      %924 = arith.addf %888, %923 : vector<26x128xf32>
      %c52 = arith.constant 52 : index
      %925 = memref.load %arg2[%c52] : memref<216xf32, #tpu.memory_space<smem>>
      %926 = vector.broadcast %925 : f32 to vector<26x128xf32>
      %927 = arith.mulf %920, %926 : vector<26x128xf32>
      %928 = arith.addf %892, %927 : vector<26x128xf32>
      %c79 = arith.constant 79 : index
      %929 = memref.load %arg2[%c79] : memref<216xf32, #tpu.memory_space<smem>>
      %930 = vector.broadcast %929 : f32 to vector<26x128xf32>
      %931 = arith.mulf %920, %930 : vector<26x128xf32>
      %932 = arith.addf %896, %931 : vector<26x128xf32>
      %c106 = arith.constant 106 : index
      %933 = memref.load %arg2[%c106] : memref<216xf32, #tpu.memory_space<smem>>
      %934 = vector.broadcast %933 : f32 to vector<26x128xf32>
      %935 = arith.mulf %920, %934 : vector<26x128xf32>
      %936 = arith.addf %900, %935 : vector<26x128xf32>
      %c133 = arith.constant 133 : index
      %937 = memref.load %arg2[%c133] : memref<216xf32, #tpu.memory_space<smem>>
      %938 = vector.broadcast %937 : f32 to vector<26x128xf32>
      %939 = arith.mulf %920, %938 : vector<26x128xf32>
      %940 = arith.addf %904, %939 : vector<26x128xf32>
      %c160 = arith.constant 160 : index
      %941 = memref.load %arg2[%c160] : memref<216xf32, #tpu.memory_space<smem>>
      %942 = vector.broadcast %941 : f32 to vector<26x128xf32>
      %943 = arith.mulf %920, %942 : vector<26x128xf32>
      %944 = arith.addf %908, %943 : vector<26x128xf32>
      %c187 = arith.constant 187 : index
      %945 = memref.load %arg2[%c187] : memref<216xf32, #tpu.memory_space<smem>>
      %946 = vector.broadcast %945 : f32 to vector<26x128xf32>
      %947 = arith.mulf %920, %946 : vector<26x128xf32>
      %948 = arith.addf %912, %947 : vector<26x128xf32>
      %c214 = arith.constant 214 : index
      %949 = memref.load %arg2[%c214] : memref<216xf32, #tpu.memory_space<smem>>
      %950 = vector.broadcast %949 : f32 to vector<26x128xf32>
      %951 = arith.mulf %920, %950 : vector<26x128xf32>
      %952 = arith.addf %916, %951 : vector<26x128xf32>
      %c2_i32_121 = arith.constant 2 : i32
      %953 = arith.addi %arg8, %c2_i32_121 : i32
      %c2_122 = arith.constant 2 : index
      %954 = arith.index_cast %953 : i32 to index
      %c2_123 = arith.constant 2 : index
      %c0_124 = arith.constant 0 : index
      %955 = vector.load %arg1[%c2_122, %954, %c2_123, %c0_124] : memref<3x28x28x128xf32, #tpu.memory_space<vmem>>, vector<1x1x26x128xf32>
      %956 = vector.shape_cast %955 : vector<1x1x26x128xf32> to vector<26x128xf32>
      %c26 = arith.constant 26 : index
      %957 = memref.load %arg2[%c26] : memref<216xf32, #tpu.memory_space<smem>>
      %958 = vector.broadcast %957 : f32 to vector<26x128xf32>
      %959 = arith.mulf %956, %958 : vector<26x128xf32>
      %960 = arith.addf %924, %959 : vector<26x128xf32>
      %c53 = arith.constant 53 : index
      %961 = memref.load %arg2[%c53] : memref<216xf32, #tpu.memory_space<smem>>
      %962 = vector.broadcast %961 : f32 to vector<26x128xf32>
      %963 = arith.mulf %956, %962 : vector<26x128xf32>
      %964 = arith.addf %928, %963 : vector<26x128xf32>
      %c80 = arith.constant 80 : index
      %965 = memref.load %arg2[%c80] : memref<216xf32, #tpu.memory_space<smem>>
      %966 = vector.broadcast %965 : f32 to vector<26x128xf32>
      %967 = arith.mulf %956, %966 : vector<26x128xf32>
      %968 = arith.addf %932, %967 : vector<26x128xf32>
      %c107 = arith.constant 107 : index
      %969 = memref.load %arg2[%c107] : memref<216xf32, #tpu.memory_space<smem>>
      %970 = vector.broadcast %969 : f32 to vector<26x128xf32>
      %971 = arith.mulf %956, %970 : vector<26x128xf32>
      %972 = arith.addf %936, %971 : vector<26x128xf32>
      %c134 = arith.constant 134 : index
      %973 = memref.load %arg2[%c134] : memref<216xf32, #tpu.memory_space<smem>>
      %974 = vector.broadcast %973 : f32 to vector<26x128xf32>
      %975 = arith.mulf %956, %974 : vector<26x128xf32>
      %976 = arith.addf %940, %975 : vector<26x128xf32>
      %c161 = arith.constant 161 : index
      %977 = memref.load %arg2[%c161] : memref<216xf32, #tpu.memory_space<smem>>
      %978 = vector.broadcast %977 : f32 to vector<26x128xf32>
      %979 = arith.mulf %956, %978 : vector<26x128xf32>
      %980 = arith.addf %944, %979 : vector<26x128xf32>
      %c188 = arith.constant 188 : index
      %981 = memref.load %arg2[%c188] : memref<216xf32, #tpu.memory_space<smem>>
      %982 = vector.broadcast %981 : f32 to vector<26x128xf32>
      %983 = arith.mulf %956, %982 : vector<26x128xf32>
      %984 = arith.addf %948, %983 : vector<26x128xf32>
      %c215 = arith.constant 215 : index
      %985 = memref.load %arg2[%c215] : memref<216xf32, #tpu.memory_space<smem>>
      %986 = vector.broadcast %985 : f32 to vector<26x128xf32>
      %987 = arith.mulf %956, %986 : vector<26x128xf32>
      %988 = arith.addf %952, %987 : vector<26x128xf32>
      %c0_125 = arith.constant 0 : index
      %989 = memref.load %arg3[%c0_125] : memref<8xf32, #tpu.memory_space<smem>>
      %990 = vector.broadcast %989 : f32 to vector<26x128xf32>
      %991 = arith.addf %960, %990 : vector<26x128xf32>
      %cst_126 = arith.constant 0.000000e+00 : f32
      %992 = vector.broadcast %cst_126 : f32 to vector<26x128xf32>
      %993 = arith.maximumf %991, %992 : vector<26x128xf32>
      %994 = arith.index_cast %arg8 : i32 to index
      %c0_127 = arith.constant 0 : index
      %c0_128 = arith.constant 0 : index
      %995 = vector.load %arg7[%994, %c0_127, %c0_128] : memref<26x208x128xf32, #tpu.memory_space<vmem>>, vector<1x26x128xf32>
      %996 = vector.shape_cast %995 : vector<1x26x128xf32> to vector<26x128xf32>
      %997 = vector.shape_cast %993 : vector<26x128xf32> to vector<1x26x128xf32>
      tpu.vector_store %arg7[%994, %c0_127, %c0_128], %997 {strides = array<i32>} : memref<26x208x128xf32, #tpu.memory_space<vmem>>, vector<1x26x128xf32>,
      %c1_129 = arith.constant 1 : index
      %998 = memref.load %arg3[%c1_129] : memref<8xf32, #tpu.memory_space<smem>>
      %999 = vector.broadcast %998 : f32 to vector<26x128xf32>
      %1000 = arith.addf %964, %999 : vector<26x128xf32>
      %cst_130 = arith.constant 0.000000e+00 : f32
      %1001 = vector.broadcast %cst_130 : f32 to vector<26x128xf32>
      %1002 = arith.maximumf %1000, %1001 : vector<26x128xf32>
      %1003 = arith.index_cast %arg8 : i32 to index
      %c26_131 = arith.constant 26 : index
      %c0_132 = arith.constant 0 : index
      %1004 = vector.load %arg7[%1003, %c26_131, %c0_132] : memref<26x208x128xf32, #tpu.memory_space<vmem>>, vector<1x26x128xf32>
      %1005 = vector.shape_cast %1004 : vector<1x26x128xf32> to vector<26x128xf32>
      %1006 = vector.shape_cast %1002 : vector<26x128xf32> to vector<1x26x128xf32>
      tpu.vector_store %arg7[%1003, %c26_131, %c0_132], %1006 {strides = array<i32>} : memref<26x208x128xf32, #tpu.memory_space<vmem>>, vector<1x26x128xf32>,
      %c2_133 = arith.constant 2 : index
      %1007 = memref.load %arg3[%c2_133] : memref<8xf32, #tpu.memory_space<smem>>
      %1008 = vector.broadcast %1007 : f32 to vector<26x128xf32>
      %1009 = arith.addf %968, %1008 : vector<26x128xf32>
      %cst_134 = arith.constant 0.000000e+00 : f32
      %1010 = vector.broadcast %cst_134 : f32 to vector<26x128xf32>
      %1011 = arith.maximumf %1009, %1010 : vector<26x128xf32>
      %1012 = arith.index_cast %arg8 : i32 to index
      %c52_135 = arith.constant 52 : index
      %c0_136 = arith.constant 0 : index
      %1013 = vector.load %arg7[%1012, %c52_135, %c0_136] : memref<26x208x128xf32, #tpu.memory_space<vmem>>, vector<1x26x128xf32>
      %1014 = vector.shape_cast %1013 : vector<1x26x128xf32> to vector<26x128xf32>
      %1015 = vector.shape_cast %1011 : vector<26x128xf32> to vector<1x26x128xf32>
      tpu.vector_store %arg7[%1012, %c52_135, %c0_136], %1015 {strides = array<i32>} : memref<26x208x128xf32, #tpu.memory_space<vmem>>, vector<1x26x128xf32>,
      %c3_137 = arith.constant 3 : index
      %1016 = memref.load %arg3[%c3_137] : memref<8xf32, #tpu.memory_space<smem>>
      %1017 = vector.broadcast %1016 : f32 to vector<26x128xf32>
      %1018 = arith.addf %972, %1017 : vector<26x128xf32>
      %cst_138 = arith.constant 0.000000e+00 : f32
      %1019 = vector.broadcast %cst_138 : f32 to vector<26x128xf32>
      %1020 = arith.maximumf %1018, %1019 : vector<26x128xf32>
      %1021 = arith.index_cast %arg8 : i32 to index
      %c78_139 = arith.constant 78 : index
      %c0_140 = arith.constant 0 : index
      %1022 = vector.load %arg7[%1021, %c78_139, %c0_140] : memref<26x208x128xf32, #tpu.memory_space<vmem>>, vector<1x26x128xf32>
      %1023 = vector.shape_cast %1022 : vector<1x26x128xf32> to vector<26x128xf32>
      %1024 = vector.shape_cast %1020 : vector<26x128xf32> to vector<1x26x128xf32>
      tpu.vector_store %arg7[%1021, %c78_139, %c0_140], %1024 {strides = array<i32>} : memref<26x208x128xf32, #tpu.memory_space<vmem>>, vector<1x26x128xf32>,
      %c4_141 = arith.constant 4 : index
      %1025 = memref.load %arg3[%c4_141] : memref<8xf32, #tpu.memory_space<smem>>
      %1026 = vector.broadcast %1025 : f32 to vector<26x128xf32>
      %1027 = arith.addf %976, %1026 : vector<26x128xf32>
      %cst_142 = arith.constant 0.000000e+00 : f32
      %1028 = vector.broadcast %cst_142 : f32 to vector<26x128xf32>
      %1029 = arith.maximumf %1027, %1028 : vector<26x128xf32>
      %1030 = arith.index_cast %arg8 : i32 to index
      %c104_143 = arith.constant 104 : index
      %c0_144 = arith.constant 0 : index
      %1031 = vector.load %arg7[%1030, %c104_143, %c0_144] : memref<26x208x128xf32, #tpu.memory_space<vmem>>, vector<1x26x128xf32>
      %1032 = vector.shape_cast %1031 : vector<1x26x128xf32> to vector<26x128xf32>
      %1033 = vector.shape_cast %1029 : vector<26x128xf32> to vector<1x26x128xf32>
      tpu.vector_store %arg7[%1030, %c104_143, %c0_144], %1033 {strides = array<i32>} : memref<26x208x128xf32, #tpu.memory_space<vmem>>, vector<1x26x128xf32>,
      %c5_145 = arith.constant 5 : index
      %1034 = memref.load %arg3[%c5_145] : memref<8xf32, #tpu.memory_space<smem>>
      %1035 = vector.broadcast %1034 : f32 to vector<26x128xf32>
      %1036 = arith.addf %980, %1035 : vector<26x128xf32>
      %cst_146 = arith.constant 0.000000e+00 : f32
      %1037 = vector.broadcast %cst_146 : f32 to vector<26x128xf32>
      %1038 = arith.maximumf %1036, %1037 : vector<26x128xf32>
      %1039 = arith.index_cast %arg8 : i32 to index
      %c130_147 = arith.constant 130 : index
      %c0_148 = arith.constant 0 : index
      %1040 = vector.load %arg7[%1039, %c130_147, %c0_148] : memref<26x208x128xf32, #tpu.memory_space<vmem>>, vector<1x26x128xf32>
      %1041 = vector.shape_cast %1040 : vector<1x26x128xf32> to vector<26x128xf32>
      %1042 = vector.shape_cast %1038 : vector<26x128xf32> to vector<1x26x128xf32>
      tpu.vector_store %arg7[%1039, %c130_147, %c0_148], %1042 {strides = array<i32>} : memref<26x208x128xf32, #tpu.memory_space<vmem>>, vector<1x26x128xf32>,
      %c6_149 = arith.constant 6 : index
      %1043 = memref.load %arg3[%c6_149] : memref<8xf32, #tpu.memory_space<smem>>
      %1044 = vector.broadcast %1043 : f32 to vector<26x128xf32>
      %1045 = arith.addf %984, %1044 : vector<26x128xf32>
      %cst_150 = arith.constant 0.000000e+00 : f32
      %1046 = vector.broadcast %cst_150 : f32 to vector<26x128xf32>
      %1047 = arith.maximumf %1045, %1046 : vector<26x128xf32>
      %1048 = arith.index_cast %arg8 : i32 to index
      %c156_151 = arith.constant 156 : index
      %c0_152 = arith.constant 0 : index
      %1049 = vector.load %arg7[%1048, %c156_151, %c0_152] : memref<26x208x128xf32, #tpu.memory_space<vmem>>, vector<1x26x128xf32>
      %1050 = vector.shape_cast %1049 : vector<1x26x128xf32> to vector<26x128xf32>
      %1051 = vector.shape_cast %1047 : vector<26x128xf32> to vector<1x26x128xf32>
      tpu.vector_store %arg7[%1048, %c156_151, %c0_152], %1051 {strides = array<i32>} : memref<26x208x128xf32, #tpu.memory_space<vmem>>, vector<1x26x128xf32>,
      %c7_153 = arith.constant 7 : index
      %1052 = memref.load %arg3[%c7_153] : memref<8xf32, #tpu.memory_space<smem>>
      %1053 = vector.broadcast %1052 : f32 to vector<26x128xf32>
      %1054 = arith.addf %988, %1053 : vector<26x128xf32>
      %cst_154 = arith.constant 0.000000e+00 : f32
      %1055 = vector.broadcast %cst_154 : f32 to vector<26x128xf32>
      %1056 = arith.maximumf %1054, %1055 : vector<26x128xf32>
      %1057 = arith.index_cast %arg8 : i32 to index
      %c182_155 = arith.constant 182 : index
      %c0_156 = arith.constant 0 : index
      %1058 = vector.load %arg7[%1057, %c182_155, %c0_156] : memref<26x208x128xf32, #tpu.memory_space<vmem>>, vector<1x26x128xf32>
      %1059 = vector.shape_cast %1058 : vector<1x26x128xf32> to vector<26x128xf32>
      %1060 = vector.shape_cast %1056 : vector<26x128xf32> to vector<1x26x128xf32>
      tpu.vector_store %arg7[%1057, %c182_155, %c0_156], %1060 {strides = array<i32>} : memref<26x208x128xf32, #tpu.memory_space<vmem>>, vector<1x26x128xf32>,
    }
    %c26_i32_0 = arith.constant 26 : i32
    %c0 = arith.constant 0 : index
    %c0_1 = arith.constant 0 : index
    %c0_2 = arith.constant 0 : index
    %1 = vector.load %arg7[%c0, %c0_1, %c0_2] : memref<26x208x128xf32, #tpu.memory_space<vmem>>, vector<26x208x128xf32>
    %2 = vector.shape_cast %1 : vector<26x208x128xf32> to vector<5408x128xf32>
    %c0_3 = arith.constant 0 : index
    %c0_4 = arith.constant 0 : index
    %3 = vector.load %arg4[%c0_3, %c0_4] : memref<128x5408xf32, #tpu.memory_space<vmem>>, vector<128x5408xf32>
    %cst = arith.constant dense<0.000000e+00> : vector<128x128xf32>
    %4 = tpu.matmul %3, %2, %cst {dimension_numbers = #tpu.dot_dimension_numbers<[1], [0], [0], [1], [0, 0, 1, 1], [], []>} : vector<128x5408xf32>, vector<5408x128xf32>, vector<128x128xf32> -> vector<128x128xf32>
    %c0_5 = arith.constant 0 : index
    %c0_6 = arith.constant 0 : index
    %5 = vector.load %arg5[%c0_5, %c0_6] : memref<128x1xf32, #tpu.memory_space<vmem>>, vector<128x1xf32>
    %6 = vector.broadcast %5 : vector<128x1xf32> to vector<128x128xf32>
    %7 = arith.addf %4, %6 : vector<128x128xf32>
    %c0_7 = arith.constant 0 : index
    %c0_8 = arith.constant 0 : index
    %8 = vector.load %arg6[%c0_7, %c0_8] : memref<128x128xf32, #tpu.memory_space<vmem>>, vector<128x128xf32>
    tpu.vector_store %arg6[%c0_7, %c0_8], %7 {strides = array<i32>} : memref<128x128xf32, #tpu.memory_space<vmem>>, vector<128x128xf32>,
    return
  }
  func.func @transform_0(%arg0: i32) -> (i32, i32, i32, i32) {
    %c0_i32 = arith.constant 0 : i32
    %c0_i32_0 = arith.constant 0 : i32
    %c0_i32_1 = arith.constant 0 : i32
    %c0_i32_2 = arith.constant 0 : i32
    return %c0_i32, %c0_i32_0, %c0_i32_1, %arg0 : i32, i32, i32, i32
  }
  func.func @transform_1(%arg0: i32) -> i32 {
    %c0_i32 = arith.constant 0 : i32
    %c0_i32_0 = arith.constant 0 : i32
    return %c0_i32 : i32
  }
  func.func @transform_2(%arg0: i32) -> i32 {
    %c0_i32 = arith.constant 0 : i32
    %c0_i32_0 = arith.constant 0 : i32
    return %c0_i32 : i32
  }
  func.func @transform_3(%arg0: i32) -> (i32, i32) {
    %c0_i32 = arith.constant 0 : i32
    %c0_i32_0 = arith.constant 0 : i32
    %c0_i32_1 = arith.constant 0 : i32
    return %c0_i32, %c0_i32_0 : i32, i32
  }
  func.func @transform_4(%arg0: i32) -> (i32, i32) {
    %c0_i32 = arith.constant 0 : i32
    %c0_i32_0 = arith.constant 0 : i32
    %c0_i32_1 = arith.constant 0 : i32
    return %c0_i32, %c0_i32_0 : i32, i32
  }
  func.func @transform_5(%arg0: i32) -> (i32, i32) {
    %c0_i32 = arith.constant 0 : i32
    %c0_i32_0 = arith.constant 0 : i32
    return %c0_i32, %arg0 : i32, i32
  }
}

</mosaic_0001>

<llo_original>
// kernel: simple_cnn_forward.1
$region0: #{simple_cnn_forward.1}
  #allocation0 [shape = 'u32[]', space=smem, size = 0x4, offset = 0x4, fixed_abs, tag = 'smem constant byte address 0x4 - core index']
  #allocation1 [shape = 'u32[144,128]{1,0:T(1,128)}', space=vmem, size = 0x12000, scoped, tag = 'internal scratch']
  #allocation2 [shape = 'f32[26,208,128]{2,1,0:T(8,128)}', space=vmem, size = 0x2a4000, scoped, tag = 'scratch operand']
  %s0 = inlined_call_operand.vmem [shape: f32[3,28,28,128], index: 0, kind: input, shape index: {}]
  %s1 = inlined_call_operand.vmem [shape: f32[216], index: 1, kind: input, shape index: {}]
  %s2 = inlined_call_operand.vmem [shape: f32[8], index: 2, kind: input, shape index: {}]
  %s3 = inlined_call_operand.vmem [shape: f32[128,5408], index: 3, kind: input, shape index: {}]
  %s4 = inlined_call_operand.vmem [shape: f32[128,1], index: 4, kind: input, shape index: {}]
  %s5 = inlined_call_operand.vmem [shape: f32[128,128], index: 5, kind: output, shape index: {}]
  %s6 = sld [smem:[#allocation0]]
  $region45: #{simple_cnn_forward.1} parent=0
    _
  %s8 = ssub.s32 1, %s6
  %s9 = scalar_select 0, %s8, %s6
  $region1: #{simple_cnn_forward.1} parent=0
    #allocation3 [shape = 'u8[1024]{0}', space=smem, size = 0x400, scoped, tag = 'input window, operand 1, single buffered']
    #allocation4 [shape = 's32[1]{0}', space=sflag, size = 0x4, scoped, tag = 'scoped memory for simple_cnn_forward.1']
    #allocation5 [shape = 'u8[512]{0}', space=smem, size = 0x200, scoped, tag = 'input window, operand 2, single buffered']
    #allocation6 [shape = 's32[1]{0}', space=sflag, size = 0x4, scoped, tag = 'scoped memory for simple_cnn_forward.1']
    %10 = vsyncpa [#allocation4], 0
    %11 = vsyncpa [#allocation6], 0
    // Predicated region
    $region2: #{simple_cnn_forward.1} parent=1 // pred_check
      _
    $region3: #{simple_cnn_forward.1} parent=1 // pred_check_branch
      %13 = sbr.rel (0) target = $region5
    $region4: #{simple_cnn_forward.1} parent=1 // pred_region
      _
    $region5: #{simple_cnn_forward.1} parent=1 // pred_fallthru
      _
    // Predicated region
    $region6: #{simple_cnn_forward.1} parent=1 // pred_check
      _
    $region7: #{simple_cnn_forward.1} parent=1 // pred_check_branch
      %15 = sbr.rel (0) target = $region9
    $region8: #{simple_cnn_forward.1} parent=1 // pred_region
      %s17 = ssub.s32 32, 32
      %18 = vsyncadd [#allocation4], %s17
      %s20 = sshll.u32 %s1, 4
      %s21 = int_to_ptr.vmem [resolvable:$true] %s20
      %23 = dma.vmem_to_smem %s21, 32, [#allocation3], [#allocation4]
    $region9: #{simple_cnn_forward.1} parent=1 // pred_fallthru
      _
    // Predicated region
    $region10: #{simple_cnn_forward.1} parent=1 // pred_check
      _
    $region11: #{simple_cnn_forward.1} parent=1 // pred_check_branch
      %25 = sbr.rel (0) target = $region13
    $region12: #{simple_cnn_forward.1} parent=1 // pred_region
      %s27 = ssub.s32 16, 16
      %28 = vsyncadd [#allocation6], %s27
      %s30 = sshll.u32 %s2, 4
      %s31 = int_to_ptr.vmem [resolvable:$true] %s30
      %33 = dma.vmem_to_smem %s31, 16, [#allocation5], [#allocation6]
    $region13: #{simple_cnn_forward.1} parent=1 // pred_fallthru
      _
    // Predicated region
    $region14: #{simple_cnn_forward.1} parent=1 // pred_check
      _
    $region15: #{simple_cnn_forward.1} parent=1 // pred_check_branch
      %35 = sbr.rel (0) target = $region17
    $region16: #{simple_cnn_forward.1} parent=1 // pred_region
      _
    $region17: #{simple_cnn_forward.1} parent=1 // pred_fallthru
      _
    // Predicated region
    $region18: #{simple_cnn_forward.1} parent=1 // pred_check
      _
    $region19: #{simple_cnn_forward.1} parent=1 // pred_check_branch
      %37 = sbr.rel (0) target = $region21
    $region20: #{simple_cnn_forward.1} parent=1 // pred_region
      _
    $region21: #{simple_cnn_forward.1} parent=1 // pred_fallthru
      _
    // Predicated region
    $region22: #{simple_cnn_forward.1} parent=1 // pred_check
      _
    $region23: #{simple_cnn_forward.1} parent=1 // pred_check_branch
      %39 = sbr.rel (0) target = $region25
    $region24: #{simple_cnn_forward.1} parent=1 // pred_region
      %40 = dma.done [#allocation4], 32
    $region25: #{simple_cnn_forward.1} parent=1 // pred_fallthru
      _
    // Predicated region
    $region26: #{simple_cnn_forward.1} parent=1 // pred_check
      _
    $region27: #{simple_cnn_forward.1} parent=1 // pred_check_branch
      %42 = sbr.rel (0) target = $region29
    $region28: #{simple_cnn_forward.1} parent=1 // pred_region
      %43 = dma.done [#allocation6], 16
    $region29: #{simple_cnn_forward.1} parent=1 // pred_fallthru
      _
    %44 = sfence
    loop: start=0, step=1, limit=26
    $region30: #{simple_cnn_forward.1} parent=1 // loop_pre_header
      _
    $region31: #{simple_cnn_forward.1} parent=1 // loop_header
      %s46 = sphi 0, %s50
      %p47 = scmp.ge.s32.totalorder %s46, 26
    $region32: #{simple_cnn_forward.1} parent=1 // loop_header_branch
      %49 = sbr.rel (%p47) target = $region36
    $region33: #{simple_cnn_forward.1} parent=1 // loop_body
      %s51 = smul.u32 %s46, 32
      %s52 = scalar_lea.vmem %s0, %s51
      %v53 = vld [vmem:[%s52] sm:$0xff]
      %v54 = vld [vmem:[%s52 + $0x8] sm:$0xff]
      %v55 = vld [vmem:[%s52 + $0x10] sm:$0xff]
      %v56 = vld [vmem:[%s52 + $0x18] sm:$0x3]
      %s57 = sld [smem:[#allocation3]]
      %v58 = vstv %s57
      %v59 = vmul.f32 %v53, %v58
      %v60 = vmul.f32 %v54, %v58
      %v61 = vmul.f32 %v55, %v58
      %v62 = vmul.f32 %v56, %v58
      %v63 = vadd.f32 %v59, 0.0
      %v64 = vadd.f32 %v60, 0.0
      %v65 = vadd.f32 %v61, 0.0
      %v66 = vadd.f32 %v62, 0.0
      %s67 = sld [smem:[#allocation3 + $0x1b]]
      %v68 = vstv %s67
      %v69 = vmul.f32 %v53, %v68
      %v70 = vmul.f32 %v54, %v68
      %v71 = vmul.f32 %v55, %v68
      %v72 = vmul.f32 %v56, %v68
      %v73 = vadd.f32 %v69, 0.0
      %v74 = vadd.f32 %v70, 0.0
      %v75 = vadd.f32 %v71, 0.0
      %v76 = vadd.f32 %v72, 0.0
      %s77 = sld [smem:[#allocation3 + $0x36]]
      %v78 = vstv %s77
      %v79 = vmul.f32 %v53, %v78
      %v80 = vmul.f32 %v54, %v78
      %v81 = vmul.f32 %v55, %v78
      %v82 = vmul.f32 %v56, %v78
      %v83 = vadd.f32 %v79, 0.0
      %v84 = vadd.f32 %v80, 0.0
      %v85 = vadd.f32 %v81, 0.0
      %v86 = vadd.f32 %v82, 0.0
      %s87 = sld [smem:[#allocation3 + $0x51]]
      %v88 = vstv %s87
      %v89 = vmul.f32 %v53, %v88
      %v90 = vmul.f32 %v54, %v88
      %v91 = vmul.f32 %v55, %v88
      %v92 = vmul.f32 %v56, %v88
      %v93 = vadd.f32 %v89, 0.0
      %v94 = vadd.f32 %v90, 0.0
      %v95 = vadd.f32 %v91, 0.0
      %v96 = vadd.f32 %v92, 0.0
      %s97 = sld [smem:[#allocation3 + $0x6c]]
      %v98 = vstv %s97
      %v99 = vmul.f32 %v53, %v98
      %v100 = vmul.f32 %v54, %v98
      %v101 = vmul.f32 %v55, %v98
      %v102 = vmul.f32 %v56, %v98
      %v103 = vadd.f32 %v99, 0.0
      %v104 = vadd.f32 %v100, 0.0
      %v105 = vadd.f32 %v101, 0.0
      %v106 = vadd.f32 %v102, 0.0
      %s107 = sld [smem:[#allocation3 + $0x87]]
      %v108 = vstv %s107
      %v109 = vmul.f32 %v53, %v108
      %v110 = vmul.f32 %v54, %v108
      %v111 = vmul.f32 %v55, %v108
      %v112 = vmul.f32 %v56, %v108
      %v113 = vadd.f32 %v109, 0.0
      %v114 = vadd.f32 %v110, 0.0
      %v115 = vadd.f32 %v111, 0.0
      %v116 = vadd.f32 %v112, 0.0
      %s117 = sld [smem:[#allocation3 + $0xa2]]
      %v118 = vstv %s117
      %v119 = vmul.f32 %v53, %v118
      %v120 = vmul.f32 %v54, %v118
      %v121 = vmul.f32 %v55, %v118
      %v122 = vmul.f32 %v56, %v118
      %v123 = vadd.f32 %v119, 0.0
      %v124 = vadd.f32 %v120, 0.0
      %v125 = vadd.f32 %v121, 0.0
      %v126 = vadd.f32 %v122, 0.0
      %s127 = sld [smem:[#allocation3 + $0xbd]]
      %v128 = vstv %s127
      %v129 = vmul.f32 %v53, %v128
      %v130 = vmul.f32 %v54, %v128
      %v131 = vmul.f32 %v55, %v128
      %v132 = vmul.f32 %v56, %v128
      %v133 = vadd.f32 %v129, 0.0
      %v134 = vadd.f32 %v130, 0.0
      %v135 = vadd.f32 %v131, 0.0
      %v136 = vadd.f32 %v132, 0.0
      %v137 = vld [vmem:[%s52 + $0x1] sm:$0xff]
      %v138 = vld [vmem:[%s52 + $0x9] sm:$0xff]
      %v139 = vld [vmem:[%s52 + $0x11] sm:$0xff]
      %v140 = vld [vmem:[%s52 + $0x19] sm:$0x3]
      %s141 = sld [smem:[#allocation3 + $0x1]]
      %v142 = vstv %s141
      %v143 = vmul.f32 %v137, %v142
      %v144 = vmul.f32 %v138, %v142
      %v145 = vmul.f32 %v139, %v142
      %v146 = vmul.f32 %v140, %v142
      %v147 = vadd.f32 %v63, %v143
      %v148 = vadd.f32 %v64, %v144
      %v149 = vadd.f32 %v65, %v145
      %v150 = vadd.f32 %v66, %v146
      %s151 = sld [smem:[#allocation3 + $0x1c]]
      %v152 = vstv %s151
      %v153 = vmul.f32 %v137, %v152
      %v154 = vmul.f32 %v138, %v152
      %v155 = vmul.f32 %v139, %v152
      %v156 = vmul.f32 %v140, %v152
      %v157 = vadd.f32 %v73, %v153
      %v158 = vadd.f32 %v74, %v154
      %v159 = vadd.f32 %v75, %v155
      %v160 = vadd.f32 %v76, %v156
      %s161 = sld [smem:[#allocation3 + $0x37]]
      %v162 = vstv %s161
      %v163 = vmul.f32 %v137, %v162
      %v164 = vmul.f32 %v138, %v162
      %v165 = vmul.f32 %v139, %v162
      %v166 = vmul.f32 %v140, %v162
      %v167 = vadd.f32 %v83, %v163
      %v168 = vadd.f32 %v84, %v164
      %v169 = vadd.f32 %v85, %v165
      %v170 = vadd.f32 %v86, %v166
      %s171 = sld [smem:[#allocation3 + $0x52]]
      %v172 = vstv %s171
      %v173 = vmul.f32 %v137, %v172
      %v174 = vmul.f32 %v138, %v172
      %v175 = vmul.f32 %v139, %v172
      %v176 = vmul.f32 %v140, %v172
      %v177 = vadd.f32 %v93, %v173
      %v178 = vadd.f32 %v94, %v174
      %v179 = vadd.f32 %v95, %v175
      %v180 = vadd.f32 %v96, %v176
      %s181 = sld [smem:[#allocation3 + $0x6d]]
      %v182 = vstv %s181
      %v183 = vmul.f32 %v137, %v182
      %v184 = vmul.f32 %v138, %v182
      %v185 = vmul.f32 %v139, %v182
      %v186 = vmul.f32 %v140, %v182
      %v187 = vadd.f32 %v103, %v183
      %v188 = vadd.f32 %v104, %v184
      %v189 = vadd.f32 %v105, %v185
      %v190 = vadd.f32 %v106, %v186
      %s191 = sld [smem:[#allocation3 + $0x88]]
      %v192 = vstv %s191
      %v193 = vmul.f32 %v137, %v192
      %v194 = vmul.f32 %v138, %v192
      %v195 = vmul.f32 %v139, %v192
      %v196 = vmul.f32 %v140, %v192
      %v197 = vadd.f32 %v113, %v193
      %v198 = vadd.f32 %v114, %v194
      %v199 = vadd.f32 %v115, %v195
      %v200 = vadd.f32 %v116, %v196
      %s201 = sld [smem:[#allocation3 + $0xa3]]
      %v202 = vstv %s201
      %v203 = vmul.f32 %v137, %v202
      %v204 = vmul.f32 %v138, %v202
      %v205 = vmul.f32 %v139, %v202
      %v206 = vmul.f32 %v140, %v202
      %v207 = vadd.f32 %v123, %v203
      %v208 = vadd.f32 %v124, %v204
      %v209 = vadd.f32 %v125, %v205
      %v210 = vadd.f32 %v126, %v206
      %s211 = sld [smem:[#allocation3 + $0xbe]]
      %v212 = vstv %s211
      %v213 = vmul.f32 %v137, %v212
      %v214 = vmul.f32 %v138, %v212
      %v215 = vmul.f32 %v139, %v212
      %v216 = vmul.f32 %v140, %v212
      %v217 = vadd.f32 %v133, %v213
      %v218 = vadd.f32 %v134, %v214
      %v219 = vadd.f32 %v135, %v215
      %v220 = vadd.f32 %v136, %v216
      %v221 = vld [vmem:[%s52 + $0x2] sm:$0xff]
      %v222 = vld [vmem:[%s52 + $0xa] sm:$0xff]
      %v223 = vld [vmem:[%s52 + $0x12] sm:$0xff]
      %v224 = vld [vmem:[%s52 + $0x1a] sm:$0x3]
      %s225 = sld [smem:[#allocation3 + $0x2]]
      %v226 = vstv %s225
      %v227 = vmul.f32 %v221, %v226
      %v228 = vmul.f32 %v222, %v226
      %v229 = vmul.f32 %v223, %v226
      %v230 = vmul.f32 %v224, %v226
      %v231 = vadd.f32 %v147, %v227
      %v232 = vadd.f32 %v148, %v228
      %v233 = vadd.f32 %v149, %v229
      %v234 = vadd.f32 %v150, %v230
      %s235 = sld [smem:[#allocation3 + $0x1d]]
      %v236 = vstv %s235
      %v237 = vmul.f32 %v221, %v236
      %v238 = vmul.f32 %v222, %v236
      %v239 = vmul.f32 %v223, %v236
      %v240 = vmul.f32 %v224, %v236
      %v241 = vadd.f32 %v157, %v237
      %v242 = vadd.f32 %v158, %v238
      %v243 = vadd.f32 %v159, %v239
      %v244 = vadd.f32 %v160, %v240
      %s245 = sld [smem:[#allocation3 + $0x38]]
      %v246 = vstv %s245
      %v247 = vmul.f32 %v221, %v246
      %v248 = vmul.f32 %v222, %v246
      %v249 = vmul.f32 %v223, %v246
      %v250 = vmul.f32 %v224, %v246
      %v251 = vadd.f32 %v167, %v247
      %v252 = vadd.f32 %v168, %v248
      %v253 = vadd.f32 %v169, %v249
      %v254 = vadd.f32 %v170, %v250
      %s255 = sld [smem:[#allocation3 + $0x53]]
      %v256 = vstv %s255
      %v257 = vmul.f32 %v221, %v256
      %v258 = vmul.f32 %v222, %v256
      %v259 = vmul.f32 %v223, %v256
      %v260 = vmul.f32 %v224, %v256
      %v261 = vadd.f32 %v177, %v257
      %v262 = vadd.f32 %v178, %v258
      %v263 = vadd.f32 %v179, %v259
      %v264 = vadd.f32 %v180, %v260
      %s265 = sld [smem:[#allocation3 + $0x6e]]
      %v266 = vstv %s265
      %v267 = vmul.f32 %v221, %v266
      %v268 = vmul.f32 %v222, %v266
      %v269 = vmul.f32 %v223, %v266
      %v270 = vmul.f32 %v224, %v266
      %v271 = vadd.f32 %v187, %v267
      %v272 = vadd.f32 %v188, %v268
      %v273 = vadd.f32 %v189, %v269
      %v274 = vadd.f32 %v190, %v270
      %s275 = sld [smem:[#allocation3 + $0x89]]
      %v276 = vstv %s275
      %v277 = vmul.f32 %v221, %v276
      %v278 = vmul.f32 %v222, %v276
      %v279 = vmul.f32 %v223, %v276
      %v280 = vmul.f32 %v224, %v276
      %v281 = vadd.f32 %v197, %v277
      %v282 = vadd.f32 %v198, %v278
      %v283 = vadd.f32 %v199, %v279
      %v284 = vadd.f32 %v200, %v280
      %s285 = sld [smem:[#allocation3 + $0xa4]]
      %v286 = vstv %s285
      %v287 = vmul.f32 %v221, %v286
      %v288 = vmul.f32 %v222, %v286
      %v289 = vmul.f32 %v223, %v286
      %v290 = vmul.f32 %v224, %v286
      %v291 = vadd.f32 %v207, %v287
      %v292 = vadd.f32 %v208, %v288
      %v293 = vadd.f32 %v209, %v289
      %v294 = vadd.f32 %v210, %v290
      %s295 = sld [smem:[#allocation3 + $0xbf]]
      %v296 = vstv %s295
      %v297 = vmul.f32 %v221, %v296
      %v298 = vmul.f32 %v222, %v296
      %v299 = vmul.f32 %v223, %v296
      %v300 = vmul.f32 %v224, %v296
      %v301 = vadd.f32 %v217, %v297
      %v302 = vadd.f32 %v218, %v298
      %v303 = vadd.f32 %v219, %v299
      %v304 = vadd.f32 %v220, %v300
      %s305 = sadd.s32 %s46, 1
      %s306 = smul.u32 %s305, 32
      %s307 = scalar_lea.vmem %s0, %s306
      %v308 = vld [vmem:[%s307] sm:$0xff]
      %v309 = vld [vmem:[%s307 + $0x8] sm:$0xff]
      %v310 = vld [vmem:[%s307 + $0x10] sm:$0xff]
      %v311 = vld [vmem:[%s307 + $0x18] sm:$0x3]
      %s312 = sld [smem:[#allocation3 + $0x3]]
      %v313 = vstv %s312
      %v314 = vmul.f32 %v308, %v313
      %v315 = vmul.f32 %v309, %v313
      %v316 = vmul.f32 %v310, %v313
      %v317 = vmul.f32 %v311, %v313
      %v318 = vadd.f32 %v231, %v314
      %v319 = vadd.f32 %v232, %v315
      %v320 = vadd.f32 %v233, %v316
      %v321 = vadd.f32 %v234, %v317
      %s322 = sld [smem:[#allocation3 + $0x1e]]
      %v323 = vstv %s322
      %v324 = vmul.f32 %v308, %v323
      %v325 = vmul.f32 %v309, %v323
      %v326 = vmul.f32 %v310, %v323
      %v327 = vmul.f32 %v311, %v323
      %v328 = vadd.f32 %v241, %v324
      %v329 = vadd.f32 %v242, %v325
      %v330 = vadd.f32 %v243, %v326
      %v331 = vadd.f32 %v244, %v327
      %s332 = sld [smem:[#allocation3 + $0x39]]
      %v333 = vstv %s332
      %v334 = vmul.f32 %v308, %v333
      %v335 = vmul.f32 %v309, %v333
      %v336 = vmul.f32 %v310, %v333
      %v337 = vmul.f32 %v311, %v333
      %v338 = vadd.f32 %v251, %v334
      %v339 = vadd.f32 %v252, %v335
      %v340 = vadd.f32 %v253, %v336
      %v341 = vadd.f32 %v254, %v337
      %s342 = sld [smem:[#allocation3 + $0x54]]
      %v343 = vstv %s342
      %v344 = vmul.f32 %v308, %v343
      %v345 = vmul.f32 %v309, %v343
      %v346 = vmul.f32 %v310, %v343
      %v347 = vmul.f32 %v311, %v343
      %v348 = vadd.f32 %v261, %v344
      %v349 = vadd.f32 %v262, %v345
      %v350 = vadd.f32 %v263, %v346
      %v351 = vadd.f32 %v264, %v347
      %s352 = sld [smem:[#allocation3 + $0x6f]]
      %v353 = vstv %s352
      %v354 = vmul.f32 %v308, %v353
      %v355 = vmul.f32 %v309, %v353
      %v356 = vmul.f32 %v310, %v353
      %v357 = vmul.f32 %v311, %v353
      %v358 = vadd.f32 %v271, %v354
      %v359 = vadd.f32 %v272, %v355
      %v360 = vadd.f32 %v273, %v356
      %v361 = vadd.f32 %v274, %v357
      %s362 = sld [smem:[#allocation3 + $0x8a]]
      %v363 = vstv %s362
      %v364 = vmul.f32 %v308, %v363
      %v365 = vmul.f32 %v309, %v363
      %v366 = vmul.f32 %v310, %v363
      %v367 = vmul.f32 %v311, %v363
      %v368 = vadd.f32 %v281, %v364
      %v369 = vadd.f32 %v282, %v365
      %v370 = vadd.f32 %v283, %v366
      %v371 = vadd.f32 %v284, %v367
      %s372 = sld [smem:[#allocation3 + $0xa5]]
      %v373 = vstv %s372
      %v374 = vmul.f32 %v308, %v373
      %v375 = vmul.f32 %v309, %v373
      %v376 = vmul.f32 %v310, %v373
      %v377 = vmul.f32 %v311, %v373
      %v378 = vadd.f32 %v291, %v374
      %v379 = vadd.f32 %v292, %v375
      %v380 = vadd.f32 %v293, %v376
      %v381 = vadd.f32 %v294, %v377
      %s382 = sld [smem:[#allocation3 + $0xc0]]
      %v383 = vstv %s382
      %v384 = vmul.f32 %v308, %v383
      %v385 = vmul.f32 %v309, %v383
      %v386 = vmul.f32 %v310, %v383
      %v387 = vmul.f32 %v311, %v383
      %v388 = vadd.f32 %v301, %v384
      %v389 = vadd.f32 %v302, %v385
      %v390 = vadd.f32 %v303, %v386
      %v391 = vadd.f32 %v304, %v387
      %v392 = vld [vmem:[%s307 + $0x1] sm:$0xff]
      %v393 = vld [vmem:[%s307 + $0x9] sm:$0xff]
      %v394 = vld [vmem:[%s307 + $0x11] sm:$0xff]
      %v395 = vld [vmem:[%s307 + $0x19] sm:$0x3]
      %s396 = sld [smem:[#allocation3 + $0x4]]
      %v397 = vstv %s396
      %v398 = vmul.f32 %v392, %v397
      %v399 = vmul.f32 %v393, %v397
      %v400 = vmul.f32 %v394, %v397
      %v401 = vmul.f32 %v395, %v397
      %v402 = vadd.f32 %v318, %v398
      %v403 = vadd.f32 %v319, %v399
      %v404 = vadd.f32 %v320, %v400
      %v405 = vadd.f32 %v321, %v401
      %s406 = sld [smem:[#allocation3 + $0x1f]]
      %v407 = vstv %s406
      %v408 = vmul.f32 %v392, %v407
      %v409 = vmul.f32 %v393, %v407
      %v410 = vmul.f32 %v394, %v407
      %v411 = vmul.f32 %v395, %v407
      %v412 = vadd.f32 %v328, %v408
      %v413 = vadd.f32 %v329, %v409
      %v414 = vadd.f32 %v330, %v410
      %v415 = vadd.f32 %v331, %v411
      %s416 = sld [smem:[#allocation3 + $0x3a]]
      %v417 = vstv %s416
      %v418 = vmul.f32 %v392, %v417
      %v419 = vmul.f32 %v393, %v417
      %v420 = vmul.f32 %v394, %v417
      %v421 = vmul.f32 %v395, %v417
      %v422 = vadd.f32 %v338, %v418
      %v423 = vadd.f32 %v339, %v419
      %v424 = vadd.f32 %v340, %v420
      %v425 = vadd.f32 %v341, %v421
      %s426 = sld [smem:[#allocation3 + $0x55]]
      %v427 = vstv %s426
      %v428 = vmul.f32 %v392, %v427
      %v429 = vmul.f32 %v393, %v427
      %v430 = vmul.f32 %v394, %v427
      %v431 = vmul.f32 %v395, %v427
      %v432 = vadd.f32 %v348, %v428
      %v433 = vadd.f32 %v349, %v429
      %v434 = vadd.f32 %v350, %v430
      %v435 = vadd.f32 %v351, %v431
      %s436 = sld [smem:[#allocation3 + $0x70]]
      %v437 = vstv %s436
      %v438 = vmul.f32 %v392, %v437
      %v439 = vmul.f32 %v393, %v437
      %v440 = vmul.f32 %v394, %v437
      %v441 = vmul.f32 %v395, %v437
      %v442 = vadd.f32 %v358, %v438
      %v443 = vadd.f32 %v359, %v439
      %v444 = vadd.f32 %v360, %v440
      %v445 = vadd.f32 %v361, %v441
      %s446 = sld [smem:[#allocation3 + $0x8b]]
      %v447 = vstv %s446
      %v448 = vmul.f32 %v392, %v447
      %v449 = vmul.f32 %v393, %v447
      %v450 = vmul.f32 %v394, %v447
      %v451 = vmul.f32 %v395, %v447
      %v452 = vadd.f32 %v368, %v448
      %v453 = vadd.f32 %v369, %v449
      %v454 = vadd.f32 %v370, %v450
      %v455 = vadd.f32 %v371, %v451
      %s456 = sld [smem:[#allocation3 + $0xa6]]
      %v457 = vstv %s456
      %v458 = vmul.f32 %v392, %v457
      %v459 = vmul.f32 %v393, %v457
      %v460 = vmul.f32 %v394, %v457
      %v461 = vmul.f32 %v395, %v457
      %v462 = vadd.f32 %v378, %v458
      %v463 = vadd.f32 %v379, %v459
      %v464 = vadd.f32 %v380, %v460
      %v465 = vadd.f32 %v381, %v461
      %s466 = sld [smem:[#allocation3 + $0xc1]]
      %v467 = vstv %s466
      %v468 = vmul.f32 %v392, %v467
      %v469 = vmul.f32 %v393, %v467
      %v470 = vmul.f32 %v394, %v467
      %v471 = vmul.f32 %v395, %v467
      %v472 = vadd.f32 %v388, %v468
      %v473 = vadd.f32 %v389, %v469
      %v474 = vadd.f32 %v390, %v470
      %v475 = vadd.f32 %v391, %v471
      %v476 = vld [vmem:[%s307 + $0x2] sm:$0xff]
      %v477 = vld [vmem:[%s307 + $0xa] sm:$0xff]
      %v478 = vld [vmem:[%s307 + $0x12] sm:$0xff]
      %v479 = vld [vmem:[%s307 + $0x1a] sm:$0x3]
      %s480 = sld [smem:[#allocation3 + $0x5]]
      %v481 = vstv %s480
      %v482 = vmul.f32 %v476, %v481
      %v483 = vmul.f32 %v477, %v481
      %v484 = vmul.f32 %v478, %v481
      %v485 = vmul.f32 %v479, %v481
      %v486 = vadd.f32 %v402, %v482
      %v487 = vadd.f32 %v403, %v483
      %v488 = vadd.f32 %v404, %v484
      %v489 = vadd.f32 %v405, %v485
      %s490 = sld [smem:[#allocation3 + $0x20]]
      %v491 = vstv %s490
      %v492 = vmul.f32 %v476, %v491
      %v493 = vmul.f32 %v477, %v491
      %v494 = vmul.f32 %v478, %v491
      %v495 = vmul.f32 %v479, %v491
      %v496 = vadd.f32 %v412, %v492
      %v497 = vadd.f32 %v413, %v493
      %v498 = vadd.f32 %v414, %v494
      %v499 = vadd.f32 %v415, %v495
      %s500 = sld [smem:[#allocation3 + $0x3b]]
      %v501 = vstv %s500
      %v502 = vmul.f32 %v476, %v501
      %v503 = vmul.f32 %v477, %v501
      %v504 = vmul.f32 %v478, %v501
      %v505 = vmul.f32 %v479, %v501
      %v506 = vadd.f32 %v422, %v502
      %v507 = vadd.f32 %v423, %v503
      %v508 = vadd.f32 %v424, %v504
      %v509 = vadd.f32 %v425, %v505
      %s510 = sld [smem:[#allocation3 + $0x56]]
      %v511 = vstv %s510
      %v512 = vmul.f32 %v476, %v511
      %v513 = vmul.f32 %v477, %v511
      %v514 = vmul.f32 %v478, %v511
      %v515 = vmul.f32 %v479, %v511
      %v516 = vadd.f32 %v432, %v512
      %v517 = vadd.f32 %v433, %v513
      %v518 = vadd.f32 %v434, %v514
      %v519 = vadd.f32 %v435, %v515
      %s520 = sld [smem:[#allocation3 + $0x71]]
      %v521 = vstv %s520
      %v522 = vmul.f32 %v476, %v521
      %v523 = vmul.f32 %v477, %v521
      %v524 = vmul.f32 %v478, %v521
      %v525 = vmul.f32 %v479, %v521
      %v526 = vadd.f32 %v442, %v522
      %v527 = vadd.f32 %v443, %v523
      %v528 = vadd.f32 %v444, %v524
      %v529 = vadd.f32 %v445, %v525
      %s530 = sld [smem:[#allocation3 + $0x8c]]
      %v531 = vstv %s530
      %v532 = vmul.f32 %v476, %v531
      %v533 = vmul.f32 %v477, %v531
      %v534 = vmul.f32 %v478, %v531
      %v535 = vmul.f32 %v479, %v531
      %v536 = vadd.f32 %v452, %v532
      %v537 = vadd.f32 %v453, %v533
      %v538 = vadd.f32 %v454, %v534
      %v539 = vadd.f32 %v455, %v535
      %s540 = sld [smem:[#allocation3 + $0xa7]]
      %v541 = vstv %s540
      %v542 = vmul.f32 %v476, %v541
      %v543 = vmul.f32 %v477, %v541
      %v544 = vmul.f32 %v478, %v541
      %v545 = vmul.f32 %v479, %v541
      %v546 = vadd.f32 %v462, %v542
      %v547 = vadd.f32 %v463, %v543
      %v548 = vadd.f32 %v464, %v544
      %v549 = vadd.f32 %v465, %v545
      %s550 = sld [smem:[#allocation3 + $0xc2]]
      %v551 = vstv %s550
      %v552 = vmul.f32 %v476, %v551
      %v553 = vmul.f32 %v477, %v551
      %v554 = vmul.f32 %v478, %v551
      %v555 = vmul.f32 %v479, %v551
      %v556 = vadd.f32 %v472, %v552
      %v557 = vadd.f32 %v473, %v553
      %v558 = vadd.f32 %v474, %v554
      %v559 = vadd.f32 %v475, %v555
      %s560 = sadd.s32 %s46, 2
      %s561 = smul.u32 %s560, 32
      %s562 = scalar_lea.vmem %s0, %s561
      %v563 = vld [vmem:[%s562] sm:$0xff]
      %v564 = vld [vmem:[%s562 + $0x8] sm:$0xff]
      %v565 = vld [vmem:[%s562 + $0x10] sm:$0xff]
      %v566 = vld [vmem:[%s562 + $0x18] sm:$0x3]
      %s567 = sld [smem:[#allocation3 + $0x6]]
      %v568 = vstv %s567
      %v569 = vmul.f32 %v563, %v568
      %v570 = vmul.f32 %v564, %v568
      %v571 = vmul.f32 %v565, %v568
      %v572 = vmul.f32 %v566, %v568
      %v573 = vadd.f32 %v486, %v569
      %v574 = vadd.f32 %v487, %v570
      %v575 = vadd.f32 %v488, %v571
      %v576 = vadd.f32 %v489, %v572
      %s577 = sld [smem:[#allocation3 + $0x21]]
      %v578 = vstv %s577
      %v579 = vmul.f32 %v563, %v578
      %v580 = vmul.f32 %v564, %v578
      %v581 = vmul.f32 %v565, %v578
      %v582 = vmul.f32 %v566, %v578
      %v583 = vadd.f32 %v496, %v579
      %v584 = vadd.f32 %v497, %v580
      %v585 = vadd.f32 %v498, %v581
      %v586 = vadd.f32 %v499, %v582
      %s587 = sld [smem:[#allocation3 + $0x3c]]
      %v588 = vstv %s587
      %v589 = vmul.f32 %v563, %v588
      %v590 = vmul.f32 %v564, %v588
      %v591 = vmul.f32 %v565, %v588
      %v592 = vmul.f32 %v566, %v588
      %v593 = vadd.f32 %v506, %v589
      %v594 = vadd.f32 %v507, %v590
      %v595 = vadd.f32 %v508, %v591
      %v596 = vadd.f32 %v509, %v592
      %s597 = sld [smem:[#allocation3 + $0x57]]
      %v598 = vstv %s597
      %v599 = vmul.f32 %v563, %v598
      %v600 = vmul.f32 %v564, %v598
      %v601 = vmul.f32 %v565, %v598
      %v602 = vmul.f32 %v566, %v598
      %v603 = vadd.f32 %v516, %v599
      %v604 = vadd.f32 %v517, %v600
      %v605 = vadd.f32 %v518, %v601
      %v606 = vadd.f32 %v519, %v602
      %s607 = sld [smem:[#allocation3 + $0x72]]
      %v608 = vstv %s607
      %v609 = vmul.f32 %v563, %v608
      %v610 = vmul.f32 %v564, %v608
      %v611 = vmul.f32 %v565, %v608
      %v612 = vmul.f32 %v566, %v608
      %v613 = vadd.f32 %v526, %v609
      %v614 = vadd.f32 %v527, %v610
      %v615 = vadd.f32 %v528, %v611
      %v616 = vadd.f32 %v529, %v612
      %s617 = sld [smem:[#allocation3 + $0x8d]]
      %v618 = vstv %s617
      %v619 = vmul.f32 %v563, %v618
      %v620 = vmul.f32 %v564, %v618
      %v621 = vmul.f32 %v565, %v618
      %v622 = vmul.f32 %v566, %v618
      %v623 = vadd.f32 %v536, %v619
      %v624 = vadd.f32 %v537, %v620
      %v625 = vadd.f32 %v538, %v621
      %v626 = vadd.f32 %v539, %v622
      %s627 = sld [smem:[#allocation3 + $0xa8]]
      %v628 = vstv %s627
      %v629 = vmul.f32 %v563, %v628
      %v630 = vmul.f32 %v564, %v628
      %v631 = vmul.f32 %v565, %v628
      %v632 = vmul.f32 %v566, %v628
      %v633 = vadd.f32 %v546, %v629
      %v634 = vadd.f32 %v547, %v630
      %v635 = vadd.f32 %v548, %v631
      %v636 = vadd.f32 %v549, %v632
      %s637 = sld [smem:[#allocation3 + $0xc3]]
      %v638 = vstv %s637
      %v639 = vmul.f32 %v563, %v638
      %v640 = vmul.f32 %v564, %v638
      %v641 = vmul.f32 %v565, %v638
      %v642 = vmul.f32 %v566, %v638
      %v643 = vadd.f32 %v556, %v639
      %v644 = vadd.f32 %v557, %v640
      %v645 = vadd.f32 %v558, %v641
      %v646 = vadd.f32 %v559, %v642
      %v647 = vld [vmem:[%s562 + $0x1] sm:$0xff]
      %v648 = vld [vmem:[%s562 + $0x9] sm:$0xff]
      %v649 = vld [vmem:[%s562 + $0x11] sm:$0xff]
      %v650 = vld [vmem:[%s562 + $0x19] sm:$0x3]
      %s651 = sld [smem:[#allocation3 + $0x7]]
      %v652 = vstv %s651
      %v653 = vmul.f32 %v647, %v652
      %v654 = vmul.f32 %v648, %v652
      %v655 = vmul.f32 %v649, %v652
      %v656 = vmul.f32 %v650, %v652
      %v657 = vadd.f32 %v573, %v653
      %v658 = vadd.f32 %v574, %v654
      %v659 = vadd.f32 %v575, %v655
      %v660 = vadd.f32 %v576, %v656
      %s661 = sld [smem:[#allocation3 + $0x22]]
      %v662 = vstv %s661
      %v663 = vmul.f32 %v647, %v662
      %v664 = vmul.f32 %v648, %v662
      %v665 = vmul.f32 %v649, %v662
      %v666 = vmul.f32 %v650, %v662
      %v667 = vadd.f32 %v583, %v663
      %v668 = vadd.f32 %v584, %v664
      %v669 = vadd.f32 %v585, %v665
      %v670 = vadd.f32 %v586, %v666
      %s671 = sld [smem:[#allocation3 + $0x3d]]
      %v672 = vstv %s671
      %v673 = vmul.f32 %v647, %v672
      %v674 = vmul.f32 %v648, %v672
      %v675 = vmul.f32 %v649, %v672
      %v676 = vmul.f32 %v650, %v672
      %v677 = vadd.f32 %v593, %v673
      %v678 = vadd.f32 %v594, %v674
      %v679 = vadd.f32 %v595, %v675
      %v680 = vadd.f32 %v596, %v676
      %s681 = sld [smem:[#allocation3 + $0x58]]
      %v682 = vstv %s681
      %v683 = vmul.f32 %v647, %v682
      %v684 = vmul.f32 %v648, %v682
      %v685 = vmul.f32 %v649, %v682
      %v686 = vmul.f32 %v650, %v682
      %v687 = vadd.f32 %v603, %v683
      %v688 = vadd.f32 %v604, %v684
      %v689 = vadd.f32 %v605, %v685
      %v690 = vadd.f32 %v606, %v686
      %s691 = sld [smem:[#allocation3 + $0x73]]
      %v692 = vstv %s691
      %v693 = vmul.f32 %v647, %v692
      %v694 = vmul.f32 %v648, %v692
      %v695 = vmul.f32 %v649, %v692
      %v696 = vmul.f32 %v650, %v692
      %v697 = vadd.f32 %v613, %v693
      %v698 = vadd.f32 %v614, %v694
      %v699 = vadd.f32 %v615, %v695
      %v700 = vadd.f32 %v616, %v696
      %s701 = sld [smem:[#allocation3 + $0x8e]]
      %v702 = vstv %s701
      %v703 = vmul.f32 %v647, %v702
      %v704 = vmul.f32 %v648, %v702
      %v705 = vmul.f32 %v649, %v702
      %v706 = vmul.f32 %v650, %v702
      %v707 = vadd.f32 %v623, %v703
      %v708 = vadd.f32 %v624, %v704
      %v709 = vadd.f32 %v625, %v705
      %v710 = vadd.f32 %v626, %v706
      %s711 = sld [smem:[#allocation3 + $0xa9]]
      %v712 = vstv %s711
      %v713 = vmul.f32 %v647, %v712
      %v714 = vmul.f32 %v648, %v712
      %v715 = vmul.f32 %v649, %v712
      %v716 = vmul.f32 %v650, %v712
      %v717 = vadd.f32 %v633, %v713
      %v718 = vadd.f32 %v634, %v714
      %v719 = vadd.f32 %v635, %v715
      %v720 = vadd.f32 %v636, %v716
      %s721 = sld [smem:[#allocation3 + $0xc4]]
      %v722 = vstv %s721
      %v723 = vmul.f32 %v647, %v722
      %v724 = vmul.f32 %v648, %v722
      %v725 = vmul.f32 %v649, %v722
      %v726 = vmul.f32 %v650, %v722
      %v727 = vadd.f32 %v643, %v723
      %v728 = vadd.f32 %v644, %v724
      %v729 = vadd.f32 %v645, %v725
      %v730 = vadd.f32 %v646, %v726
      %v731 = vld [vmem:[%s562 + $0x2] sm:$0xff]
      %v732 = vld [vmem:[%s562 + $0xa] sm:$0xff]
      %v733 = vld [vmem:[%s562 + $0x12] sm:$0xff]
      %v734 = vld [vmem:[%s562 + $0x1a] sm:$0x3]
      %s735 = sld [smem:[#allocation3 + $0x8]]
      %v736 = vstv %s735
      %v737 = vmul.f32 %v731, %v736
      %v738 = vmul.f32 %v732, %v736
      %v739 = vmul.f32 %v733, %v736
      %v740 = vmul.f32 %v734, %v736
      %v741 = vadd.f32 %v657, %v737
      %v742 = vadd.f32 %v658, %v738
      %v743 = vadd.f32 %v659, %v739
      %v744 = vadd.f32 %v660, %v740
      %s745 = sld [smem:[#allocation3 + $0x23]]
      %v746 = vstv %s745
      %v747 = vmul.f32 %v731, %v746
      %v748 = vmul.f32 %v732, %v746
      %v749 = vmul.f32 %v733, %v746
      %v750 = vmul.f32 %v734, %v746
      %v751 = vadd.f32 %v667, %v747
      %v752 = vadd.f32 %v668, %v748
      %v753 = vadd.f32 %v669, %v749
      %v754 = vadd.f32 %v670, %v750
      %s755 = sld [smem:[#allocation3 + $0x3e]]
      %v756 = vstv %s755
      %v757 = vmul.f32 %v731, %v756
      %v758 = vmul.f32 %v732, %v756
      %v759 = vmul.f32 %v733, %v756
      %v760 = vmul.f32 %v734, %v756
      %v761 = vadd.f32 %v677, %v757
      %v762 = vadd.f32 %v678, %v758
      %v763 = vadd.f32 %v679, %v759
      %v764 = vadd.f32 %v680, %v760
      %s765 = sld [smem:[#allocation3 + $0x59]]
      %v766 = vstv %s765
      %v767 = vmul.f32 %v731, %v766
      %v768 = vmul.f32 %v732, %v766
      %v769 = vmul.f32 %v733, %v766
      %v770 = vmul.f32 %v734, %v766
      %v771 = vadd.f32 %v687, %v767
      %v772 = vadd.f32 %v688, %v768
      %v773 = vadd.f32 %v689, %v769
      %v774 = vadd.f32 %v690, %v770
      %s775 = sld [smem:[#allocation3 + $0x74]]
      %v776 = vstv %s775
      %v777 = vmul.f32 %v731, %v776
      %v778 = vmul.f32 %v732, %v776
      %v779 = vmul.f32 %v733, %v776
      %v780 = vmul.f32 %v734, %v776
      %v781 = vadd.f32 %v697, %v777
      %v782 = vadd.f32 %v698, %v778
      %v783 = vadd.f32 %v699, %v779
      %v784 = vadd.f32 %v700, %v780
      %s785 = sld [smem:[#allocation3 + $0x8f]]
      %v786 = vstv %s785
      %v787 = vmul.f32 %v731, %v786
      %v788 = vmul.f32 %v732, %v786
      %v789 = vmul.f32 %v733, %v786
      %v790 = vmul.f32 %v734, %v786
      %v791 = vadd.f32 %v707, %v787
      %v792 = vadd.f32 %v708, %v788
      %v793 = vadd.f32 %v709, %v789
      %v794 = vadd.f32 %v710, %v790
      %s795 = sld [smem:[#allocation3 + $0xaa]]
      %v796 = vstv %s795
      %v797 = vmul.f32 %v731, %v796
      %v798 = vmul.f32 %v732, %v796
      %v799 = vmul.f32 %v733, %v796
      %v800 = vmul.f32 %v734, %v796
      %v801 = vadd.f32 %v717, %v797
      %v802 = vadd.f32 %v718, %v798
      %v803 = vadd.f32 %v719, %v799
      %v804 = vadd.f32 %v720, %v800
      %s805 = sld [smem:[#allocation3 + $0xc5]]
      %v806 = vstv %s805
      %v807 = vmul.f32 %v731, %v806
      %v808 = vmul.f32 %v732, %v806
      %v809 = vmul.f32 %v733, %v806
      %v810 = vmul.f32 %v734, %v806
      %v811 = vadd.f32 %v727, %v807
      %v812 = vadd.f32 %v728, %v808
      %v813 = vadd.f32 %v729, %v809
      %v814 = vadd.f32 %v730, %v810
      %s815 = sadd.s32 %s51, 896
      %s816 = scalar_lea.vmem %s0, %s815
      %v817 = vld [vmem:[%s816] sm:$0xff]
      %v818 = vld [vmem:[%s816 + $0x8] sm:$0xff]
      %v819 = vld [vmem:[%s816 + $0x10] sm:$0xff]
      %v820 = vld [vmem:[%s816 + $0x18] sm:$0x3]
      %s821 = sld [smem:[#allocation3 + $0x9]]
      %v822 = vstv %s821
      %v823 = vmul.f32 %v817, %v822
      %v824 = vmul.f32 %v818, %v822
      %v825 = vmul.f32 %v819, %v822
      %v826 = vmul.f32 %v820, %v822
      %v827 = vadd.f32 %v741, %v823
      %v828 = vadd.f32 %v742, %v824
      %v829 = vadd.f32 %v743, %v825
      %v830 = vadd.f32 %v744, %v826
      %s831 = sld [smem:[#allocation3 + $0x24]]
      %v832 = vstv %s831
      %v833 = vmul.f32 %v817, %v832
      %v834 = vmul.f32 %v818, %v832
      %v835 = vmul.f32 %v819, %v832
      %v836 = vmul.f32 %v820, %v832
      %v837 = vadd.f32 %v751, %v833
      %v838 = vadd.f32 %v752, %v834
      %v839 = vadd.f32 %v753, %v835
      %v840 = vadd.f32 %v754, %v836
      %s841 = sld [smem:[#allocation3 + $0x3f]]
      %v842 = vstv %s841
      %v843 = vmul.f32 %v817, %v842
      %v844 = vmul.f32 %v818, %v842
      %v845 = vmul.f32 %v819, %v842
      %v846 = vmul.f32 %v820, %v842
      %v847 = vadd.f32 %v761, %v843
      %v848 = vadd.f32 %v762, %v844
      %v849 = vadd.f32 %v763, %v845
      %v850 = vadd.f32 %v764, %v846
      %s851 = sld [smem:[#allocation3 + $0x5a]]
      %v852 = vstv %s851
      %v853 = vmul.f32 %v817, %v852
      %v854 = vmul.f32 %v818, %v852
      %v855 = vmul.f32 %v819, %v852
      %v856 = vmul.f32 %v820, %v852
      %v857 = vadd.f32 %v771, %v853
      %v858 = vadd.f32 %v772, %v854
      %v859 = vadd.f32 %v773, %v855
      %v860 = vadd.f32 %v774, %v856
      %s861 = sld [smem:[#allocation3 + $0x75]]
      %v862 = vstv %s861
      %v863 = vmul.f32 %v817, %v862
      %v864 = vmul.f32 %v818, %v862
      %v865 = vmul.f32 %v819, %v862
      %v866 = vmul.f32 %v820, %v862
      %v867 = vadd.f32 %v781, %v863
      %v868 = vadd.f32 %v782, %v864
      %v869 = vadd.f32 %v783, %v865
      %v870 = vadd.f32 %v784, %v866
      %s871 = sld [smem:[#allocation3 + $0x90]]
      %v872 = vstv %s871
      %v873 = vmul.f32 %v817, %v872
      %v874 = vmul.f32 %v818, %v872
      %v875 = vmul.f32 %v819, %v872
      %v876 = vmul.f32 %v820, %v872
      %v877 = vadd.f32 %v791, %v873
      %v878 = vadd.f32 %v792, %v874
      %v879 = vadd.f32 %v793, %v875
      %v880 = vadd.f32 %v794, %v876
      %s881 = sld [smem:[#allocation3 + $0xab]]
      %v882 = vstv %s881
      %v883 = vmul.f32 %v817, %v882
      %v884 = vmul.f32 %v818, %v882
      %v885 = vmul.f32 %v819, %v882
      %v886 = vmul.f32 %v820, %v882
      %v887 = vadd.f32 %v801, %v883
      %v888 = vadd.f32 %v802, %v884
      %v889 = vadd.f32 %v803, %v885
      %v890 = vadd.f32 %v804, %v886
      %s891 = sld [smem:[#allocation3 + $0xc6]]
      %v892 = vstv %s891
      %v893 = vmul.f32 %v817, %v892
      %v894 = vmul.f32 %v818, %v892
      %v895 = vmul.f32 %v819, %v892
      %v896 = vmul.f32 %v820, %v892
      %v897 = vadd.f32 %v811, %v893
      %v898 = vadd.f32 %v812, %v894
      %v899 = vadd.f32 %v813, %v895
      %v900 = vadd.f32 %v814, %v896
      %v901 = vld [vmem:[%s816 + $0x1] sm:$0xff]
      %v902 = vld [vmem:[%s816 + $0x9] sm:$0xff]
      %v903 = vld [vmem:[%s816 + $0x11] sm:$0xff]
      %v904 = vld [vmem:[%s816 + $0x19] sm:$0x3]
      %s905 = sld [smem:[#allocation3 + $0xa]]
      %v906 = vstv %s905
      %v907 = vmul.f32 %v901, %v906
      %v908 = vmul.f32 %v902, %v906
      %v909 = vmul.f32 %v903, %v906
      %v910 = vmul.f32 %v904, %v906
      %v911 = vadd.f32 %v827, %v907
      %v912 = vadd.f32 %v828, %v908
      %v913 = vadd.f32 %v829, %v909
      %v914 = vadd.f32 %v830, %v910
      %s915 = sld [smem:[#allocation3 + $0x25]]
      %v916 = vstv %s915
      %v917 = vmul.f32 %v901, %v916
      %v918 = vmul.f32 %v902, %v916
      %v919 = vmul.f32 %v903, %v916
      %v920 = vmul.f32 %v904, %v916
      %v921 = vadd.f32 %v837, %v917
      %v922 = vadd.f32 %v838, %v918
      %v923 = vadd.f32 %v839, %v919
      %v924 = vadd.f32 %v840, %v920
      %s925 = sld [smem:[#allocation3 + $0x40]]
      %v926 = vstv %s925
      %v927 = vmul.f32 %v901, %v926
      %v928 = vmul.f32 %v902, %v926
      %v929 = vmul.f32 %v903, %v926
      %v930 = vmul.f32 %v904, %v926
      %v931 = vadd.f32 %v847, %v927
      %v932 = vadd.f32 %v848, %v928
      %v933 = vadd.f32 %v849, %v929
      %v934 = vadd.f32 %v850, %v930
      %s935 = sld [smem:[#allocation3 + $0x5b]]
      %v936 = vstv %s935
      %v937 = vmul.f32 %v901, %v936
      %v938 = vmul.f32 %v902, %v936
      %v939 = vmul.f32 %v903, %v936
      %v940 = vmul.f32 %v904, %v936
      %v941 = vadd.f32 %v857, %v937
      %v942 = vadd.f32 %v858, %v938
      %v943 = vadd.f32 %v859, %v939
      %v944 = vadd.f32 %v860, %v940
      %s945 = sld [smem:[#allocation3 + $0x76]]
      %v946 = vstv %s945
      %v947 = vmul.f32 %v901, %v946
      %v948 = vmul.f32 %v902, %v946
      %v949 = vmul.f32 %v903, %v946
      %v950 = vmul.f32 %v904, %v946
      %v951 = vadd.f32 %v867, %v947
      %v952 = vadd.f32 %v868, %v948
      %v953 = vadd.f32 %v869, %v949
      %v954 = vadd.f32 %v870, %v950
      %s955 = sld [smem:[#allocation3 + $0x91]]
      %v956 = vstv %s955
      %v957 = vmul.f32 %v901, %v956
      %v958 = vmul.f32 %v902, %v956
      %v959 = vmul.f32 %v903, %v956
      %v960 = vmul.f32 %v904, %v956
      %v961 = vadd.f32 %v877, %v957
      %v962 = vadd.f32 %v878, %v958
      %v963 = vadd.f32 %v879, %v959
      %v964 = vadd.f32 %v880, %v960
      %s965 = sld [smem:[#allocation3 + $0xac]]
      %v966 = vstv %s965
      %v967 = vmul.f32 %v901, %v966
      %v968 = vmul.f32 %v902, %v966
      %v969 = vmul.f32 %v903, %v966
      %v970 = vmul.f32 %v904, %v966
      %v971 = vadd.f32 %v887, %v967
      %v972 = vadd.f32 %v888, %v968
      %v973 = vadd.f32 %v889, %v969
      %v974 = vadd.f32 %v890, %v970
      %s975 = sld [smem:[#allocation3 + $0xc7]]
      %v976 = vstv %s975
      %v977 = vmul.f32 %v901, %v976
      %v978 = vmul.f32 %v902, %v976
      %v979 = vmul.f32 %v903, %v976
      %v980 = vmul.f32 %v904, %v976
      %v981 = vadd.f32 %v897, %v977
      %v982 = vadd.f32 %v898, %v978
      %v983 = vadd.f32 %v899, %v979
      %v984 = vadd.f32 %v900, %v980
      %v985 = vld [vmem:[%s816 + $0x2] sm:$0xff]
      %v986 = vld [vmem:[%s816 + $0xa] sm:$0xff]
      %v987 = vld [vmem:[%s816 + $0x12] sm:$0xff]
      %v988 = vld [vmem:[%s816 + $0x1a] sm:$0x3]
      %s989 = sld [smem:[#allocation3 + $0xb]]
      %v990 = vstv %s989
      %v991 = vmul.f32 %v985, %v990
      %v992 = vmul.f32 %v986, %v990
      %v993 = vmul.f32 %v987, %v990
      %v994 = vmul.f32 %v988, %v990
      %v995 = vadd.f32 %v911, %v991
      %v996 = vadd.f32 %v912, %v992
      %v997 = vadd.f32 %v913, %v993
      %v998 = vadd.f32 %v914, %v994
      %s999 = sld [smem:[#allocation3 + $0x26]]
      %v1000 = vstv %s999
      %v1001 = vmul.f32 %v985, %v1000
      %v1002 = vmul.f32 %v986, %v1000
      %v1003 = vmul.f32 %v987, %v1000
      %v1004 = vmul.f32 %v988, %v1000
      %v1005 = vadd.f32 %v921, %v1001
      %v1006 = vadd.f32 %v922, %v1002
      %v1007 = vadd.f32 %v923, %v1003
      %v1008 = vadd.f32 %v924, %v1004
      %s1009 = sld [smem:[#allocation3 + $0x41]]
      %v1010 = vstv %s1009
      %v1011 = vmul.f32 %v985, %v1010
      %v1012 = vmul.f32 %v986, %v1010
      %v1013 = vmul.f32 %v987, %v1010
      %v1014 = vmul.f32 %v988, %v1010
      %v1015 = vadd.f32 %v931, %v1011
      %v1016 = vadd.f32 %v932, %v1012
      %v1017 = vadd.f32 %v933, %v1013
      %v1018 = vadd.f32 %v934, %v1014
      %s1019 = sld [smem:[#allocation3 + $0x5c]]
      %v1020 = vstv %s1019
      %v1021 = vmul.f32 %v985, %v1020
      %v1022 = vmul.f32 %v986, %v1020
      %v1023 = vmul.f32 %v987, %v1020
      %v1024 = vmul.f32 %v988, %v1020
      %v1025 = vadd.f32 %v941, %v1021
      %v1026 = vadd.f32 %v942, %v1022
      %v1027 = vadd.f32 %v943, %v1023
      %v1028 = vadd.f32 %v944, %v1024
      %s1029 = sld [smem:[#allocation3 + $0x77]]
      %v1030 = vstv %s1029
      %v1031 = vmul.f32 %v985, %v1030
      %v1032 = vmul.f32 %v986, %v1030
      %v1033 = vmul.f32 %v987, %v1030
      %v1034 = vmul.f32 %v988, %v1030
      %v1035 = vadd.f32 %v951, %v1031
      %v1036 = vadd.f32 %v952, %v1032
      %v1037 = vadd.f32 %v953, %v1033
      %v1038 = vadd.f32 %v954, %v1034
      %s1039 = sld [smem:[#allocation3 + $0x92]]
      %v1040 = vstv %s1039
      %v1041 = vmul.f32 %v985, %v1040
      %v1042 = vmul.f32 %v986, %v1040
      %v1043 = vmul.f32 %v987, %v1040
      %v1044 = vmul.f32 %v988, %v1040
      %v1045 = vadd.f32 %v961, %v1041
      %v1046 = vadd.f32 %v962, %v1042
      %v1047 = vadd.f32 %v963, %v1043
      %v1048 = vadd.f32 %v964, %v1044
      %s1049 = sld [smem:[#allocation3 + $0xad]]
      %v1050 = vstv %s1049
      %v1051 = vmul.f32 %v985, %v1050
      %v1052 = vmul.f32 %v986, %v1050
      %v1053 = vmul.f32 %v987, %v1050
      %v1054 = vmul.f32 %v988, %v1050
      %v1055 = vadd.f32 %v971, %v1051
      %v1056 = vadd.f32 %v972, %v1052
      %v1057 = vadd.f32 %v973, %v1053
      %v1058 = vadd.f32 %v974, %v1054
      %s1059 = sld [smem:[#allocation3 + $0xc8]]
      %v1060 = vstv %s1059
      %v1061 = vmul.f32 %v985, %v1060
      %v1062 = vmul.f32 %v986, %v1060
      %v1063 = vmul.f32 %v987, %v1060
      %v1064 = vmul.f32 %v988, %v1060
      %v1065 = vadd.f32 %v981, %v1061
      %v1066 = vadd.f32 %v982, %v1062
      %v1067 = vadd.f32 %v983, %v1063
      %v1068 = vadd.f32 %v984, %v1064
      %s1069 = sadd.s32 %s306, 896
      %s1070 = scalar_lea.vmem %s0, %s1069
      %v1071 = vld [vmem:[%s1070] sm:$0xff]
      %v1072 = vld [vmem:[%s1070 + $0x8] sm:$0xff]
      %v1073 = vld [vmem:[%s1070 + $0x10] sm:$0xff]
      %v1074 = vld [vmem:[%s1070 + $0x18] sm:$0x3]
      %s1075 = sld [smem:[#allocation3 + $0xc]]
      %v1076 = vstv %s1075
      %v1077 = vmul.f32 %v1071, %v1076
      %v1078 = vmul.f32 %v1072, %v1076
      %v1079 = vmul.f32 %v1073, %v1076
      %v1080 = vmul.f32 %v1074, %v1076
      %v1081 = vadd.f32 %v995, %v1077
      %v1082 = vadd.f32 %v996, %v1078
      %v1083 = vadd.f32 %v997, %v1079
      %v1084 = vadd.f32 %v998, %v1080
      %s1085 = sld [smem:[#allocation3 + $0x27]]
      %v1086 = vstv %s1085
      %v1087 = vmul.f32 %v1071, %v1086
      %v1088 = vmul.f32 %v1072, %v1086
      %v1089 = vmul.f32 %v1073, %v1086
      %v1090 = vmul.f32 %v1074, %v1086
      %v1091 = vadd.f32 %v1005, %v1087
      %v1092 = vadd.f32 %v1006, %v1088
      %v1093 = vadd.f32 %v1007, %v1089
      %v1094 = vadd.f32 %v1008, %v1090
      %s1095 = sld [smem:[#allocation3 + $0x42]]
      %v1096 = vstv %s1095
      %v1097 = vmul.f32 %v1071, %v1096
      %v1098 = vmul.f32 %v1072, %v1096
      %v1099 = vmul.f32 %v1073, %v1096
      %v1100 = vmul.f32 %v1074, %v1096
      %v1101 = vadd.f32 %v1015, %v1097
      %v1102 = vadd.f32 %v1016, %v1098
      %v1103 = vadd.f32 %v1017, %v1099
      %v1104 = vadd.f32 %v1018, %v1100
      %s1105 = sld [smem:[#allocation3 + $0x5d]]
      %v1106 = vstv %s1105
      %v1107 = vmul.f32 %v1071, %v1106
      %v1108 = vmul.f32 %v1072, %v1106
      %v1109 = vmul.f32 %v1073, %v1106
      %v1110 = vmul.f32 %v1074, %v1106
      %v1111 = vadd.f32 %v1025, %v1107
      %v1112 = vadd.f32 %v1026, %v1108
      %v1113 = vadd.f32 %v1027, %v1109
      %v1114 = vadd.f32 %v1028, %v1110
      %s1115 = sld [smem:[#allocation3 + $0x78]]
      %v1116 = vstv %s1115
      %v1117 = vmul.f32 %v1071, %v1116
      %v1118 = vmul.f32 %v1072, %v1116
      %v1119 = vmul.f32 %v1073, %v1116
      %v1120 = vmul.f32 %v1074, %v1116
      %v1121 = vadd.f32 %v1035, %v1117
      %v1122 = vadd.f32 %v1036, %v1118
      %v1123 = vadd.f32 %v1037, %v1119
      %v1124 = vadd.f32 %v1038, %v1120
      %s1125 = sld [smem:[#allocation3 + $0x93]]
      %v1126 = vstv %s1125
      %v1127 = vmul.f32 %v1071, %v1126
      %v1128 = vmul.f32 %v1072, %v1126
      %v1129 = vmul.f32 %v1073, %v1126
      %v1130 = vmul.f32 %v1074, %v1126
      %v1131 = vadd.f32 %v1045, %v1127
      %v1132 = vadd.f32 %v1046, %v1128
      %v1133 = vadd.f32 %v1047, %v1129
      %v1134 = vadd.f32 %v1048, %v1130
      %s1135 = sld [smem:[#allocation3 + $0xae]]
      %v1136 = vstv %s1135
      %v1137 = vmul.f32 %v1071, %v1136
      %v1138 = vmul.f32 %v1072, %v1136
      %v1139 = vmul.f32 %v1073, %v1136
      %v1140 = vmul.f32 %v1074, %v1136
      %v1141 = vadd.f32 %v1055, %v1137
      %v1142 = vadd.f32 %v1056, %v1138
      %v1143 = vadd.f32 %v1057, %v1139
      %v1144 = vadd.f32 %v1058, %v1140
      %s1145 = sld [smem:[#allocation3 + $0xc9]]
      %v1146 = vstv %s1145
      %v1147 = vmul.f32 %v1071, %v1146
      %v1148 = vmul.f32 %v1072, %v1146
      %v1149 = vmul.f32 %v1073, %v1146
      %v1150 = vmul.f32 %v1074, %v1146
      %v1151 = vadd.f32 %v1065, %v1147
      %v1152 = vadd.f32 %v1066, %v1148
      %v1153 = vadd.f32 %v1067, %v1149
      %v1154 = vadd.f32 %v1068, %v1150
      %v1155 = vld [vmem:[%s1070 + $0x1] sm:$0xff]
      %v1156 = vld [vmem:[%s1070 + $0x9] sm:$0xff]
      %v1157 = vld [vmem:[%s1070 + $0x11] sm:$0xff]
      %v1158 = vld [vmem:[%s1070 + $0x19] sm:$0x3]
      %s1159 = sld [smem:[#allocation3 + $0xd]]
      %v1160 = vstv %s1159
      %v1161 = vmul.f32 %v1155, %v1160
      %v1162 = vmul.f32 %v1156, %v1160
      %v1163 = vmul.f32 %v1157, %v1160
      %v1164 = vmul.f32 %v1158, %v1160
      %v1165 = vadd.f32 %v1081, %v1161
      %v1166 = vadd.f32 %v1082, %v1162
      %v1167 = vadd.f32 %v1083, %v1163
      %v1168 = vadd.f32 %v1084, %v1164
      %s1169 = sld [smem:[#allocation3 + $0x28]]
      %v1170 = vstv %s1169
      %v1171 = vmul.f32 %v1155, %v1170
      %v1172 = vmul.f32 %v1156, %v1170
      %v1173 = vmul.f32 %v1157, %v1170
      %v1174 = vmul.f32 %v1158, %v1170
      %v1175 = vadd.f32 %v1091, %v1171
      %v1176 = vadd.f32 %v1092, %v1172
      %v1177 = vadd.f32 %v1093, %v1173
      %v1178 = vadd.f32 %v1094, %v1174
      %s1179 = sld [smem:[#allocation3 + $0x43]]
      %v1180 = vstv %s1179
      %v1181 = vmul.f32 %v1155, %v1180
      %v1182 = vmul.f32 %v1156, %v1180
      %v1183 = vmul.f32 %v1157, %v1180
      %v1184 = vmul.f32 %v1158, %v1180
      %v1185 = vadd.f32 %v1101, %v1181
      %v1186 = vadd.f32 %v1102, %v1182
      %v1187 = vadd.f32 %v1103, %v1183
      %v1188 = vadd.f32 %v1104, %v1184
      %s1189 = sld [smem:[#allocation3 + $0x5e]]
      %v1190 = vstv %s1189
      %v1191 = vmul.f32 %v1155, %v1190
      %v1192 = vmul.f32 %v1156, %v1190
      %v1193 = vmul.f32 %v1157, %v1190
      %v1194 = vmul.f32 %v1158, %v1190
      %v1195 = vadd.f32 %v1111, %v1191
      %v1196 = vadd.f32 %v1112, %v1192
      %v1197 = vadd.f32 %v1113, %v1193
      %v1198 = vadd.f32 %v1114, %v1194
      %s1199 = sld [smem:[#allocation3 + $0x79]]
      %v1200 = vstv %s1199
      %v1201 = vmul.f32 %v1155, %v1200
      %v1202 = vmul.f32 %v1156, %v1200
      %v1203 = vmul.f32 %v1157, %v1200
      %v1204 = vmul.f32 %v1158, %v1200
      %v1205 = vadd.f32 %v1121, %v1201
      %v1206 = vadd.f32 %v1122, %v1202
      %v1207 = vadd.f32 %v1123, %v1203
      %v1208 = vadd.f32 %v1124, %v1204
      %s1209 = sld [smem:[#allocation3 + $0x94]]
      %v1210 = vstv %s1209
      %v1211 = vmul.f32 %v1155, %v1210
      %v1212 = vmul.f32 %v1156, %v1210
      %v1213 = vmul.f32 %v1157, %v1210
      %v1214 = vmul.f32 %v1158, %v1210
      %v1215 = vadd.f32 %v1131, %v1211
      %v1216 = vadd.f32 %v1132, %v1212
      %v1217 = vadd.f32 %v1133, %v1213
      %v1218 = vadd.f32 %v1134, %v1214
      %s1219 = sld [smem:[#allocation3 + $0xaf]]
      %v1220 = vstv %s1219
      %v1221 = vmul.f32 %v1155, %v1220
      %v1222 = vmul.f32 %v1156, %v1220
      %v1223 = vmul.f32 %v1157, %v1220
      %v1224 = vmul.f32 %v1158, %v1220
      %v1225 = vadd.f32 %v1141, %v1221
      %v1226 = vadd.f32 %v1142, %v1222
      %v1227 = vadd.f32 %v1143, %v1223
      %v1228 = vadd.f32 %v1144, %v1224
      %s1229 = sld [smem:[#allocation3 + $0xca]]
      %v1230 = vstv %s1229
      %v1231 = vmul.f32 %v1155, %v1230
      %v1232 = vmul.f32 %v1156, %v1230
      %v1233 = vmul.f32 %v1157, %v1230
      %v1234 = vmul.f32 %v1158, %v1230
      %v1235 = vadd.f32 %v1151, %v1231
      %v1236 = vadd.f32 %v1152, %v1232
      %v1237 = vadd.f32 %v1153, %v1233
      %v1238 = vadd.f32 %v1154, %v1234
      %v1239 = vld [vmem:[%s1070 + $0x2] sm:$0xff]
      %v1240 = vld [vmem:[%s1070 + $0xa] sm:$0xff]
      %v1241 = vld [vmem:[%s1070 + $0x12] sm:$0xff]
      %v1242 = vld [vmem:[%s1070 + $0x1a] sm:$0x3]
      %s1243 = sld [smem:[#allocation3 + $0xe]]
      %v1244 = vstv %s1243
      %v1245 = vmul.f32 %v1239, %v1244
      %v1246 = vmul.f32 %v1240, %v1244
      %v1247 = vmul.f32 %v1241, %v1244
      %v1248 = vmul.f32 %v1242, %v1244
      %v1249 = vadd.f32 %v1165, %v1245
      %v1250 = vadd.f32 %v1166, %v1246
      %v1251 = vadd.f32 %v1167, %v1247
      %v1252 = vadd.f32 %v1168, %v1248
      %s1253 = sld [smem:[#allocation3 + $0x29]]
      %v1254 = vstv %s1253
      %v1255 = vmul.f32 %v1239, %v1254
      %v1256 = vmul.f32 %v1240, %v1254
      %v1257 = vmul.f32 %v1241, %v1254
      %v1258 = vmul.f32 %v1242, %v1254
      %v1259 = vadd.f32 %v1175, %v1255
      %v1260 = vadd.f32 %v1176, %v1256
      %v1261 = vadd.f32 %v1177, %v1257
      %v1262 = vadd.f32 %v1178, %v1258
      %s1263 = sld [smem:[#allocation3 + $0x44]]
      %v1264 = vstv %s1263
      %v1265 = vmul.f32 %v1239, %v1264
      %v1266 = vmul.f32 %v1240, %v1264
      %v1267 = vmul.f32 %v1241, %v1264
      %v1268 = vmul.f32 %v1242, %v1264
      %v1269 = vadd.f32 %v1185, %v1265
      %v1270 = vadd.f32 %v1186, %v1266
      %v1271 = vadd.f32 %v1187, %v1267
      %v1272 = vadd.f32 %v1188, %v1268
      %s1273 = sld [smem:[#allocation3 + $0x5f]]
      %v1274 = vstv %s1273
      %v1275 = vmul.f32 %v1239, %v1274
      %v1276 = vmul.f32 %v1240, %v1274
      %v1277 = vmul.f32 %v1241, %v1274
      %v1278 = vmul.f32 %v1242, %v1274
      %v1279 = vadd.f32 %v1195, %v1275
      %v1280 = vadd.f32 %v1196, %v1276
      %v1281 = vadd.f32 %v1197, %v1277
      %v1282 = vadd.f32 %v1198, %v1278
      %s1283 = sld [smem:[#allocation3 + $0x7a]]
      %v1284 = vstv %s1283
      %v1285 = vmul.f32 %v1239, %v1284
      %v1286 = vmul.f32 %v1240, %v1284
      %v1287 = vmul.f32 %v1241, %v1284
      %v1288 = vmul.f32 %v1242, %v1284
      %v1289 = vadd.f32 %v1205, %v1285
      %v1290 = vadd.f32 %v1206, %v1286
      %v1291 = vadd.f32 %v1207, %v1287
      %v1292 = vadd.f32 %v1208, %v1288
      %s1293 = sld [smem:[#allocation3 + $0x95]]
      %v1294 = vstv %s1293
      %v1295 = vmul.f32 %v1239, %v1294
      %v1296 = vmul.f32 %v1240, %v1294
      %v1297 = vmul.f32 %v1241, %v1294
      %v1298 = vmul.f32 %v1242, %v1294
      %v1299 = vadd.f32 %v1215, %v1295
      %v1300 = vadd.f32 %v1216, %v1296
      %v1301 = vadd.f32 %v1217, %v1297
      %v1302 = vadd.f32 %v1218, %v1298
      %s1303 = sld [smem:[#allocation3 + $0xb0]]
      %v1304 = vstv %s1303
      %v1305 = vmul.f32 %v1239, %v1304
      %v1306 = vmul.f32 %v1240, %v1304
      %v1307 = vmul.f32 %v1241, %v1304
      %v1308 = vmul.f32 %v1242, %v1304
      %v1309 = vadd.f32 %v1225, %v1305
      %v1310 = vadd.f32 %v1226, %v1306
      %v1311 = vadd.f32 %v1227, %v1307
      %v1312 = vadd.f32 %v1228, %v1308
      %s1313 = sld [smem:[#allocation3 + $0xcb]]
      %v1314 = vstv %s1313
      %v1315 = vmul.f32 %v1239, %v1314
      %v1316 = vmul.f32 %v1240, %v1314
      %v1317 = vmul.f32 %v1241, %v1314
      %v1318 = vmul.f32 %v1242, %v1314
      %v1319 = vadd.f32 %v1235, %v1315
      %v1320 = vadd.f32 %v1236, %v1316
      %v1321 = vadd.f32 %v1237, %v1317
      %v1322 = vadd.f32 %v1238, %v1318
      %s1323 = sadd.s32 %s561, 896
      %s1324 = scalar_lea.vmem %s0, %s1323
      %v1325 = vld [vmem:[%s1324] sm:$0xff]
      %v1326 = vld [vmem:[%s1324 + $0x8] sm:$0xff]
      %v1327 = vld [vmem:[%s1324 + $0x10] sm:$0xff]
      %v1328 = vld [vmem:[%s1324 + $0x18] sm:$0x3]
      %s1329 = sld [smem:[#allocation3 + $0xf]]
      %v1330 = vstv %s1329
      %v1331 = vmul.f32 %v1325, %v1330
      %v1332 = vmul.f32 %v1326, %v1330
      %v1333 = vmul.f32 %v1327, %v1330
      %v1334 = vmul.f32 %v1328, %v1330
      %v1335 = vadd.f32 %v1249, %v1331
      %v1336 = vadd.f32 %v1250, %v1332
      %v1337 = vadd.f32 %v1251, %v1333
      %v1338 = vadd.f32 %v1252, %v1334
      %s1339 = sld [smem:[#allocation3 + $0x2a]]
      %v1340 = vstv %s1339
      %v1341 = vmul.f32 %v1325, %v1340
      %v1342 = vmul.f32 %v1326, %v1340
      %v1343 = vmul.f32 %v1327, %v1340
      %v1344 = vmul.f32 %v1328, %v1340
      %v1345 = vadd.f32 %v1259, %v1341
      %v1346 = vadd.f32 %v1260, %v1342
      %v1347 = vadd.f32 %v1261, %v1343
      %v1348 = vadd.f32 %v1262, %v1344
      %s1349 = sld [smem:[#allocation3 + $0x45]]
      %v1350 = vstv %s1349
      %v1351 = vmul.f32 %v1325, %v1350
      %v1352 = vmul.f32 %v1326, %v1350
      %v1353 = vmul.f32 %v1327, %v1350
      %v1354 = vmul.f32 %v1328, %v1350
      %v1355 = vadd.f32 %v1269, %v1351
      %v1356 = vadd.f32 %v1270, %v1352
      %v1357 = vadd.f32 %v1271, %v1353
      %v1358 = vadd.f32 %v1272, %v1354
      %s1359 = sld [smem:[#allocation3 + $0x60]]
      %v1360 = vstv %s1359
      %v1361 = vmul.f32 %v1325, %v1360
      %v1362 = vmul.f32 %v1326, %v1360
      %v1363 = vmul.f32 %v1327, %v1360
      %v1364 = vmul.f32 %v1328, %v1360
      %v1365 = vadd.f32 %v1279, %v1361
      %v1366 = vadd.f32 %v1280, %v1362
      %v1367 = vadd.f32 %v1281, %v1363
      %v1368 = vadd.f32 %v1282, %v1364
      %s1369 = sld [smem:[#allocation3 + $0x7b]]
      %v1370 = vstv %s1369
      %v1371 = vmul.f32 %v1325, %v1370
      %v1372 = vmul.f32 %v1326, %v1370
      %v1373 = vmul.f32 %v1327, %v1370
      %v1374 = vmul.f32 %v1328, %v1370
      %v1375 = vadd.f32 %v1289, %v1371
      %v1376 = vadd.f32 %v1290, %v1372
      %v1377 = vadd.f32 %v1291, %v1373
      %v1378 = vadd.f32 %v1292, %v1374
      %s1379 = sld [smem:[#allocation3 + $0x96]]
      %v1380 = vstv %s1379
      %v1381 = vmul.f32 %v1325, %v1380
      %v1382 = vmul.f32 %v1326, %v1380
      %v1383 = vmul.f32 %v1327, %v1380
      %v1384 = vmul.f32 %v1328, %v1380
      %v1385 = vadd.f32 %v1299, %v1381
      %v1386 = vadd.f32 %v1300, %v1382
      %v1387 = vadd.f32 %v1301, %v1383
      %v1388 = vadd.f32 %v1302, %v1384
      %s1389 = sld [smem:[#allocation3 + $0xb1]]
      %v1390 = vstv %s1389
      %v1391 = vmul.f32 %v1325, %v1390
      %v1392 = vmul.f32 %v1326, %v1390
      %v1393 = vmul.f32 %v1327, %v1390
      %v1394 = vmul.f32 %v1328, %v1390
      %v1395 = vadd.f32 %v1309, %v1391
      %v1396 = vadd.f32 %v1310, %v1392
      %v1397 = vadd.f32 %v1311, %v1393
      %v1398 = vadd.f32 %v1312, %v1394
      %s1399 = sld [smem:[#allocation3 + $0xcc]]
      %v1400 = vstv %s1399
      %v1401 = vmul.f32 %v1325, %v1400
      %v1402 = vmul.f32 %v1326, %v1400
      %v1403 = vmul.f32 %v1327, %v1400
      %v1404 = vmul.f32 %v1328, %v1400
      %v1405 = vadd.f32 %v1319, %v1401
      %v1406 = vadd.f32 %v1320, %v1402
      %v1407 = vadd.f32 %v1321, %v1403
      %v1408 = vadd.f32 %v1322, %v1404
      %v1409 = vld [vmem:[%s1324 + $0x1] sm:$0xff]
      %v1410 = vld [vmem:[%s1324 + $0x9] sm:$0xff]
      %v1411 = vld [vmem:[%s1324 + $0x11] sm:$0xff]
      %v1412 = vld [vmem:[%s1324 + $0x19] sm:$0x3]
      %s1413 = sld [smem:[#allocation3 + $0x10]]
      %v1414 = vstv %s1413
      %v1415 = vmul.f32 %v1409, %v1414
      %v1416 = vmul.f32 %v1410, %v1414
      %v1417 = vmul.f32 %v1411, %v1414
      %v1418 = vmul.f32 %v1412, %v1414
      %v1419 = vadd.f32 %v1335, %v1415
      %v1420 = vadd.f32 %v1336, %v1416
      %v1421 = vadd.f32 %v1337, %v1417
      %v1422 = vadd.f32 %v1338, %v1418
      %s1423 = sld [smem:[#allocation3 + $0x2b]]
      %v1424 = vstv %s1423
      %v1425 = vmul.f32 %v1409, %v1424
      %v1426 = vmul.f32 %v1410, %v1424
      %v1427 = vmul.f32 %v1411, %v1424
      %v1428 = vmul.f32 %v1412, %v1424
      %v1429 = vadd.f32 %v1345, %v1425
      %v1430 = vadd.f32 %v1346, %v1426
      %v1431 = vadd.f32 %v1347, %v1427
      %v1432 = vadd.f32 %v1348, %v1428
      %s1433 = sld [smem:[#allocation3 + $0x46]]
      %v1434 = vstv %s1433
      %v1435 = vmul.f32 %v1409, %v1434
      %v1436 = vmul.f32 %v1410, %v1434
      %v1437 = vmul.f32 %v1411, %v1434
      %v1438 = vmul.f32 %v1412, %v1434
      %v1439 = vadd.f32 %v1355, %v1435
      %v1440 = vadd.f32 %v1356, %v1436
      %v1441 = vadd.f32 %v1357, %v1437
      %v1442 = vadd.f32 %v1358, %v1438
      %s1443 = sld [smem:[#allocation3 + $0x61]]
      %v1444 = vstv %s1443
      %v1445 = vmul.f32 %v1409, %v1444
      %v1446 = vmul.f32 %v1410, %v1444
      %v1447 = vmul.f32 %v1411, %v1444
      %v1448 = vmul.f32 %v1412, %v1444
      %v1449 = vadd.f32 %v1365, %v1445
      %v1450 = vadd.f32 %v1366, %v1446
      %v1451 = vadd.f32 %v1367, %v1447
      %v1452 = vadd.f32 %v1368, %v1448
      %s1453 = sld [smem:[#allocation3 + $0x7c]]
      %v1454 = vstv %s1453
      %v1455 = vmul.f32 %v1409, %v1454
      %v1456 = vmul.f32 %v1410, %v1454
      %v1457 = vmul.f32 %v1411, %v1454
      %v1458 = vmul.f32 %v1412, %v1454
      %v1459 = vadd.f32 %v1375, %v1455
      %v1460 = vadd.f32 %v1376, %v1456
      %v1461 = vadd.f32 %v1377, %v1457
      %v1462 = vadd.f32 %v1378, %v1458
      %s1463 = sld [smem:[#allocation3 + $0x97]]
      %v1464 = vstv %s1463
      %v1465 = vmul.f32 %v1409, %v1464
      %v1466 = vmul.f32 %v1410, %v1464
      %v1467 = vmul.f32 %v1411, %v1464
      %v1468 = vmul.f32 %v1412, %v1464
      %v1469 = vadd.f32 %v1385, %v1465
      %v1470 = vadd.f32 %v1386, %v1466
      %v1471 = vadd.f32 %v1387, %v1467
      %v1472 = vadd.f32 %v1388, %v1468
      %s1473 = sld [smem:[#allocation3 + $0xb2]]
      %v1474 = vstv %s1473
      %v1475 = vmul.f32 %v1409, %v1474
      %v1476 = vmul.f32 %v1410, %v1474
      %v1477 = vmul.f32 %v1411, %v1474
      %v1478 = vmul.f32 %v1412, %v1474
      %v1479 = vadd.f32 %v1395, %v1475
      %v1480 = vadd.f32 %v1396, %v1476
      %v1481 = vadd.f32 %v1397, %v1477
      %v1482 = vadd.f32 %v1398, %v1478
      %s1483 = sld [smem:[#allocation3 + $0xcd]]
      %v1484 = vstv %s1483
      %v1485 = vmul.f32 %v1409, %v1484
      %v1486 = vmul.f32 %v1410, %v1484
      %v1487 = vmul.f32 %v1411, %v1484
      %v1488 = vmul.f32 %v1412, %v1484
      %v1489 = vadd.f32 %v1405, %v1485
      %v1490 = vadd.f32 %v1406, %v1486
      %v1491 = vadd.f32 %v1407, %v1487
      %v1492 = vadd.f32 %v1408, %v1488
      %v1493 = vld [vmem:[%s1324 + $0x2] sm:$0xff]
      %v1494 = vld [vmem:[%s1324 + $0xa] sm:$0xff]
      %v1495 = vld [vmem:[%s1324 + $0x12] sm:$0xff]
      %v1496 = vld [vmem:[%s1324 + $0x1a] sm:$0x3]
      %s1497 = sld [smem:[#allocation3 + $0x11]]
      %v1498 = vstv %s1497
      %v1499 = vmul.f32 %v1493, %v1498
      %v1500 = vmul.f32 %v1494, %v1498
      %v1501 = vmul.f32 %v1495, %v1498
      %v1502 = vmul.f32 %v1496, %v1498
      %v1503 = vadd.f32 %v1419, %v1499
      %v1504 = vadd.f32 %v1420, %v1500
      %v1505 = vadd.f32 %v1421, %v1501
      %v1506 = vadd.f32 %v1422, %v1502
      %s1507 = sld [smem:[#allocation3 + $0x2c]]
      %v1508 = vstv %s1507
      %v1509 = vmul.f32 %v1493, %v1508
      %v1510 = vmul.f32 %v1494, %v1508
      %v1511 = vmul.f32 %v1495, %v1508
      %v1512 = vmul.f32 %v1496, %v1508
      %v1513 = vadd.f32 %v1429, %v1509
      %v1514 = vadd.f32 %v1430, %v1510
      %v1515 = vadd.f32 %v1431, %v1511
      %v1516 = vadd.f32 %v1432, %v1512
      %s1517 = sld [smem:[#allocation3 + $0x47]]
      %v1518 = vstv %s1517
      %v1519 = vmul.f32 %v1493, %v1518
      %v1520 = vmul.f32 %v1494, %v1518
      %v1521 = vmul.f32 %v1495, %v1518
      %v1522 = vmul.f32 %v1496, %v1518
      %v1523 = vadd.f32 %v1439, %v1519
      %v1524 = vadd.f32 %v1440, %v1520
      %v1525 = vadd.f32 %v1441, %v1521
      %v1526 = vadd.f32 %v1442, %v1522
      %s1527 = sld [smem:[#allocation3 + $0x62]]
      %v1528 = vstv %s1527
      %v1529 = vmul.f32 %v1493, %v1528
      %v1530 = vmul.f32 %v1494, %v1528
      %v1531 = vmul.f32 %v1495, %v1528
      %v1532 = vmul.f32 %v1496, %v1528
      %v1533 = vadd.f32 %v1449, %v1529
      %v1534 = vadd.f32 %v1450, %v1530
      %v1535 = vadd.f32 %v1451, %v1531
      %v1536 = vadd.f32 %v1452, %v1532
      %s1537 = sld [smem:[#allocation3 + $0x7d]]
      %v1538 = vstv %s1537
      %v1539 = vmul.f32 %v1493, %v1538
      %v1540 = vmul.f32 %v1494, %v1538
      %v1541 = vmul.f32 %v1495, %v1538
      %v1542 = vmul.f32 %v1496, %v1538
      %v1543 = vadd.f32 %v1459, %v1539
      %v1544 = vadd.f32 %v1460, %v1540
      %v1545 = vadd.f32 %v1461, %v1541
      %v1546 = vadd.f32 %v1462, %v1542
      %s1547 = sld [smem:[#allocation3 + $0x98]]
      %v1548 = vstv %s1547
      %v1549 = vmul.f32 %v1493, %v1548
      %v1550 = vmul.f32 %v1494, %v1548
      %v1551 = vmul.f32 %v1495, %v1548
      %v1552 = vmul.f32 %v1496, %v1548
      %v1553 = vadd.f32 %v1469, %v1549
      %v1554 = vadd.f32 %v1470, %v1550
      %v1555 = vadd.f32 %v1471, %v1551
      %v1556 = vadd.f32 %v1472, %v1552
      %s1557 = sld [smem:[#allocation3 + $0xb3]]
      %v1558 = vstv %s1557
      %v1559 = vmul.f32 %v1493, %v1558
      %v1560 = vmul.f32 %v1494, %v1558
      %v1561 = vmul.f32 %v1495, %v1558
      %v1562 = vmul.f32 %v1496, %v1558
      %v1563 = vadd.f32 %v1479, %v1559
      %v1564 = vadd.f32 %v1480, %v1560
      %v1565 = vadd.f32 %v1481, %v1561
      %v1566 = vadd.f32 %v1482, %v1562
      %s1567 = sld [smem:[#allocation3 + $0xce]]
      %v1568 = vstv %s1567
      %v1569 = vmul.f32 %v1493, %v1568
      %v1570 = vmul.f32 %v1494, %v1568
      %v1571 = vmul.f32 %v1495, %v1568
      %v1572 = vmul.f32 %v1496, %v1568
      %v1573 = vadd.f32 %v1489, %v1569
      %v1574 = vadd.f32 %v1490, %v1570
      %v1575 = vadd.f32 %v1491, %v1571
      %v1576 = vadd.f32 %v1492, %v1572
      %s1577 = sadd.s32 %s51, 1792
      %s1578 = scalar_lea.vmem %s0, %s1577
      %v1579 = vld [vmem:[%s1578] sm:$0xff]
      %v1580 = vld [vmem:[%s1578 + $0x8] sm:$0xff]
      %v1581 = vld [vmem:[%s1578 + $0x10] sm:$0xff]
      %v1582 = vld [vmem:[%s1578 + $0x18] sm:$0x3]
      %s1583 = sld [smem:[#allocation3 + $0x12]]
      %v1584 = vstv %s1583
      %v1585 = vmul.f32 %v1579, %v1584
      %v1586 = vmul.f32 %v1580, %v1584
      %v1587 = vmul.f32 %v1581, %v1584
      %v1588 = vmul.f32 %v1582, %v1584
      %v1589 = vadd.f32 %v1503, %v1585
      %v1590 = vadd.f32 %v1504, %v1586
      %v1591 = vadd.f32 %v1505, %v1587
      %v1592 = vadd.f32 %v1506, %v1588
      %s1593 = sld [smem:[#allocation3 + $0x2d]]
      %v1594 = vstv %s1593
      %v1595 = vmul.f32 %v1579, %v1594
      %v1596 = vmul.f32 %v1580, %v1594
      %v1597 = vmul.f32 %v1581, %v1594
      %v1598 = vmul.f32 %v1582, %v1594
      %v1599 = vadd.f32 %v1513, %v1595
      %v1600 = vadd.f32 %v1514, %v1596
      %v1601 = vadd.f32 %v1515, %v1597
      %v1602 = vadd.f32 %v1516, %v1598
      %s1603 = sld [smem:[#allocation3 + $0x48]]
      %v1604 = vstv %s1603
      %v1605 = vmul.f32 %v1579, %v1604
      %v1606 = vmul.f32 %v1580, %v1604
      %v1607 = vmul.f32 %v1581, %v1604
      %v1608 = vmul.f32 %v1582, %v1604
      %v1609 = vadd.f32 %v1523, %v1605
      %v1610 = vadd.f32 %v1524, %v1606
      %v1611 = vadd.f32 %v1525, %v1607
      %v1612 = vadd.f32 %v1526, %v1608
      %s1613 = sld [smem:[#allocation3 + $0x63]]
      %v1614 = vstv %s1613
      %v1615 = vmul.f32 %v1579, %v1614
      %v1616 = vmul.f32 %v1580, %v1614
      %v1617 = vmul.f32 %v1581, %v1614
      %v1618 = vmul.f32 %v1582, %v1614
      %v1619 = vadd.f32 %v1533, %v1615
      %v1620 = vadd.f32 %v1534, %v1616
      %v1621 = vadd.f32 %v1535, %v1617
      %v1622 = vadd.f32 %v1536, %v1618
      %s1623 = sld [smem:[#allocation3 + $0x7e]]
      %v1624 = vstv %s1623
      %v1625 = vmul.f32 %v1579, %v1624
      %v1626 = vmul.f32 %v1580, %v1624
      %v1627 = vmul.f32 %v1581, %v1624
      %v1628 = vmul.f32 %v1582, %v1624
      %v1629 = vadd.f32 %v1543, %v1625
      %v1630 = vadd.f32 %v1544, %v1626
      %v1631 = vadd.f32 %v1545, %v1627
      %v1632 = vadd.f32 %v1546, %v1628
      %s1633 = sld [smem:[#allocation3 + $0x99]]
      %v1634 = vstv %s1633
      %v1635 = vmul.f32 %v1579, %v1634
      %v1636 = vmul.f32 %v1580, %v1634
      %v1637 = vmul.f32 %v1581, %v1634
      %v1638 = vmul.f32 %v1582, %v1634
      %v1639 = vadd.f32 %v1553, %v1635
      %v1640 = vadd.f32 %v1554, %v1636
      %v1641 = vadd.f32 %v1555, %v1637
      %v1642 = vadd.f32 %v1556, %v1638
      %s1643 = sld [smem:[#allocation3 + $0xb4]]
      %v1644 = vstv %s1643
      %v1645 = vmul.f32 %v1579, %v1644
      %v1646 = vmul.f32 %v1580, %v1644
      %v1647 = vmul.f32 %v1581, %v1644
      %v1648 = vmul.f32 %v1582, %v1644
      %v1649 = vadd.f32 %v1563, %v1645
      %v1650 = vadd.f32 %v1564, %v1646
      %v1651 = vadd.f32 %v1565, %v1647
      %v1652 = vadd.f32 %v1566, %v1648
      %s1653 = sld [smem:[#allocation3 + $0xcf]]
      %v1654 = vstv %s1653
      %v1655 = vmul.f32 %v1579, %v1654
      %v1656 = vmul.f32 %v1580, %v1654
      %v1657 = vmul.f32 %v1581, %v1654
      %v1658 = vmul.f32 %v1582, %v1654
      %v1659 = vadd.f32 %v1573, %v1655
      %v1660 = vadd.f32 %v1574, %v1656
      %v1661 = vadd.f32 %v1575, %v1657
      %v1662 = vadd.f32 %v1576, %v1658
      %v1663 = vld [vmem:[%s1578 + $0x1] sm:$0xff]
      %v1664 = vld [vmem:[%s1578 + $0x9] sm:$0xff]
      %v1665 = vld [vmem:[%s1578 + $0x11] sm:$0xff]
      %v1666 = vld [vmem:[%s1578 + $0x19] sm:$0x3]
      %s1667 = sld [smem:[#allocation3 + $0x13]]
      %v1668 = vstv %s1667
      %v1669 = vmul.f32 %v1663, %v1668
      %v1670 = vmul.f32 %v1664, %v1668
      %v1671 = vmul.f32 %v1665, %v1668
      %v1672 = vmul.f32 %v1666, %v1668
      %v1673 = vadd.f32 %v1589, %v1669
      %v1674 = vadd.f32 %v1590, %v1670
      %v1675 = vadd.f32 %v1591, %v1671
      %v1676 = vadd.f32 %v1592, %v1672
      %s1677 = sld [smem:[#allocation3 + $0x2e]]
      %v1678 = vstv %s1677
      %v1679 = vmul.f32 %v1663, %v1678
      %v1680 = vmul.f32 %v1664, %v1678
      %v1681 = vmul.f32 %v1665, %v1678
      %v1682 = vmul.f32 %v1666, %v1678
      %v1683 = vadd.f32 %v1599, %v1679
      %v1684 = vadd.f32 %v1600, %v1680
      %v1685 = vadd.f32 %v1601, %v1681
      %v1686 = vadd.f32 %v1602, %v1682
      %s1687 = sld [smem:[#allocation3 + $0x49]]
      %v1688 = vstv %s1687
      %v1689 = vmul.f32 %v1663, %v1688
      %v1690 = vmul.f32 %v1664, %v1688
      %v1691 = vmul.f32 %v1665, %v1688
      %v1692 = vmul.f32 %v1666, %v1688
      %v1693 = vadd.f32 %v1609, %v1689
      %v1694 = vadd.f32 %v1610, %v1690
      %v1695 = vadd.f32 %v1611, %v1691
      %v1696 = vadd.f32 %v1612, %v1692
      %s1697 = sld [smem:[#allocation3 + $0x64]]
      %v1698 = vstv %s1697
      %v1699 = vmul.f32 %v1663, %v1698
      %v1700 = vmul.f32 %v1664, %v1698
      %v1701 = vmul.f32 %v1665, %v1698
      %v1702 = vmul.f32 %v1666, %v1698
      %v1703 = vadd.f32 %v1619, %v1699
      %v1704 = vadd.f32 %v1620, %v1700
      %v1705 = vadd.f32 %v1621, %v1701
      %v1706 = vadd.f32 %v1622, %v1702
      %s1707 = sld [smem:[#allocation3 + $0x7f]]
      %v1708 = vstv %s1707
      %v1709 = vmul.f32 %v1663, %v1708
      %v1710 = vmul.f32 %v1664, %v1708
      %v1711 = vmul.f32 %v1665, %v1708
      %v1712 = vmul.f32 %v1666, %v1708
      %v1713 = vadd.f32 %v1629, %v1709
      %v1714 = vadd.f32 %v1630, %v1710
      %v1715 = vadd.f32 %v1631, %v1711
      %v1716 = vadd.f32 %v1632, %v1712
      %s1717 = sld [smem:[#allocation3 + $0x9a]]
      %v1718 = vstv %s1717
      %v1719 = vmul.f32 %v1663, %v1718
      %v1720 = vmul.f32 %v1664, %v1718
      %v1721 = vmul.f32 %v1665, %v1718
      %v1722 = vmul.f32 %v1666, %v1718
      %v1723 = vadd.f32 %v1639, %v1719
      %v1724 = vadd.f32 %v1640, %v1720
      %v1725 = vadd.f32 %v1641, %v1721
      %v1726 = vadd.f32 %v1642, %v1722
      %s1727 = sld [smem:[#allocation3 + $0xb5]]
      %v1728 = vstv %s1727
      %v1729 = vmul.f32 %v1663, %v1728
      %v1730 = vmul.f32 %v1664, %v1728
      %v1731 = vmul.f32 %v1665, %v1728
      %v1732 = vmul.f32 %v1666, %v1728
      %v1733 = vadd.f32 %v1649, %v1729
      %v1734 = vadd.f32 %v1650, %v1730
      %v1735 = vadd.f32 %v1651, %v1731
      %v1736 = vadd.f32 %v1652, %v1732
      %s1737 = sld [smem:[#allocation3 + $0xd0]]
      %v1738 = vstv %s1737
      %v1739 = vmul.f32 %v1663, %v1738
      %v1740 = vmul.f32 %v1664, %v1738
      %v1741 = vmul.f32 %v1665, %v1738
      %v1742 = vmul.f32 %v1666, %v1738
      %v1743 = vadd.f32 %v1659, %v1739
      %v1744 = vadd.f32 %v1660, %v1740
      %v1745 = vadd.f32 %v1661, %v1741
      %v1746 = vadd.f32 %v1662, %v1742
      %v1747 = vld [vmem:[%s1578 + $0x2] sm:$0xff]
      %v1748 = vld [vmem:[%s1578 + $0xa] sm:$0xff]
      %v1749 = vld [vmem:[%s1578 + $0x12] sm:$0xff]
      %v1750 = vld [vmem:[%s1578 + $0x1a] sm:$0x3]
      %s1751 = sld [smem:[#allocation3 + $0x14]]
      %v1752 = vstv %s1751
      %v1753 = vmul.f32 %v1747, %v1752
      %v1754 = vmul.f32 %v1748, %v1752
      %v1755 = vmul.f32 %v1749, %v1752
      %v1756 = vmul.f32 %v1750, %v1752
      %v1757 = vadd.f32 %v1673, %v1753
      %v1758 = vadd.f32 %v1674, %v1754
      %v1759 = vadd.f32 %v1675, %v1755
      %v1760 = vadd.f32 %v1676, %v1756
      %s1761 = sld [smem:[#allocation3 + $0x2f]]
      %v1762 = vstv %s1761
      %v1763 = vmul.f32 %v1747, %v1762
      %v1764 = vmul.f32 %v1748, %v1762
      %v1765 = vmul.f32 %v1749, %v1762
      %v1766 = vmul.f32 %v1750, %v1762
      %v1767 = vadd.f32 %v1683, %v1763
      %v1768 = vadd.f32 %v1684, %v1764
      %v1769 = vadd.f32 %v1685, %v1765
      %v1770 = vadd.f32 %v1686, %v1766
      %s1771 = sld [smem:[#allocation3 + $0x4a]]
      %v1772 = vstv %s1771
      %v1773 = vmul.f32 %v1747, %v1772
      %v1774 = vmul.f32 %v1748, %v1772
      %v1775 = vmul.f32 %v1749, %v1772
      %v1776 = vmul.f32 %v1750, %v1772
      %v1777 = vadd.f32 %v1693, %v1773
      %v1778 = vadd.f32 %v1694, %v1774
      %v1779 = vadd.f32 %v1695, %v1775
      %v1780 = vadd.f32 %v1696, %v1776
      %s1781 = sld [smem:[#allocation3 + $0x65]]
      %v1782 = vstv %s1781
      %v1783 = vmul.f32 %v1747, %v1782
      %v1784 = vmul.f32 %v1748, %v1782
      %v1785 = vmul.f32 %v1749, %v1782
      %v1786 = vmul.f32 %v1750, %v1782
      %v1787 = vadd.f32 %v1703, %v1783
      %v1788 = vadd.f32 %v1704, %v1784
      %v1789 = vadd.f32 %v1705, %v1785
      %v1790 = vadd.f32 %v1706, %v1786
      %s1791 = sld [smem:[#allocation3 + $0x80]]
      %v1792 = vstv %s1791
      %v1793 = vmul.f32 %v1747, %v1792
      %v1794 = vmul.f32 %v1748, %v1792
      %v1795 = vmul.f32 %v1749, %v1792
      %v1796 = vmul.f32 %v1750, %v1792
      %v1797 = vadd.f32 %v1713, %v1793
      %v1798 = vadd.f32 %v1714, %v1794
      %v1799 = vadd.f32 %v1715, %v1795
      %v1800 = vadd.f32 %v1716, %v1796
      %s1801 = sld [smem:[#allocation3 + $0x9b]]
      %v1802 = vstv %s1801
      %v1803 = vmul.f32 %v1747, %v1802
      %v1804 = vmul.f32 %v1748, %v1802
      %v1805 = vmul.f32 %v1749, %v1802
      %v1806 = vmul.f32 %v1750, %v1802
      %v1807 = vadd.f32 %v1723, %v1803
      %v1808 = vadd.f32 %v1724, %v1804
      %v1809 = vadd.f32 %v1725, %v1805
      %v1810 = vadd.f32 %v1726, %v1806
      %s1811 = sld [smem:[#allocation3 + $0xb6]]
      %v1812 = vstv %s1811
      %v1813 = vmul.f32 %v1747, %v1812
      %v1814 = vmul.f32 %v1748, %v1812
      %v1815 = vmul.f32 %v1749, %v1812
      %v1816 = vmul.f32 %v1750, %v1812
      %v1817 = vadd.f32 %v1733, %v1813
      %v1818 = vadd.f32 %v1734, %v1814
      %v1819 = vadd.f32 %v1735, %v1815
      %v1820 = vadd.f32 %v1736, %v1816
      %s1821 = sld [smem:[#allocation3 + $0xd1]]
      %v1822 = vstv %s1821
      %v1823 = vmul.f32 %v1747, %v1822
      %v1824 = vmul.f32 %v1748, %v1822
      %v1825 = vmul.f32 %v1749, %v1822
      %v1826 = vmul.f32 %v1750, %v1822
      %v1827 = vadd.f32 %v1743, %v1823
      %v1828 = vadd.f32 %v1744, %v1824
      %v1829 = vadd.f32 %v1745, %v1825
      %v1830 = vadd.f32 %v1746, %v1826
      %s1831 = sadd.s32 %s306, 1792
      %s1832 = scalar_lea.vmem %s0, %s1831
      %v1833 = vld [vmem:[%s1832] sm:$0xff]
      %v1834 = vld [vmem:[%s1832 + $0x8] sm:$0xff]
      %v1835 = vld [vmem:[%s1832 + $0x10] sm:$0xff]
      %v1836 = vld [vmem:[%s1832 + $0x18] sm:$0x3]
      %s1837 = sld [smem:[#allocation3 + $0x15]]
      %v1838 = vstv %s1837
      %v1839 = vmul.f32 %v1833, %v1838
      %v1840 = vmul.f32 %v1834, %v1838
      %v1841 = vmul.f32 %v1835, %v1838
      %v1842 = vmul.f32 %v1836, %v1838
      %v1843 = vadd.f32 %v1757, %v1839
      %v1844 = vadd.f32 %v1758, %v1840
      %v1845 = vadd.f32 %v1759, %v1841
      %v1846 = vadd.f32 %v1760, %v1842
      %s1847 = sld [smem:[#allocation3 + $0x30]]
      %v1848 = vstv %s1847
      %v1849 = vmul.f32 %v1833, %v1848
      %v1850 = vmul.f32 %v1834, %v1848
      %v1851 = vmul.f32 %v1835, %v1848
      %v1852 = vmul.f32 %v1836, %v1848
      %v1853 = vadd.f32 %v1767, %v1849
      %v1854 = vadd.f32 %v1768, %v1850
      %v1855 = vadd.f32 %v1769, %v1851
      %v1856 = vadd.f32 %v1770, %v1852
      %s1857 = sld [smem:[#allocation3 + $0x4b]]
      %v1858 = vstv %s1857
      %v1859 = vmul.f32 %v1833, %v1858
      %v1860 = vmul.f32 %v1834, %v1858
      %v1861 = vmul.f32 %v1835, %v1858
      %v1862 = vmul.f32 %v1836, %v1858
      %v1863 = vadd.f32 %v1777, %v1859
      %v1864 = vadd.f32 %v1778, %v1860
      %v1865 = vadd.f32 %v1779, %v1861
      %v1866 = vadd.f32 %v1780, %v1862
      %s1867 = sld [smem:[#allocation3 + $0x66]]
      %v1868 = vstv %s1867
      %v1869 = vmul.f32 %v1833, %v1868
      %v1870 = vmul.f32 %v1834, %v1868
      %v1871 = vmul.f32 %v1835, %v1868
      %v1872 = vmul.f32 %v1836, %v1868
      %v1873 = vadd.f32 %v1787, %v1869
      %v1874 = vadd.f32 %v1788, %v1870
      %v1875 = vadd.f32 %v1789, %v1871
      %v1876 = vadd.f32 %v1790, %v1872
      %s1877 = sld [smem:[#allocation3 + $0x81]]
      %v1878 = vstv %s1877
      %v1879 = vmul.f32 %v1833, %v1878
      %v1880 = vmul.f32 %v1834, %v1878
      %v1881 = vmul.f32 %v1835, %v1878
      %v1882 = vmul.f32 %v1836, %v1878
      %v1883 = vadd.f32 %v1797, %v1879
      %v1884 = vadd.f32 %v1798, %v1880
      %v1885 = vadd.f32 %v1799, %v1881
      %v1886 = vadd.f32 %v1800, %v1882
      %s1887 = sld [smem:[#allocation3 + $0x9c]]
      %v1888 = vstv %s1887
      %v1889 = vmul.f32 %v1833, %v1888
      %v1890 = vmul.f32 %v1834, %v1888
      %v1891 = vmul.f32 %v1835, %v1888
      %v1892 = vmul.f32 %v1836, %v1888
      %v1893 = vadd.f32 %v1807, %v1889
      %v1894 = vadd.f32 %v1808, %v1890
      %v1895 = vadd.f32 %v1809, %v1891
      %v1896 = vadd.f32 %v1810, %v1892
      %s1897 = sld [smem:[#allocation3 + $0xb7]]
      %v1898 = vstv %s1897
      %v1899 = vmul.f32 %v1833, %v1898
      %v1900 = vmul.f32 %v1834, %v1898
      %v1901 = vmul.f32 %v1835, %v1898
      %v1902 = vmul.f32 %v1836, %v1898
      %v1903 = vadd.f32 %v1817, %v1899
      %v1904 = vadd.f32 %v1818, %v1900
      %v1905 = vadd.f32 %v1819, %v1901
      %v1906 = vadd.f32 %v1820, %v1902
      %s1907 = sld [smem:[#allocation3 + $0xd2]]
      %v1908 = vstv %s1907
      %v1909 = vmul.f32 %v1833, %v1908
      %v1910 = vmul.f32 %v1834, %v1908
      %v1911 = vmul.f32 %v1835, %v1908
      %v1912 = vmul.f32 %v1836, %v1908
      %v1913 = vadd.f32 %v1827, %v1909
      %v1914 = vadd.f32 %v1828, %v1910
      %v1915 = vadd.f32 %v1829, %v1911
      %v1916 = vadd.f32 %v1830, %v1912
      %v1917 = vld [vmem:[%s1832 + $0x1] sm:$0xff]
      %v1918 = vld [vmem:[%s1832 + $0x9] sm:$0xff]
      %v1919 = vld [vmem:[%s1832 + $0x11] sm:$0xff]
      %v1920 = vld [vmem:[%s1832 + $0x19] sm:$0x3]
      %s1921 = sld [smem:[#allocation3 + $0x16]]
      %v1922 = vstv %s1921
      %v1923 = vmul.f32 %v1917, %v1922
      %v1924 = vmul.f32 %v1918, %v1922
      %v1925 = vmul.f32 %v1919, %v1922
      %v1926 = vmul.f32 %v1920, %v1922
      %v1927 = vadd.f32 %v1843, %v1923
      %v1928 = vadd.f32 %v1844, %v1924
      %v1929 = vadd.f32 %v1845, %v1925
      %v1930 = vadd.f32 %v1846, %v1926
      %s1931 = sld [smem:[#allocation3 + $0x31]]
      %v1932 = vstv %s1931
      %v1933 = vmul.f32 %v1917, %v1932
      %v1934 = vmul.f32 %v1918, %v1932
      %v1935 = vmul.f32 %v1919, %v1932
      %v1936 = vmul.f32 %v1920, %v1932
      %v1937 = vadd.f32 %v1853, %v1933
      %v1938 = vadd.f32 %v1854, %v1934
      %v1939 = vadd.f32 %v1855, %v1935
      %v1940 = vadd.f32 %v1856, %v1936
      %s1941 = sld [smem:[#allocation3 + $0x4c]]
      %v1942 = vstv %s1941
      %v1943 = vmul.f32 %v1917, %v1942
      %v1944 = vmul.f32 %v1918, %v1942
      %v1945 = vmul.f32 %v1919, %v1942
      %v1946 = vmul.f32 %v1920, %v1942
      %v1947 = vadd.f32 %v1863, %v1943
      %v1948 = vadd.f32 %v1864, %v1944
      %v1949 = vadd.f32 %v1865, %v1945
      %v1950 = vadd.f32 %v1866, %v1946
      %s1951 = sld [smem:[#allocation3 + $0x67]]
      %v1952 = vstv %s1951
      %v1953 = vmul.f32 %v1917, %v1952
      %v1954 = vmul.f32 %v1918, %v1952
      %v1955 = vmul.f32 %v1919, %v1952
      %v1956 = vmul.f32 %v1920, %v1952
      %v1957 = vadd.f32 %v1873, %v1953
      %v1958 = vadd.f32 %v1874, %v1954
      %v1959 = vadd.f32 %v1875, %v1955
      %v1960 = vadd.f32 %v1876, %v1956
      %s1961 = sld [smem:[#allocation3 + $0x82]]
      %v1962 = vstv %s1961
      %v1963 = vmul.f32 %v1917, %v1962
      %v1964 = vmul.f32 %v1918, %v1962
      %v1965 = vmul.f32 %v1919, %v1962
      %v1966 = vmul.f32 %v1920, %v1962
      %v1967 = vadd.f32 %v1883, %v1963
      %v1968 = vadd.f32 %v1884, %v1964
      %v1969 = vadd.f32 %v1885, %v1965
      %v1970 = vadd.f32 %v1886, %v1966
      %s1971 = sld [smem:[#allocation3 + $0x9d]]
      %v1972 = vstv %s1971
      %v1973 = vmul.f32 %v1917, %v1972
      %v1974 = vmul.f32 %v1918, %v1972
      %v1975 = vmul.f32 %v1919, %v1972
      %v1976 = vmul.f32 %v1920, %v1972
      %v1977 = vadd.f32 %v1893, %v1973
      %v1978 = vadd.f32 %v1894, %v1974
      %v1979 = vadd.f32 %v1895, %v1975
      %v1980 = vadd.f32 %v1896, %v1976
      %s1981 = sld [smem:[#allocation3 + $0xb8]]
      %v1982 = vstv %s1981
      %v1983 = vmul.f32 %v1917, %v1982
      %v1984 = vmul.f32 %v1918, %v1982
      %v1985 = vmul.f32 %v1919, %v1982
      %v1986 = vmul.f32 %v1920, %v1982
      %v1987 = vadd.f32 %v1903, %v1983
      %v1988 = vadd.f32 %v1904, %v1984
      %v1989 = vadd.f32 %v1905, %v1985
      %v1990 = vadd.f32 %v1906, %v1986
      %s1991 = sld [smem:[#allocation3 + $0xd3]]
      %v1992 = vstv %s1991
      %v1993 = vmul.f32 %v1917, %v1992
      %v1994 = vmul.f32 %v1918, %v1992
      %v1995 = vmul.f32 %v1919, %v1992
      %v1996 = vmul.f32 %v1920, %v1992
      %v1997 = vadd.f32 %v1913, %v1993
      %v1998 = vadd.f32 %v1914, %v1994
      %v1999 = vadd.f32 %v1915, %v1995
      %v2000 = vadd.f32 %v1916, %v1996
      %v2001 = vld [vmem:[%s1832 + $0x2] sm:$0xff]
      %v2002 = vld [vmem:[%s1832 + $0xa] sm:$0xff]
      %v2003 = vld [vmem:[%s1832 + $0x12] sm:$0xff]
      %v2004 = vld [vmem:[%s1832 + $0x1a] sm:$0x3]
      %s2005 = sld [smem:[#allocation3 + $0x17]]
      %v2006 = vstv %s2005
      %v2007 = vmul.f32 %v2001, %v2006
      %v2008 = vmul.f32 %v2002, %v2006
      %v2009 = vmul.f32 %v2003, %v2006
      %v2010 = vmul.f32 %v2004, %v2006
      %v2011 = vadd.f32 %v1927, %v2007
      %v2012 = vadd.f32 %v1928, %v2008
      %v2013 = vadd.f32 %v1929, %v2009
      %v2014 = vadd.f32 %v1930, %v2010
      %s2015 = sld [smem:[#allocation3 + $0x32]]
      %v2016 = vstv %s2015
      %v2017 = vmul.f32 %v2001, %v2016
      %v2018 = vmul.f32 %v2002, %v2016
      %v2019 = vmul.f32 %v2003, %v2016
      %v2020 = vmul.f32 %v2004, %v2016
      %v2021 = vadd.f32 %v1937, %v2017
      %v2022 = vadd.f32 %v1938, %v2018
      %v2023 = vadd.f32 %v1939, %v2019
      %v2024 = vadd.f32 %v1940, %v2020
      %s2025 = sld [smem:[#allocation3 + $0x4d]]
      %v2026 = vstv %s2025
      %v2027 = vmul.f32 %v2001, %v2026
      %v2028 = vmul.f32 %v2002, %v2026
      %v2029 = vmul.f32 %v2003, %v2026
      %v2030 = vmul.f32 %v2004, %v2026
      %v2031 = vadd.f32 %v1947, %v2027
      %v2032 = vadd.f32 %v1948, %v2028
      %v2033 = vadd.f32 %v1949, %v2029
      %v2034 = vadd.f32 %v1950, %v2030
      %s2035 = sld [smem:[#allocation3 + $0x68]]
      %v2036 = vstv %s2035
      %v2037 = vmul.f32 %v2001, %v2036
      %v2038 = vmul.f32 %v2002, %v2036
      %v2039 = vmul.f32 %v2003, %v2036
      %v2040 = vmul.f32 %v2004, %v2036
      %v2041 = vadd.f32 %v1957, %v2037
      %v2042 = vadd.f32 %v1958, %v2038
      %v2043 = vadd.f32 %v1959, %v2039
      %v2044 = vadd.f32 %v1960, %v2040
      %s2045 = sld [smem:[#allocation3 + $0x83]]
      %v2046 = vstv %s2045
      %v2047 = vmul.f32 %v2001, %v2046
      %v2048 = vmul.f32 %v2002, %v2046
      %v2049 = vmul.f32 %v2003, %v2046
      %v2050 = vmul.f32 %v2004, %v2046
      %v2051 = vadd.f32 %v1967, %v2047
      %v2052 = vadd.f32 %v1968, %v2048
      %v2053 = vadd.f32 %v1969, %v2049
      %v2054 = vadd.f32 %v1970, %v2050
      %s2055 = sld [smem:[#allocation3 + $0x9e]]
      %v2056 = vstv %s2055
      %v2057 = vmul.f32 %v2001, %v2056
      %v2058 = vmul.f32 %v2002, %v2056
      %v2059 = vmul.f32 %v2003, %v2056
      %v2060 = vmul.f32 %v2004, %v2056
      %v2061 = vadd.f32 %v1977, %v2057
      %v2062 = vadd.f32 %v1978, %v2058
      %v2063 = vadd.f32 %v1979, %v2059
      %v2064 = vadd.f32 %v1980, %v2060
      %s2065 = sld [smem:[#allocation3 + $0xb9]]
      %v2066 = vstv %s2065
      %v2067 = vmul.f32 %v2001, %v2066
      %v2068 = vmul.f32 %v2002, %v2066
      %v2069 = vmul.f32 %v2003, %v2066
      %v2070 = vmul.f32 %v2004, %v2066
      %v2071 = vadd.f32 %v1987, %v2067
      %v2072 = vadd.f32 %v1988, %v2068
      %v2073 = vadd.f32 %v1989, %v2069
      %v2074 = vadd.f32 %v1990, %v2070
      %s2075 = sld [smem:[#allocation3 + $0xd4]]
      %v2076 = vstv %s2075
      %v2077 = vmul.f32 %v2001, %v2076
      %v2078 = vmul.f32 %v2002, %v2076
      %v2079 = vmul.f32 %v2003, %v2076
      %v2080 = vmul.f32 %v2004, %v2076
      %v2081 = vadd.f32 %v1997, %v2077
      %v2082 = vadd.f32 %v1998, %v2078
      %v2083 = vadd.f32 %v1999, %v2079
      %v2084 = vadd.f32 %v2000, %v2080
      %s2085 = sadd.s32 %s561, 1792
      %s2086 = scalar_lea.vmem %s0, %s2085
      %v2087 = vld [vmem:[%s2086] sm:$0xff]
      %v2088 = vld [vmem:[%s2086 + $0x8] sm:$0xff]
      %v2089 = vld [vmem:[%s2086 + $0x10] sm:$0xff]
      %v2090 = vld [vmem:[%s2086 + $0x18] sm:$0x3]
      %s2091 = sld [smem:[#allocation3 + $0x18]]
      %v2092 = vstv %s2091
      %v2093 = vmul.f32 %v2087, %v2092
      %v2094 = vmul.f32 %v2088, %v2092
      %v2095 = vmul.f32 %v2089, %v2092
      %v2096 = vmul.f32 %v2090, %v2092
      %v2097 = vadd.f32 %v2011, %v2093
      %v2098 = vadd.f32 %v2012, %v2094
      %v2099 = vadd.f32 %v2013, %v2095
      %v2100 = vadd.f32 %v2014, %v2096
      %s2101 = sld [smem:[#allocation3 + $0x33]]
      %v2102 = vstv %s2101
      %v2103 = vmul.f32 %v2087, %v2102
      %v2104 = vmul.f32 %v2088, %v2102
      %v2105 = vmul.f32 %v2089, %v2102
      %v2106 = vmul.f32 %v2090, %v2102
      %v2107 = vadd.f32 %v2021, %v2103
      %v2108 = vadd.f32 %v2022, %v2104
      %v2109 = vadd.f32 %v2023, %v2105
      %v2110 = vadd.f32 %v2024, %v2106
      %s2111 = sld [smem:[#allocation3 + $0x4e]]
      %v2112 = vstv %s2111
      %v2113 = vmul.f32 %v2087, %v2112
      %v2114 = vmul.f32 %v2088, %v2112
      %v2115 = vmul.f32 %v2089, %v2112
      %v2116 = vmul.f32 %v2090, %v2112
      %v2117 = vadd.f32 %v2031, %v2113
      %v2118 = vadd.f32 %v2032, %v2114
      %v2119 = vadd.f32 %v2033, %v2115
      %v2120 = vadd.f32 %v2034, %v2116
      %s2121 = sld [smem:[#allocation3 + $0x69]]
      %v2122 = vstv %s2121
      %v2123 = vmul.f32 %v2087, %v2122
      %v2124 = vmul.f32 %v2088, %v2122
      %v2125 = vmul.f32 %v2089, %v2122
      %v2126 = vmul.f32 %v2090, %v2122
      %v2127 = vadd.f32 %v2041, %v2123
      %v2128 = vadd.f32 %v2042, %v2124
      %v2129 = vadd.f32 %v2043, %v2125
      %v2130 = vadd.f32 %v2044, %v2126
      %s2131 = sld [smem:[#allocation3 + $0x84]]
      %v2132 = vstv %s2131
      %v2133 = vmul.f32 %v2087, %v2132
      %v2134 = vmul.f32 %v2088, %v2132
      %v2135 = vmul.f32 %v2089, %v2132
      %v2136 = vmul.f32 %v2090, %v2132
      %v2137 = vadd.f32 %v2051, %v2133
      %v2138 = vadd.f32 %v2052, %v2134
      %v2139 = vadd.f32 %v2053, %v2135
      %v2140 = vadd.f32 %v2054, %v2136
      %s2141 = sld [smem:[#allocation3 + $0x9f]]
      %v2142 = vstv %s2141
      %v2143 = vmul.f32 %v2087, %v2142
      %v2144 = vmul.f32 %v2088, %v2142
      %v2145 = vmul.f32 %v2089, %v2142
      %v2146 = vmul.f32 %v2090, %v2142
      %v2147 = vadd.f32 %v2061, %v2143
      %v2148 = vadd.f32 %v2062, %v2144
      %v2149 = vadd.f32 %v2063, %v2145
      %v2150 = vadd.f32 %v2064, %v2146
      %s2151 = sld [smem:[#allocation3 + $0xba]]
      %v2152 = vstv %s2151
      %v2153 = vmul.f32 %v2087, %v2152
      %v2154 = vmul.f32 %v2088, %v2152
      %v2155 = vmul.f32 %v2089, %v2152
      %v2156 = vmul.f32 %v2090, %v2152
      %v2157 = vadd.f32 %v2071, %v2153
      %v2158 = vadd.f32 %v2072, %v2154
      %v2159 = vadd.f32 %v2073, %v2155
      %v2160 = vadd.f32 %v2074, %v2156
      %s2161 = sld [smem:[#allocation3 + $0xd5]]
      %v2162 = vstv %s2161
      %v2163 = vmul.f32 %v2087, %v2162
      %v2164 = vmul.f32 %v2088, %v2162
      %v2165 = vmul.f32 %v2089, %v2162
      %v2166 = vmul.f32 %v2090, %v2162
      %v2167 = vadd.f32 %v2081, %v2163
      %v2168 = vadd.f32 %v2082, %v2164
      %v2169 = vadd.f32 %v2083, %v2165
      %v2170 = vadd.f32 %v2084, %v2166
      %v2171 = vld [vmem:[%s2086 + $0x1] sm:$0xff]
      %v2172 = vld [vmem:[%s2086 + $0x9] sm:$0xff]
      %v2173 = vld [vmem:[%s2086 + $0x11] sm:$0xff]
      %v2174 = vld [vmem:[%s2086 + $0x19] sm:$0x3]
      %s2175 = sld [smem:[#allocation3 + $0x19]]
      %v2176 = vstv %s2175
      %v2177 = vmul.f32 %v2171, %v2176
      %v2178 = vmul.f32 %v2172, %v2176
      %v2179 = vmul.f32 %v2173, %v2176
      %v2180 = vmul.f32 %v2174, %v2176
      %v2181 = vadd.f32 %v2097, %v2177
      %v2182 = vadd.f32 %v2098, %v2178
      %v2183 = vadd.f32 %v2099, %v2179
      %v2184 = vadd.f32 %v2100, %v2180
      %s2185 = sld [smem:[#allocation3 + $0x34]]
      %v2186 = vstv %s2185
      %v2187 = vmul.f32 %v2171, %v2186
      %v2188 = vmul.f32 %v2172, %v2186
      %v2189 = vmul.f32 %v2173, %v2186
      %v2190 = vmul.f32 %v2174, %v2186
      %v2191 = vadd.f32 %v2107, %v2187
      %v2192 = vadd.f32 %v2108, %v2188
      %v2193 = vadd.f32 %v2109, %v2189
      %v2194 = vadd.f32 %v2110, %v2190
      %s2195 = sld [smem:[#allocation3 + $0x4f]]
      %v2196 = vstv %s2195
      %v2197 = vmul.f32 %v2171, %v2196
      %v2198 = vmul.f32 %v2172, %v2196
      %v2199 = vmul.f32 %v2173, %v2196
      %v2200 = vmul.f32 %v2174, %v2196
      %v2201 = vadd.f32 %v2117, %v2197
      %v2202 = vadd.f32 %v2118, %v2198
      %v2203 = vadd.f32 %v2119, %v2199
      %v2204 = vadd.f32 %v2120, %v2200
      %s2205 = sld [smem:[#allocation3 + $0x6a]]
      %v2206 = vstv %s2205
      %v2207 = vmul.f32 %v2171, %v2206
      %v2208 = vmul.f32 %v2172, %v2206
      %v2209 = vmul.f32 %v2173, %v2206
      %v2210 = vmul.f32 %v2174, %v2206
      %v2211 = vadd.f32 %v2127, %v2207
      %v2212 = vadd.f32 %v2128, %v2208
      %v2213 = vadd.f32 %v2129, %v2209
      %v2214 = vadd.f32 %v2130, %v2210
      %s2215 = sld [smem:[#allocation3 + $0x85]]
      %v2216 = vstv %s2215
      %v2217 = vmul.f32 %v2171, %v2216
      %v2218 = vmul.f32 %v2172, %v2216
      %v2219 = vmul.f32 %v2173, %v2216
      %v2220 = vmul.f32 %v2174, %v2216
      %v2221 = vadd.f32 %v2137, %v2217
      %v2222 = vadd.f32 %v2138, %v2218
      %v2223 = vadd.f32 %v2139, %v2219
      %v2224 = vadd.f32 %v2140, %v2220
      %s2225 = sld [smem:[#allocation3 + $0xa0]]
      %v2226 = vstv %s2225
      %v2227 = vmul.f32 %v2171, %v2226
      %v2228 = vmul.f32 %v2172, %v2226
      %v2229 = vmul.f32 %v2173, %v2226
      %v2230 = vmul.f32 %v2174, %v2226
      %v2231 = vadd.f32 %v2147, %v2227
      %v2232 = vadd.f32 %v2148, %v2228
      %v2233 = vadd.f32 %v2149, %v2229
      %v2234 = vadd.f32 %v2150, %v2230
      %s2235 = sld [smem:[#allocation3 + $0xbb]]
      %v2236 = vstv %s2235
      %v2237 = vmul.f32 %v2171, %v2236
      %v2238 = vmul.f32 %v2172, %v2236
      %v2239 = vmul.f32 %v2173, %v2236
      %v2240 = vmul.f32 %v2174, %v2236
      %v2241 = vadd.f32 %v2157, %v2237
      %v2242 = vadd.f32 %v2158, %v2238
      %v2243 = vadd.f32 %v2159, %v2239
      %v2244 = vadd.f32 %v2160, %v2240
      %s2245 = sld [smem:[#allocation3 + $0xd6]]
      %v2246 = vstv %s2245
      %v2247 = vmul.f32 %v2171, %v2246
      %v2248 = vmul.f32 %v2172, %v2246
      %v2249 = vmul.f32 %v2173, %v2246
      %v2250 = vmul.f32 %v2174, %v2246
      %v2251 = vadd.f32 %v2167, %v2247
      %v2252 = vadd.f32 %v2168, %v2248
      %v2253 = vadd.f32 %v2169, %v2249
      %v2254 = vadd.f32 %v2170, %v2250
      %v2255 = vld [vmem:[%s2086 + $0x2] sm:$0xff]
      %v2256 = vld [vmem:[%s2086 + $0xa] sm:$0xff]
      %v2257 = vld [vmem:[%s2086 + $0x12] sm:$0xff]
      %v2258 = vld [vmem:[%s2086 + $0x1a] sm:$0x3]
      %s2259 = sld [smem:[#allocation3 + $0x1a]]
      %v2260 = vstv %s2259
      %v2261 = vmul.f32 %v2255, %v2260
      %v2262 = vmul.f32 %v2256, %v2260
      %v2263 = vmul.f32 %v2257, %v2260
      %v2264 = vmul.f32 %v2258, %v2260
      %v2265 = vadd.f32 %v2181, %v2261
      %v2266 = vadd.f32 %v2182, %v2262
      %v2267 = vadd.f32 %v2183, %v2263
      %v2268 = vadd.f32 %v2184, %v2264
      %s2269 = sld [smem:[#allocation3 + $0x35]]
      %v2270 = vstv %s2269
      %v2271 = vmul.f32 %v2255, %v2270
      %v2272 = vmul.f32 %v2256, %v2270
      %v2273 = vmul.f32 %v2257, %v2270
      %v2274 = vmul.f32 %v2258, %v2270
      %v2275 = vadd.f32 %v2191, %v2271
      %v2276 = vadd.f32 %v2192, %v2272
      %v2277 = vadd.f32 %v2193, %v2273
      %v2278 = vadd.f32 %v2194, %v2274
      %s2279 = sld [smem:[#allocation3 + $0x50]]
      %v2280 = vstv %s2279
      %v2281 = vmul.f32 %v2255, %v2280
      %v2282 = vmul.f32 %v2256, %v2280
      %v2283 = vmul.f32 %v2257, %v2280
      %v2284 = vmul.f32 %v2258, %v2280
      %v2285 = vadd.f32 %v2201, %v2281
      %v2286 = vadd.f32 %v2202, %v2282
      %v2287 = vadd.f32 %v2203, %v2283
      %v2288 = vadd.f32 %v2204, %v2284
      %s2289 = sld [smem:[#allocation3 + $0x6b]]
      %v2290 = vstv %s2289
      %v2291 = vmul.f32 %v2255, %v2290
      %v2292 = vmul.f32 %v2256, %v2290
      %v2293 = vmul.f32 %v2257, %v2290
      %v2294 = vmul.f32 %v2258, %v2290
      %v2295 = vadd.f32 %v2211, %v2291
      %v2296 = vadd.f32 %v2212, %v2292
      %v2297 = vadd.f32 %v2213, %v2293
      %v2298 = vadd.f32 %v2214, %v2294
      %s2299 = sld [smem:[#allocation3 + $0x86]]
      %v2300 = vstv %s2299
      %v2301 = vmul.f32 %v2255, %v2300
      %v2302 = vmul.f32 %v2256, %v2300
      %v2303 = vmul.f32 %v2257, %v2300
      %v2304 = vmul.f32 %v2258, %v2300
      %v2305 = vadd.f32 %v2221, %v2301
      %v2306 = vadd.f32 %v2222, %v2302
      %v2307 = vadd.f32 %v2223, %v2303
      %v2308 = vadd.f32 %v2224, %v2304
      %s2309 = sld [smem:[#allocation3 + $0xa1]]
      %v2310 = vstv %s2309
      %v2311 = vmul.f32 %v2255, %v2310
      %v2312 = vmul.f32 %v2256, %v2310
      %v2313 = vmul.f32 %v2257, %v2310
      %v2314 = vmul.f32 %v2258, %v2310
      %v2315 = vadd.f32 %v2231, %v2311
      %v2316 = vadd.f32 %v2232, %v2312
      %v2317 = vadd.f32 %v2233, %v2313
      %v2318 = vadd.f32 %v2234, %v2314
      %s2319 = sld [smem:[#allocation3 + $0xbc]]
      %v2320 = vstv %s2319
      %v2321 = vmul.f32 %v2255, %v2320
      %v2322 = vmul.f32 %v2256, %v2320
      %v2323 = vmul.f32 %v2257, %v2320
      %v2324 = vmul.f32 %v2258, %v2320
      %v2325 = vadd.f32 %v2241, %v2321
      %v2326 = vadd.f32 %v2242, %v2322
      %v2327 = vadd.f32 %v2243, %v2323
      %v2328 = vadd.f32 %v2244, %v2324
      %s2329 = sld [smem:[#allocation3 + $0xd7]]
      %v2330 = vstv %s2329
      %v2331 = vmul.f32 %v2255, %v2330
      %v2332 = vmul.f32 %v2256, %v2330
      %v2333 = vmul.f32 %v2257, %v2330
      %v2334 = vmul.f32 %v2258, %v2330
      %v2335 = vadd.f32 %v2251, %v2331
      %v2336 = vadd.f32 %v2252, %v2332
      %v2337 = vadd.f32 %v2253, %v2333
      %v2338 = vadd.f32 %v2254, %v2334
      %s2339 = sld [smem:[#allocation5]]
      %v2340 = vstv %s2339
      %v2341 = vadd.f32 %v2265, %v2340
      %v2342 = vadd.f32 %v2266, %v2340
      %v2343 = vadd.f32 %v2267, %v2340
      %v2344 = vadd.f32 %v2268, %v2340
      %v2345 = vmax.f32 %v2341, 0.0
      %v2346 = vmax.f32 %v2342, 0.0
      %v2347 = vmax.f32 %v2343, 0.0
      %v2348 = vmax.f32 %v2344, 0.0
      %s2349 = smul.u32 %s46, 208
      %s2350 = scalar_lea.vmem [#allocation2], %s2349
      %2351 = vst [vmem:[%s2350] sm:$0xff] %v2345
      %2352 = vst [vmem:[%s2350 + $0x8] sm:$0xff] %v2346
      %2353 = vst [vmem:[%s2350 + $0x10] sm:$0xff] %v2347
      %2354 = vst [vmem:[%s2350 + $0x18] sm:$0x3] %v2348
      %s2355 = sld [smem:[#allocation5 + $0x1]]
      %v2356 = vstv %s2355
      %v2357 = vadd.f32 %v2275, %v2356
      %v2358 = vadd.f32 %v2276, %v2356
      %v2359 = vadd.f32 %v2277, %v2356
      %v2360 = vadd.f32 %v2278, %v2356
      %v2361 = vmax.f32 %v2357, 0.0
      %v2362 = vmax.f32 %v2358, 0.0
      %v2363 = vmax.f32 %v2359, 0.0
      %v2364 = vmax.f32 %v2360, 0.0
      %2365 = vst [vmem:[%s2350 + $0x1a] sm:$0xff] %v2361
      %2366 = vst [vmem:[%s2350 + $0x22] sm:$0xff] %v2362
      %2367 = vst [vmem:[%s2350 + $0x2a] sm:$0xff] %v2363
      %2368 = vst [vmem:[%s2350 + $0x32] sm:$0x3] %v2364
      %s2369 = sld [smem:[#allocation5 + $0x2]]
      %v2370 = vstv %s2369
      %v2371 = vadd.f32 %v2285, %v2370
      %v2372 = vadd.f32 %v2286, %v2370
      %v2373 = vadd.f32 %v2287, %v2370
      %v2374 = vadd.f32 %v2288, %v2370
      %v2375 = vmax.f32 %v2371, 0.0
      %v2376 = vmax.f32 %v2372, 0.0
      %v2377 = vmax.f32 %v2373, 0.0
      %v2378 = vmax.f32 %v2374, 0.0
      %2379 = vst [vmem:[%s2350 + $0x34] sm:$0xff] %v2375
      %2380 = vst [vmem:[%s2350 + $0x3c] sm:$0xff] %v2376
      %2381 = vst [vmem:[%s2350 + $0x44] sm:$0xff] %v2377
      %2382 = vst [vmem:[%s2350 + $0x4c] sm:$0x3] %v2378
      %s2383 = sld [smem:[#allocation5 + $0x3]]
      %v2384 = vstv %s2383
      %v2385 = vadd.f32 %v2295, %v2384
      %v2386 = vadd.f32 %v2296, %v2384
      %v2387 = vadd.f32 %v2297, %v2384
      %v2388 = vadd.f32 %v2298, %v2384
      %v2389 = vmax.f32 %v2385, 0.0
      %v2390 = vmax.f32 %v2386, 0.0
      %v2391 = vmax.f32 %v2387, 0.0
      %v2392 = vmax.f32 %v2388, 0.0
      %2393 = vst [vmem:[%s2350 + $0x4e] sm:$0xff] %v2389
      %2394 = vst [vmem:[%s2350 + $0x56] sm:$0xff] %v2390
      %2395 = vst [vmem:[%s2350 + $0x5e] sm:$0xff] %v2391
      %2396 = vst [vmem:[%s2350 + $0x66] sm:$0x3] %v2392
      %s2397 = sld [smem:[#allocation5 + $0x4]]
      %v2398 = vstv %s2397
      %v2399 = vadd.f32 %v2305, %v2398
      %v2400 = vadd.f32 %v2306, %v2398
      %v2401 = vadd.f32 %v2307, %v2398
      %v2402 = vadd.f32 %v2308, %v2398
      %v2403 = vmax.f32 %v2399, 0.0
      %v2404 = vmax.f32 %v2400, 0.0
      %v2405 = vmax.f32 %v2401, 0.0
      %v2406 = vmax.f32 %v2402, 0.0
      %2407 = vst [vmem:[%s2350 + $0x68] sm:$0xff] %v2403
      %2408 = vst [vmem:[%s2350 + $0x70] sm:$0xff] %v2404
      %2409 = vst [vmem:[%s2350 + $0x78] sm:$0xff] %v2405
      %2410 = vst [vmem:[%s2350 + $0x80] sm:$0x3] %v2406
      %s2411 = sld [smem:[#allocation5 + $0x5]]
      %v2412 = vstv %s2411
      %v2413 = vadd.f32 %v2315, %v2412
      %v2414 = vadd.f32 %v2316, %v2412
      %v2415 = vadd.f32 %v2317, %v2412
      %v2416 = vadd.f32 %v2318, %v2412
      %v2417 = vmax.f32 %v2413, 0.0
      %v2418 = vmax.f32 %v2414, 0.0
      %v2419 = vmax.f32 %v2415, 0.0
      %v2420 = vmax.f32 %v2416, 0.0
      %2421 = vst [vmem:[%s2350 + $0x82] sm:$0xff] %v2417
      %2422 = vst [vmem:[%s2350 + $0x8a] sm:$0xff] %v2418
      %2423 = vst [vmem:[%s2350 + $0x92] sm:$0xff] %v2419
      %2424 = vst [vmem:[%s2350 + $0x9a] sm:$0x3] %v2420
      %s2425 = sld [smem:[#allocation5 + $0x6]]
      %v2426 = vstv %s2425
      %v2427 = vadd.f32 %v2325, %v2426
      %v2428 = vadd.f32 %v2326, %v2426
      %v2429 = vadd.f32 %v2327, %v2426
      %v2430 = vadd.f32 %v2328, %v2426
      %v2431 = vmax.f32 %v2427, 0.0
      %v2432 = vmax.f32 %v2428, 0.0
      %v2433 = vmax.f32 %v2429, 0.0
      %v2434 = vmax.f32 %v2430, 0.0
      %2435 = vst [vmem:[%s2350 + $0x9c] sm:$0xff] %v2431
      %2436 = vst [vmem:[%s2350 + $0xa4] sm:$0xff] %v2432
      %2437 = vst [vmem:[%s2350 + $0xac] sm:$0xff] %v2433
      %2438 = vst [vmem:[%s2350 + $0xb4] sm:$0x3] %v2434
      %s2439 = sld [smem:[#allocation5 + $0x7]]
      %v2440 = vstv %s2439
      %v2441 = vadd.f32 %v2335, %v2440
      %v2442 = vadd.f32 %v2336, %v2440
      %v2443 = vadd.f32 %v2337, %v2440
      %v2444 = vadd.f32 %v2338, %v2440
      %v2445 = vmax.f32 %v2441, 0.0
      %v2446 = vmax.f32 %v2442, 0.0
      %v2447 = vmax.f32 %v2443, 0.0
      %v2448 = vmax.f32 %v2444, 0.0
      %2449 = vst [vmem:[%s2350 + $0xb6] sm:$0xff] %v2445
      %2450 = vst [vmem:[%s2350 + $0xbe] sm:$0xff] %v2446
      %2451 = vst [vmem:[%s2350 + $0xc6] sm:$0xff] %v2447
      %2452 = vst [vmem:[%s2350 + $0xce] sm:$0x3] %v2448
    $region34: #{simple_cnn_forward.1} parent=1 // loop_footer
      %s50 = sadd.s32 1, %s46
    $region35: #{simple_cnn_forward.1} parent=1 // loop_footer_branch
      %45 = sbr.rel target = $region31
    $region36: #{simple_cnn_forward.1} parent=1 // loop_exit
      _
    %v2453 = vld [vmem:[#allocation2] sm:$0xff]
    %v2454 = vld [vmem:[#allocation2 + $0x8] sm:$0xff]
    %v2455 = vld [vmem:[#allocation2 + $0x10] sm:$0xff]
    %v2456 = vld [vmem:[#allocation2 + $0x18] sm:$0xff]
    %v2457 = vld [vmem:[#allocation2 + $0x20] sm:$0xff]
    %v2458 = vld [vmem:[#allocation2 + $0x28] sm:$0xff]
    %v2459 = vld [vmem:[#allocation2 + $0x30] sm:$0xff]
    %v2460 = vld [vmem:[#allocation2 + $0x38] sm:$0xff]
    %v2461 = vld [vmem:[#allocation2 + $0x40] sm:$0xff]
    %v2462 = vld [vmem:[#allocation2 + $0x48] sm:$0xff]
    %v2463 = vld [vmem:[#allocation2 + $0x50] sm:$0xff]
    %v2464 = vld [vmem:[#allocation2 + $0x58] sm:$0xff]
    %v2465 = vld [vmem:[#allocation2 + $0x60] sm:$0xff]
    %v2466 = vld [vmem:[#allocation2 + $0x68] sm:$0xff]
    %v2467 = vld [vmem:[#allocation2 + $0x70] sm:$0xff]
    %v2468 = vld [vmem:[#allocation2 + $0x78] sm:$0xff]
    %v2469 = vld [vmem:[#allocation2 + $0x80] sm:$0xff]
    %v2470 = vld [vmem:[#allocation2 + $0x88] sm:$0xff]
    %v2471 = vld [vmem:[#allocation2 + $0x90] sm:$0xff]
    %v2472 = vld [vmem:[#allocation2 + $0x98] sm:$0xff]
    %v2473 = vld [vmem:[#allocation2 + $0xa0] sm:$0xff]
    %v2474 = vld [vmem:[#allocation2 + $0xa8] sm:$0xff]
    %v2475 = vld [vmem:[#allocation2 + $0xb0] sm:$0xff]
    %v2476 = vld [vmem:[#allocation2 + $0xb8] sm:$0xff]
    %v2477 = vld [vmem:[#allocation2 + $0xc0] sm:$0xff]
    %v2478 = vld [vmem:[#allocation2 + $0xc8] sm:$0xff]
    %v2479 = vld [vmem:[#allocation2 + $0xd0] sm:$0xff]
    %v2480 = vld [vmem:[#allocation2 + $0xd8] sm:$0xff]
    %v2481 = vld [vmem:[#allocation2 + $0xe0] sm:$0xff]
    %v2482 = vld [vmem:[#allocation2 + $0xe8] sm:$0xff]
    %v2483 = vld [vmem:[#allocation2 + $0xf0] sm:$0xff]
    %v2484 = vld [vmem:[#allocation2 + $0xf8] sm:$0xff]
    %v2485 = vld [vmem:[#allocation2 + $0x100] sm:$0xff]
    %v2486 = vld [vmem:[#allocation2 + $0x108] sm:$0xff]
    %v2487 = vld [vmem:[#allocation2 + $0x110] sm:$0xff]
    %v2488 = vld [vmem:[#allocation2 + $0x118] sm:$0xff]
    %v2489 = vld [vmem:[#allocation2 + $0x120] sm:$0xff]
    %v2490 = vld [vmem:[#allocation2 + $0x128] sm:$0xff]
    %v2491 = vld [vmem:[#allocation2 + $0x130] sm:$0xff]
    %v2492 = vld [vmem:[#allocation2 + $0x138] sm:$0xff]
    %v2493 = vld [vmem:[#allocation2 + $0x140] sm:$0xff]
    %v2494 = vld [vmem:[#allocation2 + $0x148] sm:$0xff]
    %v2495 = vld [vmem:[#allocation2 + $0x150] sm:$0xff]
    %v2496 = vld [vmem:[#allocation2 + $0x158] sm:$0xff]
    %v2497 = vld [vmem:[#allocation2 + $0x160] sm:$0xff]
    %v2498 = vld [vmem:[#allocation2 + $0x168] sm:$0xff]
    %v2499 = vld [vmem:[#allocation2 + $0x170] sm:$0xff]
    %v2500 = vld [vmem:[#allocation2 + $0x178] sm:$0xff]
    %v2501 = vld [vmem:[#allocation2 + $0x180] sm:$0xff]
    %v2502 = vld [vmem:[#allocation2 + $0x188] sm:$0xff]
    %v2503 = vld [vmem:[#allocation2 + $0x190] sm:$0xff]
    %v2504 = vld [vmem:[#allocation2 + $0x198] sm:$0xff]
    %v2505 = vld [vmem:[#allocation2 + $0x1a0] sm:$0xff]
    %v2506 = vld [vmem:[#allocation2 + $0x1a8] sm:$0xff]
    %v2507 = vld [vmem:[#allocation2 + $0x1b0] sm:$0xff]
    %v2508 = vld [vmem:[#allocation2 + $0x1b8] sm:$0xff]
    %v2509 = vld [vmem:[#allocation2 + $0x1c0] sm:$0xff]
    %v2510 = vld [vmem:[#allocation2 + $0x1c8] sm:$0xff]
    %v2511 = vld [vmem:[#allocation2 + $0x1d0] sm:$0xff]
    %v2512 = vld [vmem:[#allocation2 + $0x1d8] sm:$0xff]
    %v2513 = vld [vmem:[#allocation2 + $0x1e0] sm:$0xff]
    %v2514 = vld [vmem:[#allocation2 + $0x1e8] sm:$0xff]
    %v2515 = vld [vmem:[#allocation2 + $0x1f0] sm:$0xff]
    %v2516 = vld [vmem:[#allocation2 + $0x1f8] sm:$0xff]
    %v2517 = vld [vmem:[#allocation2 + $0x200] sm:$0xff]
    %v2518 = vld [vmem:[#allocation2 + $0x208] sm:$0xff]
    %v2519 = vld [vmem:[#allocation2 + $0x210] sm:$0xff]
    %v2520 = vld [vmem:[#allocation2 + $0x218] sm:$0xff]
    %v2521 = vld [vmem:[#allocation2 + $0x220] sm:$0xff]
    %v2522 = vld [vmem:[#allocation2 + $0x228] sm:$0xff]
    %v2523 = vld [vmem:[#allocation2 + $0x230] sm:$0xff]
    %v2524 = vld [vmem:[#allocation2 + $0x238] sm:$0xff]
    %v2525 = vld [vmem:[#allocation2 + $0x240] sm:$0xff]
    %v2526 = vld [vmem:[#allocation2 + $0x248] sm:$0xff]
    %v2527 = vld [vmem:[#allocation2 + $0x250] sm:$0xff]
    %v2528 = vld [vmem:[#allocation2 + $0x258] sm:$0xff]
    %v2529 = vld [vmem:[#allocation2 + $0x260] sm:$0xff]
    %v2530 = vld [vmem:[#allocation2 + $0x268] sm:$0xff]
    %v2531 = vld [vmem:[#allocation2 + $0x270] sm:$0xff]
    %v2532 = vld [vmem:[#allocation2 + $0x278] sm:$0xff]
    %v2533 = vld [vmem:[#allocation2 + $0x280] sm:$0xff]
    %v2534 = vld [vmem:[#allocation2 + $0x288] sm:$0xff]
    %v2535 = vld [vmem:[#allocation2 + $0x290] sm:$0xff]
    %v2536 = vld [vmem:[#allocation2 + $0x298] sm:$0xff]
    %v2537 = vld [vmem:[#allocation2 + $0x2a0] sm:$0xff]
    %v2538 = vld [vmem:[#allocation2 + $0x2a8] sm:$0xff]
    %v2539 = vld [vmem:[#allocation2 + $0x2b0] sm:$0xff]
    %v2540 = vld [vmem:[#allocation2 + $0x2b8] sm:$0xff]
    %v2541 = vld [vmem:[#allocation2 + $0x2c0] sm:$0xff]
    %v2542 = vld [vmem:[#allocation2 + $0x2c8] sm:$0xff]
    %v2543 = vld [vmem:[#allocation2 + $0x2d0] sm:$0xff]
    %v2544 = vld [vmem:[#allocation2 + $0x2d8] sm:$0xff]
    %v2545 = vld [vmem:[#allocation2 + $0x2e0] sm:$0xff]
    %v2546 = vld [vmem:[#allocation2 + $0x2e8] sm:$0xff]
    %v2547 = vld [vmem:[#allocation2 + $0x2f0] sm:$0xff]
    %v2548 = vld [vmem:[#allocation2 + $0x2f8] sm:$0xff]
    %v2549 = vld [vmem:[#allocation2 + $0x300] sm:$0xff]
    %v2550 = vld [vmem:[#allocation2 + $0x308] sm:$0xff]
    %v2551 = vld [vmem:[#allocation2 + $0x310] sm:$0xff]
    %v2552 = vld [vmem:[#allocation2 + $0x318] sm:$0xff]
    %v2553 = vld [vmem:[#allocation2 + $0x320] sm:$0xff]
    %v2554 = vld [vmem:[#allocation2 + $0x328] sm:$0xff]
    %v2555 = vld [vmem:[#allocation2 + $0x330] sm:$0xff]
    %v2556 = vld [vmem:[#allocation2 + $0x338] sm:$0xff]
    %v2557 = vld [vmem:[#allocation2 + $0x340] sm:$0xff]
    %v2558 = vld [vmem:[#allocation2 + $0x348] sm:$0xff]
    %v2559 = vld [vmem:[#allocation2 + $0x350] sm:$0xff]
    %v2560 = vld [vmem:[#allocation2 + $0x358] sm:$0xff]
    %v2561 = vld [vmem:[#allocation2 + $0x360] sm:$0xff]
    %v2562 = vld [vmem:[#allocation2 + $0x368] sm:$0xff]
    %v2563 = vld [vmem:[#allocation2 + $0x370] sm:$0xff]
    %v2564 = vld [vmem:[#allocation2 + $0x378] sm:$0xff]
    %v2565 = vld [vmem:[#allocation2 + $0x380] sm:$0xff]
    %v2566 = vld [vmem:[#allocation2 + $0x388] sm:$0xff]
    %v2567 = vld [vmem:[#allocation2 + $0x390] sm:$0xff]
    %v2568 = vld [vmem:[#allocation2 + $0x398] sm:$0xff]
    %v2569 = vld [vmem:[#allocation2 + $0x3a0] sm:$0xff]
    %v2570 = vld [vmem:[#allocation2 + $0x3a8] sm:$0xff]
    %v2571 = vld [vmem:[#allocation2 + $0x3b0] sm:$0xff]
    %v2572 = vld [vmem:[#allocation2 + $0x3b8] sm:$0xff]
    %v2573 = vld [vmem:[#allocation2 + $0x3c0] sm:$0xff]
    %v2574 = vld [vmem:[#allocation2 + $0x3c8] sm:$0xff]
    %v2575 = vld [vmem:[#allocation2 + $0x3d0] sm:$0xff]
    %v2576 = vld [vmem:[#allocation2 + $0x3d8] sm:$0xff]
    %v2577 = vld [vmem:[#allocation2 + $0x3e0] sm:$0xff]
    %v2578 = vld [vmem:[#allocation2 + $0x3e8] sm:$0xff]
    %v2579 = vld [vmem:[#allocation2 + $0x3f0] sm:$0xff]
    %v2580 = vld [vmem:[#allocation2 + $0x3f8] sm:$0xff]
    %v2581 = vld [vmem:[#allocation2 + $0x400] sm:$0xff]
    %v2582 = vld [vmem:[#allocation2 + $0x408] sm:$0xff]
    %v2583 = vld [vmem:[#allocation2 + $0x410] sm:$0xff]
    %v2584 = vld [vmem:[#allocation2 + $0x418] sm:$0xff]
    %v2585 = vld [vmem:[#allocation2 + $0x420] sm:$0xff]
    %v2586 = vld [vmem:[#allocation2 + $0x428] sm:$0xff]
    %v2587 = vld [vmem:[#allocation2 + $0x430] sm:$0xff]
    %v2588 = vld [vmem:[#allocation2 + $0x438] sm:$0xff]
    %v2589 = vld [vmem:[#allocation2 + $0x440] sm:$0xff]
    %v2590 = vld [vmem:[#allocation2 + $0x448] sm:$0xff]
    %v2591 = vld [vmem:[#allocation2 + $0x450] sm:$0xff]
    %v2592 = vld [vmem:[#allocation2 + $0x458] sm:$0xff]
    %v2593 = vld [vmem:[#allocation2 + $0x460] sm:$0xff]
    %v2594 = vld [vmem:[#allocation2 + $0x468] sm:$0xff]
    %v2595 = vld [vmem:[#allocation2 + $0x470] sm:$0xff]
    %v2596 = vld [vmem:[#allocation2 + $0x478] sm:$0xff]
    %v2597 = vld [vmem:[#allocation2 + $0x480] sm:$0xff]
    %v2598 = vld [vmem:[#allocation2 + $0x488] sm:$0xff]
    %v2599 = vld [vmem:[#allocation2 + $0x490] sm:$0xff]
    %v2600 = vld [vmem:[#allocation2 + $0x498] sm:$0xff]
    %v2601 = vld [vmem:[#allocation2 + $0x4a0] sm:$0xff]
    %v2602 = vld [vmem:[#allocation2 + $0x4a8] sm:$0xff]
    %v2603 = vld [vmem:[#allocation2 + $0x4b0] sm:$0xff]
    %v2604 = vld [vmem:[#allocation2 + $0x4b8] sm:$0xff]
    %v2605 = vld [vmem:[#allocation2 + $0x4c0] sm:$0xff]
    %v2606 = vld [vmem:[#allocation2 + $0x4c8] sm:$0xff]
    %v2607 = vld [vmem:[#allocation2 + $0x4d0] sm:$0xff]
    %v2608 = vld [vmem:[#allocation2 + $0x4d8] sm:$0xff]
    %v2609 = vld [vmem:[#allocation2 + $0x4e0] sm:$0xff]
    %v2610 = vld [vmem:[#allocation2 + $0x4e8] sm:$0xff]
    %v2611 = vld [vmem:[#allocation2 + $0x4f0] sm:$0xff]
    %v2612 = vld [vmem:[#allocation2 + $0x4f8] sm:$0xff]
    %v2613 = vld [vmem:[#allocation2 + $0x500] sm:$0xff]
    %v2614 = vld [vmem:[#allocation2 + $0x508] sm:$0xff]
    %v2615 = vld [vmem:[#allocation2 + $0x510] sm:$0xff]
    %v2616 = vld [vmem:[#allocation2 + $0x518] sm:$0xff]
    %v2617 = vld [vmem:[#allocation2 + $0x520] sm:$0xff]
    %v2618 = vld [vmem:[#allocation2 + $0x528] sm:$0xff]
    %v2619 = vld [vmem:[#allocation2 + $0x530] sm:$0xff]
    %v2620 = vld [vmem:[#allocation2 + $0x538] sm:$0xff]
    %v2621 = vld [vmem:[#allocation2 + $0x540] sm:$0xff]
    %v2622 = vld [vmem:[#allocation2 + $0x548] sm:$0xff]
    %v2623 = vld [vmem:[#allocation2 + $0x550] sm:$0xff]
    %v2624 = vld [vmem:[#allocation2 + $0x558] sm:$0xff]
    %v2625 = vld [vmem:[#allocation2 + $0x560] sm:$0xff]
    %v2626 = vld [vmem:[#allocation2 + $0x568] sm:$0xff]
    %v2627 = vld [vmem:[#allocation2 + $0x570] sm:$0xff]
    %v2628 = vld [vmem:[#allocation2 + $0x578] sm:$0xff]
    %v2629 = vld [vmem:[#allocation2 + $0x580] sm:$0xff]
    %v2630 = vld [vmem:[#allocation2 + $0x588] sm:$0xff]
    %v2631 = vld [vmem:[#allocation2 + $0x590] sm:$0xff]
    %v2632 = vld [vmem:[#allocation2 + $0x598] sm:$0xff]
    %v2633 = vld [vmem:[#allocation2 + $0x5a0] sm:$0xff]
    %v2634 = vld [vmem:[#allocation2 + $0x5a8] sm:$0xff]
    %v2635 = vld [vmem:[#allocation2 + $0x5b0] sm:$0xff]
    %v2636 = vld [vmem:[#allocation2 + $0x5b8] sm:$0xff]
    %v2637 = vld [vmem:[#allocation2 + $0x5c0] sm:$0xff]
    %v2638 = vld [vmem:[#allocation2 + $0x5c8] sm:$0xff]
    %v2639 = vld [vmem:[#allocation2 + $0x5d0] sm:$0xff]
    %v2640 = vld [vmem:[#allocation2 + $0x5d8] sm:$0xff]
    %v2641 = vld [vmem:[#allocation2 + $0x5e0] sm:$0xff]
    %v2642 = vld [vmem:[#allocation2 + $0x5e8] sm:$0xff]
    %v2643 = vld [vmem:[#allocation2 + $0x5f0] sm:$0xff]
    %v2644 = vld [vmem:[#allocation2 + $0x5f8] sm:$0xff]
    %v2645 = vld [vmem:[#allocation2 + $0x600] sm:$0xff]
    %v2646 = vld [vmem:[#allocation2 + $0x608] sm:$0xff]
    %v2647 = vld [vmem:[#allocation2 + $0x610] sm:$0xff]
    %v2648 = vld [vmem:[#allocation2 + $0x618] sm:$0xff]
    %v2649 = vld [vmem:[#allocation2 + $0x620] sm:$0xff]
    %v2650 = vld [vmem:[#allocation2 + $0x628] sm:$0xff]
    %v2651 = vld [vmem:[#allocation2 + $0x630] sm:$0xff]
    %v2652 = vld [vmem:[#allocation2 + $0x638] sm:$0xff]
    %v2653 = vld [vmem:[#allocation2 + $0x640] sm:$0xff]
    %v2654 = vld [vmem:[#allocation2 + $0x648] sm:$0xff]
    %v2655 = vld [vmem:[#allocation2 + $0x650] sm:$0xff]
    %v2656 = vld [vmem:[#allocation2 + $0x658] sm:$0xff]
    %v2657 = vld [vmem:[#allocation2 + $0x660] sm:$0xff]
    %v2658 = vld [vmem:[#allocation2 + $0x668] sm:$0xff]
    %v2659 = vld [vmem:[#allocation2 + $0x670] sm:$0xff]
    %v2660 = vld [vmem:[#allocation2 + $0x678] sm:$0xff]
    %v2661 = vld [vmem:[#allocation2 + $0x680] sm:$0xff]
    %v2662 = vld [vmem:[#allocation2 + $0x688] sm:$0xff]
    %v2663 = vld [vmem:[#allocation2 + $0x690] sm:$0xff]
    %v2664 = vld [vmem:[#allocation2 + $0x698] sm:$0xff]
    %v2665 = vld [vmem:[#allocation2 + $0x6a0] sm:$0xff]
    %v2666 = vld [vmem:[#allocation2 + $0x6a8] sm:$0xff]
    %v2667 = vld [vmem:[#allocation2 + $0x6b0] sm:$0xff]
    %v2668 = vld [vmem:[#allocation2 + $0x6b8] sm:$0xff]
    %v2669 = vld [vmem:[#allocation2 + $0x6c0] sm:$0xff]
    %v2670 = vld [vmem:[#allocation2 + $0x6c8] sm:$0xff]
    %v2671 = vld [vmem:[#allocation2 + $0x6d0] sm:$0xff]
    %v2672 = vld [vmem:[#allocation2 + $0x6d8] sm:$0xff]
    %v2673 = vld [vmem:[#allocation2 + $0x6e0] sm:$0xff]
    %v2674 = vld [vmem:[#allocation2 + $0x6e8] sm:$0xff]
    %v2675 = vld [vmem:[#allocation2 + $0x6f0] sm:$0xff]
    %v2676 = vld [vmem:[#allocation2 + $0x6f8] sm:$0xff]
    %v2677 = vld [vmem:[#allocation2 + $0x700] sm:$0xff]
    %v2678 = vld [vmem:[#allocation2 + $0x708] sm:$0xff]
    %v2679 = vld [vmem:[#allocation2 + $0x710] sm:$0xff]
    %v2680 = vld [vmem:[#allocation2 + $0x718] sm:$0xff]
    %v2681 = vld [vmem:[#allocation2 + $0x720] sm:$0xff]
    %v2682 = vld [vmem:[#allocation2 + $0x728] sm:$0xff]
    %v2683 = vld [vmem:[#allocation2 + $0x730] sm:$0xff]
    %v2684 = vld [vmem:[#allocation2 + $0x738] sm:$0xff]
    %v2685 = vld [vmem:[#allocation2 + $0x740] sm:$0xff]
    %v2686 = vld [vmem:[#allocation2 + $0x748] sm:$0xff]
    %v2687 = vld [vmem:[#allocation2 + $0x750] sm:$0xff]
    %v2688 = vld [vmem:[#allocation2 + $0x758] sm:$0xff]
    %v2689 = vld [vmem:[#allocation2 + $0x760] sm:$0xff]
    %v2690 = vld [vmem:[#allocation2 + $0x768] sm:$0xff]
    %v2691 = vld [vmem:[#allocation2 + $0x770] sm:$0xff]
    %v2692 = vld [vmem:[#allocation2 + $0x778] sm:$0xff]
    %v2693 = vld [vmem:[#allocation2 + $0x780] sm:$0xff]
    %v2694 = vld [vmem:[#allocation2 + $0x788] sm:$0xff]
    %v2695 = vld [vmem:[#allocation2 + $0x790] sm:$0xff]
    %v2696 = vld [vmem:[#allocation2 + $0x798] sm:$0xff]
    %v2697 = vld [vmem:[#allocation2 + $0x7a0] sm:$0xff]
    %v2698 = vld [vmem:[#allocation2 + $0x7a8] sm:$0xff]
    %v2699 = vld [vmem:[#allocation2 + $0x7b0] sm:$0xff]
    %v2700 = vld [vmem:[#allocation2 + $0x7b8] sm:$0xff]
    %v2701 = vld [vmem:[#allocation2 + $0x7c0] sm:$0xff]
    %v2702 = vld [vmem:[#allocation2 + $0x7c8] sm:$0xff]
    %v2703 = vld [vmem:[#allocation2 + $0x7d0] sm:$0xff]
    %v2704 = vld [vmem:[#allocation2 + $0x7d8] sm:$0xff]
    %v2705 = vld [vmem:[#allocation2 + $0x7e0] sm:$0xff]
    %v2706 = vld [vmem:[#allocation2 + $0x7e8] sm:$0xff]
    %v2707 = vld [vmem:[#allocation2 + $0x7f0] sm:$0xff]
    %v2708 = vld [vmem:[#allocation2 + $0x7f8] sm:$0xff]
    %v2709 = vld [vmem:[#allocation2 + $0x800] sm:$0xff]
    %v2710 = vld [vmem:[#allocation2 + $0x808] sm:$0xff]
    %v2711 = vld [vmem:[#allocation2 + $0x810] sm:$0xff]
    %v2712 = vld [vmem:[#allocation2 + $0x818] sm:$0xff]
    %v2713 = vld [vmem:[#allocation2 + $0x820] sm:$0xff]
    %v2714 = vld [vmem:[#allocation2 + $0x828] sm:$0xff]
    %v2715 = vld [vmem:[#allocation2 + $0x830] sm:$0xff]
    %v2716 = vld [vmem:[#allocation2 + $0x838] sm:$0xff]
    %v2717 = vld [vmem:[#allocation2 + $0x840] sm:$0xff]
    %v2718 = vld [vmem:[#allocation2 + $0x848] sm:$0xff]
    %v2719 = vld [vmem:[#allocation2 + $0x850] sm:$0xff]
    %v2720 = vld [vmem:[#allocation2 + $0x858] sm:$0xff]
    %v2721 = vld [vmem:[#allocation2 + $0x860] sm:$0xff]
    %v2722 = vld [vmem:[#allocation2 + $0x868] sm:$0xff]
    %v2723 = vld [vmem:[#allocation2 + $0x870] sm:$0xff]
    %v2724 = vld [vmem:[#allocation2 + $0x878] sm:$0xff]
    %v2725 = vld [vmem:[#allocation2 + $0x880] sm:$0xff]
    %v2726 = vld [vmem:[#allocation2 + $0x888] sm:$0xff]
    %v2727 = vld [vmem:[#allocation2 + $0x890] sm:$0xff]
    %v2728 = vld [vmem:[#allocation2 + $0x898] sm:$0xff]
    %v2729 = vld [vmem:[#allocation2 + $0x8a0] sm:$0xff]
    %v2730 = vld [vmem:[#allocation2 + $0x8a8] sm:$0xff]
    %v2731 = vld [vmem:[#allocation2 + $0x8b0] sm:$0xff]
    %v2732 = vld [vmem:[#allocation2 + $0x8b8] sm:$0xff]
    %v2733 = vld [vmem:[#allocation2 + $0x8c0] sm:$0xff]
    %v2734 = vld [vmem:[#allocation2 + $0x8c8] sm:$0xff]
    %v2735 = vld [vmem:[#allocation2 + $0x8d0] sm:$0xff]
    %v2736 = vld [vmem:[#allocation2 + $0x8d8] sm:$0xff]
    %v2737 = vld [vmem:[#allocation2 + $0x8e0] sm:$0xff]
    %v2738 = vld [vmem:[#allocation2 + $0x8e8] sm:$0xff]
    %v2739 = vld [vmem:[#allocation2 + $0x8f0] sm:$0xff]
    %v2740 = vld [vmem:[#allocation2 + $0x8f8] sm:$0xff]
    %v2741 = vld [vmem:[#allocation2 + $0x900] sm:$0xff]
    %v2742 = vld [vmem:[#allocation2 + $0x908] sm:$0xff]
    %v2743 = vld [vmem:[#allocation2 + $0x910] sm:$0xff]
    %v2744 = vld [vmem:[#allocation2 + $0x918] sm:$0xff]
    %v2745 = vld [vmem:[#allocation2 + $0x920] sm:$0xff]
    %v2746 = vld [vmem:[#allocation2 + $0x928] sm:$0xff]
    %v2747 = vld [vmem:[#allocation2 + $0x930] sm:$0xff]
    %v2748 = vld [vmem:[#allocation2 + $0x938] sm:$0xff]
    %v2749 = vld [vmem:[#allocation2 + $0x940] sm:$0xff]
    %v2750 = vld [vmem:[#allocation2 + $0x948] sm:$0xff]
    %v2751 = vld [vmem:[#allocation2 + $0x950] sm:$0xff]
    %v2752 = vld [vmem:[#allocation2 + $0x958] sm:$0xff]
    %v2753 = vld [vmem:[#allocation2 + $0x960] sm:$0xff]
    %v2754 = vld [vmem:[#allocation2 + $0x968] sm:$0xff]
    %v2755 = vld [vmem:[#allocation2 + $0x970] sm:$0xff]
    %v2756 = vld [vmem:[#allocation2 + $0x978] sm:$0xff]
    %v2757 = vld [vmem:[#allocation2 + $0x980] sm:$0xff]
    %v2758 = vld [vmem:[#allocation2 + $0x988] sm:$0xff]
    %v2759 = vld [vmem:[#allocation2 + $0x990] sm:$0xff]
    %v2760 = vld [vmem:[#allocation2 + $0x998] sm:$0xff]
    %v2761 = vld [vmem:[#allocation2 + $0x9a0] sm:$0xff]
    %v2762 = vld [vmem:[#allocation2 + $0x9a8] sm:$0xff]
    %v2763 = vld [vmem:[#allocation2 + $0x9b0] sm:$0xff]
    %v2764 = vld [vmem:[#allocation2 + $0x9b8] sm:$0xff]
    %v2765 = vld [vmem:[#allocation2 + $0x9c0] sm:$0xff]
    %v2766 = vld [vmem:[#allocation2 + $0x9c8] sm:$0xff]
    %v2767 = vld [vmem:[#allocation2 + $0x9d0] sm:$0xff]
    %v2768 = vld [vmem:[#allocation2 + $0x9d8] sm:$0xff]
    %v2769 = vld [vmem:[#allocation2 + $0x9e0] sm:$0xff]
    %v2770 = vld [vmem:[#allocation2 + $0x9e8] sm:$0xff]
    %v2771 = vld [vmem:[#allocation2 + $0x9f0] sm:$0xff]
    %v2772 = vld [vmem:[#allocation2 + $0x9f8] sm:$0xff]
    %v2773 = vld [vmem:[#allocation2 + $0xa00] sm:$0xff]
    %v2774 = vld [vmem:[#allocation2 + $0xa08] sm:$0xff]
    %v2775 = vld [vmem:[#allocation2 + $0xa10] sm:$0xff]
    %v2776 = vld [vmem:[#allocation2 + $0xa18] sm:$0xff]
    %v2777 = vld [vmem:[#allocation2 + $0xa20] sm:$0xff]
    %v2778 = vld [vmem:[#allocation2 + $0xa28] sm:$0xff]
    %v2779 = vld [vmem:[#allocation2 + $0xa30] sm:$0xff]
    %v2780 = vld [vmem:[#allocation2 + $0xa38] sm:$0xff]
    %v2781 = vld [vmem:[#allocation2 + $0xa40] sm:$0xff]
    %v2782 = vld [vmem:[#allocation2 + $0xa48] sm:$0xff]
    %v2783 = vld [vmem:[#allocation2 + $0xa50] sm:$0xff]
    %v2784 = vld [vmem:[#allocation2 + $0xa58] sm:$0xff]
    %v2785 = vld [vmem:[#allocation2 + $0xa60] sm:$0xff]
    %v2786 = vld [vmem:[#allocation2 + $0xa68] sm:$0xff]
    %v2787 = vld [vmem:[#allocation2 + $0xa70] sm:$0xff]
    %v2788 = vld [vmem:[#allocation2 + $0xa78] sm:$0xff]
    %v2789 = vld [vmem:[#allocation2 + $0xa80] sm:$0xff]
    %v2790 = vld [vmem:[#allocation2 + $0xa88] sm:$0xff]
    %v2791 = vld [vmem:[#allocation2 + $0xa90] sm:$0xff]
    %v2792 = vld [vmem:[#allocation2 + $0xa98] sm:$0xff]
    %v2793 = vld [vmem:[#allocation2 + $0xaa0] sm:$0xff]
    %v2794 = vld [vmem:[#allocation2 + $0xaa8] sm:$0xff]
    %v2795 = vld [vmem:[#allocation2 + $0xab0] sm:$0xff]
    %v2796 = vld [vmem:[#allocation2 + $0xab8] sm:$0xff]
    %v2797 = vld [vmem:[#allocation2 + $0xac0] sm:$0xff]
    %v2798 = vld [vmem:[#allocation2 + $0xac8] sm:$0xff]
    %v2799 = vld [vmem:[#allocation2 + $0xad0] sm:$0xff]
    %v2800 = vld [vmem:[#allocation2 + $0xad8] sm:$0xff]
    %v2801 = vld [vmem:[#allocation2 + $0xae0] sm:$0xff]
    %v2802 = vld [vmem:[#allocation2 + $0xae8] sm:$0xff]
    %v2803 = vld [vmem:[#allocation2 + $0xaf0] sm:$0xff]
    %v2804 = vld [vmem:[#allocation2 + $0xaf8] sm:$0xff]
    %v2805 = vld [vmem:[#allocation2 + $0xb00] sm:$0xff]
    %v2806 = vld [vmem:[#allocation2 + $0xb08] sm:$0xff]
    %v2807 = vld [vmem:[#allocation2 + $0xb10] sm:$0xff]
    %v2808 = vld [vmem:[#allocation2 + $0xb18] sm:$0xff]
    %v2809 = vld [vmem:[#allocation2 + $0xb20] sm:$0xff]
    %v2810 = vld [vmem:[#allocation2 + $0xb28] sm:$0xff]
    %v2811 = vld [vmem:[#allocation2 + $0xb30] sm:$0xff]
    %v2812 = vld [vmem:[#allocation2 + $0xb38] sm:$0xff]
    %v2813 = vld [vmem:[#allocation2 + $0xb40] sm:$0xff]
    %v2814 = vld [vmem:[#allocation2 + $0xb48] sm:$0xff]
    %v2815 = vld [vmem:[#allocation2 + $0xb50] sm:$0xff]
    %v2816 = vld [vmem:[#allocation2 + $0xb58] sm:$0xff]
    %v2817 = vld [vmem:[#allocation2 + $0xb60] sm:$0xff]
    %v2818 = vld [vmem:[#allocation2 + $0xb68] sm:$0xff]
    %v2819 = vld [vmem:[#allocation2 + $0xb70] sm:$0xff]
    %v2820 = vld [vmem:[#allocation2 + $0xb78] sm:$0xff]
    %v2821 = vld [vmem:[#allocation2 + $0xb80] sm:$0xff]
    %v2822 = vld [vmem:[#allocation2 + $0xb88] sm:$0xff]
    %v2823 = vld [vmem:[#allocation2 + $0xb90] sm:$0xff]
    %v2824 = vld [vmem:[#allocation2 + $0xb98] sm:$0xff]
    %v2825 = vld [vmem:[#allocation2 + $0xba0] sm:$0xff]
    %v2826 = vld [vmem:[#allocation2 + $0xba8] sm:$0xff]
    %v2827 = vld [vmem:[#allocation2 + $0xbb0] sm:$0xff]
    %v2828 = vld [vmem:[#allocation2 + $0xbb8] sm:$0xff]
    %v2829 = vld [vmem:[#allocation2 + $0xbc0] sm:$0xff]
    %v2830 = vld [vmem:[#allocation2 + $0xbc8] sm:$0xff]
    %v2831 = vld [vmem:[#allocation2 + $0xbd0] sm:$0xff]
    %v2832 = vld [vmem:[#allocation2 + $0xbd8] sm:$0xff]
    %v2833 = vld [vmem:[#allocation2 + $0xbe0] sm:$0xff]
    %v2834 = vld [vmem:[#allocation2 + $0xbe8] sm:$0xff]
    %v2835 = vld [vmem:[#allocation2 + $0xbf0] sm:$0xff]
    %v2836 = vld [vmem:[#allocation2 + $0xbf8] sm:$0xff]
    %v2837 = vld [vmem:[#allocation2 + $0xc00] sm:$0xff]
    %v2838 = vld [vmem:[#allocation2 + $0xc08] sm:$0xff]
    %v2839 = vld [vmem:[#allocation2 + $0xc10] sm:$0xff]
    %v2840 = vld [vmem:[#allocation2 + $0xc18] sm:$0xff]
    %v2841 = vld [vmem:[#allocation2 + $0xc20] sm:$0xff]
    %v2842 = vld [vmem:[#allocation2 + $0xc28] sm:$0xff]
    %v2843 = vld [vmem:[#allocation2 + $0xc30] sm:$0xff]
    %v2844 = vld [vmem:[#allocation2 + $0xc38] sm:$0xff]
    %v2845 = vld [vmem:[#allocation2 + $0xc40] sm:$0xff]
    %v2846 = vld [vmem:[#allocation2 + $0xc48] sm:$0xff]
    %v2847 = vld [vmem:[#allocation2 + $0xc50] sm:$0xff]
    %v2848 = vld [vmem:[#allocation2 + $0xc58] sm:$0xff]
    %v2849 = vld [vmem:[#allocation2 + $0xc60] sm:$0xff]
    %v2850 = vld [vmem:[#allocation2 + $0xc68] sm:$0xff]
    %v2851 = vld [vmem:[#allocation2 + $0xc70] sm:$0xff]
    %v2852 = vld [vmem:[#allocation2 + $0xc78] sm:$0xff]
    %v2853 = vld [vmem:[#allocation2 + $0xc80] sm:$0xff]
    %v2854 = vld [vmem:[#allocation2 + $0xc88] sm:$0xff]
    %v2855 = vld [vmem:[#allocation2 + $0xc90] sm:$0xff]
    %v2856 = vld [vmem:[#allocation2 + $0xc98] sm:$0xff]
    %v2857 = vld [vmem:[#allocation2 + $0xca0] sm:$0xff]
    %v2858 = vld [vmem:[#allocation2 + $0xca8] sm:$0xff]
    %v2859 = vld [vmem:[#allocation2 + $0xcb0] sm:$0xff]
    %v2860 = vld [vmem:[#allocation2 + $0xcb8] sm:$0xff]
    %v2861 = vld [vmem:[#allocation2 + $0xcc0] sm:$0xff]
    %v2862 = vld [vmem:[#allocation2 + $0xcc8] sm:$0xff]
    %v2863 = vld [vmem:[#allocation2 + $0xcd0] sm:$0xff]
    %v2864 = vld [vmem:[#allocation2 + $0xcd8] sm:$0xff]
    %v2865 = vld [vmem:[#allocation2 + $0xce0] sm:$0xff]
    %v2866 = vld [vmem:[#allocation2 + $0xce8] sm:$0xff]
    %v2867 = vld [vmem:[#allocation2 + $0xcf0] sm:$0xff]
    %v2868 = vld [vmem:[#allocation2 + $0xcf8] sm:$0xff]
    %v2869 = vld [vmem:[#allocation2 + $0xd00] sm:$0xff]
    %v2870 = vld [vmem:[#allocation2 + $0xd08] sm:$0xff]
    %v2871 = vld [vmem:[#allocation2 + $0xd10] sm:$0xff]
    %v2872 = vld [vmem:[#allocation2 + $0xd18] sm:$0xff]
    %v2873 = vld [vmem:[#allocation2 + $0xd20] sm:$0xff]
    %v2874 = vld [vmem:[#allocation2 + $0xd28] sm:$0xff]
    %v2875 = vld [vmem:[#allocation2 + $0xd30] sm:$0xff]
    %v2876 = vld [vmem:[#allocation2 + $0xd38] sm:$0xff]
    %v2877 = vld [vmem:[#allocation2 + $0xd40] sm:$0xff]
    %v2878 = vld [vmem:[#allocation2 + $0xd48] sm:$0xff]
    %v2879 = vld [vmem:[#allocation2 + $0xd50] sm:$0xff]
    %v2880 = vld [vmem:[#allocation2 + $0xd58] sm:$0xff]
    %v2881 = vld [vmem:[#allocation2 + $0xd60] sm:$0xff]
    %v2882 = vld [vmem:[#allocation2 + $0xd68] sm:$0xff]
    %v2883 = vld [vmem:[#allocation2 + $0xd70] sm:$0xff]
    %v2884 = vld [vmem:[#allocation2 + $0xd78] sm:$0xff]
    %v2885 = vld [vmem:[#allocation2 + $0xd80] sm:$0xff]
    %v2886 = vld [vmem:[#allocation2 + $0xd88] sm:$0xff]
    %v2887 = vld [vmem:[#allocation2 + $0xd90] sm:$0xff]
    %v2888 = vld [vmem:[#allocation2 + $0xd98] sm:$0xff]
    %v2889 = vld [vmem:[#allocation2 + $0xda0] sm:$0xff]
    %v2890 = vld [vmem:[#allocation2 + $0xda8] sm:$0xff]
    %v2891 = vld [vmem:[#allocation2 + $0xdb0] sm:$0xff]
    %v2892 = vld [vmem:[#allocation2 + $0xdb8] sm:$0xff]
    %v2893 = vld [vmem:[#allocation2 + $0xdc0] sm:$0xff]
    %v2894 = vld [vmem:[#allocation2 + $0xdc8] sm:$0xff]
    %v2895 = vld [vmem:[#allocation2 + $0xdd0] sm:$0xff]
    %v2896 = vld [vmem:[#allocation2 + $0xdd8] sm:$0xff]
    %v2897 = vld [vmem:[#allocation2 + $0xde0] sm:$0xff]
    %v2898 = vld [vmem:[#allocation2 + $0xde8] sm:$0xff]
    %v2899 = vld [vmem:[#allocation2 + $0xdf0] sm:$0xff]
    %v2900 = vld [vmem:[#allocation2 + $0xdf8] sm:$0xff]
    %v2901 = vld [vmem:[#allocation2 + $0xe00] sm:$0xff]
    %v2902 = vld [vmem:[#allocation2 + $0xe08] sm:$0xff]
    %v2903 = vld [vmem:[#allocation2 + $0xe10] sm:$0xff]
    %v2904 = vld [vmem:[#allocation2 + $0xe18] sm:$0xff]
    %v2905 = vld [vmem:[#allocation2 + $0xe20] sm:$0xff]
    %v2906 = vld [vmem:[#allocation2 + $0xe28] sm:$0xff]
    %v2907 = vld [vmem:[#allocation2 + $0xe30] sm:$0xff]
    %v2908 = vld [vmem:[#allocation2 + $0xe38] sm:$0xff]
    %v2909 = vld [vmem:[#allocation2 + $0xe40] sm:$0xff]
    %v2910 = vld [vmem:[#allocation2 + $0xe48] sm:$0xff]
    %v2911 = vld [vmem:[#allocation2 + $0xe50] sm:$0xff]
    %v2912 = vld [vmem:[#allocation2 + $0xe58] sm:$0xff]
    %v2913 = vld [vmem:[#allocation2 + $0xe60] sm:$0xff]
    %v2914 = vld [vmem:[#allocation2 + $0xe68] sm:$0xff]
    %v2915 = vld [vmem:[#allocation2 + $0xe70] sm:$0xff]
    %v2916 = vld [vmem:[#allocation2 + $0xe78] sm:$0xff]
    %v2917 = vld [vmem:[#allocation2 + $0xe80] sm:$0xff]
    %v2918 = vld [vmem:[#allocation2 + $0xe88] sm:$0xff]
    %v2919 = vld [vmem:[#allocation2 + $0xe90] sm:$0xff]
    %v2920 = vld [vmem:[#allocation2 + $0xe98] sm:$0xff]
    %v2921 = vld [vmem:[#allocation2 + $0xea0] sm:$0xff]
    %v2922 = vld [vmem:[#allocation2 + $0xea8] sm:$0xff]
    %v2923 = vld [vmem:[#allocation2 + $0xeb0] sm:$0xff]
    %v2924 = vld [vmem:[#allocation2 + $0xeb8] sm:$0xff]
    %v2925 = vld [vmem:[#allocation2 + $0xec0] sm:$0xff]
    %v2926 = vld [vmem:[#allocation2 + $0xec8] sm:$0xff]
    %v2927 = vld [vmem:[#allocation2 + $0xed0] sm:$0xff]
    %v2928 = vld [vmem:[#allocation2 + $0xed8] sm:$0xff]
    %v2929 = vld [vmem:[#allocation2 + $0xee0] sm:$0xff]
    %v2930 = vld [vmem:[#allocation2 + $0xee8] sm:$0xff]
    %v2931 = vld [vmem:[#allocation2 + $0xef0] sm:$0xff]
    %v2932 = vld [vmem:[#allocation2 + $0xef8] sm:$0xff]
    %v2933 = vld [vmem:[#allocation2 + $0xf00] sm:$0xff]
    %v2934 = vld [vmem:[#allocation2 + $0xf08] sm:$0xff]
    %v2935 = vld [vmem:[#allocation2 + $0xf10] sm:$0xff]
    %v2936 = vld [vmem:[#allocation2 + $0xf18] sm:$0xff]
    %v2937 = vld [vmem:[#allocation2 + $0xf20] sm:$0xff]
    %v2938 = vld [vmem:[#allocation2 + $0xf28] sm:$0xff]
    %v2939 = vld [vmem:[#allocation2 + $0xf30] sm:$0xff]
    %v2940 = vld [vmem:[#allocation2 + $0xf38] sm:$0xff]
    %v2941 = vld [vmem:[#allocation2 + $0xf40] sm:$0xff]
    %v2942 = vld [vmem:[#allocation2 + $0xf48] sm:$0xff]
    %v2943 = vld [vmem:[#allocation2 + $0xf50] sm:$0xff]
    %v2944 = vld [vmem:[#allocation2 + $0xf58] sm:$0xff]
    %v2945 = vld [vmem:[#allocation2 + $0xf60] sm:$0xff]
    %v2946 = vld [vmem:[#allocation2 + $0xf68] sm:$0xff]
    %v2947 = vld [vmem:[#allocation2 + $0xf70] sm:$0xff]
    %v2948 = vld [vmem:[#allocation2 + $0xf78] sm:$0xff]
    %v2949 = vld [vmem:[#allocation2 + $0xf80] sm:$0xff]
    %v2950 = vld [vmem:[#allocation2 + $0xf88] sm:$0xff]
    %v2951 = vld [vmem:[#allocation2 + $0xf90] sm:$0xff]
    %v2952 = vld [vmem:[#allocation2 + $0xf98] sm:$0xff]
    %v2953 = vld [vmem:[#allocation2 + $0xfa0] sm:$0xff]
    %v2954 = vld [vmem:[#allocation2 + $0xfa8] sm:$0xff]
    %v2955 = vld [vmem:[#allocation2 + $0xfb0] sm:$0xff]
    %v2956 = vld [vmem:[#allocation2 + $0xfb8] sm:$0xff]
    %v2957 = vld [vmem:[#allocation2 + $0xfc0] sm:$0xff]
    %v2958 = vld [vmem:[#allocation2 + $0xfc8] sm:$0xff]
    %v2959 = vld [vmem:[#allocation2 + $0xfd0] sm:$0xff]
    %v2960 = vld [vmem:[#allocation2 + $0xfd8] sm:$0xff]
    %v2961 = vld [vmem:[#allocation2 + $0xfe0] sm:$0xff]
    %v2962 = vld [vmem:[#allocation2 + $0xfe8] sm:$0xff]
    %v2963 = vld [vmem:[#allocation2 + $0xff0] sm:$0xff]
    %v2964 = vld [vmem:[#allocation2 + $0xff8] sm:$0xff]
    %v2965 = vld [vmem:[#allocation2 + $0x1000] sm:$0xff]
    %v2966 = vld [vmem:[#allocation2 + $0x1008] sm:$0xff]
    %v2967 = vld [vmem:[#allocation2 + $0x1010] sm:$0xff]
    %v2968 = vld [vmem:[#allocation2 + $0x1018] sm:$0xff]
    %v2969 = vld [vmem:[#allocation2 + $0x1020] sm:$0xff]
    %v2970 = vld [vmem:[#allocation2 + $0x1028] sm:$0xff]
    %v2971 = vld [vmem:[#allocation2 + $0x1030] sm:$0xff]
    %v2972 = vld [vmem:[#allocation2 + $0x1038] sm:$0xff]
    %v2973 = vld [vmem:[#allocation2 + $0x1040] sm:$0xff]
    %v2974 = vld [vmem:[#allocation2 + $0x1048] sm:$0xff]
    %v2975 = vld [vmem:[#allocation2 + $0x1050] sm:$0xff]
    %v2976 = vld [vmem:[#allocation2 + $0x1058] sm:$0xff]
    %v2977 = vld [vmem:[#allocation2 + $0x1060] sm:$0xff]
    %v2978 = vld [vmem:[#allocation2 + $0x1068] sm:$0xff]
    %v2979 = vld [vmem:[#allocation2 + $0x1070] sm:$0xff]
    %v2980 = vld [vmem:[#allocation2 + $0x1078] sm:$0xff]
    %v2981 = vld [vmem:[#allocation2 + $0x1080] sm:$0xff]
    %v2982 = vld [vmem:[#allocation2 + $0x1088] sm:$0xff]
    %v2983 = vld [vmem:[#allocation2 + $0x1090] sm:$0xff]
    %v2984 = vld [vmem:[#allocation2 + $0x1098] sm:$0xff]
    %v2985 = vld [vmem:[#allocation2 + $0x10a0] sm:$0xff]
    %v2986 = vld [vmem:[#allocation2 + $0x10a8] sm:$0xff]
    %v2987 = vld [vmem:[#allocation2 + $0x10b0] sm:$0xff]
    %v2988 = vld [vmem:[#allocation2 + $0x10b8] sm:$0xff]
    %v2989 = vld [vmem:[#allocation2 + $0x10c0] sm:$0xff]
    %v2990 = vld [vmem:[#allocation2 + $0x10c8] sm:$0xff]
    %v2991 = vld [vmem:[#allocation2 + $0x10d0] sm:$0xff]
    %v2992 = vld [vmem:[#allocation2 + $0x10d8] sm:$0xff]
    %v2993 = vld [vmem:[#allocation2 + $0x10e0] sm:$0xff]
    %v2994 = vld [vmem:[#allocation2 + $0x10e8] sm:$0xff]
    %v2995 = vld [vmem:[#allocation2 + $0x10f0] sm:$0xff]
    %v2996 = vld [vmem:[#allocation2 + $0x10f8] sm:$0xff]
    %v2997 = vld [vmem:[#allocation2 + $0x1100] sm:$0xff]
    %v2998 = vld [vmem:[#allocation2 + $0x1108] sm:$0xff]
    %v2999 = vld [vmem:[#allocation2 + $0x1110] sm:$0xff]
    %v3000 = vld [vmem:[#allocation2 + $0x1118] sm:$0xff]
    %v3001 = vld [vmem:[#allocation2 + $0x1120] sm:$0xff]
    %v3002 = vld [vmem:[#allocation2 + $0x1128] sm:$0xff]
    %v3003 = vld [vmem:[#allocation2 + $0x1130] sm:$0xff]
    %v3004 = vld [vmem:[#allocation2 + $0x1138] sm:$0xff]
    %v3005 = vld [vmem:[#allocation2 + $0x1140] sm:$0xff]
    %v3006 = vld [vmem:[#allocation2 + $0x1148] sm:$0xff]
    %v3007 = vld [vmem:[#allocation2 + $0x1150] sm:$0xff]
    %v3008 = vld [vmem:[#allocation2 + $0x1158] sm:$0xff]
    %v3009 = vld [vmem:[#allocation2 + $0x1160] sm:$0xff]
    %v3010 = vld [vmem:[#allocation2 + $0x1168] sm:$0xff]
    %v3011 = vld [vmem:[#allocation2 + $0x1170] sm:$0xff]
    %v3012 = vld [vmem:[#allocation2 + $0x1178] sm:$0xff]
    %v3013 = vld [vmem:[#allocation2 + $0x1180] sm:$0xff]
    %v3014 = vld [vmem:[#allocation2 + $0x1188] sm:$0xff]
    %v3015 = vld [vmem:[#allocation2 + $0x1190] sm:$0xff]
    %v3016 = vld [vmem:[#allocation2 + $0x1198] sm:$0xff]
    %v3017 = vld [vmem:[#allocation2 + $0x11a0] sm:$0xff]
    %v3018 = vld [vmem:[#allocation2 + $0x11a8] sm:$0xff]
    %v3019 = vld [vmem:[#allocation2 + $0x11b0] sm:$0xff]
    %v3020 = vld [vmem:[#allocation2 + $0x11b8] sm:$0xff]
    %v3021 = vld [vmem:[#allocation2 + $0x11c0] sm:$0xff]
    %v3022 = vld [vmem:[#allocation2 + $0x11c8] sm:$0xff]
    %v3023 = vld [vmem:[#allocation2 + $0x11d0] sm:$0xff]
    %v3024 = vld [vmem:[#allocation2 + $0x11d8] sm:$0xff]
    %v3025 = vld [vmem:[#allocation2 + $0x11e0] sm:$0xff]
    %v3026 = vld [vmem:[#allocation2 + $0x11e8] sm:$0xff]
    %v3027 = vld [vmem:[#allocation2 + $0x11f0] sm:$0xff]
    %v3028 = vld [vmem:[#allocation2 + $0x11f8] sm:$0xff]
    %v3029 = vld [vmem:[#allocation2 + $0x1200] sm:$0xff]
    %v3030 = vld [vmem:[#allocation2 + $0x1208] sm:$0xff]
    %v3031 = vld [vmem:[#allocation2 + $0x1210] sm:$0xff]
    %v3032 = vld [vmem:[#allocation2 + $0x1218] sm:$0xff]
    %v3033 = vld [vmem:[#allocation2 + $0x1220] sm:$0xff]
    %v3034 = vld [vmem:[#allocation2 + $0x1228] sm:$0xff]
    %v3035 = vld [vmem:[#allocation2 + $0x1230] sm:$0xff]
    %v3036 = vld [vmem:[#allocation2 + $0x1238] sm:$0xff]
    %v3037 = vld [vmem:[#allocation2 + $0x1240] sm:$0xff]
    %v3038 = vld [vmem:[#allocation2 + $0x1248] sm:$0xff]
    %v3039 = vld [vmem:[#allocation2 + $0x1250] sm:$0xff]
    %v3040 = vld [vmem:[#allocation2 + $0x1258] sm:$0xff]
    %v3041 = vld [vmem:[#allocation2 + $0x1260] sm:$0xff]
    %v3042 = vld [vmem:[#allocation2 + $0x1268] sm:$0xff]
    %v3043 = vld [vmem:[#allocation2 + $0x1270] sm:$0xff]
    %v3044 = vld [vmem:[#allocation2 + $0x1278] sm:$0xff]
    %v3045 = vld [vmem:[#allocation2 + $0x1280] sm:$0xff]
    %v3046 = vld [vmem:[#allocation2 + $0x1288] sm:$0xff]
    %v3047 = vld [vmem:[#allocation2 + $0x1290] sm:$0xff]
    %v3048 = vld [vmem:[#allocation2 + $0x1298] sm:$0xff]
    %v3049 = vld [vmem:[#allocation2 + $0x12a0] sm:$0xff]
    %v3050 = vld [vmem:[#allocation2 + $0x12a8] sm:$0xff]
    %v3051 = vld [vmem:[#allocation2 + $0x12b0] sm:$0xff]
    %v3052 = vld [vmem:[#allocation2 + $0x12b8] sm:$0xff]
    %v3053 = vld [vmem:[#allocation2 + $0x12c0] sm:$0xff]
    %v3054 = vld [vmem:[#allocation2 + $0x12c8] sm:$0xff]
    %v3055 = vld [vmem:[#allocation2 + $0x12d0] sm:$0xff]
    %v3056 = vld [vmem:[#allocation2 + $0x12d8] sm:$0xff]
    %v3057 = vld [vmem:[#allocation2 + $0x12e0] sm:$0xff]
    %v3058 = vld [vmem:[#allocation2 + $0x12e8] sm:$0xff]
    %v3059 = vld [vmem:[#allocation2 + $0x12f0] sm:$0xff]
    %v3060 = vld [vmem:[#allocation2 + $0x12f8] sm:$0xff]
    %v3061 = vld [vmem:[#allocation2 + $0x1300] sm:$0xff]
    %v3062 = vld [vmem:[#allocation2 + $0x1308] sm:$0xff]
    %v3063 = vld [vmem:[#allocation2 + $0x1310] sm:$0xff]
    %v3064 = vld [vmem:[#allocation2 + $0x1318] sm:$0xff]
    %v3065 = vld [vmem:[#allocation2 + $0x1320] sm:$0xff]
    %v3066 = vld [vmem:[#allocation2 + $0x1328] sm:$0xff]
    %v3067 = vld [vmem:[#allocation2 + $0x1330] sm:$0xff]
    %v3068 = vld [vmem:[#allocation2 + $0x1338] sm:$0xff]
    %v3069 = vld [vmem:[#allocation2 + $0x1340] sm:$0xff]
    %v3070 = vld [vmem:[#allocation2 + $0x1348] sm:$0xff]
    %v3071 = vld [vmem:[#allocation2 + $0x1350] sm:$0xff]
    %v3072 = vld [vmem:[#allocation2 + $0x1358] sm:$0xff]
    %v3073 = vld [vmem:[#allocation2 + $0x1360] sm:$0xff]
    %v3074 = vld [vmem:[#allocation2 + $0x1368] sm:$0xff]
    %v3075 = vld [vmem:[#allocation2 + $0x1370] sm:$0xff]
    %v3076 = vld [vmem:[#allocation2 + $0x1378] sm:$0xff]
    %v3077 = vld [vmem:[#allocation2 + $0x1380] sm:$0xff]
    %v3078 = vld [vmem:[#allocation2 + $0x1388] sm:$0xff]
    %v3079 = vld [vmem:[#allocation2 + $0x1390] sm:$0xff]
    %v3080 = vld [vmem:[#allocation2 + $0x1398] sm:$0xff]
    %v3081 = vld [vmem:[#allocation2 + $0x13a0] sm:$0xff]
    %v3082 = vld [vmem:[#allocation2 + $0x13a8] sm:$0xff]
    %v3083 = vld [vmem:[#allocation2 + $0x13b0] sm:$0xff]
    %v3084 = vld [vmem:[#allocation2 + $0x13b8] sm:$0xff]
    %v3085 = vld [vmem:[#allocation2 + $0x13c0] sm:$0xff]
    %v3086 = vld [vmem:[#allocation2 + $0x13c8] sm:$0xff]
    %v3087 = vld [vmem:[#allocation2 + $0x13d0] sm:$0xff]
    %v3088 = vld [vmem:[#allocation2 + $0x13d8] sm:$0xff]
    %v3089 = vld [vmem:[#allocation2 + $0x13e0] sm:$0xff]
    %v3090 = vld [vmem:[#allocation2 + $0x13e8] sm:$0xff]
    %v3091 = vld [vmem:[#allocation2 + $0x13f0] sm:$0xff]
    %v3092 = vld [vmem:[#allocation2 + $0x13f8] sm:$0xff]
    %v3093 = vld [vmem:[#allocation2 + $0x1400] sm:$0xff]
    %v3094 = vld [vmem:[#allocation2 + $0x1408] sm:$0xff]
    %v3095 = vld [vmem:[#allocation2 + $0x1410] sm:$0xff]
    %v3096 = vld [vmem:[#allocation2 + $0x1418] sm:$0xff]
    %v3097 = vld [vmem:[#allocation2 + $0x1420] sm:$0xff]
    %v3098 = vld [vmem:[#allocation2 + $0x1428] sm:$0xff]
    %v3099 = vld [vmem:[#allocation2 + $0x1430] sm:$0xff]
    %v3100 = vld [vmem:[#allocation2 + $0x1438] sm:$0xff]
    %v3101 = vld [vmem:[#allocation2 + $0x1440] sm:$0xff]
    %v3102 = vld [vmem:[#allocation2 + $0x1448] sm:$0xff]
    %v3103 = vld [vmem:[#allocation2 + $0x1450] sm:$0xff]
    %v3104 = vld [vmem:[#allocation2 + $0x1458] sm:$0xff]
    %v3105 = vld [vmem:[#allocation2 + $0x1460] sm:$0xff]
    %v3106 = vld [vmem:[#allocation2 + $0x1468] sm:$0xff]
    %v3107 = vld [vmem:[#allocation2 + $0x1470] sm:$0xff]
    %v3108 = vld [vmem:[#allocation2 + $0x1478] sm:$0xff]
    %v3109 = vld [vmem:[#allocation2 + $0x1480] sm:$0xff]
    %v3110 = vld [vmem:[#allocation2 + $0x1488] sm:$0xff]
    %v3111 = vld [vmem:[#allocation2 + $0x1490] sm:$0xff]
    %v3112 = vld [vmem:[#allocation2 + $0x1498] sm:$0xff]
    %v3113 = vld [vmem:[#allocation2 + $0x14a0] sm:$0xff]
    %v3114 = vld [vmem:[#allocation2 + $0x14a8] sm:$0xff]
    %v3115 = vld [vmem:[#allocation2 + $0x14b0] sm:$0xff]
    %v3116 = vld [vmem:[#allocation2 + $0x14b8] sm:$0xff]
    %v3117 = vld [vmem:[#allocation2 + $0x14c0] sm:$0xff]
    %v3118 = vld [vmem:[#allocation2 + $0x14c8] sm:$0xff]
    %v3119 = vld [vmem:[#allocation2 + $0x14d0] sm:$0xff]
    %v3120 = vld [vmem:[#allocation2 + $0x14d8] sm:$0xff]
    %v3121 = vld [vmem:[#allocation2 + $0x14e0] sm:$0xff]
    %v3122 = vld [vmem:[#allocation2 + $0x14e8] sm:$0xff]
    %v3123 = vld [vmem:[#allocation2 + $0x14f0] sm:$0xff]
    %v3124 = vld [vmem:[#allocation2 + $0x14f8] sm:$0xff]
    %v3125 = vld [vmem:[#allocation2 + $0x1500] sm:$0xff]
    %v3126 = vld [vmem:[#allocation2 + $0x1508] sm:$0xff]
    %v3127 = vld [vmem:[#allocation2 + $0x1510] sm:$0xff]
    %v3128 = vld [vmem:[#allocation2 + $0x1518] sm:$0xff]
    %v3129 = vld [vmem:[%s3] sm:$0xff]
    %v3130 = vld [vmem:[%s3 + $0x8] sm:$0xff]
    %v3131 = vld [vmem:[%s3 + $0x10] sm:$0xff]
    %v3132 = vld [vmem:[%s3 + $0x18] sm:$0xff]
    %v3133 = vld [vmem:[%s3 + $0x20] sm:$0xff]
    %v3134 = vld [vmem:[%s3 + $0x28] sm:$0xff]
    %v3135 = vld [vmem:[%s3 + $0x30] sm:$0xff]
    %v3136 = vld [vmem:[%s3 + $0x38] sm:$0xff]
    %v3137 = vld [vmem:[%s3 + $0x40] sm:$0xff]
    %v3138 = vld [vmem:[%s3 + $0x48] sm:$0xff]
    %v3139 = vld [vmem:[%s3 + $0x50] sm:$0xff]
    %v3140 = vld [vmem:[%s3 + $0x58] sm:$0xff]
    %v3141 = vld [vmem:[%s3 + $0x60] sm:$0xff]
    %v3142 = vld [vmem:[%s3 + $0x68] sm:$0xff]
    %v3143 = vld [vmem:[%s3 + $0x70] sm:$0xff]
    %v3144 = vld [vmem:[%s3 + $0x78] sm:$0xff]
    %v3145 = vld [vmem:[%s3 + $0x80] sm:$0xff]
    %v3146 = vld [vmem:[%s3 + $0x88] sm:$0xff]
    %v3147 = vld [vmem:[%s3 + $0x90] sm:$0xff]
    %v3148 = vld [vmem:[%s3 + $0x98] sm:$0xff]
    %v3149 = vld [vmem:[%s3 + $0xa0] sm:$0xff]
    %v3150 = vld [vmem:[%s3 + $0xa8] sm:$0xff]
    %v3151 = vld [vmem:[%s3 + $0xb0] sm:$0xff]
    %v3152 = vld [vmem:[%s3 + $0xb8] sm:$0xff]
    %v3153 = vld [vmem:[%s3 + $0xc0] sm:$0xff]
    %v3154 = vld [vmem:[%s3 + $0xc8] sm:$0xff]
    %v3155 = vld [vmem:[%s3 + $0xd0] sm:$0xff]
    %v3156 = vld [vmem:[%s3 + $0xd8] sm:$0xff]
    %v3157 = vld [vmem:[%s3 + $0xe0] sm:$0xff]
    %v3158 = vld [vmem:[%s3 + $0xe8] sm:$0xff]
    %v3159 = vld [vmem:[%s3 + $0xf0] sm:$0xff]
    %v3160 = vld [vmem:[%s3 + $0xf8] sm:$0xff]
    %v3161 = vld [vmem:[%s3 + $0x100] sm:$0xff]
    %v3162 = vld [vmem:[%s3 + $0x108] sm:$0xff]
    %v3163 = vld [vmem:[%s3 + $0x110] sm:$0xff]
    %v3164 = vld [vmem:[%s3 + $0x118] sm:$0xff]
    %v3165 = vld [vmem:[%s3 + $0x120] sm:$0xff]
    %v3166 = vld [vmem:[%s3 + $0x128] sm:$0xff]
    %v3167 = vld [vmem:[%s3 + $0x130] sm:$0xff]
    %v3168 = vld [vmem:[%s3 + $0x138] sm:$0xff]
    %v3169 = vld [vmem:[%s3 + $0x140] sm:$0xff]
    %v3170 = vld [vmem:[%s3 + $0x148] sm:$0xff]
    %v3171 = vld [vmem:[%s3 + $0x150] sm:$0xff]
    %v3172 = vld [vmem:[%s3 + $0x158] sm:$0xff]
    %v3173 = vld [vmem:[%s3 + $0x160] sm:$0xff]
    %v3174 = vld [vmem:[%s3 + $0x168] sm:$0xff]
    %v3175 = vld [vmem:[%s3 + $0x170] sm:$0xff]
    %v3176 = vld [vmem:[%s3 + $0x178] sm:$0xff]
    %v3177 = vld [vmem:[%s3 + $0x180] sm:$0xff]
    %v3178 = vld [vmem:[%s3 + $0x188] sm:$0xff]
    %v3179 = vld [vmem:[%s3 + $0x190] sm:$0xff]
    %v3180 = vld [vmem:[%s3 + $0x198] sm:$0xff]
    %v3181 = vld [vmem:[%s3 + $0x1a0] sm:$0xff]
    %v3182 = vld [vmem:[%s3 + $0x1a8] sm:$0xff]
    %v3183 = vld [vmem:[%s3 + $0x1b0] sm:$0xff]
    %v3184 = vld [vmem:[%s3 + $0x1b8] sm:$0xff]
    %v3185 = vld [vmem:[%s3 + $0x1c0] sm:$0xff]
    %v3186 = vld [vmem:[%s3 + $0x1c8] sm:$0xff]
    %v3187 = vld [vmem:[%s3 + $0x1d0] sm:$0xff]
    %v3188 = vld [vmem:[%s3 + $0x1d8] sm:$0xff]
    %v3189 = vld [vmem:[%s3 + $0x1e0] sm:$0xff]
    %v3190 = vld [vmem:[%s3 + $0x1e8] sm:$0xff]
    %v3191 = vld [vmem:[%s3 + $0x1f0] sm:$0xff]
    %v3192 = vld [vmem:[%s3 + $0x1f8] sm:$0xff]
    %v3193 = vld [vmem:[%s3 + $0x200] sm:$0xff]
    %v3194 = vld [vmem:[%s3 + $0x208] sm:$0xff]
    %v3195 = vld [vmem:[%s3 + $0x210] sm:$0xff]
    %v3196 = vld [vmem:[%s3 + $0x218] sm:$0xff]
    %v3197 = vld [vmem:[%s3 + $0x220] sm:$0xff]
    %v3198 = vld [vmem:[%s3 + $0x228] sm:$0xff]
    %v3199 = vld [vmem:[%s3 + $0x230] sm:$0xff]
    %v3200 = vld [vmem:[%s3 + $0x238] sm:$0xff]
    %v3201 = vld [vmem:[%s3 + $0x240] sm:$0xff]
    %v3202 = vld [vmem:[%s3 + $0x248] sm:$0xff]
    %v3203 = vld [vmem:[%s3 + $0x250] sm:$0xff]
    %v3204 = vld [vmem:[%s3 + $0x258] sm:$0xff]
    %v3205 = vld [vmem:[%s3 + $0x260] sm:$0xff]
    %v3206 = vld [vmem:[%s3 + $0x268] sm:$0xff]
    %v3207 = vld [vmem:[%s3 + $0x270] sm:$0xff]
    %v3208 = vld [vmem:[%s3 + $0x278] sm:$0xff]
    %v3209 = vld [vmem:[%s3 + $0x280] sm:$0xff]
    %v3210 = vld [vmem:[%s3 + $0x288] sm:$0xff]
    %v3211 = vld [vmem:[%s3 + $0x290] sm:$0xff]
    %v3212 = vld [vmem:[%s3 + $0x298] sm:$0xff]
    %v3213 = vld [vmem:[%s3 + $0x2a0] sm:$0xff]
    %v3214 = vld [vmem:[%s3 + $0x2a8] sm:$0xff]
    %v3215 = vld [vmem:[%s3 + $0x2b0] sm:$0xff]
    %v3216 = vld [vmem:[%s3 + $0x2b8] sm:$0xff]
    %v3217 = vld [vmem:[%s3 + $0x2c0] sm:$0xff]
    %v3218 = vld [vmem:[%s3 + $0x2c8] sm:$0xff]
    %v3219 = vld [vmem:[%s3 + $0x2d0] sm:$0xff]
    %v3220 = vld [vmem:[%s3 + $0x2d8] sm:$0xff]
    %v3221 = vld [vmem:[%s3 + $0x2e0] sm:$0xff]
    %v3222 = vld [vmem:[%s3 + $0x2e8] sm:$0xff]
    %v3223 = vld [vmem:[%s3 + $0x2f0] sm:$0xff]
    %v3224 = vld [vmem:[%s3 + $0x2f8] sm:$0xff]
    %v3225 = vld [vmem:[%s3 + $0x300] sm:$0xff]
    %v3226 = vld [vmem:[%s3 + $0x308] sm:$0xff]
    %v3227 = vld [vmem:[%s3 + $0x310] sm:$0xff]
    %v3228 = vld [vmem:[%s3 + $0x318] sm:$0xff]
    %v3229 = vld [vmem:[%s3 + $0x320] sm:$0xff]
    %v3230 = vld [vmem:[%s3 + $0x328] sm:$0xff]
    %v3231 = vld [vmem:[%s3 + $0x330] sm:$0xff]
    %v3232 = vld [vmem:[%s3 + $0x338] sm:$0xff]
    %v3233 = vld [vmem:[%s3 + $0x340] sm:$0xff]
    %v3234 = vld [vmem:[%s3 + $0x348] sm:$0xff]
    %v3235 = vld [vmem:[%s3 + $0x350] sm:$0xff]
    %v3236 = vld [vmem:[%s3 + $0x358] sm:$0xff]
    %v3237 = vld [vmem:[%s3 + $0x360] sm:$0xff]
    %v3238 = vld [vmem:[%s3 + $0x368] sm:$0xff]
    %v3239 = vld [vmem:[%s3 + $0x370] sm:$0xff]
    %v3240 = vld [vmem:[%s3 + $0x378] sm:$0xff]
    %v3241 = vld [vmem:[%s3 + $0x380] sm:$0xff]
    %v3242 = vld [vmem:[%s3 + $0x388] sm:$0xff]
    %v3243 = vld [vmem:[%s3 + $0x390] sm:$0xff]
    %v3244 = vld [vmem:[%s3 + $0x398] sm:$0xff]
    %v3245 = vld [vmem:[%s3 + $0x3a0] sm:$0xff]
    %v3246 = vld [vmem:[%s3 + $0x3a8] sm:$0xff]
    %v3247 = vld [vmem:[%s3 + $0x3b0] sm:$0xff]
    %v3248 = vld [vmem:[%s3 + $0x3b8] sm:$0xff]
    %v3249 = vld [vmem:[%s3 + $0x3c0] sm:$0xff]
    %v3250 = vld [vmem:[%s3 + $0x3c8] sm:$0xff]
    %v3251 = vld [vmem:[%s3 + $0x3d0] sm:$0xff]
    %v3252 = vld [vmem:[%s3 + $0x3d8] sm:$0xff]
    %v3253 = vld [vmem:[%s3 + $0x3e0] sm:$0xff]
    %v3254 = vld [vmem:[%s3 + $0x3e8] sm:$0xff]
    %v3255 = vld [vmem:[%s3 + $0x3f0] sm:$0xff]
    %v3256 = vld [vmem:[%s3 + $0x3f8] sm:$0xff]
    %v3257 = vld [vmem:[%s3 + $0x400] sm:$0xff]
    %v3258 = vld [vmem:[%s3 + $0x408] sm:$0xff]
    %v3259 = vld [vmem:[%s3 + $0x410] sm:$0xff]
    %v3260 = vld [vmem:[%s3 + $0x418] sm:$0xff]
    %v3261 = vld [vmem:[%s3 + $0x420] sm:$0xff]
    %v3262 = vld [vmem:[%s3 + $0x428] sm:$0xff]
    %v3263 = vld [vmem:[%s3 + $0x430] sm:$0xff]
    %v3264 = vld [vmem:[%s3 + $0x438] sm:$0xff]
    %v3265 = vld [vmem:[%s3 + $0x440] sm:$0xff]
    %v3266 = vld [vmem:[%s3 + $0x448] sm:$0xff]
    %v3267 = vld [vmem:[%s3 + $0x450] sm:$0xff]
    %v3268 = vld [vmem:[%s3 + $0x458] sm:$0xff]
    %v3269 = vld [vmem:[%s3 + $0x460] sm:$0xff]
    %v3270 = vld [vmem:[%s3 + $0x468] sm:$0xff]
    %v3271 = vld [vmem:[%s3 + $0x470] sm:$0xff]
    %v3272 = vld [vmem:[%s3 + $0x478] sm:$0xff]
    %v3273 = vld [vmem:[%s3 + $0x480] sm:$0xff]
    %v3274 = vld [vmem:[%s3 + $0x488] sm:$0xff]
    %v3275 = vld [vmem:[%s3 + $0x490] sm:$0xff]
    %v3276 = vld [vmem:[%s3 + $0x498] sm:$0xff]
    %v3277 = vld [vmem:[%s3 + $0x4a0] sm:$0xff]
    %v3278 = vld [vmem:[%s3 + $0x4a8] sm:$0xff]
    %v3279 = vld [vmem:[%s3 + $0x4b0] sm:$0xff]
    %v3280 = vld [vmem:[%s3 + $0x4b8] sm:$0xff]
    %v3281 = vld [vmem:[%s3 + $0x4c0] sm:$0xff]
    %v3282 = vld [vmem:[%s3 + $0x4c8] sm:$0xff]
    %v3283 = vld [vmem:[%s3 + $0x4d0] sm:$0xff]
    %v3284 = vld [vmem:[%s3 + $0x4d8] sm:$0xff]
    %v3285 = vld [vmem:[%s3 + $0x4e0] sm:$0xff]
    %v3286 = vld [vmem:[%s3 + $0x4e8] sm:$0xff]
    %v3287 = vld [vmem:[%s3 + $0x4f0] sm:$0xff]
    %v3288 = vld [vmem:[%s3 + $0x4f8] sm:$0xff]
    %v3289 = vld [vmem:[%s3 + $0x500] sm:$0xff]
    %v3290 = vld [vmem:[%s3 + $0x508] sm:$0xff]
    %v3291 = vld [vmem:[%s3 + $0x510] sm:$0xff]
    %v3292 = vld [vmem:[%s3 + $0x518] sm:$0xff]
    %v3293 = vld [vmem:[%s3 + $0x520] sm:$0xff]
    %v3294 = vld [vmem:[%s3 + $0x528] sm:$0xff]
    %v3295 = vld [vmem:[%s3 + $0x530] sm:$0xff]
    %v3296 = vld [vmem:[%s3 + $0x538] sm:$0xff]
    %v3297 = vld [vmem:[%s3 + $0x540] sm:$0xff]
    %v3298 = vld [vmem:[%s3 + $0x548] sm:$0xff]
    %v3299 = vld [vmem:[%s3 + $0x550] sm:$0xff]
    %v3300 = vld [vmem:[%s3 + $0x558] sm:$0xff]
    %v3301 = vld [vmem:[%s3 + $0x560] sm:$0xff]
    %v3302 = vld [vmem:[%s3 + $0x568] sm:$0xff]
    %v3303 = vld [vmem:[%s3 + $0x570] sm:$0xff]
    %v3304 = vld [vmem:[%s3 + $0x578] sm:$0xff]
    %v3305 = vld [vmem:[%s3 + $0x580] sm:$0xff]
    %v3306 = vld [vmem:[%s3 + $0x588] sm:$0xff]
    %v3307 = vld [vmem:[%s3 + $0x590] sm:$0xff]
    %v3308 = vld [vmem:[%s3 + $0x598] sm:$0xff]
    %v3309 = vld [vmem:[%s3 + $0x5a0] sm:$0xff]
    %v3310 = vld [vmem:[%s3 + $0x5a8] sm:$0xff]
    %v3311 = vld [vmem:[%s3 + $0x5b0] sm:$0xff]
    %v3312 = vld [vmem:[%s3 + $0x5b8] sm:$0xff]
    %v3313 = vld [vmem:[%s3 + $0x5c0] sm:$0xff]
    %v3314 = vld [vmem:[%s3 + $0x5c8] sm:$0xff]
    %v3315 = vld [vmem:[%s3 + $0x5d0] sm:$0xff]
    %v3316 = vld [vmem:[%s3 + $0x5d8] sm:$0xff]
    %v3317 = vld [vmem:[%s3 + $0x5e0] sm:$0xff]
    %v3318 = vld [vmem:[%s3 + $0x5e8] sm:$0xff]
    %v3319 = vld [vmem:[%s3 + $0x5f0] sm:$0xff]
    %v3320 = vld [vmem:[%s3 + $0x5f8] sm:$0xff]
    %v3321 = vld [vmem:[%s3 + $0x600] sm:$0xff]
    %v3322 = vld [vmem:[%s3 + $0x608] sm:$0xff]
    %v3323 = vld [vmem:[%s3 + $0x610] sm:$0xff]
    %v3324 = vld [vmem:[%s3 + $0x618] sm:$0xff]
    %v3325 = vld [vmem:[%s3 + $0x620] sm:$0xff]
    %v3326 = vld [vmem:[%s3 + $0x628] sm:$0xff]
    %v3327 = vld [vmem:[%s3 + $0x630] sm:$0xff]
    %v3328 = vld [vmem:[%s3 + $0x638] sm:$0xff]
    %v3329 = vld [vmem:[%s3 + $0x640] sm:$0xff]
    %v3330 = vld [vmem:[%s3 + $0x648] sm:$0xff]
    %v3331 = vld [vmem:[%s3 + $0x650] sm:$0xff]
    %v3332 = vld [vmem:[%s3 + $0x658] sm:$0xff]
    %v3333 = vld [vmem:[%s3 + $0x660] sm:$0xff]
    %v3334 = vld [vmem:[%s3 + $0x668] sm:$0xff]
    %v3335 = vld [vmem:[%s3 + $0x670] sm:$0xff]
    %v3336 = vld [vmem:[%s3 + $0x678] sm:$0xff]
    %v3337 = vld [vmem:[%s3 + $0x680] sm:$0xff]
    %v3338 = vld [vmem:[%s3 + $0x688] sm:$0xff]
    %v3339 = vld [vmem:[%s3 + $0x690] sm:$0xff]
    %v3340 = vld [vmem:[%s3 + $0x698] sm:$0xff]
    %v3341 = vld [vmem:[%s3 + $0x6a0] sm:$0xff]
    %v3342 = vld [vmem:[%s3 + $0x6a8] sm:$0xff]
    %v3343 = vld [vmem:[%s3 + $0x6b0] sm:$0xff]
    %v3344 = vld [vmem:[%s3 + $0x6b8] sm:$0xff]
    %v3345 = vld [vmem:[%s3 + $0x6c0] sm:$0xff]
    %v3346 = vld [vmem:[%s3 + $0x6c8] sm:$0xff]
    %v3347 = vld [vmem:[%s3 + $0x6d0] sm:$0xff]
    %v3348 = vld [vmem:[%s3 + $0x6d8] sm:$0xff]
    %v3349 = vld [vmem:[%s3 + $0x6e0] sm:$0xff]
    %v3350 = vld [vmem:[%s3 + $0x6e8] sm:$0xff]
    %v3351 = vld [vmem:[%s3 + $0x6f0] sm:$0xff]
    %v3352 = vld [vmem:[%s3 + $0x6f8] sm:$0xff]
    %v3353 = vld [vmem:[%s3 + $0x700] sm:$0xff]
    %v3354 = vld [vmem:[%s3 + $0x708] sm:$0xff]
    %v3355 = vld [vmem:[%s3 + $0x710] sm:$0xff]
    %v3356 = vld [vmem:[%s3 + $0x718] sm:$0xff]
    %v3357 = vld [vmem:[%s3 + $0x720] sm:$0xff]
    %v3358 = vld [vmem:[%s3 + $0x728] sm:$0xff]
    %v3359 = vld [vmem:[%s3 + $0x730] sm:$0xff]
    %v3360 = vld [vmem:[%s3 + $0x738] sm:$0xff]
    %v3361 = vld [vmem:[%s3 + $0x740] sm:$0xff]
    %v3362 = vld [vmem:[%s3 + $0x748] sm:$0xff]
    %v3363 = vld [vmem:[%s3 + $0x750] sm:$0xff]
    %v3364 = vld [vmem:[%s3 + $0x758] sm:$0xff]
    %v3365 = vld [vmem:[%s3 + $0x760] sm:$0xff]
    %v3366 = vld [vmem:[%s3 + $0x768] sm:$0xff]
    %v3367 = vld [vmem:[%s3 + $0x770] sm:$0xff]
    %v3368 = vld [vmem:[%s3 + $0x778] sm:$0xff]
    %v3369 = vld [vmem:[%s3 + $0x780] sm:$0xff]
    %v3370 = vld [vmem:[%s3 + $0x788] sm:$0xff]
    %v3371 = vld [vmem:[%s3 + $0x790] sm:$0xff]
    %v3372 = vld [vmem:[%s3 + $0x798] sm:$0xff]
    %v3373 = vld [vmem:[%s3 + $0x7a0] sm:$0xff]
    %v3374 = vld [vmem:[%s3 + $0x7a8] sm:$0xff]
    %v3375 = vld [vmem:[%s3 + $0x7b0] sm:$0xff]
    %v3376 = vld [vmem:[%s3 + $0x7b8] sm:$0xff]
    %v3377 = vld [vmem:[%s3 + $0x7c0] sm:$0xff]
    %v3378 = vld [vmem:[%s3 + $0x7c8] sm:$0xff]
    %v3379 = vld [vmem:[%s3 + $0x7d0] sm:$0xff]
    %v3380 = vld [vmem:[%s3 + $0x7d8] sm:$0xff]
    %v3381 = vld [vmem:[%s3 + $0x7e0] sm:$0xff]
    %v3382 = vld [vmem:[%s3 + $0x7e8] sm:$0xff]
    %v3383 = vld [vmem:[%s3 + $0x7f0] sm:$0xff]
    %v3384 = vld [vmem:[%s3 + $0x7f8] sm:$0xff]
    %v3385 = vld [vmem:[%s3 + $0x800] sm:$0xff]
    %v3386 = vld [vmem:[%s3 + $0x808] sm:$0xff]
    %v3387 = vld [vmem:[%s3 + $0x810] sm:$0xff]
    %v3388 = vld [vmem:[%s3 + $0x818] sm:$0xff]
    %v3389 = vld [vmem:[%s3 + $0x820] sm:$0xff]
    %v3390 = vld [vmem:[%s3 + $0x828] sm:$0xff]
    %v3391 = vld [vmem:[%s3 + $0x830] sm:$0xff]
    %v3392 = vld [vmem:[%s3 + $0x838] sm:$0xff]
    %v3393 = vld [vmem:[%s3 + $0x840] sm:$0xff]
    %v3394 = vld [vmem:[%s3 + $0x848] sm:$0xff]
    %v3395 = vld [vmem:[%s3 + $0x850] sm:$0xff]
    %v3396 = vld [vmem:[%s3 + $0x858] sm:$0xff]
    %v3397 = vld [vmem:[%s3 + $0x860] sm:$0xff]
    %v3398 = vld [vmem:[%s3 + $0x868] sm:$0xff]
    %v3399 = vld [vmem:[%s3 + $0x870] sm:$0xff]
    %v3400 = vld [vmem:[%s3 + $0x878] sm:$0xff]
    %v3401 = vld [vmem:[%s3 + $0x880] sm:$0xff]
    %v3402 = vld [vmem:[%s3 + $0x888] sm:$0xff]
    %v3403 = vld [vmem:[%s3 + $0x890] sm:$0xff]
    %v3404 = vld [vmem:[%s3 + $0x898] sm:$0xff]
    %v3405 = vld [vmem:[%s3 + $0x8a0] sm:$0xff]
    %v3406 = vld [vmem:[%s3 + $0x8a8] sm:$0xff]
    %v3407 = vld [vmem:[%s3 + $0x8b0] sm:$0xff]
    %v3408 = vld [vmem:[%s3 + $0x8b8] sm:$0xff]
    %v3409 = vld [vmem:[%s3 + $0x8c0] sm:$0xff]
    %v3410 = vld [vmem:[%s3 + $0x8c8] sm:$0xff]
    %v3411 = vld [vmem:[%s3 + $0x8d0] sm:$0xff]
    %v3412 = vld [vmem:[%s3 + $0x8d8] sm:$0xff]
    %v3413 = vld [vmem:[%s3 + $0x8e0] sm:$0xff]
    %v3414 = vld [vmem:[%s3 + $0x8e8] sm:$0xff]
    %v3415 = vld [vmem:[%s3 + $0x8f0] sm:$0xff]
    %v3416 = vld [vmem:[%s3 + $0x8f8] sm:$0xff]
    %v3417 = vld [vmem:[%s3 + $0x900] sm:$0xff]
    %v3418 = vld [vmem:[%s3 + $0x908] sm:$0xff]
    %v3419 = vld [vmem:[%s3 + $0x910] sm:$0xff]
    %v3420 = vld [vmem:[%s3 + $0x918] sm:$0xff]
    %v3421 = vld [vmem:[%s3 + $0x920] sm:$0xff]
    %v3422 = vld [vmem:[%s3 + $0x928] sm:$0xff]
    %v3423 = vld [vmem:[%s3 + $0x930] sm:$0xff]
    %v3424 = vld [vmem:[%s3 + $0x938] sm:$0xff]
    %v3425 = vld [vmem:[%s3 + $0x940] sm:$0xff]
    %v3426 = vld [vmem:[%s3 + $0x948] sm:$0xff]
    %v3427 = vld [vmem:[%s3 + $0x950] sm:$0xff]
    %v3428 = vld [vmem:[%s3 + $0x958] sm:$0xff]
    %v3429 = vld [vmem:[%s3 + $0x960] sm:$0xff]
    %v3430 = vld [vmem:[%s3 + $0x968] sm:$0xff]
    %v3431 = vld [vmem:[%s3 + $0x970] sm:$0xff]
    %v3432 = vld [vmem:[%s3 + $0x978] sm:$0xff]
    %v3433 = vld [vmem:[%s3 + $0x980] sm:$0xff]
    %v3434 = vld [vmem:[%s3 + $0x988] sm:$0xff]
    %v3435 = vld [vmem:[%s3 + $0x990] sm:$0xff]
    %v3436 = vld [vmem:[%s3 + $0x998] sm:$0xff]
    %v3437 = vld [vmem:[%s3 + $0x9a0] sm:$0xff]
    %v3438 = vld [vmem:[%s3 + $0x9a8] sm:$0xff]
    %v3439 = vld [vmem:[%s3 + $0x9b0] sm:$0xff]
    %v3440 = vld [vmem:[%s3 + $0x9b8] sm:$0xff]
    %v3441 = vld [vmem:[%s3 + $0x9c0] sm:$0xff]
    %v3442 = vld [vmem:[%s3 + $0x9c8] sm:$0xff]
    %v3443 = vld [vmem:[%s3 + $0x9d0] sm:$0xff]
    %v3444 = vld [vmem:[%s3 + $0x9d8] sm:$0xff]
    %v3445 = vld [vmem:[%s3 + $0x9e0] sm:$0xff]
    %v3446 = vld [vmem:[%s3 + $0x9e8] sm:$0xff]
    %v3447 = vld [vmem:[%s3 + $0x9f0] sm:$0xff]
    %v3448 = vld [vmem:[%s3 + $0x9f8] sm:$0xff]
    %v3449 = vld [vmem:[%s3 + $0xa00] sm:$0xff]
    %v3450 = vld [vmem:[%s3 + $0xa08] sm:$0xff]
    %v3451 = vld [vmem:[%s3 + $0xa10] sm:$0xff]
    %v3452 = vld [vmem:[%s3 + $0xa18] sm:$0xff]
    %v3453 = vld [vmem:[%s3 + $0xa20] sm:$0xff]
    %v3454 = vld [vmem:[%s3 + $0xa28] sm:$0xff]
    %v3455 = vld [vmem:[%s3 + $0xa30] sm:$0xff]
    %v3456 = vld [vmem:[%s3 + $0xa38] sm:$0xff]
    %v3457 = vld [vmem:[%s3 + $0xa40] sm:$0xff]
    %v3458 = vld [vmem:[%s3 + $0xa48] sm:$0xff]
    %v3459 = vld [vmem:[%s3 + $0xa50] sm:$0xff]
    %v3460 = vld [vmem:[%s3 + $0xa58] sm:$0xff]
    %v3461 = vld [vmem:[%s3 + $0xa60] sm:$0xff]
    %v3462 = vld [vmem:[%s3 + $0xa68] sm:$0xff]
    %v3463 = vld [vmem:[%s3 + $0xa70] sm:$0xff]
    %v3464 = vld [vmem:[%s3 + $0xa78] sm:$0xff]
    %v3465 = vld [vmem:[%s3 + $0xa80] sm:$0xff]
    %v3466 = vld [vmem:[%s3 + $0xa88] sm:$0xff]
    %v3467 = vld [vmem:[%s3 + $0xa90] sm:$0xff]
    %v3468 = vld [vmem:[%s3 + $0xa98] sm:$0xff]
    %v3469 = vld [vmem:[%s3 + $0xaa0] sm:$0xff]
    %v3470 = vld [vmem:[%s3 + $0xaa8] sm:$0xff]
    %v3471 = vld [vmem:[%s3 + $0xab0] sm:$0xff]
    %v3472 = vld [vmem:[%s3 + $0xab8] sm:$0xff]
    %v3473 = vld [vmem:[%s3 + $0xac0] sm:$0xff]
    %v3474 = vld [vmem:[%s3 + $0xac8] sm:$0xff]
    %v3475 = vld [vmem:[%s3 + $0xad0] sm:$0xff]
    %v3476 = vld [vmem:[%s3 + $0xad8] sm:$0xff]
    %v3477 = vld [vmem:[%s3 + $0xae0] sm:$0xff]
    %v3478 = vld [vmem:[%s3 + $0xae8] sm:$0xff]
    %v3479 = vld [vmem:[%s3 + $0xaf0] sm:$0xff]
    %v3480 = vld [vmem:[%s3 + $0xaf8] sm:$0xff]
    %v3481 = vld [vmem:[%s3 + $0xb00] sm:$0xff]
    %v3482 = vld [vmem:[%s3 + $0xb08] sm:$0xff]
    %v3483 = vld [vmem:[%s3 + $0xb10] sm:$0xff]
    %v3484 = vld [vmem:[%s3 + $0xb18] sm:$0xff]
    %v3485 = vld [vmem:[%s3 + $0xb20] sm:$0xff]
    %v3486 = vld [vmem:[%s3 + $0xb28] sm:$0xff]
    %v3487 = vld [vmem:[%s3 + $0xb30] sm:$0xff]
    %v3488 = vld [vmem:[%s3 + $0xb38] sm:$0xff]
    %v3489 = vld [vmem:[%s3 + $0xb40] sm:$0xff]
    %v3490 = vld [vmem:[%s3 + $0xb48] sm:$0xff]
    %v3491 = vld [vmem:[%s3 + $0xb50] sm:$0xff]
    %v3492 = vld [vmem:[%s3 + $0xb58] sm:$0xff]
    %v3493 = vld [vmem:[%s3 + $0xb60] sm:$0xff]
    %v3494 = vld [vmem:[%s3 + $0xb68] sm:$0xff]
    %v3495 = vld [vmem:[%s3 + $0xb70] sm:$0xff]
    %v3496 = vld [vmem:[%s3 + $0xb78] sm:$0xff]
    %v3497 = vld [vmem:[%s3 + $0xb80] sm:$0xff]
    %v3498 = vld [vmem:[%s3 + $0xb88] sm:$0xff]
    %v3499 = vld [vmem:[%s3 + $0xb90] sm:$0xff]
    %v3500 = vld [vmem:[%s3 + $0xb98] sm:$0xff]
    %v3501 = vld [vmem:[%s3 + $0xba0] sm:$0xff]
    %v3502 = vld [vmem:[%s3 + $0xba8] sm:$0xff]
    %v3503 = vld [vmem:[%s3 + $0xbb0] sm:$0xff]
    %v3504 = vld [vmem:[%s3 + $0xbb8] sm:$0xff]
    %v3505 = vld [vmem:[%s3 + $0xbc0] sm:$0xff]
    %v3506 = vld [vmem:[%s3 + $0xbc8] sm:$0xff]
    %v3507 = vld [vmem:[%s3 + $0xbd0] sm:$0xff]
    %v3508 = vld [vmem:[%s3 + $0xbd8] sm:$0xff]
    %v3509 = vld [vmem:[%s3 + $0xbe0] sm:$0xff]
    %v3510 = vld [vmem:[%s3 + $0xbe8] sm:$0xff]
    %v3511 = vld [vmem:[%s3 + $0xbf0] sm:$0xff]
    %v3512 = vld [vmem:[%s3 + $0xbf8] sm:$0xff]
    %v3513 = vld [vmem:[%s3 + $0xc00] sm:$0xff]
    %v3514 = vld [vmem:[%s3 + $0xc08] sm:$0xff]
    %v3515 = vld [vmem:[%s3 + $0xc10] sm:$0xff]
    %v3516 = vld [vmem:[%s3 + $0xc18] sm:$0xff]
    %v3517 = vld [vmem:[%s3 + $0xc20] sm:$0xff]
    %v3518 = vld [vmem:[%s3 + $0xc28] sm:$0xff]
    %v3519 = vld [vmem:[%s3 + $0xc30] sm:$0xff]
    %v3520 = vld [vmem:[%s3 + $0xc38] sm:$0xff]
    %v3521 = vld [vmem:[%s3 + $0xc40] sm:$0xff]
    %v3522 = vld [vmem:[%s3 + $0xc48] sm:$0xff]
    %v3523 = vld [vmem:[%s3 + $0xc50] sm:$0xff]
    %v3524 = vld [vmem:[%s3 + $0xc58] sm:$0xff]
    %v3525 = vld [vmem:[%s3 + $0xc60] sm:$0xff]
    %v3526 = vld [vmem:[%s3 + $0xc68] sm:$0xff]
    %v3527 = vld [vmem:[%s3 + $0xc70] sm:$0xff]
    %v3528 = vld [vmem:[%s3 + $0xc78] sm:$0xff]
    %v3529 = vld [vmem:[%s3 + $0xc80] sm:$0xff]
    %v3530 = vld [vmem:[%s3 + $0xc88] sm:$0xff]
    %v3531 = vld [vmem:[%s3 + $0xc90] sm:$0xff]
    %v3532 = vld [vmem:[%s3 + $0xc98] sm:$0xff]
    %v3533 = vld [vmem:[%s3 + $0xca0] sm:$0xff]
    %v3534 = vld [vmem:[%s3 + $0xca8] sm:$0xff]
    %v3535 = vld [vmem:[%s3 + $0xcb0] sm:$0xff]
    %v3536 = vld [vmem:[%s3 + $0xcb8] sm:$0xff]
    %v3537 = vld [vmem:[%s3 + $0xcc0] sm:$0xff]
    %v3538 = vld [vmem:[%s3 + $0xcc8] sm:$0xff]
    %v3539 = vld [vmem:[%s3 + $0xcd0] sm:$0xff]
    %v3540 = vld [vmem:[%s3 + $0xcd8] sm:$0xff]
    %v3541 = vld [vmem:[%s3 + $0xce0] sm:$0xff]
    %v3542 = vld [vmem:[%s3 + $0xce8] sm:$0xff]
    %v3543 = vld [vmem:[%s3 + $0xcf0] sm:$0xff]
    %v3544 = vld [vmem:[%s3 + $0xcf8] sm:$0xff]
    %v3545 = vld [vmem:[%s3 + $0xd00] sm:$0xff]
    %v3546 = vld [vmem:[%s3 + $0xd08] sm:$0xff]
    %v3547 = vld [vmem:[%s3 + $0xd10] sm:$0xff]
    %v3548 = vld [vmem:[%s3 + $0xd18] sm:$0xff]
    %v3549 = vld [vmem:[%s3 + $0xd20] sm:$0xff]
    %v3550 = vld [vmem:[%s3 + $0xd28] sm:$0xff]
    %v3551 = vld [vmem:[%s3 + $0xd30] sm:$0xff]
    %v3552 = vld [vmem:[%s3 + $0xd38] sm:$0xff]
    %v3553 = vld [vmem:[%s3 + $0xd40] sm:$0xff]
    %v3554 = vld [vmem:[%s3 + $0xd48] sm:$0xff]
    %v3555 = vld [vmem:[%s3 + $0xd50] sm:$0xff]
    %v3556 = vld [vmem:[%s3 + $0xd58] sm:$0xff]
    %v3557 = vld [vmem:[%s3 + $0xd60] sm:$0xff]
    %v3558 = vld [vmem:[%s3 + $0xd68] sm:$0xff]
    %v3559 = vld [vmem:[%s3 + $0xd70] sm:$0xff]
    %v3560 = vld [vmem:[%s3 + $0xd78] sm:$0xff]
    %v3561 = vld [vmem:[%s3 + $0xd80] sm:$0xff]
    %v3562 = vld [vmem:[%s3 + $0xd88] sm:$0xff]
    %v3563 = vld [vmem:[%s3 + $0xd90] sm:$0xff]
    %v3564 = vld [vmem:[%s3 + $0xd98] sm:$0xff]
    %v3565 = vld [vmem:[%s3 + $0xda0] sm:$0xff]
    %v3566 = vld [vmem:[%s3 + $0xda8] sm:$0xff]
    %v3567 = vld [vmem:[%s3 + $0xdb0] sm:$0xff]
    %v3568 = vld [vmem:[%s3 + $0xdb8] sm:$0xff]
    %v3569 = vld [vmem:[%s3 + $0xdc0] sm:$0xff]
    %v3570 = vld [vmem:[%s3 + $0xdc8] sm:$0xff]
    %v3571 = vld [vmem:[%s3 + $0xdd0] sm:$0xff]
    %v3572 = vld [vmem:[%s3 + $0xdd8] sm:$0xff]
    %v3573 = vld [vmem:[%s3 + $0xde0] sm:$0xff]
    %v3574 = vld [vmem:[%s3 + $0xde8] sm:$0xff]
    %v3575 = vld [vmem:[%s3 + $0xdf0] sm:$0xff]
    %v3576 = vld [vmem:[%s3 + $0xdf8] sm:$0xff]
    %v3577 = vld [vmem:[%s3 + $0xe00] sm:$0xff]
    %v3578 = vld [vmem:[%s3 + $0xe08] sm:$0xff]
    %v3579 = vld [vmem:[%s3 + $0xe10] sm:$0xff]
    %v3580 = vld [vmem:[%s3 + $0xe18] sm:$0xff]
    %v3581 = vld [vmem:[%s3 + $0xe20] sm:$0xff]
    %v3582 = vld [vmem:[%s3 + $0xe28] sm:$0xff]
    %v3583 = vld [vmem:[%s3 + $0xe30] sm:$0xff]
    %v3584 = vld [vmem:[%s3 + $0xe38] sm:$0xff]
    %v3585 = vld [vmem:[%s3 + $0xe40] sm:$0xff]
    %v3586 = vld [vmem:[%s3 + $0xe48] sm:$0xff]
    %v3587 = vld [vmem:[%s3 + $0xe50] sm:$0xff]
    %v3588 = vld [vmem:[%s3 + $0xe58] sm:$0xff]
    %v3589 = vld [vmem:[%s3 + $0xe60] sm:$0xff]
    %v3590 = vld [vmem:[%s3 + $0xe68] sm:$0xff]
    %v3591 = vld [vmem:[%s3 + $0xe70] sm:$0xff]
    %v3592 = vld [vmem:[%s3 + $0xe78] sm:$0xff]
    %v3593 = vld [vmem:[%s3 + $0xe80] sm:$0xff]
    %v3594 = vld [vmem:[%s3 + $0xe88] sm:$0xff]
    %v3595 = vld [vmem:[%s3 + $0xe90] sm:$0xff]
    %v3596 = vld [vmem:[%s3 + $0xe98] sm:$0xff]
    %v3597 = vld [vmem:[%s3 + $0xea0] sm:$0xff]
    %v3598 = vld [vmem:[%s3 + $0xea8] sm:$0xff]
    %v3599 = vld [vmem:[%s3 + $0xeb0] sm:$0xff]
    %v3600 = vld [vmem:[%s3 + $0xeb8] sm:$0xff]
    %v3601 = vld [vmem:[%s3 + $0xec0] sm:$0xff]
    %v3602 = vld [vmem:[%s3 + $0xec8] sm:$0xff]
    %v3603 = vld [vmem:[%s3 + $0xed0] sm:$0xff]
    %v3604 = vld [vmem:[%s3 + $0xed8] sm:$0xff]
    %v3605 = vld [vmem:[%s3 + $0xee0] sm:$0xff]
    %v3606 = vld [vmem:[%s3 + $0xee8] sm:$0xff]
    %v3607 = vld [vmem:[%s3 + $0xef0] sm:$0xff]
    %v3608 = vld [vmem:[%s3 + $0xef8] sm:$0xff]
    %v3609 = vld [vmem:[%s3 + $0xf00] sm:$0xff]
    %v3610 = vld [vmem:[%s3 + $0xf08] sm:$0xff]
    %v3611 = vld [vmem:[%s3 + $0xf10] sm:$0xff]
    %v3612 = vld [vmem:[%s3 + $0xf18] sm:$0xff]
    %v3613 = vld [vmem:[%s3 + $0xf20] sm:$0xff]
    %v3614 = vld [vmem:[%s3 + $0xf28] sm:$0xff]
    %v3615 = vld [vmem:[%s3 + $0xf30] sm:$0xff]
    %v3616 = vld [vmem:[%s3 + $0xf38] sm:$0xff]
    %v3617 = vld [vmem:[%s3 + $0xf40] sm:$0xff]
    %v3618 = vld [vmem:[%s3 + $0xf48] sm:$0xff]
    %v3619 = vld [vmem:[%s3 + $0xf50] sm:$0xff]
    %v3620 = vld [vmem:[%s3 + $0xf58] sm:$0xff]
    %v3621 = vld [vmem:[%s3 + $0xf60] sm:$0xff]
    %v3622 = vld [vmem:[%s3 + $0xf68] sm:$0xff]
    %v3623 = vld [vmem:[%s3 + $0xf70] sm:$0xff]
    %v3624 = vld [vmem:[%s3 + $0xf78] sm:$0xff]
    %v3625 = vld [vmem:[%s3 + $0xf80] sm:$0xff]
    %v3626 = vld [vmem:[%s3 + $0xf88] sm:$0xff]
    %v3627 = vld [vmem:[%s3 + $0xf90] sm:$0xff]
    %v3628 = vld [vmem:[%s3 + $0xf98] sm:$0xff]
    %v3629 = vld [vmem:[%s3 + $0xfa0] sm:$0xff]
    %v3630 = vld [vmem:[%s3 + $0xfa8] sm:$0xff]
    %v3631 = vld [vmem:[%s3 + $0xfb0] sm:$0xff]
    %v3632 = vld [vmem:[%s3 + $0xfb8] sm:$0xff]
    %v3633 = vld [vmem:[%s3 + $0xfc0] sm:$0xff]
    %v3634 = vld [vmem:[%s3 + $0xfc8] sm:$0xff]
    %v3635 = vld [vmem:[%s3 + $0xfd0] sm:$0xff]
    %v3636 = vld [vmem:[%s3 + $0xfd8] sm:$0xff]
    %v3637 = vld [vmem:[%s3 + $0xfe0] sm:$0xff]
    %v3638 = vld [vmem:[%s3 + $0xfe8] sm:$0xff]
    %v3639 = vld [vmem:[%s3 + $0xff0] sm:$0xff]
    %v3640 = vld [vmem:[%s3 + $0xff8] sm:$0xff]
    %v3641 = vld [vmem:[%s3 + $0x1000] sm:$0xff]
    %v3642 = vld [vmem:[%s3 + $0x1008] sm:$0xff]
    %v3643 = vld [vmem:[%s3 + $0x1010] sm:$0xff]
    %v3644 = vld [vmem:[%s3 + $0x1018] sm:$0xff]
    %v3645 = vld [vmem:[%s3 + $0x1020] sm:$0xff]
    %v3646 = vld [vmem:[%s3 + $0x1028] sm:$0xff]
    %v3647 = vld [vmem:[%s3 + $0x1030] sm:$0xff]
    %v3648 = vld [vmem:[%s3 + $0x1038] sm:$0xff]
    %v3649 = vld [vmem:[%s3 + $0x1040] sm:$0xff]
    %v3650 = vld [vmem:[%s3 + $0x1048] sm:$0xff]
    %v3651 = vld [vmem:[%s3 + $0x1050] sm:$0xff]
    %v3652 = vld [vmem:[%s3 + $0x1058] sm:$0xff]
    %v3653 = vld [vmem:[%s3 + $0x1060] sm:$0xff]
    %v3654 = vld [vmem:[%s3 + $0x1068] sm:$0xff]
    %v3655 = vld [vmem:[%s3 + $0x1070] sm:$0xff]
    %v3656 = vld [vmem:[%s3 + $0x1078] sm:$0xff]
    %v3657 = vld [vmem:[%s3 + $0x1080] sm:$0xff]
    %v3658 = vld [vmem:[%s3 + $0x1088] sm:$0xff]
    %v3659 = vld [vmem:[%s3 + $0x1090] sm:$0xff]
    %v3660 = vld [vmem:[%s3 + $0x1098] sm:$0xff]
    %v3661 = vld [vmem:[%s3 + $0x10a0] sm:$0xff]
    %v3662 = vld [vmem:[%s3 + $0x10a8] sm:$0xff]
    %v3663 = vld [vmem:[%s3 + $0x10b0] sm:$0xff]
    %v3664 = vld [vmem:[%s3 + $0x10b8] sm:$0xff]
    %v3665 = vld [vmem:[%s3 + $0x10c0] sm:$0xff]
    %v3666 = vld [vmem:[%s3 + $0x10c8] sm:$0xff]
    %v3667 = vld [vmem:[%s3 + $0x10d0] sm:$0xff]
    %v3668 = vld [vmem:[%s3 + $0x10d8] sm:$0xff]
    %v3669 = vld [vmem:[%s3 + $0x10e0] sm:$0xff]
    %v3670 = vld [vmem:[%s3 + $0x10e8] sm:$0xff]
    %v3671 = vld [vmem:[%s3 + $0x10f0] sm:$0xff]
    %v3672 = vld [vmem:[%s3 + $0x10f8] sm:$0xff]
    %v3673 = vld [vmem:[%s3 + $0x1100] sm:$0xff]
    %v3674 = vld [vmem:[%s3 + $0x1108] sm:$0xff]
    %v3675 = vld [vmem:[%s3 + $0x1110] sm:$0xff]
    %v3676 = vld [vmem:[%s3 + $0x1118] sm:$0xff]
    %v3677 = vld [vmem:[%s3 + $0x1120] sm:$0xff]
    %v3678 = vld [vmem:[%s3 + $0x1128] sm:$0xff]
    %v3679 = vld [vmem:[%s3 + $0x1130] sm:$0xff]
    %v3680 = vld [vmem:[%s3 + $0x1138] sm:$0xff]
    %v3681 = vld [vmem:[%s3 + $0x1140] sm:$0xff]
    %v3682 = vld [vmem:[%s3 + $0x1148] sm:$0xff]
    %v3683 = vld [vmem:[%s3 + $0x1150] sm:$0xff]
    %v3684 = vld [vmem:[%s3 + $0x1158] sm:$0xff]
    %v3685 = vld [vmem:[%s3 + $0x1160] sm:$0xff]
    %v3686 = vld [vmem:[%s3 + $0x1168] sm:$0xff]
    %v3687 = vld [vmem:[%s3 + $0x1170] sm:$0xff]
    %v3688 = vld [vmem:[%s3 + $0x1178] sm:$0xff]
    %v3689 = vld [vmem:[%s3 + $0x1180] sm:$0xff]
    %v3690 = vld [vmem:[%s3 + $0x1188] sm:$0xff]
    %v3691 = vld [vmem:[%s3 + $0x1190] sm:$0xff]
    %v3692 = vld [vmem:[%s3 + $0x1198] sm:$0xff]
    %v3693 = vld [vmem:[%s3 + $0x11a0] sm:$0xff]
    %v3694 = vld [vmem:[%s3 + $0x11a8] sm:$0xff]
    %v3695 = vld [vmem:[%s3 + $0x11b0] sm:$0xff]
    %v3696 = vld [vmem:[%s3 + $0x11b8] sm:$0xff]
    %v3697 = vld [vmem:[%s3 + $0x11c0] sm:$0xff]
    %v3698 = vld [vmem:[%s3 + $0x11c8] sm:$0xff]
    %v3699 = vld [vmem:[%s3 + $0x11d0] sm:$0xff]
    %v3700 = vld [vmem:[%s3 + $0x11d8] sm:$0xff]
    %v3701 = vld [vmem:[%s3 + $0x11e0] sm:$0xff]
    %v3702 = vld [vmem:[%s3 + $0x11e8] sm:$0xff]
    %v3703 = vld [vmem:[%s3 + $0x11f0] sm:$0xff]
    %v3704 = vld [vmem:[%s3 + $0x11f8] sm:$0xff]
    %v3705 = vld [vmem:[%s3 + $0x1200] sm:$0xff]
    %v3706 = vld [vmem:[%s3 + $0x1208] sm:$0xff]
    %v3707 = vld [vmem:[%s3 + $0x1210] sm:$0xff]
    %v3708 = vld [vmem:[%s3 + $0x1218] sm:$0xff]
    %v3709 = vld [vmem:[%s3 + $0x1220] sm:$0xff]
    %v3710 = vld [vmem:[%s3 + $0x1228] sm:$0xff]
    %v3711 = vld [vmem:[%s3 + $0x1230] sm:$0xff]
    %v3712 = vld [vmem:[%s3 + $0x1238] sm:$0xff]
    %v3713 = vld [vmem:[%s3 + $0x1240] sm:$0xff]
    %v3714 = vld [vmem:[%s3 + $0x1248] sm:$0xff]
    %v3715 = vld [vmem:[%s3 + $0x1250] sm:$0xff]
    %v3716 = vld [vmem:[%s3 + $0x1258] sm:$0xff]
    %v3717 = vld [vmem:[%s3 + $0x1260] sm:$0xff]
    %v3718 = vld [vmem:[%s3 + $0x1268] sm:$0xff]
    %v3719 = vld [vmem:[%s3 + $0x1270] sm:$0xff]
    %v3720 = vld [vmem:[%s3 + $0x1278] sm:$0xff]
    %v3721 = vld [vmem:[%s3 + $0x1280] sm:$0xff]
    %v3722 = vld [vmem:[%s3 + $0x1288] sm:$0xff]
    %v3723 = vld [vmem:[%s3 + $0x1290] sm:$0xff]
    %v3724 = vld [vmem:[%s3 + $0x1298] sm:$0xff]
    %v3725 = vld [vmem:[%s3 + $0x12a0] sm:$0xff]
    %v3726 = vld [vmem:[%s3 + $0x12a8] sm:$0xff]
    %v3727 = vld [vmem:[%s3 + $0x12b0] sm:$0xff]
    %v3728 = vld [vmem:[%s3 + $0x12b8] sm:$0xff]
    %v3729 = vld [vmem:[%s3 + $0x12c0] sm:$0xff]
    %v3730 = vld [vmem:[%s3 + $0x12c8] sm:$0xff]
    %v3731 = vld [vmem:[%s3 + $0x12d0] sm:$0xff]
    %v3732 = vld [vmem:[%s3 + $0x12d8] sm:$0xff]
    %v3733 = vld [vmem:[%s3 + $0x12e0] sm:$0xff]
    %v3734 = vld [vmem:[%s3 + $0x12e8] sm:$0xff]
    %v3735 = vld [vmem:[%s3 + $0x12f0] sm:$0xff]
    %v3736 = vld [vmem:[%s3 + $0x12f8] sm:$0xff]
    %v3737 = vld [vmem:[%s3 + $0x1300] sm:$0xff]
    %v3738 = vld [vmem:[%s3 + $0x1308] sm:$0xff]
    %v3739 = vld [vmem:[%s3 + $0x1310] sm:$0xff]
    %v3740 = vld [vmem:[%s3 + $0x1318] sm:$0xff]
    %v3741 = vld [vmem:[%s3 + $0x1320] sm:$0xff]
    %v3742 = vld [vmem:[%s3 + $0x1328] sm:$0xff]
    %v3743 = vld [vmem:[%s3 + $0x1330] sm:$0xff]
    %v3744 = vld [vmem:[%s3 + $0x1338] sm:$0xff]
    %v3745 = vld [vmem:[%s3 + $0x1340] sm:$0xff]
    %v3746 = vld [vmem:[%s3 + $0x1348] sm:$0xff]
    %v3747 = vld [vmem:[%s3 + $0x1350] sm:$0xff]
    %v3748 = vld [vmem:[%s3 + $0x1358] sm:$0xff]
    %v3749 = vld [vmem:[%s3 + $0x1360] sm:$0xff]
    %v3750 = vld [vmem:[%s3 + $0x1368] sm:$0xff]
    %v3751 = vld [vmem:[%s3 + $0x1370] sm:$0xff]
    %v3752 = vld [vmem:[%s3 + $0x1378] sm:$0xff]
    %v3753 = vld [vmem:[%s3 + $0x1380] sm:$0xff]
    %v3754 = vld [vmem:[%s3 + $0x1388] sm:$0xff]
    %v3755 = vld [vmem:[%s3 + $0x1390] sm:$0xff]
    %v3756 = vld [vmem:[%s3 + $0x1398] sm:$0xff]
    %v3757 = vld [vmem:[%s3 + $0x13a0] sm:$0xff]
    %v3758 = vld [vmem:[%s3 + $0x13a8] sm:$0xff]
    %v3759 = vld [vmem:[%s3 + $0x13b0] sm:$0xff]
    %v3760 = vld [vmem:[%s3 + $0x13b8] sm:$0xff]
    %v3761 = vld [vmem:[%s3 + $0x13c0] sm:$0xff]
    %v3762 = vld [vmem:[%s3 + $0x13c8] sm:$0xff]
    %v3763 = vld [vmem:[%s3 + $0x13d0] sm:$0xff]
    %v3764 = vld [vmem:[%s3 + $0x13d8] sm:$0xff]
    %v3765 = vld [vmem:[%s3 + $0x13e0] sm:$0xff]
    %v3766 = vld [vmem:[%s3 + $0x13e8] sm:$0xff]
    %v3767 = vld [vmem:[%s3 + $0x13f0] sm:$0xff]
    %v3768 = vld [vmem:[%s3 + $0x13f8] sm:$0xff]
    %v3769 = vld [vmem:[%s3 + $0x1400] sm:$0xff]
    %v3770 = vld [vmem:[%s3 + $0x1408] sm:$0xff]
    %v3771 = vld [vmem:[%s3 + $0x1410] sm:$0xff]
    %v3772 = vld [vmem:[%s3 + $0x1418] sm:$0xff]
    %v3773 = vld [vmem:[%s3 + $0x1420] sm:$0xff]
    %v3774 = vld [vmem:[%s3 + $0x1428] sm:$0xff]
    %v3775 = vld [vmem:[%s3 + $0x1430] sm:$0xff]
    %v3776 = vld [vmem:[%s3 + $0x1438] sm:$0xff]
    %v3777 = vld [vmem:[%s3 + $0x1440] sm:$0xff]
    %v3778 = vld [vmem:[%s3 + $0x1448] sm:$0xff]
    %v3779 = vld [vmem:[%s3 + $0x1450] sm:$0xff]
    %v3780 = vld [vmem:[%s3 + $0x1458] sm:$0xff]
    %v3781 = vld [vmem:[%s3 + $0x1460] sm:$0xff]
    %v3782 = vld [vmem:[%s3 + $0x1468] sm:$0xff]
    %v3783 = vld [vmem:[%s3 + $0x1470] sm:$0xff]
    %v3784 = vld [vmem:[%s3 + $0x1478] sm:$0xff]
    %v3785 = vld [vmem:[%s3 + $0x1480] sm:$0xff]
    %v3786 = vld [vmem:[%s3 + $0x1488] sm:$0xff]
    %v3787 = vld [vmem:[%s3 + $0x1490] sm:$0xff]
    %v3788 = vld [vmem:[%s3 + $0x1498] sm:$0xff]
    %v3789 = vld [vmem:[%s3 + $0x14a0] sm:$0xff]
    %v3790 = vld [vmem:[%s3 + $0x14a8] sm:$0xff]
    %v3791 = vld [vmem:[%s3 + $0x14b0] sm:$0xff]
    %v3792 = vld [vmem:[%s3 + $0x14b8] sm:$0xff]
    %v3793 = vld [vmem:[%s3 + $0x14c0] sm:$0xff]
    %v3794 = vld [vmem:[%s3 + $0x14c8] sm:$0xff]
    %v3795 = vld [vmem:[%s3 + $0x14d0] sm:$0xff]
    %v3796 = vld [vmem:[%s3 + $0x14d8] sm:$0xff]
    %v3797 = vld [vmem:[%s3 + $0x14e0] sm:$0xff]
    %v3798 = vld [vmem:[%s3 + $0x14e8] sm:$0xff]
    %v3799 = vld [vmem:[%s3 + $0x14f0] sm:$0xff]
    %v3800 = vld [vmem:[%s3 + $0x14f8] sm:$0xff]
    %v3801 = vld [vmem:[%s3 + $0x1500] sm:$0xff]
    %v3802 = vld [vmem:[%s3 + $0x1508] sm:$0xff]
    %v3803 = vld [vmem:[%s3 + $0x1510] sm:$0xff]
    %v3804 = vld [vmem:[%s3 + $0x1518] sm:$0xff]
    %v3805 = vld [vmem:[%s3 + $0x1520] sm:$0xff]
    %v3806 = vld [vmem:[%s3 + $0x1528] sm:$0xff]
    %v3807 = vld [vmem:[%s3 + $0x1530] sm:$0xff]
    %v3808 = vld [vmem:[%s3 + $0x1538] sm:$0xff]
    %v3809 = vld [vmem:[%s3 + $0x1540] sm:$0xff]
    %v3810 = vld [vmem:[%s3 + $0x1548] sm:$0xff]
    %v3811 = vld [vmem:[%s3 + $0x1550] sm:$0xff]
    %v3812 = vld [vmem:[%s3 + $0x1558] sm:$0xff]
    %v3813 = vld [vmem:[%s3 + $0x1560] sm:$0xff]
    %v3814 = vld [vmem:[%s3 + $0x1568] sm:$0xff]
    %v3815 = vld [vmem:[%s3 + $0x1570] sm:$0xff]
    %v3816 = vld [vmem:[%s3 + $0x1578] sm:$0xff]
    %v3817 = vld [vmem:[%s4] sm:$0xff]
    %v3818 = vld [vmem:[%s4 + $0x8] sm:$0xff]
    %v3819 = vld [vmem:[%s4 + $0x10] sm:$0xff]
    %v3820 = vld [vmem:[%s4 + $0x18] sm:$0xff]
    %v3821 = vld [vmem:[%s4 + $0x20] sm:$0xff]
    %v3822 = vld [vmem:[%s4 + $0x28] sm:$0xff]
    %v3823 = vld [vmem:[%s4 + $0x30] sm:$0xff]
    %v3824 = vld [vmem:[%s4 + $0x38] sm:$0xff]
    %v3825 = vld [vmem:[%s4 + $0x40] sm:$0xff]
    %v3826 = vld [vmem:[%s4 + $0x48] sm:$0xff]
    %v3827 = vld [vmem:[%s4 + $0x50] sm:$0xff]
    %v3828 = vld [vmem:[%s4 + $0x58] sm:$0xff]
    %v3829 = vld [vmem:[%s4 + $0x60] sm:$0xff]
    %v3830 = vld [vmem:[%s4 + $0x68] sm:$0xff]
    %v3831 = vld [vmem:[%s4 + $0x70] sm:$0xff]
    %v3832 = vld [vmem:[%s4 + $0x78] sm:$0xff]
    %3834 = vset.pattern.permute.xlu0 0
    %3835 = vperm.xlu0 %3834, %v3817
    %v3836 = vpop.permute.xlu0 %3835
    %3839 = vset.pattern.permute.xlu0 0
    %3840 = vperm.xlu0 %3839, %v3818
    %v3841 = vpop.permute.xlu0 %3840
    %3844 = vset.pattern.permute.xlu0 0
    %3845 = vperm.xlu0 %3844, %v3819
    %v3846 = vpop.permute.xlu0 %3845
    %3849 = vset.pattern.permute.xlu0 0
    %3850 = vperm.xlu0 %3849, %v3820
    %v3851 = vpop.permute.xlu0 %3850
    %3854 = vset.pattern.permute.xlu0 0
    %3855 = vperm.xlu0 %3854, %v3821
    %v3856 = vpop.permute.xlu0 %3855
    %3859 = vset.pattern.permute.xlu0 0
    %3860 = vperm.xlu0 %3859, %v3822
    %v3861 = vpop.permute.xlu0 %3860
    %3864 = vset.pattern.permute.xlu0 0
    %3865 = vperm.xlu0 %3864, %v3823
    %v3866 = vpop.permute.xlu0 %3865
    %3869 = vset.pattern.permute.xlu0 0
    %3870 = vperm.xlu0 %3869, %v3824
    %v3871 = vpop.permute.xlu0 %3870
    %3874 = vset.pattern.permute.xlu0 0
    %3875 = vperm.xlu0 %3874, %v3825
    %v3876 = vpop.permute.xlu0 %3875
    %3879 = vset.pattern.permute.xlu0 0
    %3880 = vperm.xlu0 %3879, %v3826
    %v3881 = vpop.permute.xlu0 %3880
    %3884 = vset.pattern.permute.xlu0 0
    %3885 = vperm.xlu0 %3884, %v3827
    %v3886 = vpop.permute.xlu0 %3885
    %3889 = vset.pattern.permute.xlu0 0
    %3890 = vperm.xlu0 %3889, %v3828
    %v3891 = vpop.permute.xlu0 %3890
    %3894 = vset.pattern.permute.xlu0 0
    %3895 = vperm.xlu0 %3894, %v3829
    %v3896 = vpop.permute.xlu0 %3895
    %3899 = vset.pattern.permute.xlu0 0
    %3900 = vperm.xlu0 %3899, %v3830
    %v3901 = vpop.permute.xlu0 %3900
    %3904 = vset.pattern.permute.xlu0 0
    %3905 = vperm.xlu0 %3904, %v3831
    %v3906 = vpop.permute.xlu0 %3905
    %3909 = vset.pattern.permute.xlu0 0
    %3910 = vperm.xlu0 %3909, %v3832
    %v3911 = vpop.permute.xlu0 %3910
    %vm3913 = vcmask 261120
    %v3915 = vsel %vm3913, %v3171, 0
    %v3918 = vsel %vm3913, %v3214, 0
    %v3921 = vsel %vm3913, %v3257, 0
    %v3924 = vsel %vm3913, %v3300, 0
    %v3927 = vsel %vm3913, %v3343, 0
    %v3930 = vsel %vm3913, %v3386, 0
    %v3933 = vsel %vm3913, %v3429, 0
    %v3936 = vsel %vm3913, %v3472, 0
    %v3939 = vsel %vm3913, %v3515, 0
    %v3942 = vsel %vm3913, %v3558, 0
    %v3945 = vsel %vm3913, %v3601, 0
    %v3948 = vsel %vm3913, %v3644, 0
    %v3951 = vsel %vm3913, %v3687, 0
    %v3954 = vsel %vm3913, %v3730, 0
    %v3957 = vsel %vm3913, %v3773, 0
    %v3960 = vsel %vm3913, %v3816, 0
    %3962 = vmatprep.subr.mxu0 0.0
    %3963 = vmatpush1.msra.mxu0 %v2453
    %3964 = vmatprep.subr.mxu0 0.0
    %3965 = vmatpush1.msra.mxu0 %v2454
    %3966 = vmatprep.subr.mxu0 0.0
    %3967 = vmatpush1.msra.mxu0 %v2455
    %3968 = vmatprep.subr.mxu0 0.0
    %3969 = vmatpush1.msra.mxu0 %v2456
    %3970 = vmatprep.subr.mxu0 0.0
    %3971 = vmatpush1.msra.mxu0 %v2457
    %3972 = vmatprep.subr.mxu0 0.0
    %3973 = vmatpush1.msra.mxu0 %v2458
    %3974 = vmatprep.subr.mxu0 0.0
    %3975 = vmatpush1.msra.mxu0 %v2459
    %3976 = vmatprep.subr.mxu0 0.0
    %3977 = vmatpush1.msra.mxu0 %v2460
    %3978 = vmatprep.subr.mxu0 0.0
    %3979 = vmatpush1.msra.mxu0 %v2461
    %3980 = vmatprep.subr.mxu0 0.0
    %3981 = vmatpush1.msra.mxu0 %v2462
    %3982 = vmatprep.subr.mxu0 0.0
    %3983 = vmatpush1.msra.mxu0 %v2463
    %3984 = vmatprep.subr.mxu0 0.0
    %3985 = vmatpush1.msra.mxu0 %v2464
    %3986 = vmatprep.subr.mxu0 0.0
    %3987 = vmatpush1.msra.mxu0 %v2465
    %3988 = vmatprep.subr.mxu0 0.0
    %3989 = vmatpush1.msra.mxu0 %v2466
    %3990 = vmatprep.subr.mxu0 0.0
    %3991 = vmatpush1.msra.mxu0 %v2467
    %3992 = vmatprep.subr.mxu0 0.0
    %3993 = vmatpush1.msra.mxu0 %v2468
    %3994 = vmatprep.subr.mxu0 0.0
    %3995 = vmatpush1.msra.mxu0 %v2469
    %3996 = vmatprep.subr.mxu0 0.0
    %3997 = vmatpush1.msra.mxu0 %v2470
    %3998 = vmatprep.subr.mxu0 0.0
    %3999 = vmatpush1.msra.mxu0 %v2471
    %4000 = vmatprep.subr.mxu0 0.0
    %4001 = vmatpush1.msra.mxu0 %v2472
    %4002 = vmatprep.subr.mxu0 0.0
    %4003 = vmatpush1.msra.mxu0 %v2473
    %4004 = vmatprep.subr.mxu0 0.0
    %4005 = vmatpush1.msra.mxu0 %v2474
    %4006 = vmatprep.subr.mxu0 0.0
    %4007 = vmatpush1.msra.mxu0 %v2475
    %4008 = vmatprep.subr.mxu0 0.0
    %4009 = vmatpush1.msra.mxu0 %v2476
    %4010 = vmatprep.subr.mxu0 0.0
    %4011 = vmatpush1.msra.mxu0 %v2477
    %4012 = vmatprep.subr.mxu0 0.0
    %4013 = vmatpush1.msra.mxu0 %v2478
    %4014 = vmatprep.subr.mxu0 0.0
    %4015 = vmatpush1.msra.mxu0 %v2479
    %4016 = vmatprep.subr.mxu0 0.0
    %4017 = vmatpush1.msra.mxu0 %v2480
    %4018 = vmatprep.subr.mxu0 0.0
    %4019 = vmatpush1.msra.mxu0 %v2481
    %4020 = vmatprep.subr.mxu0 0.0
    %4021 = vmatpush1.msra.mxu0 %v2482
    %4022 = vmatprep.subr.mxu0 0.0
    %4023 = vmatpush1.msra.mxu0 %v2483
    %4024 = vmatprep.subr.mxu0 0.0
    %4025 = vmatpush1.msra.mxu0 %v2484
    %4026 = vmatprep.mubr.f32.mxu0 %v3130
    %4027 = vmatmul.mubr.f32.gmra.mrb[0].mxu0 %v3129
    %v4028 = vpop.f32.mrb[0].mxu0
    %v4029 = vadd.f32 %v3836, %v4028
    %v4030 = vpop.f32.mrb[0].mxu0
    %4031 = vmatprep.mubr.f32.mxu0 %v3173
    %4032 = vmatmul.mubr.f32.gmra.mrb[0].mxu0 %v3172
    %v4033 = vpop.f32.mrb[0].mxu0
    %v4034 = vadd.f32 %v3841, %v4033
    %v4035 = vpop.f32.mrb[0].mxu0
    %4036 = vmatprep.mubr.f32.mxu0 %v3216
    %4037 = vmatmul.mubr.f32.gmra.mrb[0].mxu0 %v3215
    %v4038 = vpop.f32.mrb[0].mxu0
    %v4039 = vadd.f32 %v3846, %v4038
    %v4040 = vpop.f32.mrb[0].mxu0
    %4041 = vmatprep.mubr.f32.mxu0 %v3259
    %4042 = vmatmul.mubr.f32.gmra.mrb[0].mxu0 %v3258
    %v4043 = vpop.f32.mrb[0].mxu0
    %v4044 = vadd.f32 %v3851, %v4043
    %v4045 = vpop.f32.mrb[0].mxu0
    %4046 = vmatprep.mubr.f32.mxu0 %v3302
    %4047 = vmatmul.mubr.f32.gmra.mrb[0].mxu0 %v3301
    %v4048 = vpop.f32.mrb[0].mxu0
    %v4049 = vadd.f32 %v3856, %v4048
    %v4050 = vpop.f32.mrb[0].mxu0
    %4051 = vmatprep.mubr.f32.mxu0 %v3345
    %4052 = vmatmul.mubr.f32.gmra.mrb[0].mxu0 %v3344
    %v4053 = vpop.f32.mrb[0].mxu0
    %v4054 = vadd.f32 %v3861, %v4053
    %v4055 = vpop.f32.mrb[0].mxu0
    %4056 = vmatprep.mubr.f32.mxu0 %v3388
    %4057 = vmatmul.mubr.f32.gmra.mrb[0].mxu0 %v3387
    %v4058 = vpop.f32.mrb[0].mxu0
    %v4059 = vadd.f32 %v3866, %v4058
    %v4060 = vpop.f32.mrb[0].mxu0
    %4061 = vmatprep.mubr.f32.mxu0 %v3431
    %4062 = vmatmul.mubr.f32.gmra.mrb[0].mxu0 %v3430
    %v4063 = vpop.f32.mrb[0].mxu0
    %v4064 = vadd.f32 %v3871, %v4063
    %v4065 = vpop.f32.mrb[0].mxu0
    %4066 = vmatprep.mubr.f32.mxu0 %v3474
    %4067 = vmatmul.mubr.f32.gmra.mrb[0].mxu0 %v3473
    %v4068 = vpop.f32.mrb[0].mxu0
    %v4069 = vadd.f32 %v3876, %v4068
    %v4070 = vpop.f32.mrb[0].mxu0
    %4071 = vmatprep.mubr.f32.mxu0 %v3517
    %4072 = vmatmul.mubr.f32.gmra.mrb[0].mxu0 %v3516
    %v4073 = vpop.f32.mrb[0].mxu0
    %v4074 = vadd.f32 %v3881, %v4073
    %v4075 = vpop.f32.mrb[0].mxu0
    %4076 = vmatprep.mubr.f32.mxu0 %v3560
    %4077 = vmatmul.mubr.f32.gmra.mrb[0].mxu0 %v3559
    %v4078 = vpop.f32.mrb[0].mxu0
    %v4079 = vadd.f32 %v3886, %v4078
    %v4080 = vpop.f32.mrb[0].mxu0
    %4081 = vmatprep.mubr.f32.mxu0 %v3603
    %4082 = vmatmul.mubr.f32.gmra.mrb[0].mxu0 %v3602
    %v4083 = vpop.f32.mrb[0].mxu0
    %v4084 = vadd.f32 %v3891, %v4083
    %v4085 = vpop.f32.mrb[0].mxu0
    %4086 = vmatprep.mubr.f32.mxu0 %v3646
    %4087 = vmatmul.mubr.f32.gmra.mrb[0].mxu0 %v3645
    %v4088 = vpop.f32.mrb[0].mxu0
    %v4089 = vadd.f32 %v3896, %v4088
    %v4090 = vpop.f32.mrb[0].mxu0
    %4091 = vmatprep.mubr.f32.mxu0 %v3689
    %4092 = vmatmul.mubr.f32.gmra.mrb[0].mxu0 %v3688
    %v4093 = vpop.f32.mrb[0].mxu0
    %v4094 = vadd.f32 %v3901, %v4093
    %v4095 = vpop.f32.mrb[0].mxu0
    %4096 = vmatprep.mubr.f32.mxu0 %v3732
    %4097 = vmatmul.mubr.f32.gmra.mrb[0].mxu0 %v3731
    %v4098 = vpop.f32.mrb[0].mxu0
    %v4099 = vadd.f32 %v3906, %v4098
    %v4100 = vpop.f32.mrb[0].mxu0
    %4101 = vmatprep.mubr.f32.mxu0 %v3775
    %4102 = vmatmul.mubr.f32.gmra.mrb[0].mxu0 %v3774
    %v4103 = vpop.f32.mrb[0].mxu0
    %v4104 = vadd.f32 %v3911, %v4103
    %v4105 = vpop.f32.mrb[0].mxu0
    %4106 = vdwg.mxu0
    %4107 = vmatprep.subr.mxu0 0.0
    %4108 = vmatpush1.msra.mxu0 %v2485
    %4109 = vmatprep.subr.mxu0 0.0
    %4110 = vmatpush1.msra.mxu0 %v2486
    %4111 = vmatprep.subr.mxu0 0.0
    %4112 = vmatpush1.msra.mxu0 %v2487
    %4113 = vmatprep.subr.mxu0 0.0
    %4114 = vmatpush1.msra.mxu0 %v2488
    %4115 = vmatprep.subr.mxu0 0.0
    %4116 = vmatpush1.msra.mxu0 %v2489
    %4117 = vmatprep.subr.mxu0 0.0
    %4118 = vmatpush1.msra.mxu0 %v2490
    %4119 = vmatprep.subr.mxu0 0.0
    %4120 = vmatpush1.msra.mxu0 %v2491
    %4121 = vmatprep.subr.mxu0 0.0
    %4122 = vmatpush1.msra.mxu0 %v2492
    %4123 = vmatprep.subr.mxu0 0.0
    %4124 = vmatpush1.msra.mxu0 %v2493
    %4125 = vmatprep.subr.mxu0 0.0
    %4126 = vmatpush1.msra.mxu0 %v2494
    %4127 = vmatprep.subr.mxu0 0.0
    %4128 = vmatpush1.msra.mxu0 %v2495
    %4129 = vmatprep.subr.mxu0 0.0
    %4130 = vmatpush1.msra.mxu0 %v2496
    %4131 = vmatprep.subr.mxu0 0.0
    %4132 = vmatpush1.msra.mxu0 %v2497
    %4133 = vmatprep.subr.mxu0 0.0
    %4134 = vmatpush1.msra.mxu0 %v2498
    %4135 = vmatprep.subr.mxu0 0.0
    %4136 = vmatpush1.msra.mxu0 %v2499
    %4137 = vmatprep.subr.mxu0 0.0
    %4138 = vmatpush1.msra.mxu0 %v2500
    %4139 = vmatprep.subr.mxu0 0.0
    %4140 = vmatpush1.msra.mxu0 %v2501
    %4141 = vmatprep.subr.mxu0 0.0
    %4142 = vmatpush1.msra.mxu0 %v2502
    %4143 = vmatprep.subr.mxu0 0.0
    %4144 = vmatpush1.msra.mxu0 %v2503
    %4145 = vmatprep.subr.mxu0 0.0
    %4146 = vmatpush1.msra.mxu0 %v2504
    %4147 = vmatprep.subr.mxu0 0.0
    %4148 = vmatpush1.msra.mxu0 %v2505
    %4149 = vmatprep.subr.mxu0 0.0
    %4150 = vmatpush1.msra.mxu0 %v2506
    %4151 = vmatprep.subr.mxu0 0.0
    %4152 = vmatpush1.msra.mxu0 %v2507
    %4153 = vmatprep.subr.mxu0 0.0
    %4154 = vmatpush1.msra.mxu0 %v2508
    %4155 = vmatprep.subr.mxu0 0.0
    %4156 = vmatpush1.msra.mxu0 %v2509
    %4157 = vmatprep.subr.mxu0 0.0
    %4158 = vmatpush1.msra.mxu0 %v2510
    %4159 = vmatprep.subr.mxu0 0.0
    %4160 = vmatpush1.msra.mxu0 %v2511
    %4161 = vmatprep.subr.mxu0 0.0
    %4162 = vmatpush1.msra.mxu0 %v2512
    %4163 = vmatprep.subr.mxu0 0.0
    %4164 = vmatpush1.msra.mxu0 %v2513
    %4165 = vmatprep.subr.mxu0 0.0
    %4166 = vmatpush1.msra.mxu0 %v2514
    %4167 = vmatprep.subr.mxu0 0.0
    %4168 = vmatpush1.msra.mxu0 %v2515
    %4169 = vmatprep.subr.mxu0 0.0
    %4170 = vmatpush1.msra.mxu0 %v2516
    %4171 = vmatprep.mubr.f32.mxu0 %v3132
    %4172 = vmatmul.mubr.f32.gmra.mrb[0].mxu0 %v3131
    %v4173 = vpop.f32.mrb[0].mxu0
    %v4174 = vadd.f32 %v4029, %v4173
    %v4175 = vpop.f32.mrb[0].mxu0
    %4176 = vmatprep.mubr.f32.mxu0 %v3175
    %4177 = vmatmul.mubr.f32.gmra.mrb[0].mxu0 %v3174
    %v4178 = vpop.f32.mrb[0].mxu0
    %v4179 = vadd.f32 %v4034, %v4178
    %v4180 = vpop.f32.mrb[0].mxu0
    %4181 = vmatprep.mubr.f32.mxu0 %v3218
    %4182 = vmatmul.mubr.f32.gmra.mrb[0].mxu0 %v3217
    %v4183 = vpop.f32.mrb[0].mxu0
    %v4184 = vadd.f32 %v4039, %v4183
    %v4185 = vpop.f32.mrb[0].mxu0
    %4186 = vmatprep.mubr.f32.mxu0 %v3261
    %4187 = vmatmul.mubr.f32.gmra.mrb[0].mxu0 %v3260
    %v4188 = vpop.f32.mrb[0].mxu0
    %v4189 = vadd.f32 %v4044, %v4188
    %v4190 = vpop.f32.mrb[0].mxu0
    %4191 = vmatprep.mubr.f32.mxu0 %v3304
    %4192 = vmatmul.mubr.f32.gmra.mrb[0].mxu0 %v3303
    %v4193 = vpop.f32.mrb[0].mxu0
    %v4194 = vadd.f32 %v4049, %v4193
    %v4195 = vpop.f32.mrb[0].mxu0
    %4196 = vmatprep.mubr.f32.mxu0 %v3347
    %4197 = vmatmul.mubr.f32.gmra.mrb[0].mxu0 %v3346
    %v4198 = vpop.f32.mrb[0].mxu0
    %v4199 = vadd.f32 %v4054, %v4198
    %v4200 = vpop.f32.mrb[0].mxu0
    %4201 = vmatprep.mubr.f32.mxu0 %v3390
    %4202 = vmatmul.mubr.f32.gmra.mrb[0].mxu0 %v3389
    %v4203 = vpop.f32.mrb[0].mxu0
    %v4204 = vadd.f32 %v4059, %v4203
    %v4205 = vpop.f32.mrb[0].mxu0
    %4206 = vmatprep.mubr.f32.mxu0 %v3433
    %4207 = vmatmul.mubr.f32.gmra.mrb[0].mxu0 %v3432
    %v4208 = vpop.f32.mrb[0].mxu0
    %v4209 = vadd.f32 %v4064, %v4208
    %v4210 = vpop.f32.mrb[0].mxu0
    %4211 = vmatprep.mubr.f32.mxu0 %v3476
    %4212 = vmatmul.mubr.f32.gmra.mrb[0].mxu0 %v3475
    %v4213 = vpop.f32.mrb[0].mxu0
    %v4214 = vadd.f32 %v4069, %v4213
    %v4215 = vpop.f32.mrb[0].mxu0
    %4216 = vmatprep.mubr.f32.mxu0 %v3519
    %4217 = vmatmul.mubr.f32.gmra.mrb[0].mxu0 %v3518
    %v4218 = vpop.f32.mrb[0].mxu0
    %v4219 = vadd.f32 %v4074, %v4218
    %v4220 = vpop.f32.mrb[0].mxu0
    %4221 = vmatprep.mubr.f32.mxu0 %v3562
    %4222 = vmatmul.mubr.f32.gmra.mrb[0].mxu0 %v3561
    %v4223 = vpop.f32.mrb[0].mxu0
    %v4224 = vadd.f32 %v4079, %v4223
    %v4225 = vpop.f32.mrb[0].mxu0
    %4226 = vmatprep.mubr.f32.mxu0 %v3605
    %4227 = vmatmul.mubr.f32.gmra.mrb[0].mxu0 %v3604
    %v4228 = vpop.f32.mrb[0].mxu0
    %v4229 = vadd.f32 %v4084, %v4228
    %v4230 = vpop.f32.mrb[0].mxu0
    %4231 = vmatprep.mubr.f32.mxu0 %v3648
    %4232 = vmatmul.mubr.f32.gmra.mrb[0].mxu0 %v3647
    %v4233 = vpop.f32.mrb[0].mxu0
    %v4234 = vadd.f32 %v4089, %v4233
    %v4235 = vpop.f32.mrb[0].mxu0
    %4236 = vmatprep.mubr.f32.mxu0 %v3691
    %4237 = vmatmul.mubr.f32.gmra.mrb[0].mxu0 %v3690
    %v4238 = vpop.f32.mrb[0].mxu0
    %v4239 = vadd.f32 %v4094, %v4238
    %v4240 = vpop.f32.mrb[0].mxu0
    %4241 = vmatprep.mubr.f32.mxu0 %v3734
    %4242 = vmatmul.mubr.f32.gmra.mrb[0].mxu0 %v3733
    %v4243 = vpop.f32.mrb[0].mxu0
    %v4244 = vadd.f32 %v4099, %v4243
    %v4245 = vpop.f32.mrb[0].mxu0
    %4246 = vmatprep.mubr.f32.mxu0 %v3777
    %4247 = vmatmul.mubr.f32.gmra.mrb[0].mxu0 %v3776
    %v4248 = vpop.f32.mrb[0].mxu0
    %v4249 = vadd.f32 %v4104, %v4248
    %v4250 = vpop.f32.mrb[0].mxu0
    %4251 = vdwg.mxu0
    %4252 = vmatprep.subr.mxu0 0.0
    %4253 = vmatpush1.msra.mxu0 %v2517
    %4254 = vmatprep.subr.mxu0 0.0
    %4255 = vmatpush1.msra.mxu0 %v2518
    %4256 = vmatprep.subr.mxu0 0.0
    %4257 = vmatpush1.msra.mxu0 %v2519
    %4258 = vmatprep.subr.mxu0 0.0
    %4259 = vmatpush1.msra.mxu0 %v2520
    %4260 = vmatprep.subr.mxu0 0.0
    %4261 = vmatpush1.msra.mxu0 %v2521
    %4262 = vmatprep.subr.mxu0 0.0
    %4263 = vmatpush1.msra.mxu0 %v2522
    %4264 = vmatprep.subr.mxu0 0.0
    %4265 = vmatpush1.msra.mxu0 %v2523
    %4266 = vmatprep.subr.mxu0 0.0
    %4267 = vmatpush1.msra.mxu0 %v2524
    %4268 = vmatprep.subr.mxu0 0.0
    %4269 = vmatpush1.msra.mxu0 %v2525
    %4270 = vmatprep.subr.mxu0 0.0
    %4271 = vmatpush1.msra.mxu0 %v2526
    %4272 = vmatprep.subr.mxu0 0.0
    %4273 = vmatpush1.msra.mxu0 %v2527
    %4274 = vmatprep.subr.mxu0 0.0
    %4275 = vmatpush1.msra.mxu0 %v2528
    %4276 = vmatprep.subr.mxu0 0.0
    %4277 = vmatpush1.msra.mxu0 %v2529
    %4278 = vmatprep.subr.mxu0 0.0
    %4279 = vmatpush1.msra.mxu0 %v2530
    %4280 = vmatprep.subr.mxu0 0.0
    %4281 = vmatpush1.msra.mxu0 %v2531
    %4282 = vmatprep.subr.mxu0 0.0
    %4283 = vmatpush1.msra.mxu0 %v2532
    %4284 = vmatprep.subr.mxu0 0.0
    %4285 = vmatpush1.msra.mxu0 %v2533
    %4286 = vmatprep.subr.mxu0 0.0
    %4287 = vmatpush1.msra.mxu0 %v2534
    %4288 = vmatprep.subr.mxu0 0.0
    %4289 = vmatpush1.msra.mxu0 %v2535
    %4290 = vmatprep.subr.mxu0 0.0
    %4291 = vmatpush1.msra.mxu0 %v2536
    %4292 = vmatprep.subr.mxu0 0.0
    %4293 = vmatpush1.msra.mxu0 %v2537
    %4294 = vmatprep.subr.mxu0 0.0
    %4295 = vmatpush1.msra.mxu0 %v2538
    %4296 = vmatprep.subr.mxu0 0.0
    %4297 = vmatpush1.msra.mxu0 %v2539
    %4298 = vmatprep.subr.mxu0 0.0
    %4299 = vmatpush1.msra.mxu0 %v2540
    %4300 = vmatprep.subr.mxu0 0.0
    %4301 = vmatpush1.msra.mxu0 %v2541
    %4302 = vmatprep.subr.mxu0 0.0
    %4303 = vmatpush1.msra.mxu0 %v2542
    %4304 = vmatprep.subr.mxu0 0.0
    %4305 = vmatpush1.msra.mxu0 %v2543
    %4306 = vmatprep.subr.mxu0 0.0
    %4307 = vmatpush1.msra.mxu0 %v2544
    %4308 = vmatprep.subr.mxu0 0.0
    %4309 = vmatpush1.msra.mxu0 %v2545
    %4310 = vmatprep.subr.mxu0 0.0
    %4311 = vmatpush1.msra.mxu0 %v2546
    %4312 = vmatprep.subr.mxu0 0.0
    %4313 = vmatpush1.msra.mxu0 %v2547
    %4314 = vmatprep.subr.mxu0 0.0
    %4315 = vmatpush1.msra.mxu0 %v2548
    %4316 = vmatprep.mubr.f32.mxu0 %v3134
    %4317 = vmatmul.mubr.f32.gmra.mrb[0].mxu0 %v3133
    %v4318 = vpop.f32.mrb[0].mxu0
    %v4319 = vadd.f32 %v4174, %v4318
    %v4320 = vpop.f32.mrb[0].mxu0
    %4321 = vmatprep.mubr.f32.mxu0 %v3177
    %4322 = vmatmul.mubr.f32.gmra.mrb[0].mxu0 %v3176
    %v4323 = vpop.f32.mrb[0].mxu0
    %v4324 = vadd.f32 %v4179, %v4323
    %v4325 = vpop.f32.mrb[0].mxu0
    %4326 = vmatprep.mubr.f32.mxu0 %v3220
    %4327 = vmatmul.mubr.f32.gmra.mrb[0].mxu0 %v3219
    %v4328 = vpop.f32.mrb[0].mxu0
    %v4329 = vadd.f32 %v4184, %v4328
    %v4330 = vpop.f32.mrb[0].mxu0
    %4331 = vmatprep.mubr.f32.mxu0 %v3263
    %4332 = vmatmul.mubr.f32.gmra.mrb[0].mxu0 %v3262
    %v4333 = vpop.f32.mrb[0].mxu0
    %v4334 = vadd.f32 %v4189, %v4333
    %v4335 = vpop.f32.mrb[0].mxu0
    %4336 = vmatprep.mubr.f32.mxu0 %v3306
    %4337 = vmatmul.mubr.f32.gmra.mrb[0].mxu0 %v3305
    %v4338 = vpop.f32.mrb[0].mxu0
    %v4339 = vadd.f32 %v4194, %v4338
    %v4340 = vpop.f32.mrb[0].mxu0
    %4341 = vmatprep.mubr.f32.mxu0 %v3349
    %4342 = vmatmul.mubr.f32.gmra.mrb[0].mxu0 %v3348
    %v4343 = vpop.f32.mrb[0].mxu0
    %v4344 = vadd.f32 %v4199, %v4343
    %v4345 = vpop.f32.mrb[0].mxu0
    %4346 = vmatprep.mubr.f32.mxu0 %v3392
    %4347 = vmatmul.mubr.f32.gmra.mrb[0].mxu0 %v3391
    %v4348 = vpop.f32.mrb[0].mxu0
    %v4349 = vadd.f32 %v4204, %v4348
    %v4350 = vpop.f32.mrb[0].mxu0
    %4351 = vmatprep.mubr.f32.mxu0 %v3435
    %4352 = vmatmul.mubr.f32.gmra.mrb[0].mxu0 %v3434
    %v4353 = vpop.f32.mrb[0].mxu0
    %v4354 = vadd.f32 %v4209, %v4353
    %v4355 = vpop.f32.mrb[0].mxu0
    %4356 = vmatprep.mubr.f32.mxu0 %v3478
    %4357 = vmatmul.mubr.f32.gmra.mrb[0].mxu0 %v3477
    %v4358 = vpop.f32.mrb[0].mxu0
    %v4359 = vadd.f32 %v4214, %v4358
    %v4360 = vpop.f32.mrb[0].mxu0
    %4361 = vmatprep.mubr.f32.mxu0 %v3521
    %4362 = vmatmul.mubr.f32.gmra.mrb[0].mxu0 %v3520
    %v4363 = vpop.f32.mrb[0].mxu0
    %v4364 = vadd.f32 %v4219, %v4363
    %v4365 = vpop.f32.mrb[0].mxu0
    %4366 = vmatprep.mubr.f32.mxu0 %v3564
    %4367 = vmatmul.mubr.f32.gmra.mrb[0].mxu0 %v3563
    %v4368 = vpop.f32.mrb[0].mxu0
    %v4369 = vadd.f32 %v4224, %v4368
    %v4370 = vpop.f32.mrb[0].mxu0
    %4371 = vmatprep.mubr.f32.mxu0 %v3607
    %4372 = vmatmul.mubr.f32.gmra.mrb[0].mxu0 %v3606
    %v4373 = vpop.f32.mrb[0].mxu0
    %v4374 = vadd.f32 %v4229, %v4373
    %v4375 = vpop.f32.mrb[0].mxu0
    %4376 = vmatprep.mubr.f32.mxu0 %v3650
    %4377 = vmatmul.mubr.f32.gmra.mrb[0].mxu0 %v3649
    %v4378 = vpop.f32.mrb[0].mxu0
    %v4379 = vadd.f32 %v4234, %v4378
    %v4380 = vpop.f32.mrb[0].mxu0
    %4381 = vmatprep.mubr.f32.mxu0 %v3693
    %4382 = vmatmul.mubr.f32.gmra.mrb[0].mxu0 %v3692
    %v4383 = vpop.f32.mrb[0].mxu0
    %v4384 = vadd.f32 %v4239, %v4383
    %v4385 = vpop.f32.mrb[0].mxu0
    %4386 = vmatprep.mubr.f32.mxu0 %v3736
    %4387 = vmatmul.mubr.f32.gmra.mrb[0].mxu0 %v3735
    %v4388 = vpop.f32.mrb[0].mxu0
    %v4389 = vadd.f32 %v4244, %v4388
    %v4390 = vpop.f32.mrb[0].mxu0
    %4391 = vmatprep.mubr.f32.mxu0 %v3779
    %4392 = vmatmul.mubr.f32.gmra.mrb[0].mxu0 %v3778
    %v4393 = vpop.f32.mrb[0].mxu0
    %v4394 = vadd.f32 %v4249, %v4393
    %v4395 = vpop.f32.mrb[0].mxu0
    %4396 = vdwg.mxu0
    %4397 = vmatprep.subr.mxu0 0.0
    %4398 = vmatpush1.msra.mxu0 %v2549
    %4399 = vmatprep.subr.mxu0 0.0
    %4400 = vmatpush1.msra.mxu0 %v2550
    %4401 = vmatprep.subr.mxu0 0.0
    %4402 = vmatpush1.msra.mxu0 %v2551
    %4403 = vmatprep.subr.mxu0 0.0
    %4404 = vmatpush1.msra.mxu0 %v2552
    %4405 = vmatprep.subr.mxu0 0.0
    %4406 = vmatpush1.msra.mxu0 %v2553
    %4407 = vmatprep.subr.mxu0 0.0
    %4408 = vmatpush1.msra.mxu0 %v2554
    %4409 = vmatprep.subr.mxu0 0.0
    %4410 = vmatpush1.msra.mxu0 %v2555
    %4411 = vmatprep.subr.mxu0 0.0
    %4412 = vmatpush1.msra.mxu0 %v2556
    %4413 = vmatprep.subr.mxu0 0.0
    %4414 = vmatpush1.msra.mxu0 %v2557
    %4415 = vmatprep.subr.mxu0 0.0
    %4416 = vmatpush1.msra.mxu0 %v2558
    %4417 = vmatprep.subr.mxu0 0.0
    %4418 = vmatpush1.msra.mxu0 %v2559
    %4419 = vmatprep.subr.mxu0 0.0
    %4420 = vmatpush1.msra.mxu0 %v2560
    %4421 = vmatprep.subr.mxu0 0.0
    %4422 = vmatpush1.msra.mxu0 %v2561
    %4423 = vmatprep.subr.mxu0 0.0
    %4424 = vmatpush1.msra.mxu0 %v2562
    %4425 = vmatprep.subr.mxu0 0.0
    %4426 = vmatpush1.msra.mxu0 %v2563
    %4427 = vmatprep.subr.mxu0 0.0
    %4428 = vmatpush1.msra.mxu0 %v2564
    %4429 = vmatprep.subr.mxu0 0.0
    %4430 = vmatpush1.msra.mxu0 %v2565
    %4431 = vmatprep.subr.mxu0 0.0
    %4432 = vmatpush1.msra.mxu0 %v2566
    %4433 = vmatprep.subr.mxu0 0.0
    %4434 = vmatpush1.msra.mxu0 %v2567
    %4435 = vmatprep.subr.mxu0 0.0
    %4436 = vmatpush1.msra.mxu0 %v2568
    %4437 = vmatprep.subr.mxu0 0.0
    %4438 = vmatpush1.msra.mxu0 %v2569
    %4439 = vmatprep.subr.mxu0 0.0
    %4440 = vmatpush1.msra.mxu0 %v2570
    %4441 = vmatprep.subr.mxu0 0.0
    %4442 = vmatpush1.msra.mxu0 %v2571
    %4443 = vmatprep.subr.mxu0 0.0
    %4444 = vmatpush1.msra.mxu0 %v2572
    %4445 = vmatprep.subr.mxu0 0.0
    %4446 = vmatpush1.msra.mxu0 %v2573
    %4447 = vmatprep.subr.mxu0 0.0
    %4448 = vmatpush1.msra.mxu0 %v2574
    %4449 = vmatprep.subr.mxu0 0.0
    %4450 = vmatpush1.msra.mxu0 %v2575
    %4451 = vmatprep.subr.mxu0 0.0
    %4452 = vmatpush1.msra.mxu0 %v2576
    %4453 = vmatprep.subr.mxu0 0.0
    %4454 = vmatpush1.msra.mxu0 %v2577
    %4455 = vmatprep.subr.mxu0 0.0
    %4456 = vmatpush1.msra.mxu0 %v2578
    %4457 = vmatprep.subr.mxu0 0.0
    %4458 = vmatpush1.msra.mxu0 %v2579
    %4459 = vmatprep.subr.mxu0 0.0
    %4460 = vmatpush1.msra.mxu0 %v2580
    %4461 = vmatprep.mubr.f32.mxu0 %v3136
    %4462 = vmatmul.mubr.f32.gmra.mrb[0].mxu0 %v3135
    %v4463 = vpop.f32.mrb[0].mxu0
    %v4464 = vadd.f32 %v4319, %v4463
    %v4465 = vpop.f32.mrb[0].mxu0
    %4466 = vmatprep.mubr.f32.mxu0 %v3179
    %4467 = vmatmul.mubr.f32.gmra.mrb[0].mxu0 %v3178
    %v4468 = vpop.f32.mrb[0].mxu0
    %v4469 = vadd.f32 %v4324, %v4468
    %v4470 = vpop.f32.mrb[0].mxu0
    %4471 = vmatprep.mubr.f32.mxu0 %v3222
    %4472 = vmatmul.mubr.f32.gmra.mrb[0].mxu0 %v3221
    %v4473 = vpop.f32.mrb[0].mxu0
    %v4474 = vadd.f32 %v4329, %v4473
    %v4475 = vpop.f32.mrb[0].mxu0
    %4476 = vmatprep.mubr.f32.mxu0 %v3265
    %4477 = vmatmul.mubr.f32.gmra.mrb[0].mxu0 %v3264
    %v4478 = vpop.f32.mrb[0].mxu0
    %v4479 = vadd.f32 %v4334, %v4478
    %v4480 = vpop.f32.mrb[0].mxu0
    %4481 = vmatprep.mubr.f32.mxu0 %v3308
    %4482 = vmatmul.mubr.f32.gmra.mrb[0].mxu0 %v3307
    %v4483 = vpop.f32.mrb[0].mxu0
    %v4484 = vadd.f32 %v4339, %v4483
    %v4485 = vpop.f32.mrb[0].mxu0
    %4486 = vmatprep.mubr.f32.mxu0 %v3351
    %4487 = vmatmul.mubr.f32.gmra.mrb[0].mxu0 %v3350
    %v4488 = vpop.f32.mrb[0].mxu0
    %v4489 = vadd.f32 %v4344, %v4488
    %v4490 = vpop.f32.mrb[0].mxu0
    %4491 = vmatprep.mubr.f32.mxu0 %v3394
    %4492 = vmatmul.mubr.f32.gmra.mrb[0].mxu0 %v3393
    %v4493 = vpop.f32.mrb[0].mxu0
    %v4494 = vadd.f32 %v4349, %v4493
    %v4495 = vpop.f32.mrb[0].mxu0
    %4496 = vmatprep.mubr.f32.mxu0 %v3437
    %4497 = vmatmul.mubr.f32.gmra.mrb[0].mxu0 %v3436
    %v4498 = vpop.f32.mrb[0].mxu0
    %v4499 = vadd.f32 %v4354, %v4498
    %v4500 = vpop.f32.mrb[0].mxu0
    %4501 = vmatprep.mubr.f32.mxu0 %v3480
    %4502 = vmatmul.mubr.f32.gmra.mrb[0].mxu0 %v3479
    %v4503 = vpop.f32.mrb[0].mxu0
    %v4504 = vadd.f32 %v4359, %v4503
    %v4505 = vpop.f32.mrb[0].mxu0
    %4506 = vmatprep.mubr.f32.mxu0 %v3523
    %4507 = vmatmul.mubr.f32.gmra.mrb[0].mxu0 %v3522
    %v4508 = vpop.f32.mrb[0].mxu0
    %v4509 = vadd.f32 %v4364, %v4508
    %v4510 = vpop.f32.mrb[0].mxu0
    %4511 = vmatprep.mubr.f32.mxu0 %v3566
    %4512 = vmatmul.mubr.f32.gmra.mrb[0].mxu0 %v3565
    %v4513 = vpop.f32.mrb[0].mxu0
    %v4514 = vadd.f32 %v4369, %v4513
    %v4515 = vpop.f32.mrb[0].mxu0
    %4516 = vmatprep.mubr.f32.mxu0 %v3609
    %4517 = vmatmul.mubr.f32.gmra.mrb[0].mxu0 %v3608
    %v4518 = vpop.f32.mrb[0].mxu0
    %v4519 = vadd.f32 %v4374, %v4518
    %v4520 = vpop.f32.mrb[0].mxu0
    %4521 = vmatprep.mubr.f32.mxu0 %v3652
    %4522 = vmatmul.mubr.f32.gmra.mrb[0].mxu0 %v3651
    %v4523 = vpop.f32.mrb[0].mxu0
    %v4524 = vadd.f32 %v4379, %v4523
    %v4525 = vpop.f32.mrb[0].mxu0
    %4526 = vmatprep.mubr.f32.mxu0 %v3695
    %4527 = vmatmul.mubr.f32.gmra.mrb[0].mxu0 %v3694
    %v4528 = vpop.f32.mrb[0].mxu0
    %v4529 = vadd.f32 %v4384, %v4528
    %v4530 = vpop.f32.mrb[0].mxu0
    %4531 = vmatprep.mubr.f32.mxu0 %v3738
    %4532 = vmatmul.mubr.f32.gmra.mrb[0].mxu0 %v3737
    %v4533 = vpop.f32.mrb[0].mxu0
    %v4534 = vadd.f32 %v4389, %v4533
    %v4535 = vpop.f32.mrb[0].mxu0
    %4536 = vmatprep.mubr.f32.mxu0 %v3781
    %4537 = vmatmul.mubr.f32.gmra.mrb[0].mxu0 %v3780
    %v4538 = vpop.f32.mrb[0].mxu0
    %v4539 = vadd.f32 %v4394, %v4538
    %v4540 = vpop.f32.mrb[0].mxu0
    %4541 = vdwg.mxu0
    %4542 = vmatprep.subr.mxu0 0.0
    %4543 = vmatpush1.msra.mxu0 %v2581
    %4544 = vmatprep.subr.mxu0 0.0
    %4545 = vmatpush1.msra.mxu0 %v2582
    %4546 = vmatprep.subr.mxu0 0.0
    %4547 = vmatpush1.msra.mxu0 %v2583
    %4548 = vmatprep.subr.mxu0 0.0
    %4549 = vmatpush1.msra.mxu0 %v2584
    %4550 = vmatprep.subr.mxu0 0.0
    %4551 = vmatpush1.msra.mxu0 %v2585
    %4552 = vmatprep.subr.mxu0 0.0
    %4553 = vmatpush1.msra.mxu0 %v2586
    %4554 = vmatprep.subr.mxu0 0.0
    %4555 = vmatpush1.msra.mxu0 %v2587
    %4556 = vmatprep.subr.mxu0 0.0
    %4557 = vmatpush1.msra.mxu0 %v2588
    %4558 = vmatprep.subr.mxu0 0.0
    %4559 = vmatpush1.msra.mxu0 %v2589
    %4560 = vmatprep.subr.mxu0 0.0
    %4561 = vmatpush1.msra.mxu0 %v2590
    %4562 = vmatprep.subr.mxu0 0.0
    %4563 = vmatpush1.msra.mxu0 %v2591
    %4564 = vmatprep.subr.mxu0 0.0
    %4565 = vmatpush1.msra.mxu0 %v2592
    %4566 = vmatprep.subr.mxu0 0.0
    %4567 = vmatpush1.msra.mxu0 %v2593
    %4568 = vmatprep.subr.mxu0 0.0
    %4569 = vmatpush1.msra.mxu0 %v2594
    %4570 = vmatprep.subr.mxu0 0.0
    %4571 = vmatpush1.msra.mxu0 %v2595
    %4572 = vmatprep.subr.mxu0 0.0
    %4573 = vmatpush1.msra.mxu0 %v2596
    %4574 = vmatprep.subr.mxu0 0.0
    %4575 = vmatpush1.msra.mxu0 %v2597
    %4576 = vmatprep.subr.mxu0 0.0
    %4577 = vmatpush1.msra.mxu0 %v2598
    %4578 = vmatprep.subr.mxu0 0.0
    %4579 = vmatpush1.msra.mxu0 %v2599
    %4580 = vmatprep.subr.mxu0 0.0
    %4581 = vmatpush1.msra.mxu0 %v2600
    %4582 = vmatprep.subr.mxu0 0.0
    %4583 = vmatpush1.msra.mxu0 %v2601
    %4584 = vmatprep.subr.mxu0 0.0
    %4585 = vmatpush1.msra.mxu0 %v2602
    %4586 = vmatprep.subr.mxu0 0.0
    %4587 = vmatpush1.msra.mxu0 %v2603
    %4588 = vmatprep.subr.mxu0 0.0
    %4589 = vmatpush1.msra.mxu0 %v2604
    %4590 = vmatprep.subr.mxu0 0.0
    %4591 = vmatpush1.msra.mxu0 %v2605
    %4592 = vmatprep.subr.mxu0 0.0
    %4593 = vmatpush1.msra.mxu0 %v2606
    %4594 = vmatprep.subr.mxu0 0.0
    %4595 = vmatpush1.msra.mxu0 %v2607
    %4596 = vmatprep.subr.mxu0 0.0
    %4597 = vmatpush1.msra.mxu0 %v2608
    %4598 = vmatprep.subr.mxu0 0.0
    %4599 = vmatpush1.msra.mxu0 %v2609
    %4600 = vmatprep.subr.mxu0 0.0
    %4601 = vmatpush1.msra.mxu0 %v2610
    %4602 = vmatprep.subr.mxu0 0.0
    %4603 = vmatpush1.msra.mxu0 %v2611
    %4604 = vmatprep.subr.mxu0 0.0
    %4605 = vmatpush1.msra.mxu0 %v2612
    %4606 = vmatprep.mubr.f32.mxu0 %v3138
    %4607 = vmatmul.mubr.f32.gmra.mrb[0].mxu0 %v3137
    %v4608 = vpop.f32.mrb[0].mxu0
    %v4609 = vadd.f32 %v4464, %v4608
    %v4610 = vpop.f32.mrb[0].mxu0
    %4611 = vmatprep.mubr.f32.mxu0 %v3181
    %4612 = vmatmul.mubr.f32.gmra.mrb[0].mxu0 %v3180
    %v4613 = vpop.f32.mrb[0].mxu0
    %v4614 = vadd.f32 %v4469, %v4613
    %v4615 = vpop.f32.mrb[0].mxu0
    %4616 = vmatprep.mubr.f32.mxu0 %v3224
    %4617 = vmatmul.mubr.f32.gmra.mrb[0].mxu0 %v3223
    %v4618 = vpop.f32.mrb[0].mxu0
    %v4619 = vadd.f32 %v4474, %v4618
    %v4620 = vpop.f32.mrb[0].mxu0
    %4621 = vmatprep.mubr.f32.mxu0 %v3267
    %4622 = vmatmul.mubr.f32.gmra.mrb[0].mxu0 %v3266
    %v4623 = vpop.f32.mrb[0].mxu0
    %v4624 = vadd.f32 %v4479, %v4623
    %v4625 = vpop.f32.mrb[0].mxu0
    %4626 = vmatprep.mubr.f32.mxu0 %v3310
    %4627 = vmatmul.mubr.f32.gmra.mrb[0].mxu0 %v3309
    %v4628 = vpop.f32.mrb[0].mxu0
    %v4629 = vadd.f32 %v4484, %v4628
    %v4630 = vpop.f32.mrb[0].mxu0
    %4631 = vmatprep.mubr.f32.mxu0 %v3353
    %4632 = vmatmul.mubr.f32.gmra.mrb[0].mxu0 %v3352
    %v4633 = vpop.f32.mrb[0].mxu0
    %v4634 = vadd.f32 %v4489, %v4633
    %v4635 = vpop.f32.mrb[0].mxu0
    %4636 = vmatprep.mubr.f32.mxu0 %v3396
    %4637 = vmatmul.mubr.f32.gmra.mrb[0].mxu0 %v3395
    %v4638 = vpop.f32.mrb[0].mxu0
    %v4639 = vadd.f32 %v4494, %v4638
    %v4640 = vpop.f32.mrb[0].mxu0
    %4641 = vmatprep.mubr.f32.mxu0 %v3439
    %4642 = vmatmul.mubr.f32.gmra.mrb[0].mxu0 %v3438
    %v4643 = vpop.f32.mrb[0].mxu0
    %v4644 = vadd.f32 %v4499, %v4643
    %v4645 = vpop.f32.mrb[0].mxu0
    %4646 = vmatprep.mubr.f32.mxu0 %v3482
    %4647 = vmatmul.mubr.f32.gmra.mrb[0].mxu0 %v3481
    %v4648 = vpop.f32.mrb[0].mxu0
    %v4649 = vadd.f32 %v4504, %v4648
    %v4650 = vpop.f32.mrb[0].mxu0
    %4651 = vmatprep.mubr.f32.mxu0 %v3525
    %4652 = vmatmul.mubr.f32.gmra.mrb[0].mxu0 %v3524
    %v4653 = vpop.f32.mrb[0].mxu0
    %v4654 = vadd.f32 %v4509, %v4653
    %v4655 = vpop.f32.mrb[0].mxu0
    %4656 = vmatprep.mubr.f32.mxu0 %v3568
    %4657 = vmatmul.mubr.f32.gmra.mrb[0].mxu0 %v3567
    %v4658 = vpop.f32.mrb[0].mxu0
    %v4659 = vadd.f32 %v4514, %v4658
    %v4660 = vpop.f32.mrb[0].mxu0
    %4661 = vmatprep.mubr.f32.mxu0 %v3611
    %4662 = vmatmul.mubr.f32.gmra.mrb[0].mxu0 %v3610
    %v4663 = vpop.f32.mrb[0].mxu0
    %v4664 = vadd.f32 %v4519, %v4663
    %v4665 = vpop.f32.mrb[0].mxu0
    %4666 = vmatprep.mubr.f32.mxu0 %v3654
    %4667 = vmatmul.mubr.f32.gmra.mrb[0].mxu0 %v3653
    %v4668 = vpop.f32.mrb[0].mxu0
    %v4669 = vadd.f32 %v4524, %v4668
    %v4670 = vpop.f32.mrb[0].mxu0
    %4671 = vmatprep.mubr.f32.mxu0 %v3697
    %4672 = vmatmul.mubr.f32.gmra.mrb[0].mxu0 %v3696
    %v4673 = vpop.f32.mrb[0].mxu0
    %v4674 = vadd.f32 %v4529, %v4673
    %v4675 = vpop.f32.mrb[0].mxu0
    %4676 = vmatprep.mubr.f32.mxu0 %v3740
    %4677 = vmatmul.mubr.f32.gmra.mrb[0].mxu0 %v3739
    %v4678 = vpop.f32.mrb[0].mxu0
    %v4679 = vadd.f32 %v4534, %v4678
    %v4680 = vpop.f32.mrb[0].mxu0
    %4681 = vmatprep.mubr.f32.mxu0 %v3783
    %4682 = vmatmul.mubr.f32.gmra.mrb[0].mxu0 %v3782
    %v4683 = vpop.f32.mrb[0].mxu0
    %v4684 = vadd.f32 %v4539, %v4683
    %v4685 = vpop.f32.mrb[0].mxu0
    %4686 = vdwg.mxu0
    %4687 = vmatprep.subr.mxu0 0.0
    %4688 = vmatpush1.msra.mxu0 %v2613
    %4689 = vmatprep.subr.mxu0 0.0
    %4690 = vmatpush1.msra.mxu0 %v2614
    %4691 = vmatprep.subr.mxu0 0.0
    %4692 = vmatpush1.msra.mxu0 %v2615
    %4693 = vmatprep.subr.mxu0 0.0
    %4694 = vmatpush1.msra.mxu0 %v2616
    %4695 = vmatprep.subr.mxu0 0.0
    %4696 = vmatpush1.msra.mxu0 %v2617
    %4697 = vmatprep.subr.mxu0 0.0
    %4698 = vmatpush1.msra.mxu0 %v2618
    %4699 = vmatprep.subr.mxu0 0.0
    %4700 = vmatpush1.msra.mxu0 %v2619
    %4701 = vmatprep.subr.mxu0 0.0
    %4702 = vmatpush1.msra.mxu0 %v2620
    %4703 = vmatprep.subr.mxu0 0.0
    %4704 = vmatpush1.msra.mxu0 %v2621
    %4705 = vmatprep.subr.mxu0 0.0
    %4706 = vmatpush1.msra.mxu0 %v2622
    %4707 = vmatprep.subr.mxu0 0.0
    %4708 = vmatpush1.msra.mxu0 %v2623
    %4709 = vmatprep.subr.mxu0 0.0
    %4710 = vmatpush1.msra.mxu0 %v2624
    %4711 = vmatprep.subr.mxu0 0.0
    %4712 = vmatpush1.msra.mxu0 %v2625
    %4713 = vmatprep.subr.mxu0 0.0
    %4714 = vmatpush1.msra.mxu0 %v2626
    %4715 = vmatprep.subr.mxu0 0.0
    %4716 = vmatpush1.msra.mxu0 %v2627
    %4717 = vmatprep.subr.mxu0 0.0
    %4718 = vmatpush1.msra.mxu0 %v2628
    %4719 = vmatprep.subr.mxu0 0.0
    %4720 = vmatpush1.msra.mxu0 %v2629
    %4721 = vmatprep.subr.mxu0 0.0
    %4722 = vmatpush1.msra.mxu0 %v2630
    %4723 = vmatprep.subr.mxu0 0.0
    %4724 = vmatpush1.msra.mxu0 %v2631
    %4725 = vmatprep.subr.mxu0 0.0
    %4726 = vmatpush1.msra.mxu0 %v2632
    %4727 = vmatprep.subr.mxu0 0.0
    %4728 = vmatpush1.msra.mxu0 %v2633
    %4729 = vmatprep.subr.mxu0 0.0
    %4730 = vmatpush1.msra.mxu0 %v2634
    %4731 = vmatprep.subr.mxu0 0.0
    %4732 = vmatpush1.msra.mxu0 %v2635
    %4733 = vmatprep.subr.mxu0 0.0
    %4734 = vmatpush1.msra.mxu0 %v2636
    %4735 = vmatprep.subr.mxu0 0.0
    %4736 = vmatpush1.msra.mxu0 %v2637
    %4737 = vmatprep.subr.mxu0 0.0
    %4738 = vmatpush1.msra.mxu0 %v2638
    %4739 = vmatprep.subr.mxu0 0.0
    %4740 = vmatpush1.msra.mxu0 %v2639
    %4741 = vmatprep.subr.mxu0 0.0
    %4742 = vmatpush1.msra.mxu0 %v2640
    %4743 = vmatprep.subr.mxu0 0.0
    %4744 = vmatpush1.msra.mxu0 %v2641
    %4745 = vmatprep.subr.mxu0 0.0
    %4746 = vmatpush1.msra.mxu0 %v2642
    %4747 = vmatprep.subr.mxu0 0.0
    %4748 = vmatpush1.msra.mxu0 %v2643
    %4749 = vmatprep.subr.mxu0 0.0
    %4750 = vmatpush1.msra.mxu0 %v2644
    %4751 = vmatprep.mubr.f32.mxu0 %v3140
    %4752 = vmatmul.mubr.f32.gmra.mrb[0].mxu0 %v3139
    %v4753 = vpop.f32.mrb[0].mxu0
    %v4754 = vadd.f32 %v4609, %v4753
    %v4755 = vpop.f32.mrb[0].mxu0
    %4756 = vmatprep.mubr.f32.mxu0 %v3183
    %4757 = vmatmul.mubr.f32.gmra.mrb[0].mxu0 %v3182
    %v4758 = vpop.f32.mrb[0].mxu0
    %v4759 = vadd.f32 %v4614, %v4758
    %v4760 = vpop.f32.mrb[0].mxu0
    %4761 = vmatprep.mubr.f32.mxu0 %v3226
    %4762 = vmatmul.mubr.f32.gmra.mrb[0].mxu0 %v3225
    %v4763 = vpop.f32.mrb[0].mxu0
    %v4764 = vadd.f32 %v4619, %v4763
    %v4765 = vpop.f32.mrb[0].mxu0
    %4766 = vmatprep.mubr.f32.mxu0 %v3269
    %4767 = vmatmul.mubr.f32.gmra.mrb[0].mxu0 %v3268
    %v4768 = vpop.f32.mrb[0].mxu0
    %v4769 = vadd.f32 %v4624, %v4768
    %v4770 = vpop.f32.mrb[0].mxu0
    %4771 = vmatprep.mubr.f32.mxu0 %v3312
    %4772 = vmatmul.mubr.f32.gmra.mrb[0].mxu0 %v3311
    %v4773 = vpop.f32.mrb[0].mxu0
    %v4774 = vadd.f32 %v4629, %v4773
    %v4775 = vpop.f32.mrb[0].mxu0
    %4776 = vmatprep.mubr.f32.mxu0 %v3355
    %4777 = vmatmul.mubr.f32.gmra.mrb[0].mxu0 %v3354
    %v4778 = vpop.f32.mrb[0].mxu0
    %v4779 = vadd.f32 %v4634, %v4778
    %v4780 = vpop.f32.mrb[0].mxu0
    %4781 = vmatprep.mubr.f32.mxu0 %v3398
    %4782 = vmatmul.mubr.f32.gmra.mrb[0].mxu0 %v3397
    %v4783 = vpop.f32.mrb[0].mxu0
    %v4784 = vadd.f32 %v4639, %v4783
    %v4785 = vpop.f32.mrb[0].mxu0
    %4786 = vmatprep.mubr.f32.mxu0 %v3441
    %4787 = vmatmul.mubr.f32.gmra.mrb[0].mxu0 %v3440
    %v4788 = vpop.f32.mrb[0].mxu0
    %v4789 = vadd.f32 %v4644, %v4788
    %v4790 = vpop.f32.mrb[0].mxu0
    %4791 = vmatprep.mubr.f32.mxu0 %v3484
    %4792 = vmatmul.mubr.f32.gmra.mrb[0].mxu0 %v3483
    %v4793 = vpop.f32.mrb[0].mxu0
    %v4794 = vadd.f32 %v4649, %v4793
    %v4795 = vpop.f32.mrb[0].mxu0
    %4796 = vmatprep.mubr.f32.mxu0 %v3527
    %4797 = vmatmul.mubr.f32.gmra.mrb[0].mxu0 %v3526
    %v4798 = vpop.f32.mrb[0].mxu0
    %v4799 = vadd.f32 %v4654, %v4798
    %v4800 = vpop.f32.mrb[0].mxu0
    %4801 = vmatprep.mubr.f32.mxu0 %v3570
    %4802 = vmatmul.mubr.f32.gmra.mrb[0].mxu0 %v3569
    %v4803 = vpop.f32.mrb[0].mxu0
    %v4804 = vadd.f32 %v4659, %v4803
    %v4805 = vpop.f32.mrb[0].mxu0
    %4806 = vmatprep.mubr.f32.mxu0 %v3613
    %4807 = vmatmul.mubr.f32.gmra.mrb[0].mxu0 %v3612
    %v4808 = vpop.f32.mrb[0].mxu0
    %v4809 = vadd.f32 %v4664, %v4808
    %v4810 = vpop.f32.mrb[0].mxu0
    %4811 = vmatprep.mubr.f32.mxu0 %v3656
    %4812 = vmatmul.mubr.f32.gmra.mrb[0].mxu0 %v3655
    %v4813 = vpop.f32.mrb[0].mxu0
    %v4814 = vadd.f32 %v4669, %v4813
    %v4815 = vpop.f32.mrb[0].mxu0
    %4816 = vmatprep.mubr.f32.mxu0 %v3699
    %4817 = vmatmul.mubr.f32.gmra.mrb[0].mxu0 %v3698
    %v4818 = vpop.f32.mrb[0].mxu0
    %v4819 = vadd.f32 %v4674, %v4818
    %v4820 = vpop.f32.mrb[0].mxu0
    %4821 = vmatprep.mubr.f32.mxu0 %v3742
    %4822 = vmatmul.mubr.f32.gmra.mrb[0].mxu0 %v3741
    %v4823 = vpop.f32.mrb[0].mxu0
    %v4824 = vadd.f32 %v4679, %v4823
    %v4825 = vpop.f32.mrb[0].mxu0
    %4826 = vmatprep.mubr.f32.mxu0 %v3785
    %4827 = vmatmul.mubr.f32.gmra.mrb[0].mxu0 %v3784
    %v4828 = vpop.f32.mrb[0].mxu0
    %v4829 = vadd.f32 %v4684, %v4828
    %v4830 = vpop.f32.mrb[0].mxu0
    %4831 = vdwg.mxu0
    %4832 = vmatprep.subr.mxu0 0.0
    %4833 = vmatpush1.msra.mxu0 %v2645
    %4834 = vmatprep.subr.mxu0 0.0
    %4835 = vmatpush1.msra.mxu0 %v2646
    %4836 = vmatprep.subr.mxu0 0.0
    %4837 = vmatpush1.msra.mxu0 %v2647
    %4838 = vmatprep.subr.mxu0 0.0
    %4839 = vmatpush1.msra.mxu0 %v2648
    %4840 = vmatprep.subr.mxu0 0.0
    %4841 = vmatpush1.msra.mxu0 %v2649
    %4842 = vmatprep.subr.mxu0 0.0
    %4843 = vmatpush1.msra.mxu0 %v2650
    %4844 = vmatprep.subr.mxu0 0.0
    %4845 = vmatpush1.msra.mxu0 %v2651
    %4846 = vmatprep.subr.mxu0 0.0
    %4847 = vmatpush1.msra.mxu0 %v2652
    %4848 = vmatprep.subr.mxu0 0.0
    %4849 = vmatpush1.msra.mxu0 %v2653
    %4850 = vmatprep.subr.mxu0 0.0
    %4851 = vmatpush1.msra.mxu0 %v2654
    %4852 = vmatprep.subr.mxu0 0.0
    %4853 = vmatpush1.msra.mxu0 %v2655
    %4854 = vmatprep.subr.mxu0 0.0
    %4855 = vmatpush1.msra.mxu0 %v2656
    %4856 = vmatprep.subr.mxu0 0.0
    %4857 = vmatpush1.msra.mxu0 %v2657
    %4858 = vmatprep.subr.mxu0 0.0
    %4859 = vmatpush1.msra.mxu0 %v2658
    %4860 = vmatprep.subr.mxu0 0.0
    %4861 = vmatpush1.msra.mxu0 %v2659
    %4862 = vmatprep.subr.mxu0 0.0
    %4863 = vmatpush1.msra.mxu0 %v2660
    %4864 = vmatprep.subr.mxu0 0.0
    %4865 = vmatpush1.msra.mxu0 %v2661
    %4866 = vmatprep.subr.mxu0 0.0
    %4867 = vmatpush1.msra.mxu0 %v2662
    %4868 = vmatprep.subr.mxu0 0.0
    %4869 = vmatpush1.msra.mxu0 %v2663
    %4870 = vmatprep.subr.mxu0 0.0
    %4871 = vmatpush1.msra.mxu0 %v2664
    %4872 = vmatprep.subr.mxu0 0.0
    %4873 = vmatpush1.msra.mxu0 %v2665
    %4874 = vmatprep.subr.mxu0 0.0
    %4875 = vmatpush1.msra.mxu0 %v2666
    %4876 = vmatprep.subr.mxu0 0.0
    %4877 = vmatpush1.msra.mxu0 %v2667
    %4878 = vmatprep.subr.mxu0 0.0
    %4879 = vmatpush1.msra.mxu0 %v2668
    %4880 = vmatprep.subr.mxu0 0.0
    %4881 = vmatpush1.msra.mxu0 %v2669
    %4882 = vmatprep.subr.mxu0 0.0
    %4883 = vmatpush1.msra.mxu0 %v2670
    %4884 = vmatprep.subr.mxu0 0.0
    %4885 = vmatpush1.msra.mxu0 %v2671
    %4886 = vmatprep.subr.mxu0 0.0
    %4887 = vmatpush1.msra.mxu0 %v2672
    %4888 = vmatprep.subr.mxu0 0.0
    %4889 = vmatpush1.msra.mxu0 %v2673
    %4890 = vmatprep.subr.mxu0 0.0
    %4891 = vmatpush1.msra.mxu0 %v2674
    %4892 = vmatprep.subr.mxu0 0.0
    %4893 = vmatpush1.msra.mxu0 %v2675
    %4894 = vmatprep.subr.mxu0 0.0
    %4895 = vmatpush1.msra.mxu0 %v2676
    %4896 = vmatprep.mubr.f32.mxu0 %v3142
    %4897 = vmatmul.mubr.f32.gmra.mrb[0].mxu0 %v3141
    %v4898 = vpop.f32.mrb[0].mxu0
    %v4899 = vadd.f32 %v4754, %v4898
    %v4900 = vpop.f32.mrb[0].mxu0
    %4901 = vmatprep.mubr.f32.mxu0 %v3185
    %4902 = vmatmul.mubr.f32.gmra.mrb[0].mxu0 %v3184
    %v4903 = vpop.f32.mrb[0].mxu0
    %v4904 = vadd.f32 %v4759, %v4903
    %v4905 = vpop.f32.mrb[0].mxu0
    %4906 = vmatprep.mubr.f32.mxu0 %v3228
    %4907 = vmatmul.mubr.f32.gmra.mrb[0].mxu0 %v3227
    %v4908 = vpop.f32.mrb[0].mxu0
    %v4909 = vadd.f32 %v4764, %v4908
    %v4910 = vpop.f32.mrb[0].mxu0
    %4911 = vmatprep.mubr.f32.mxu0 %v3271
    %4912 = vmatmul.mubr.f32.gmra.mrb[0].mxu0 %v3270
    %v4913 = vpop.f32.mrb[0].mxu0
    %v4914 = vadd.f32 %v4769, %v4913
    %v4915 = vpop.f32.mrb[0].mxu0
    %4916 = vmatprep.mubr.f32.mxu0 %v3314
    %4917 = vmatmul.mubr.f32.gmra.mrb[0].mxu0 %v3313
    %v4918 = vpop.f32.mrb[0].mxu0
    %v4919 = vadd.f32 %v4774, %v4918
    %v4920 = vpop.f32.mrb[0].mxu0
    %4921 = vmatprep.mubr.f32.mxu0 %v3357
    %4922 = vmatmul.mubr.f32.gmra.mrb[0].mxu0 %v3356
    %v4923 = vpop.f32.mrb[0].mxu0
    %v4924 = vadd.f32 %v4779, %v4923
    %v4925 = vpop.f32.mrb[0].mxu0
    %4926 = vmatprep.mubr.f32.mxu0 %v3400
    %4927 = vmatmul.mubr.f32.gmra.mrb[0].mxu0 %v3399
    %v4928 = vpop.f32.mrb[0].mxu0
    %v4929 = vadd.f32 %v4784, %v4928
    %v4930 = vpop.f32.mrb[0].mxu0
    %4931 = vmatprep.mubr.f32.mxu0 %v3443
    %4932 = vmatmul.mubr.f32.gmra.mrb[0].mxu0 %v3442
    %v4933 = vpop.f32.mrb[0].mxu0
    %v4934 = vadd.f32 %v4789, %v4933
    %v4935 = vpop.f32.mrb[0].mxu0
    %4936 = vmatprep.mubr.f32.mxu0 %v3486
    %4937 = vmatmul.mubr.f32.gmra.mrb[0].mxu0 %v3485
    %v4938 = vpop.f32.mrb[0].mxu0
    %v4939 = vadd.f32 %v4794, %v4938
    %v4940 = vpop.f32.mrb[0].mxu0
    %4941 = vmatprep.mubr.f32.mxu0 %v3529
    %4942 = vmatmul.mubr.f32.gmra.mrb[0].mxu0 %v3528
    %v4943 = vpop.f32.mrb[0].mxu0
    %v4944 = vadd.f32 %v4799, %v4943
    %v4945 = vpop.f32.mrb[0].mxu0
    %4946 = vmatprep.mubr.f32.mxu0 %v3572
    %4947 = vmatmul.mubr.f32.gmra.mrb[0].mxu0 %v3571
    %v4948 = vpop.f32.mrb[0].mxu0
    %v4949 = vadd.f32 %v4804, %v4948
    %v4950 = vpop.f32.mrb[0].mxu0
    %4951 = vmatprep.mubr.f32.mxu0 %v3615
    %4952 = vmatmul.mubr.f32.gmra.mrb[0].mxu0 %v3614
    %v4953 = vpop.f32.mrb[0].mxu0
    %v4954 = vadd.f32 %v4809, %v4953
    %v4955 = vpop.f32.mrb[0].mxu0
    %4956 = vmatprep.mubr.f32.mxu0 %v3658
    %4957 = vmatmul.mubr.f32.gmra.mrb[0].mxu0 %v3657
    %v4958 = vpop.f32.mrb[0].mxu0
    %v4959 = vadd.f32 %v4814, %v4958
    %v4960 = vpop.f32.mrb[0].mxu0
    %4961 = vmatprep.mubr.f32.mxu0 %v3701
    %4962 = vmatmul.mubr.f32.gmra.mrb[0].mxu0 %v3700
    %v4963 = vpop.f32.mrb[0].mxu0
    %v4964 = vadd.f32 %v4819, %v4963
    %v4965 = vpop.f32.mrb[0].mxu0
    %4966 = vmatprep.mubr.f32.mxu0 %v3744
    %4967 = vmatmul.mubr.f32.gmra.mrb[0].mxu0 %v3743
    %v4968 = vpop.f32.mrb[0].mxu0
    %v4969 = vadd.f32 %v4824, %v4968
    %v4970 = vpop.f32.mrb[0].mxu0
    %4971 = vmatprep.mubr.f32.mxu0 %v3787
    %4972 = vmatmul.mubr.f32.gmra.mrb[0].mxu0 %v3786
    %v4973 = vpop.f32.mrb[0].mxu0
    %v4974 = vadd.f32 %v4829, %v4973
    %v4975 = vpop.f32.mrb[0].mxu0
    %4976 = vdwg.mxu0
    %4977 = vmatprep.subr.mxu0 0.0
    %4978 = vmatpush1.msra.mxu0 %v2677
    %4979 = vmatprep.subr.mxu0 0.0
    %4980 = vmatpush1.msra.mxu0 %v2678
    %4981 = vmatprep.subr.mxu0 0.0
    %4982 = vmatpush1.msra.mxu0 %v2679
    %4983 = vmatprep.subr.mxu0 0.0
    %4984 = vmatpush1.msra.mxu0 %v2680
    %4985 = vmatprep.subr.mxu0 0.0
    %4986 = vmatpush1.msra.mxu0 %v2681
    %4987 = vmatprep.subr.mxu0 0.0
    %4988 = vmatpush1.msra.mxu0 %v2682
    %4989 = vmatprep.subr.mxu0 0.0
    %4990 = vmatpush1.msra.mxu0 %v2683
    %4991 = vmatprep.subr.mxu0 0.0
    %4992 = vmatpush1.msra.mxu0 %v2684
    %4993 = vmatprep.subr.mxu0 0.0
    %4994 = vmatpush1.msra.mxu0 %v2685
    %4995 = vmatprep.subr.mxu0 0.0
    %4996 = vmatpush1.msra.mxu0 %v2686
    %4997 = vmatprep.subr.mxu0 0.0
    %4998 = vmatpush1.msra.mxu0 %v2687
    %4999 = vmatprep.subr.mxu0 0.0
    %5000 = vmatpush1.msra.mxu0 %v2688
    %5001 = vmatprep.subr.mxu0 0.0
    %5002 = vmatpush1.msra.mxu0 %v2689
    %5003 = vmatprep.subr.mxu0 0.0
    %5004 = vmatpush1.msra.mxu0 %v2690
    %5005 = vmatprep.subr.mxu0 0.0
    %5006 = vmatpush1.msra.mxu0 %v2691
    %5007 = vmatprep.subr.mxu0 0.0
    %5008 = vmatpush1.msra.mxu0 %v2692
    %5009 = vmatprep.subr.mxu0 0.0
    %5010 = vmatpush1.msra.mxu0 %v2693
    %5011 = vmatprep.subr.mxu0 0.0
    %5012 = vmatpush1.msra.mxu0 %v2694
    %5013 = vmatprep.subr.mxu0 0.0
    %5014 = vmatpush1.msra.mxu0 %v2695
    %5015 = vmatprep.subr.mxu0 0.0
    %5016 = vmatpush1.msra.mxu0 %v2696
    %5017 = vmatprep.subr.mxu0 0.0
    %5018 = vmatpush1.msra.mxu0 %v2697
    %5019 = vmatprep.subr.mxu0 0.0
    %5020 = vmatpush1.msra.mxu0 %v2698
    %5021 = vmatprep.subr.mxu0 0.0
    %5022 = vmatpush1.msra.mxu0 %v2699
    %5023 = vmatprep.subr.mxu0 0.0
    %5024 = vmatpush1.msra.mxu0 %v2700
    %5025 = vmatprep.subr.mxu0 0.0
    %5026 = vmatpush1.msra.mxu0 %v2701
    %5027 = vmatprep.subr.mxu0 0.0
    %5028 = vmatpush1.msra.mxu0 %v2702
    %5029 = vmatprep.subr.mxu0 0.0
    %5030 = vmatpush1.msra.mxu0 %v2703
    %5031 = vmatprep.subr.mxu0 0.0
    %5032 = vmatpush1.msra.mxu0 %v2704
    %5033 = vmatprep.subr.mxu0 0.0
    %5034 = vmatpush1.msra.mxu0 %v2705
    %5035 = vmatprep.subr.mxu0 0.0
    %5036 = vmatpush1.msra.mxu0 %v2706
    %5037 = vmatprep.subr.mxu0 0.0
    %5038 = vmatpush1.msra.mxu0 %v2707
    %5039 = vmatprep.subr.mxu0 0.0
    %5040 = vmatpush1.msra.mxu0 %v2708
    %5041 = vmatprep.mubr.f32.mxu0 %v3144
    %5042 = vmatmul.mubr.f32.gmra.mrb[0].mxu0 %v3143
    %v5043 = vpop.f32.mrb[0].mxu0
    %v5044 = vadd.f32 %v4899, %v5043
    %v5045 = vpop.f32.mrb[0].mxu0
    %5046 = vmatprep.mubr.f32.mxu0 %v3187
    %5047 = vmatmul.mubr.f32.gmra.mrb[0].mxu0 %v3186
    %v5048 = vpop.f32.mrb[0].mxu0
    %v5049 = vadd.f32 %v4904, %v5048
    %v5050 = vpop.f32.mrb[0].mxu0
    %5051 = vmatprep.mubr.f32.mxu0 %v3230
    %5052 = vmatmul.mubr.f32.gmra.mrb[0].mxu0 %v3229
    %v5053 = vpop.f32.mrb[0].mxu0
    %v5054 = vadd.f32 %v4909, %v5053
    %v5055 = vpop.f32.mrb[0].mxu0
    %5056 = vmatprep.mubr.f32.mxu0 %v3273
    %5057 = vmatmul.mubr.f32.gmra.mrb[0].mxu0 %v3272
    %v5058 = vpop.f32.mrb[0].mxu0
    %v5059 = vadd.f32 %v4914, %v5058
    %v5060 = vpop.f32.mrb[0].mxu0
    %5061 = vmatprep.mubr.f32.mxu0 %v3316
    %5062 = vmatmul.mubr.f32.gmra.mrb[0].mxu0 %v3315
    %v5063 = vpop.f32.mrb[0].mxu0
    %v5064 = vadd.f32 %v4919, %v5063
    %v5065 = vpop.f32.mrb[0].mxu0
    %5066 = vmatprep.mubr.f32.mxu0 %v3359
    %5067 = vmatmul.mubr.f32.gmra.mrb[0].mxu0 %v3358
    %v5068 = vpop.f32.mrb[0].mxu0
    %v5069 = vadd.f32 %v4924, %v5068
    %v5070 = vpop.f32.mrb[0].mxu0
    %5071 = vmatprep.mubr.f32.mxu0 %v3402
    %5072 = vmatmul.mubr.f32.gmra.mrb[0].mxu0 %v3401
    %v5073 = vpop.f32.mrb[0].mxu0
    %v5074 = vadd.f32 %v4929, %v5073
    %v5075 = vpop.f32.mrb[0].mxu0
    %5076 = vmatprep.mubr.f32.mxu0 %v3445
    %5077 = vmatmul.mubr.f32.gmra.mrb[0].mxu0 %v3444
    %v5078 = vpop.f32.mrb[0].mxu0
    %v5079 = vadd.f32 %v4934, %v5078
    %v5080 = vpop.f32.mrb[0].mxu0
    %5081 = vmatprep.mubr.f32.mxu0 %v3488
    %5082 = vmatmul.mubr.f32.gmra.mrb[0].mxu0 %v3487
    %v5083 = vpop.f32.mrb[0].mxu0
    %v5084 = vadd.f32 %v4939, %v5083
    %v5085 = vpop.f32.mrb[0].mxu0
    %5086 = vmatprep.mubr.f32.mxu0 %v3531
    %5087 = vmatmul.mubr.f32.gmra.mrb[0].mxu0 %v3530
    %v5088 = vpop.f32.mrb[0].mxu0
    %v5089 = vadd.f32 %v4944, %v5088
    %v5090 = vpop.f32.mrb[0].mxu0
    %5091 = vmatprep.mubr.f32.mxu0 %v3574
    %5092 = vmatmul.mubr.f32.gmra.mrb[0].mxu0 %v3573
    %v5093 = vpop.f32.mrb[0].mxu0
    %v5094 = vadd.f32 %v4949, %v5093
    %v5095 = vpop.f32.mrb[0].mxu0
    %5096 = vmatprep.mubr.f32.mxu0 %v3617
    %5097 = vmatmul.mubr.f32.gmra.mrb[0].mxu0 %v3616
    %v5098 = vpop.f32.mrb[0].mxu0
    %v5099 = vadd.f32 %v4954, %v5098
    %v5100 = vpop.f32.mrb[0].mxu0
    %5101 = vmatprep.mubr.f32.mxu0 %v3660
    %5102 = vmatmul.mubr.f32.gmra.mrb[0].mxu0 %v3659
    %v5103 = vpop.f32.mrb[0].mxu0
    %v5104 = vadd.f32 %v4959, %v5103
    %v5105 = vpop.f32.mrb[0].mxu0
    %5106 = vmatprep.mubr.f32.mxu0 %v3703
    %5107 = vmatmul.mubr.f32.gmra.mrb[0].mxu0 %v3702
    %v5108 = vpop.f32.mrb[0].mxu0
    %v5109 = vadd.f32 %v4964, %v5108
    %v5110 = vpop.f32.mrb[0].mxu0
    %5111 = vmatprep.mubr.f32.mxu0 %v3746
    %5112 = vmatmul.mubr.f32.gmra.mrb[0].mxu0 %v3745
    %v5113 = vpop.f32.mrb[0].mxu0
    %v5114 = vadd.f32 %v4969, %v5113
    %v5115 = vpop.f32.mrb[0].mxu0
    %5116 = vmatprep.mubr.f32.mxu0 %v3789
    %5117 = vmatmul.mubr.f32.gmra.mrb[0].mxu0 %v3788
    %v5118 = vpop.f32.mrb[0].mxu0
    %v5119 = vadd.f32 %v4974, %v5118
    %v5120 = vpop.f32.mrb[0].mxu0
    %5121 = vdwg.mxu0
    %5122 = vmatprep.subr.mxu0 0.0
    %5123 = vmatpush1.msra.mxu0 %v2709
    %5124 = vmatprep.subr.mxu0 0.0
    %5125 = vmatpush1.msra.mxu0 %v2710
    %5126 = vmatprep.subr.mxu0 0.0
    %5127 = vmatpush1.msra.mxu0 %v2711
    %5128 = vmatprep.subr.mxu0 0.0
    %5129 = vmatpush1.msra.mxu0 %v2712
    %5130 = vmatprep.subr.mxu0 0.0
    %5131 = vmatpush1.msra.mxu0 %v2713
    %5132 = vmatprep.subr.mxu0 0.0
    %5133 = vmatpush1.msra.mxu0 %v2714
    %5134 = vmatprep.subr.mxu0 0.0
    %5135 = vmatpush1.msra.mxu0 %v2715
    %5136 = vmatprep.subr.mxu0 0.0
    %5137 = vmatpush1.msra.mxu0 %v2716
    %5138 = vmatprep.subr.mxu0 0.0
    %5139 = vmatpush1.msra.mxu0 %v2717
    %5140 = vmatprep.subr.mxu0 0.0
    %5141 = vmatpush1.msra.mxu0 %v2718
    %5142 = vmatprep.subr.mxu0 0.0
    %5143 = vmatpush1.msra.mxu0 %v2719
    %5144 = vmatprep.subr.mxu0 0.0
    %5145 = vmatpush1.msra.mxu0 %v2720
    %5146 = vmatprep.subr.mxu0 0.0
    %5147 = vmatpush1.msra.mxu0 %v2721
    %5148 = vmatprep.subr.mxu0 0.0
    %5149 = vmatpush1.msra.mxu0 %v2722
    %5150 = vmatprep.subr.mxu0 0.0
    %5151 = vmatpush1.msra.mxu0 %v2723
    %5152 = vmatprep.subr.mxu0 0.0
    %5153 = vmatpush1.msra.mxu0 %v2724
    %5154 = vmatprep.subr.mxu0 0.0
    %5155 = vmatpush1.msra.mxu0 %v2725
    %5156 = vmatprep.subr.mxu0 0.0
    %5157 = vmatpush1.msra.mxu0 %v2726
    %5158 = vmatprep.subr.mxu0 0.0
    %5159 = vmatpush1.msra.mxu0 %v2727
    %5160 = vmatprep.subr.mxu0 0.0
    %5161 = vmatpush1.msra.mxu0 %v2728
    %5162 = vmatprep.subr.mxu0 0.0
    %5163 = vmatpush1.msra.mxu0 %v2729
    %5164 = vmatprep.subr.mxu0 0.0
    %5165 = vmatpush1.msra.mxu0 %v2730
    %5166 = vmatprep.subr.mxu0 0.0
    %5167 = vmatpush1.msra.mxu0 %v2731
    %5168 = vmatprep.subr.mxu0 0.0
    %5169 = vmatpush1.msra.mxu0 %v2732
    %5170 = vmatprep.subr.mxu0 0.0
    %5171 = vmatpush1.msra.mxu0 %v2733
    %5172 = vmatprep.subr.mxu0 0.0
    %5173 = vmatpush1.msra.mxu0 %v2734
    %5174 = vmatprep.subr.mxu0 0.0
    %5175 = vmatpush1.msra.mxu0 %v2735
    %5176 = vmatprep.subr.mxu0 0.0
    %5177 = vmatpush1.msra.mxu0 %v2736
    %5178 = vmatprep.subr.mxu0 0.0
    %5179 = vmatpush1.msra.mxu0 %v2737
    %5180 = vmatprep.subr.mxu0 0.0
    %5181 = vmatpush1.msra.mxu0 %v2738
    %5182 = vmatprep.subr.mxu0 0.0
    %5183 = vmatpush1.msra.mxu0 %v2739
    %5184 = vmatprep.subr.mxu0 0.0
    %5185 = vmatpush1.msra.mxu0 %v2740
    %5186 = vmatprep.mubr.f32.mxu0 %v3146
    %5187 = vmatmul.mubr.f32.gmra.mrb[0].mxu0 %v3145
    %v5188 = vpop.f32.mrb[0].mxu0
    %v5189 = vadd.f32 %v5044, %v5188
    %v5190 = vpop.f32.mrb[0].mxu0
    %5191 = vmatprep.mubr.f32.mxu0 %v3189
    %5192 = vmatmul.mubr.f32.gmra.mrb[0].mxu0 %v3188
    %v5193 = vpop.f32.mrb[0].mxu0
    %v5194 = vadd.f32 %v5049, %v5193
    %v5195 = vpop.f32.mrb[0].mxu0
    %5196 = vmatprep.mubr.f32.mxu0 %v3232
    %5197 = vmatmul.mubr.f32.gmra.mrb[0].mxu0 %v3231
    %v5198 = vpop.f32.mrb[0].mxu0
    %v5199 = vadd.f32 %v5054, %v5198
    %v5200 = vpop.f32.mrb[0].mxu0
    %5201 = vmatprep.mubr.f32.mxu0 %v3275
    %5202 = vmatmul.mubr.f32.gmra.mrb[0].mxu0 %v3274
    %v5203 = vpop.f32.mrb[0].mxu0
    %v5204 = vadd.f32 %v5059, %v5203
    %v5205 = vpop.f32.mrb[0].mxu0
    %5206 = vmatprep.mubr.f32.mxu0 %v3318
    %5207 = vmatmul.mubr.f32.gmra.mrb[0].mxu0 %v3317
    %v5208 = vpop.f32.mrb[0].mxu0
    %v5209 = vadd.f32 %v5064, %v5208
    %v5210 = vpop.f32.mrb[0].mxu0
    %5211 = vmatprep.mubr.f32.mxu0 %v3361
    %5212 = vmatmul.mubr.f32.gmra.mrb[0].mxu0 %v3360
    %v5213 = vpop.f32.mrb[0].mxu0
    %v5214 = vadd.f32 %v5069, %v5213
    %v5215 = vpop.f32.mrb[0].mxu0
    %5216 = vmatprep.mubr.f32.mxu0 %v3404
    %5217 = vmatmul.mubr.f32.gmra.mrb[0].mxu0 %v3403
    %v5218 = vpop.f32.mrb[0].mxu0
    %v5219 = vadd.f32 %v5074, %v5218
    %v5220 = vpop.f32.mrb[0].mxu0
    %5221 = vmatprep.mubr.f32.mxu0 %v3447
    %5222 = vmatmul.mubr.f32.gmra.mrb[0].mxu0 %v3446
    %v5223 = vpop.f32.mrb[0].mxu0
    %v5224 = vadd.f32 %v5079, %v5223
    %v5225 = vpop.f32.mrb[0].mxu0
    %5226 = vmatprep.mubr.f32.mxu0 %v3490
    %5227 = vmatmul.mubr.f32.gmra.mrb[0].mxu0 %v3489
    %v5228 = vpop.f32.mrb[0].mxu0
    %v5229 = vadd.f32 %v5084, %v5228
    %v5230 = vpop.f32.mrb[0].mxu0
    %5231 = vmatprep.mubr.f32.mxu0 %v3533
    %5232 = vmatmul.mubr.f32.gmra.mrb[0].mxu0 %v3532
    %v5233 = vpop.f32.mrb[0].mxu0
    %v5234 = vadd.f32 %v5089, %v5233
    %v5235 = vpop.f32.mrb[0].mxu0
    %5236 = vmatprep.mubr.f32.mxu0 %v3576
    %5237 = vmatmul.mubr.f32.gmra.mrb[0].mxu0 %v3575
    %v5238 = vpop.f32.mrb[0].mxu0
    %v5239 = vadd.f32 %v5094, %v5238
    %v5240 = vpop.f32.mrb[0].mxu0
    %5241 = vmatprep.mubr.f32.mxu0 %v3619
    %5242 = vmatmul.mubr.f32.gmra.mrb[0].mxu0 %v3618
    %v5243 = vpop.f32.mrb[0].mxu0
    %v5244 = vadd.f32 %v5099, %v5243
    %v5245 = vpop.f32.mrb[0].mxu0
    %5246 = vmatprep.mubr.f32.mxu0 %v3662
    %5247 = vmatmul.mubr.f32.gmra.mrb[0].mxu0 %v3661
    %v5248 = vpop.f32.mrb[0].mxu0
    %v5249 = vadd.f32 %v5104, %v5248
    %v5250 = vpop.f32.mrb[0].mxu0
    %5251 = vmatprep.mubr.f32.mxu0 %v3705
    %5252 = vmatmul.mubr.f32.gmra.mrb[0].mxu0 %v3704
    %v5253 = vpop.f32.mrb[0].mxu0
    %v5254 = vadd.f32 %v5109, %v5253
    %v5255 = vpop.f32.mrb[0].mxu0
    %5256 = vmatprep.mubr.f32.mxu0 %v3748
    %5257 = vmatmul.mubr.f32.gmra.mrb[0].mxu0 %v3747
    %v5258 = vpop.f32.mrb[0].mxu0
    %v5259 = vadd.f32 %v5114, %v5258
    %v5260 = vpop.f32.mrb[0].mxu0
    %5261 = vmatprep.mubr.f32.mxu0 %v3791
    %5262 = vmatmul.mubr.f32.gmra.mrb[0].mxu0 %v3790
    %v5263 = vpop.f32.mrb[0].mxu0
    %v5264 = vadd.f32 %v5119, %v5263
    %v5265 = vpop.f32.mrb[0].mxu0
    %5266 = vdwg.mxu0
    %5267 = vmatprep.subr.mxu0 0.0
    %5268 = vmatpush1.msra.mxu0 %v2741
    %5269 = vmatprep.subr.mxu0 0.0
    %5270 = vmatpush1.msra.mxu0 %v2742
    %5271 = vmatprep.subr.mxu0 0.0
    %5272 = vmatpush1.msra.mxu0 %v2743
    %5273 = vmatprep.subr.mxu0 0.0
    %5274 = vmatpush1.msra.mxu0 %v2744
    %5275 = vmatprep.subr.mxu0 0.0
    %5276 = vmatpush1.msra.mxu0 %v2745
    %5277 = vmatprep.subr.mxu0 0.0
    %5278 = vmatpush1.msra.mxu0 %v2746
    %5279 = vmatprep.subr.mxu0 0.0
    %5280 = vmatpush1.msra.mxu0 %v2747
    %5281 = vmatprep.subr.mxu0 0.0
    %5282 = vmatpush1.msra.mxu0 %v2748
    %5283 = vmatprep.subr.mxu0 0.0
    %5284 = vmatpush1.msra.mxu0 %v2749
    %5285 = vmatprep.subr.mxu0 0.0
    %5286 = vmatpush1.msra.mxu0 %v2750
    %5287 = vmatprep.subr.mxu0 0.0
    %5288 = vmatpush1.msra.mxu0 %v2751
    %5289 = vmatprep.subr.mxu0 0.0
    %5290 = vmatpush1.msra.mxu0 %v2752
    %5291 = vmatprep.subr.mxu0 0.0
    %5292 = vmatpush1.msra.mxu0 %v2753
    %5293 = vmatprep.subr.mxu0 0.0
    %5294 = vmatpush1.msra.mxu0 %v2754
    %5295 = vmatprep.subr.mxu0 0.0
    %5296 = vmatpush1.msra.mxu0 %v2755
    %5297 = vmatprep.subr.mxu0 0.0
    %5298 = vmatpush1.msra.mxu0 %v2756
    %5299 = vmatprep.subr.mxu0 0.0
    %5300 = vmatpush1.msra.mxu0 %v2757
    %5301 = vmatprep.subr.mxu0 0.0
    %5302 = vmatpush1.msra.mxu0 %v2758
    %5303 = vmatprep.subr.mxu0 0.0
    %5304 = vmatpush1.msra.mxu0 %v2759
    %5305 = vmatprep.subr.mxu0 0.0
    %5306 = vmatpush1.msra.mxu0 %v2760
    %5307 = vmatprep.subr.mxu0 0.0
    %5308 = vmatpush1.msra.mxu0 %v2761
    %5309 = vmatprep.subr.mxu0 0.0
    %5310 = vmatpush1.msra.mxu0 %v2762
    %5311 = vmatprep.subr.mxu0 0.0
    %5312 = vmatpush1.msra.mxu0 %v2763
    %5313 = vmatprep.subr.mxu0 0.0
    %5314 = vmatpush1.msra.mxu0 %v2764
    %5315 = vmatprep.subr.mxu0 0.0
    %5316 = vmatpush1.msra.mxu0 %v2765
    %5317 = vmatprep.subr.mxu0 0.0
    %5318 = vmatpush1.msra.mxu0 %v2766
    %5319 = vmatprep.subr.mxu0 0.0
    %5320 = vmatpush1.msra.mxu0 %v2767
    %5321 = vmatprep.subr.mxu0 0.0
    %5322 = vmatpush1.msra.mxu0 %v2768
    %5323 = vmatprep.subr.mxu0 0.0
    %5324 = vmatpush1.msra.mxu0 %v2769
    %5325 = vmatprep.subr.mxu0 0.0
    %5326 = vmatpush1.msra.mxu0 %v2770
    %5327 = vmatprep.subr.mxu0 0.0
    %5328 = vmatpush1.msra.mxu0 %v2771
    %5329 = vmatprep.subr.mxu0 0.0
    %5330 = vmatpush1.msra.mxu0 %v2772
    %5331 = vmatprep.mubr.f32.mxu0 %v3148
    %5332 = vmatmul.mubr.f32.gmra.mrb[0].mxu0 %v3147
    %v5333 = vpop.f32.mrb[0].mxu0
    %v5334 = vadd.f32 %v5189, %v5333
    %v5335 = vpop.f32.mrb[0].mxu0
    %5336 = vmatprep.mubr.f32.mxu0 %v3191
    %5337 = vmatmul.mubr.f32.gmra.mrb[0].mxu0 %v3190
    %v5338 = vpop.f32.mrb[0].mxu0
    %v5339 = vadd.f32 %v5194, %v5338
    %v5340 = vpop.f32.mrb[0].mxu0
    %5341 = vmatprep.mubr.f32.mxu0 %v3234
    %5342 = vmatmul.mubr.f32.gmra.mrb[0].mxu0 %v3233
    %v5343 = vpop.f32.mrb[0].mxu0
    %v5344 = vadd.f32 %v5199, %v5343
    %v5345 = vpop.f32.mrb[0].mxu0
    %5346 = vmatprep.mubr.f32.mxu0 %v3277
    %5347 = vmatmul.mubr.f32.gmra.mrb[0].mxu0 %v3276
    %v5348 = vpop.f32.mrb[0].mxu0
    %v5349 = vadd.f32 %v5204, %v5348
    %v5350 = vpop.f32.mrb[0].mxu0
    %5351 = vmatprep.mubr.f32.mxu0 %v3320
    %5352 = vmatmul.mubr.f32.gmra.mrb[0].mxu0 %v3319
    %v5353 = vpop.f32.mrb[0].mxu0
    %v5354 = vadd.f32 %v5209, %v5353
    %v5355 = vpop.f32.mrb[0].mxu0
    %5356 = vmatprep.mubr.f32.mxu0 %v3363
    %5357 = vmatmul.mubr.f32.gmra.mrb[0].mxu0 %v3362
    %v5358 = vpop.f32.mrb[0].mxu0
    %v5359 = vadd.f32 %v5214, %v5358
    %v5360 = vpop.f32.mrb[0].mxu0
    %5361 = vmatprep.mubr.f32.mxu0 %v3406
    %5362 = vmatmul.mubr.f32.gmra.mrb[0].mxu0 %v3405
    %v5363 = vpop.f32.mrb[0].mxu0
    %v5364 = vadd.f32 %v5219, %v5363
    %v5365 = vpop.f32.mrb[0].mxu0
    %5366 = vmatprep.mubr.f32.mxu0 %v3449
    %5367 = vmatmul.mubr.f32.gmra.mrb[0].mxu0 %v3448
    %v5368 = vpop.f32.mrb[0].mxu0
    %v5369 = vadd.f32 %v5224, %v5368
    %v5370 = vpop.f32.mrb[0].mxu0
    %5371 = vmatprep.mubr.f32.mxu0 %v3492
    %5372 = vmatmul.mubr.f32.gmra.mrb[0].mxu0 %v3491
    %v5373 = vpop.f32.mrb[0].mxu0
    %v5374 = vadd.f32 %v5229, %v5373
    %v5375 = vpop.f32.mrb[0].mxu0
    %5376 = vmatprep.mubr.f32.mxu0 %v3535
    %5377 = vmatmul.mubr.f32.gmra.mrb[0].mxu0 %v3534
    %v5378 = vpop.f32.mrb[0].mxu0
    %v5379 = vadd.f32 %v5234, %v5378
    %v5380 = vpop.f32.mrb[0].mxu0
    %5381 = vmatprep.mubr.f32.mxu0 %v3578
    %5382 = vmatmul.mubr.f32.gmra.mrb[0].mxu0 %v3577
    %v5383 = vpop.f32.mrb[0].mxu0
    %v5384 = vadd.f32 %v5239, %v5383
    %v5385 = vpop.f32.mrb[0].mxu0
    %5386 = vmatprep.mubr.f32.mxu0 %v3621
    %5387 = vmatmul.mubr.f32.gmra.mrb[0].mxu0 %v3620
    %v5388 = vpop.f32.mrb[0].mxu0
    %v5389 = vadd.f32 %v5244, %v5388
    %v5390 = vpop.f32.mrb[0].mxu0
    %5391 = vmatprep.mubr.f32.mxu0 %v3664
    %5392 = vmatmul.mubr.f32.gmra.mrb[0].mxu0 %v3663
    %v5393 = vpop.f32.mrb[0].mxu0
    %v5394 = vadd.f32 %v5249, %v5393
    %v5395 = vpop.f32.mrb[0].mxu0
    %5396 = vmatprep.mubr.f32.mxu0 %v3707
    %5397 = vmatmul.mubr.f32.gmra.mrb[0].mxu0 %v3706
    %v5398 = vpop.f32.mrb[0].mxu0
    %v5399 = vadd.f32 %v5254, %v5398
    %v5400 = vpop.f32.mrb[0].mxu0
    %5401 = vmatprep.mubr.f32.mxu0 %v3750
    %5402 = vmatmul.mubr.f32.gmra.mrb[0].mxu0 %v3749
    %v5403 = vpop.f32.mrb[0].mxu0
    %v5404 = vadd.f32 %v5259, %v5403
    %v5405 = vpop.f32.mrb[0].mxu0
    %5406 = vmatprep.mubr.f32.mxu0 %v3793
    %5407 = vmatmul.mubr.f32.gmra.mrb[0].mxu0 %v3792
    %v5408 = vpop.f32.mrb[0].mxu0
    %v5409 = vadd.f32 %v5264, %v5408
    %v5410 = vpop.f32.mrb[0].mxu0
    %5411 = vdwg.mxu0
    %5412 = vmatprep.subr.mxu0 0.0
    %5413 = vmatpush1.msra.mxu0 %v2773
    %5414 = vmatprep.subr.mxu0 0.0
    %5415 = vmatpush1.msra.mxu0 %v2774
    %5416 = vmatprep.subr.mxu0 0.0
    %5417 = vmatpush1.msra.mxu0 %v2775
    %5418 = vmatprep.subr.mxu0 0.0
    %5419 = vmatpush1.msra.mxu0 %v2776
    %5420 = vmatprep.subr.mxu0 0.0
    %5421 = vmatpush1.msra.mxu0 %v2777
    %5422 = vmatprep.subr.mxu0 0.0
    %5423 = vmatpush1.msra.mxu0 %v2778
    %5424 = vmatprep.subr.mxu0 0.0
    %5425 = vmatpush1.msra.mxu0 %v2779
    %5426 = vmatprep.subr.mxu0 0.0
    %5427 = vmatpush1.msra.mxu0 %v2780
    %5428 = vmatprep.subr.mxu0 0.0
    %5429 = vmatpush1.msra.mxu0 %v2781
    %5430 = vmatprep.subr.mxu0 0.0
    %5431 = vmatpush1.msra.mxu0 %v2782
    %5432 = vmatprep.subr.mxu0 0.0
    %5433 = vmatpush1.msra.mxu0 %v2783
    %5434 = vmatprep.subr.mxu0 0.0
    %5435 = vmatpush1.msra.mxu0 %v2784
    %5436 = vmatprep.subr.mxu0 0.0
    %5437 = vmatpush1.msra.mxu0 %v2785
    %5438 = vmatprep.subr.mxu0 0.0
    %5439 = vmatpush1.msra.mxu0 %v2786
    %5440 = vmatprep.subr.mxu0 0.0
    %5441 = vmatpush1.msra.mxu0 %v2787
    %5442 = vmatprep.subr.mxu0 0.0
    %5443 = vmatpush1.msra.mxu0 %v2788
    %5444 = vmatprep.subr.mxu0 0.0
    %5445 = vmatpush1.msra.mxu0 %v2789
    %5446 = vmatprep.subr.mxu0 0.0
    %5447 = vmatpush1.msra.mxu0 %v2790
    %5448 = vmatprep.subr.mxu0 0.0
    %5449 = vmatpush1.msra.mxu0 %v2791
    %5450 = vmatprep.subr.mxu0 0.0
    %5451 = vmatpush1.msra.mxu0 %v2792
    %5452 = vmatprep.subr.mxu0 0.0
    %5453 = vmatpush1.msra.mxu0 %v2793
    %5454 = vmatprep.subr.mxu0 0.0
    %5455 = vmatpush1.msra.mxu0 %v2794
    %5456 = vmatprep.subr.mxu0 0.0
    %5457 = vmatpush1.msra.mxu0 %v2795
    %5458 = vmatprep.subr.mxu0 0.0
    %5459 = vmatpush1.msra.mxu0 %v2796
    %5460 = vmatprep.subr.mxu0 0.0
    %5461 = vmatpush1.msra.mxu0 %v2797
    %5462 = vmatprep.subr.mxu0 0.0
    %5463 = vmatpush1.msra.mxu0 %v2798
    %5464 = vmatprep.subr.mxu0 0.0
    %5465 = vmatpush1.msra.mxu0 %v2799
    %5466 = vmatprep.subr.mxu0 0.0
    %5467 = vmatpush1.msra.mxu0 %v2800
    %5468 = vmatprep.subr.mxu0 0.0
    %5469 = vmatpush1.msra.mxu0 %v2801
    %5470 = vmatprep.subr.mxu0 0.0
    %5471 = vmatpush1.msra.mxu0 %v2802
    %5472 = vmatprep.subr.mxu0 0.0
    %5473 = vmatpush1.msra.mxu0 %v2803
    %5474 = vmatprep.subr.mxu0 0.0
    %5475 = vmatpush1.msra.mxu0 %v2804
    %5476 = vmatprep.mubr.f32.mxu0 %v3150
    %5477 = vmatmul.mubr.f32.gmra.mrb[0].mxu0 %v3149
    %v5478 = vpop.f32.mrb[0].mxu0
    %v5479 = vadd.f32 %v5334, %v5478
    %v5480 = vpop.f32.mrb[0].mxu0
    %5481 = vmatprep.mubr.f32.mxu0 %v3193
    %5482 = vmatmul.mubr.f32.gmra.mrb[0].mxu0 %v3192
    %v5483 = vpop.f32.mrb[0].mxu0
    %v5484 = vadd.f32 %v5339, %v5483
    %v5485 = vpop.f32.mrb[0].mxu0
    %5486 = vmatprep.mubr.f32.mxu0 %v3236
    %5487 = vmatmul.mubr.f32.gmra.mrb[0].mxu0 %v3235
    %v5488 = vpop.f32.mrb[0].mxu0
    %v5489 = vadd.f32 %v5344, %v5488
    %v5490 = vpop.f32.mrb[0].mxu0
    %5491 = vmatprep.mubr.f32.mxu0 %v3279
    %5492 = vmatmul.mubr.f32.gmra.mrb[0].mxu0 %v3278
    %v5493 = vpop.f32.mrb[0].mxu0
    %v5494 = vadd.f32 %v5349, %v5493
    %v5495 = vpop.f32.mrb[0].mxu0
    %5496 = vmatprep.mubr.f32.mxu0 %v3322
    %5497 = vmatmul.mubr.f32.gmra.mrb[0].mxu0 %v3321
    %v5498 = vpop.f32.mrb[0].mxu0
    %v5499 = vadd.f32 %v5354, %v5498
    %v5500 = vpop.f32.mrb[0].mxu0
    %5501 = vmatprep.mubr.f32.mxu0 %v3365
    %5502 = vmatmul.mubr.f32.gmra.mrb[0].mxu0 %v3364
    %v5503 = vpop.f32.mrb[0].mxu0
    %v5504 = vadd.f32 %v5359, %v5503
    %v5505 = vpop.f32.mrb[0].mxu0
    %5506 = vmatprep.mubr.f32.mxu0 %v3408
    %5507 = vmatmul.mubr.f32.gmra.mrb[0].mxu0 %v3407
    %v5508 = vpop.f32.mrb[0].mxu0
    %v5509 = vadd.f32 %v5364, %v5508
    %v5510 = vpop.f32.mrb[0].mxu0
    %5511 = vmatprep.mubr.f32.mxu0 %v3451
    %5512 = vmatmul.mubr.f32.gmra.mrb[0].mxu0 %v3450
    %v5513 = vpop.f32.mrb[0].mxu0
    %v5514 = vadd.f32 %v5369, %v5513
    %v5515 = vpop.f32.mrb[0].mxu0
    %5516 = vmatprep.mubr.f32.mxu0 %v3494
    %5517 = vmatmul.mubr.f32.gmra.mrb[0].mxu0 %v3493
    %v5518 = vpop.f32.mrb[0].mxu0
    %v5519 = vadd.f32 %v5374, %v5518
    %v5520 = vpop.f32.mrb[0].mxu0
    %5521 = vmatprep.mubr.f32.mxu0 %v3537
    %5522 = vmatmul.mubr.f32.gmra.mrb[0].mxu0 %v3536
    %v5523 = vpop.f32.mrb[0].mxu0
    %v5524 = vadd.f32 %v5379, %v5523
    %v5525 = vpop.f32.mrb[0].mxu0
    %5526 = vmatprep.mubr.f32.mxu0 %v3580
    %5527 = vmatmul.mubr.f32.gmra.mrb[0].mxu0 %v3579
    %v5528 = vpop.f32.mrb[0].mxu0
    %v5529 = vadd.f32 %v5384, %v5528
    %v5530 = vpop.f32.mrb[0].mxu0
    %5531 = vmatprep.mubr.f32.mxu0 %v3623
    %5532 = vmatmul.mubr.f32.gmra.mrb[0].mxu0 %v3622
    %v5533 = vpop.f32.mrb[0].mxu0
    %v5534 = vadd.f32 %v5389, %v5533
    %v5535 = vpop.f32.mrb[0].mxu0
    %5536 = vmatprep.mubr.f32.mxu0 %v3666
    %5537 = vmatmul.mubr.f32.gmra.mrb[0].mxu0 %v3665
    %v5538 = vpop.f32.mrb[0].mxu0
    %v5539 = vadd.f32 %v5394, %v5538
    %v5540 = vpop.f32.mrb[0].mxu0
    %5541 = vmatprep.mubr.f32.mxu0 %v3709
    %5542 = vmatmul.mubr.f32.gmra.mrb[0].mxu0 %v3708
    %v5543 = vpop.f32.mrb[0].mxu0
    %v5544 = vadd.f32 %v5399, %v5543
    %v5545 = vpop.f32.mrb[0].mxu0
    %5546 = vmatprep.mubr.f32.mxu0 %v3752
    %5547 = vmatmul.mubr.f32.gmra.mrb[0].mxu0 %v3751
    %v5548 = vpop.f32.mrb[0].mxu0
    %v5549 = vadd.f32 %v5404, %v5548
    %v5550 = vpop.f32.mrb[0].mxu0
    %5551 = vmatprep.mubr.f32.mxu0 %v3795
    %5552 = vmatmul.mubr.f32.gmra.mrb[0].mxu0 %v3794
    %v5553 = vpop.f32.mrb[0].mxu0
    %v5554 = vadd.f32 %v5409, %v5553
    %v5555 = vpop.f32.mrb[0].mxu0
    %5556 = vdwg.mxu0
    %5557 = vmatprep.subr.mxu0 0.0
    %5558 = vmatpush1.msra.mxu0 %v2805
    %5559 = vmatprep.subr.mxu0 0.0
    %5560 = vmatpush1.msra.mxu0 %v2806
    %5561 = vmatprep.subr.mxu0 0.0
    %5562 = vmatpush1.msra.mxu0 %v2807
    %5563 = vmatprep.subr.mxu0 0.0
    %5564 = vmatpush1.msra.mxu0 %v2808
    %5565 = vmatprep.subr.mxu0 0.0
    %5566 = vmatpush1.msra.mxu0 %v2809
    %5567 = vmatprep.subr.mxu0 0.0
    %5568 = vmatpush1.msra.mxu0 %v2810
    %5569 = vmatprep.subr.mxu0 0.0
    %5570 = vmatpush1.msra.mxu0 %v2811
    %5571 = vmatprep.subr.mxu0 0.0
    %5572 = vmatpush1.msra.mxu0 %v2812
    %5573 = vmatprep.subr.mxu0 0.0
    %5574 = vmatpush1.msra.mxu0 %v2813
    %5575 = vmatprep.subr.mxu0 0.0
    %5576 = vmatpush1.msra.mxu0 %v2814
    %5577 = vmatprep.subr.mxu0 0.0
    %5578 = vmatpush1.msra.mxu0 %v2815
    %5579 = vmatprep.subr.mxu0 0.0
    %5580 = vmatpush1.msra.mxu0 %v2816
    %5581 = vmatprep.subr.mxu0 0.0
    %5582 = vmatpush1.msra.mxu0 %v2817
    %5583 = vmatprep.subr.mxu0 0.0
    %5584 = vmatpush1.msra.mxu0 %v2818
    %5585 = vmatprep.subr.mxu0 0.0
    %5586 = vmatpush1.msra.mxu0 %v2819
    %5587 = vmatprep.subr.mxu0 0.0
    %5588 = vmatpush1.msra.mxu0 %v2820
    %5589 = vmatprep.subr.mxu0 0.0
    %5590 = vmatpush1.msra.mxu0 %v2821
    %5591 = vmatprep.subr.mxu0 0.0
    %5592 = vmatpush1.msra.mxu0 %v2822
    %5593 = vmatprep.subr.mxu0 0.0
    %5594 = vmatpush1.msra.mxu0 %v2823
    %5595 = vmatprep.subr.mxu0 0.0
    %5596 = vmatpush1.msra.mxu0 %v2824
    %5597 = vmatprep.subr.mxu0 0.0
    %5598 = vmatpush1.msra.mxu0 %v2825
    %5599 = vmatprep.subr.mxu0 0.0
    %5600 = vmatpush1.msra.mxu0 %v2826
    %5601 = vmatprep.subr.mxu0 0.0
    %5602 = vmatpush1.msra.mxu0 %v2827
    %5603 = vmatprep.subr.mxu0 0.0
    %5604 = vmatpush1.msra.mxu0 %v2828
    %5605 = vmatprep.subr.mxu0 0.0
    %5606 = vmatpush1.msra.mxu0 %v2829
    %5607 = vmatprep.subr.mxu0 0.0
    %5608 = vmatpush1.msra.mxu0 %v2830
    %5609 = vmatprep.subr.mxu0 0.0
    %5610 = vmatpush1.msra.mxu0 %v2831
    %5611 = vmatprep.subr.mxu0 0.0
    %5612 = vmatpush1.msra.mxu0 %v2832
    %5613 = vmatprep.subr.mxu0 0.0
    %5614 = vmatpush1.msra.mxu0 %v2833
    %5615 = vmatprep.subr.mxu0 0.0
    %5616 = vmatpush1.msra.mxu0 %v2834
    %5617 = vmatprep.subr.mxu0 0.0
    %5618 = vmatpush1.msra.mxu0 %v2835
    %5619 = vmatprep.subr.mxu0 0.0
    %5620 = vmatpush1.msra.mxu0 %v2836
    %5621 = vmatprep.mubr.f32.mxu0 %v3152
    %5622 = vmatmul.mubr.f32.gmra.mrb[0].mxu0 %v3151
    %v5623 = vpop.f32.mrb[0].mxu0
    %v5624 = vadd.f32 %v5479, %v5623
    %v5625 = vpop.f32.mrb[0].mxu0
    %5626 = vmatprep.mubr.f32.mxu0 %v3195
    %5627 = vmatmul.mubr.f32.gmra.mrb[0].mxu0 %v3194
    %v5628 = vpop.f32.mrb[0].mxu0
    %v5629 = vadd.f32 %v5484, %v5628
    %v5630 = vpop.f32.mrb[0].mxu0
    %5631 = vmatprep.mubr.f32.mxu0 %v3238
    %5632 = vmatmul.mubr.f32.gmra.mrb[0].mxu0 %v3237
    %v5633 = vpop.f32.mrb[0].mxu0
    %v5634 = vadd.f32 %v5489, %v5633
    %v5635 = vpop.f32.mrb[0].mxu0
    %5636 = vmatprep.mubr.f32.mxu0 %v3281
    %5637 = vmatmul.mubr.f32.gmra.mrb[0].mxu0 %v3280
    %v5638 = vpop.f32.mrb[0].mxu0
    %v5639 = vadd.f32 %v5494, %v5638
    %v5640 = vpop.f32.mrb[0].mxu0
    %5641 = vmatprep.mubr.f32.mxu0 %v3324
    %5642 = vmatmul.mubr.f32.gmra.mrb[0].mxu0 %v3323
    %v5643 = vpop.f32.mrb[0].mxu0
    %v5644 = vadd.f32 %v5499, %v5643
    %v5645 = vpop.f32.mrb[0].mxu0
    %5646 = vmatprep.mubr.f32.mxu0 %v3367
    %5647 = vmatmul.mubr.f32.gmra.mrb[0].mxu0 %v3366
    %v5648 = vpop.f32.mrb[0].mxu0
    %v5649 = vadd.f32 %v5504, %v5648
    %v5650 = vpop.f32.mrb[0].mxu0
    %5651 = vmatprep.mubr.f32.mxu0 %v3410
    %5652 = vmatmul.mubr.f32.gmra.mrb[0].mxu0 %v3409
    %v5653 = vpop.f32.mrb[0].mxu0
    %v5654 = vadd.f32 %v5509, %v5653
    %v5655 = vpop.f32.mrb[0].mxu0
    %5656 = vmatprep.mubr.f32.mxu0 %v3453
    %5657 = vmatmul.mubr.f32.gmra.mrb[0].mxu0 %v3452
    %v5658 = vpop.f32.mrb[0].mxu0
    %v5659 = vadd.f32 %v5514, %v5658
    %v5660 = vpop.f32.mrb[0].mxu0
    %5661 = vmatprep.mubr.f32.mxu0 %v3496
    %5662 = vmatmul.mubr.f32.gmra.mrb[0].mxu0 %v3495
    %v5663 = vpop.f32.mrb[0].mxu0
    %v5664 = vadd.f32 %v5519, %v5663
    %v5665 = vpop.f32.mrb[0].mxu0
    %5666 = vmatprep.mubr.f32.mxu0 %v3539
    %5667 = vmatmul.mubr.f32.gmra.mrb[0].mxu0 %v3538
    %v5668 = vpop.f32.mrb[0].mxu0
    %v5669 = vadd.f32 %v5524, %v5668
    %v5670 = vpop.f32.mrb[0].mxu0
    %5671 = vmatprep.mubr.f32.mxu0 %v3582
    %5672 = vmatmul.mubr.f32.gmra.mrb[0].mxu0 %v3581
    %v5673 = vpop.f32.mrb[0].mxu0
    %v5674 = vadd.f32 %v5529, %v5673
    %v5675 = vpop.f32.mrb[0].mxu0
    %5676 = vmatprep.mubr.f32.mxu0 %v3625
    %5677 = vmatmul.mubr.f32.gmra.mrb[0].mxu0 %v3624
    %v5678 = vpop.f32.mrb[0].mxu0
    %v5679 = vadd.f32 %v5534, %v5678
    %v5680 = vpop.f32.mrb[0].mxu0
    %5681 = vmatprep.mubr.f32.mxu0 %v3668
    %5682 = vmatmul.mubr.f32.gmra.mrb[0].mxu0 %v3667
    %v5683 = vpop.f32.mrb[0].mxu0
    %v5684 = vadd.f32 %v5539, %v5683
    %v5685 = vpop.f32.mrb[0].mxu0
    %5686 = vmatprep.mubr.f32.mxu0 %v3711
    %5687 = vmatmul.mubr.f32.gmra.mrb[0].mxu0 %v3710
    %v5688 = vpop.f32.mrb[0].mxu0
    %v5689 = vadd.f32 %v5544, %v5688
    %v5690 = vpop.f32.mrb[0].mxu0
    %5691 = vmatprep.mubr.f32.mxu0 %v3754
    %5692 = vmatmul.mubr.f32.gmra.mrb[0].mxu0 %v3753
    %v5693 = vpop.f32.mrb[0].mxu0
    %v5694 = vadd.f32 %v5549, %v5693
    %v5695 = vpop.f32.mrb[0].mxu0
    %5696 = vmatprep.mubr.f32.mxu0 %v3797
    %5697 = vmatmul.mubr.f32.gmra.mrb[0].mxu0 %v3796
    %v5698 = vpop.f32.mrb[0].mxu0
    %v5699 = vadd.f32 %v5554, %v5698
    %v5700 = vpop.f32.mrb[0].mxu0
    %5701 = vdwg.mxu0
    %5702 = vmatprep.subr.mxu0 0.0
    %5703 = vmatpush1.msra.mxu0 %v2837
    %5704 = vmatprep.subr.mxu0 0.0
    %5705 = vmatpush1.msra.mxu0 %v2838
    %5706 = vmatprep.subr.mxu0 0.0
    %5707 = vmatpush1.msra.mxu0 %v2839
    %5708 = vmatprep.subr.mxu0 0.0
    %5709 = vmatpush1.msra.mxu0 %v2840
    %5710 = vmatprep.subr.mxu0 0.0
    %5711 = vmatpush1.msra.mxu0 %v2841
    %5712 = vmatprep.subr.mxu0 0.0
    %5713 = vmatpush1.msra.mxu0 %v2842
    %5714 = vmatprep.subr.mxu0 0.0
    %5715 = vmatpush1.msra.mxu0 %v2843
    %5716 = vmatprep.subr.mxu0 0.0
    %5717 = vmatpush1.msra.mxu0 %v2844
    %5718 = vmatprep.subr.mxu0 0.0
    %5719 = vmatpush1.msra.mxu0 %v2845
    %5720 = vmatprep.subr.mxu0 0.0
    %5721 = vmatpush1.msra.mxu0 %v2846
    %5722 = vmatprep.subr.mxu0 0.0
    %5723 = vmatpush1.msra.mxu0 %v2847
    %5724 = vmatprep.subr.mxu0 0.0
    %5725 = vmatpush1.msra.mxu0 %v2848
    %5726 = vmatprep.subr.mxu0 0.0
    %5727 = vmatpush1.msra.mxu0 %v2849
    %5728 = vmatprep.subr.mxu0 0.0
    %5729 = vmatpush1.msra.mxu0 %v2850
    %5730 = vmatprep.subr.mxu0 0.0
    %5731 = vmatpush1.msra.mxu0 %v2851
    %5732 = vmatprep.subr.mxu0 0.0
    %5733 = vmatpush1.msra.mxu0 %v2852
    %5734 = vmatprep.subr.mxu0 0.0
    %5735 = vmatpush1.msra.mxu0 %v2853
    %5736 = vmatprep.subr.mxu0 0.0
    %5737 = vmatpush1.msra.mxu0 %v2854
    %5738 = vmatprep.subr.mxu0 0.0
    %5739 = vmatpush1.msra.mxu0 %v2855
    %5740 = vmatprep.subr.mxu0 0.0
    %5741 = vmatpush1.msra.mxu0 %v2856
    %5742 = vmatprep.subr.mxu0 0.0
    %5743 = vmatpush1.msra.mxu0 %v2857
    %5744 = vmatprep.subr.mxu0 0.0
    %5745 = vmatpush1.msra.mxu0 %v2858
    %5746 = vmatprep.subr.mxu0 0.0
    %5747 = vmatpush1.msra.mxu0 %v2859
    %5748 = vmatprep.subr.mxu0 0.0
    %5749 = vmatpush1.msra.mxu0 %v2860
    %5750 = vmatprep.subr.mxu0 0.0
    %5751 = vmatpush1.msra.mxu0 %v2861
    %5752 = vmatprep.subr.mxu0 0.0
    %5753 = vmatpush1.msra.mxu0 %v2862
    %5754 = vmatprep.subr.mxu0 0.0
    %5755 = vmatpush1.msra.mxu0 %v2863
    %5756 = vmatprep.subr.mxu0 0.0
    %5757 = vmatpush1.msra.mxu0 %v2864
    %5758 = vmatprep.subr.mxu0 0.0
    %5759 = vmatpush1.msra.mxu0 %v2865
    %5760 = vmatprep.subr.mxu0 0.0
    %5761 = vmatpush1.msra.mxu0 %v2866
    %5762 = vmatprep.subr.mxu0 0.0
    %5763 = vmatpush1.msra.mxu0 %v2867
    %5764 = vmatprep.subr.mxu0 0.0
    %5765 = vmatpush1.msra.mxu0 %v2868
    %5766 = vmatprep.mubr.f32.mxu0 %v3154
    %5767 = vmatmul.mubr.f32.gmra.mrb[0].mxu0 %v3153
    %v5768 = vpop.f32.mrb[0].mxu0
    %v5769 = vadd.f32 %v5624, %v5768
    %v5770 = vpop.f32.mrb[0].mxu0
    %5771 = vmatprep.mubr.f32.mxu0 %v3197
    %5772 = vmatmul.mubr.f32.gmra.mrb[0].mxu0 %v3196
    %v5773 = vpop.f32.mrb[0].mxu0
    %v5774 = vadd.f32 %v5629, %v5773
    %v5775 = vpop.f32.mrb[0].mxu0
    %5776 = vmatprep.mubr.f32.mxu0 %v3240
    %5777 = vmatmul.mubr.f32.gmra.mrb[0].mxu0 %v3239
    %v5778 = vpop.f32.mrb[0].mxu0
    %v5779 = vadd.f32 %v5634, %v5778
    %v5780 = vpop.f32.mrb[0].mxu0
    %5781 = vmatprep.mubr.f32.mxu0 %v3283
    %5782 = vmatmul.mubr.f32.gmra.mrb[0].mxu0 %v3282
    %v5783 = vpop.f32.mrb[0].mxu0
    %v5784 = vadd.f32 %v5639, %v5783
    %v5785 = vpop.f32.mrb[0].mxu0
    %5786 = vmatprep.mubr.f32.mxu0 %v3326
    %5787 = vmatmul.mubr.f32.gmra.mrb[0].mxu0 %v3325
    %v5788 = vpop.f32.mrb[0].mxu0
    %v5789 = vadd.f32 %v5644, %v5788
    %v5790 = vpop.f32.mrb[0].mxu0
    %5791 = vmatprep.mubr.f32.mxu0 %v3369
    %5792 = vmatmul.mubr.f32.gmra.mrb[0].mxu0 %v3368
    %v5793 = vpop.f32.mrb[0].mxu0
    %v5794 = vadd.f32 %v5649, %v5793
    %v5795 = vpop.f32.mrb[0].mxu0
    %5796 = vmatprep.mubr.f32.mxu0 %v3412
    %5797 = vmatmul.mubr.f32.gmra.mrb[0].mxu0 %v3411
    %v5798 = vpop.f32.mrb[0].mxu0
    %v5799 = vadd.f32 %v5654, %v5798
    %v5800 = vpop.f32.mrb[0].mxu0
    %5801 = vmatprep.mubr.f32.mxu0 %v3455
    %5802 = vmatmul.mubr.f32.gmra.mrb[0].mxu0 %v3454
    %v5803 = vpop.f32.mrb[0].mxu0
    %v5804 = vadd.f32 %v5659, %v5803
    %v5805 = vpop.f32.mrb[0].mxu0
    %5806 = vmatprep.mubr.f32.mxu0 %v3498
    %5807 = vmatmul.mubr.f32.gmra.mrb[0].mxu0 %v3497
    %v5808 = vpop.f32.mrb[0].mxu0
    %v5809 = vadd.f32 %v5664, %v5808
    %v5810 = vpop.f32.mrb[0].mxu0
    %5811 = vmatprep.mubr.f32.mxu0 %v3541
    %5812 = vmatmul.mubr.f32.gmra.mrb[0].mxu0 %v3540
    %v5813 = vpop.f32.mrb[0].mxu0
    %v5814 = vadd.f32 %v5669, %v5813
    %v5815 = vpop.f32.mrb[0].mxu0
    %5816 = vmatprep.mubr.f32.mxu0 %v3584
    %5817 = vmatmul.mubr.f32.gmra.mrb[0].mxu0 %v3583
    %v5818 = vpop.f32.mrb[0].mxu0
    %v5819 = vadd.f32 %v5674, %v5818
    %v5820 = vpop.f32.mrb[0].mxu0
    %5821 = vmatprep.mubr.f32.mxu0 %v3627
    %5822 = vmatmul.mubr.f32.gmra.mrb[0].mxu0 %v3626
    %v5823 = vpop.f32.mrb[0].mxu0
    %v5824 = vadd.f32 %v5679, %v5823
    %v5825 = vpop.f32.mrb[0].mxu0
    %5826 = vmatprep.mubr.f32.mxu0 %v3670
    %5827 = vmatmul.mubr.f32.gmra.mrb[0].mxu0 %v3669
    %v5828 = vpop.f32.mrb[0].mxu0
    %v5829 = vadd.f32 %v5684, %v5828
    %v5830 = vpop.f32.mrb[0].mxu0
    %5831 = vmatprep.mubr.f32.mxu0 %v3713
    %5832 = vmatmul.mubr.f32.gmra.mrb[0].mxu0 %v3712
    %v5833 = vpop.f32.mrb[0].mxu0
    %v5834 = vadd.f32 %v5689, %v5833
    %v5835 = vpop.f32.mrb[0].mxu0
    %5836 = vmatprep.mubr.f32.mxu0 %v3756
    %5837 = vmatmul.mubr.f32.gmra.mrb[0].mxu0 %v3755
    %v5838 = vpop.f32.mrb[0].mxu0
    %v5839 = vadd.f32 %v5694, %v5838
    %v5840 = vpop.f32.mrb[0].mxu0
    %5841 = vmatprep.mubr.f32.mxu0 %v3799
    %5842 = vmatmul.mubr.f32.gmra.mrb[0].mxu0 %v3798
    %v5843 = vpop.f32.mrb[0].mxu0
    %v5844 = vadd.f32 %v5699, %v5843
    %v5845 = vpop.f32.mrb[0].mxu0
    %5846 = vdwg.mxu0
    %5847 = vmatprep.subr.mxu0 0.0
    %5848 = vmatpush1.msra.mxu0 %v2869
    %5849 = vmatprep.subr.mxu0 0.0
    %5850 = vmatpush1.msra.mxu0 %v2870
    %5851 = vmatprep.subr.mxu0 0.0
    %5852 = vmatpush1.msra.mxu0 %v2871
    %5853 = vmatprep.subr.mxu0 0.0
    %5854 = vmatpush1.msra.mxu0 %v2872
    %5855 = vmatprep.subr.mxu0 0.0
    %5856 = vmatpush1.msra.mxu0 %v2873
    %5857 = vmatprep.subr.mxu0 0.0
    %5858 = vmatpush1.msra.mxu0 %v2874
    %5859 = vmatprep.subr.mxu0 0.0
    %5860 = vmatpush1.msra.mxu0 %v2875
    %5861 = vmatprep.subr.mxu0 0.0
    %5862 = vmatpush1.msra.mxu0 %v2876
    %5863 = vmatprep.subr.mxu0 0.0
    %5864 = vmatpush1.msra.mxu0 %v2877
    %5865 = vmatprep.subr.mxu0 0.0
    %5866 = vmatpush1.msra.mxu0 %v2878
    %5867 = vmatprep.subr.mxu0 0.0
    %5868 = vmatpush1.msra.mxu0 %v2879
    %5869 = vmatprep.subr.mxu0 0.0
    %5870 = vmatpush1.msra.mxu0 %v2880
    %5871 = vmatprep.subr.mxu0 0.0
    %5872 = vmatpush1.msra.mxu0 %v2881
    %5873 = vmatprep.subr.mxu0 0.0
    %5874 = vmatpush1.msra.mxu0 %v2882
    %5875 = vmatprep.subr.mxu0 0.0
    %5876 = vmatpush1.msra.mxu0 %v2883
    %5877 = vmatprep.subr.mxu0 0.0
    %5878 = vmatpush1.msra.mxu0 %v2884
    %5879 = vmatprep.subr.mxu0 0.0
    %5880 = vmatpush1.msra.mxu0 %v2885
    %5881 = vmatprep.subr.mxu0 0.0
    %5882 = vmatpush1.msra.mxu0 %v2886
    %5883 = vmatprep.subr.mxu0 0.0
    %5884 = vmatpush1.msra.mxu0 %v2887
    %5885 = vmatprep.subr.mxu0 0.0
    %5886 = vmatpush1.msra.mxu0 %v2888
    %5887 = vmatprep.subr.mxu0 0.0
    %5888 = vmatpush1.msra.mxu0 %v2889
    %5889 = vmatprep.subr.mxu0 0.0
    %5890 = vmatpush1.msra.mxu0 %v2890
    %5891 = vmatprep.subr.mxu0 0.0
    %5892 = vmatpush1.msra.mxu0 %v2891
    %5893 = vmatprep.subr.mxu0 0.0
    %5894 = vmatpush1.msra.mxu0 %v2892
    %5895 = vmatprep.subr.mxu0 0.0
    %5896 = vmatpush1.msra.mxu0 %v2893
    %5897 = vmatprep.subr.mxu0 0.0
    %5898 = vmatpush1.msra.mxu0 %v2894
    %5899 = vmatprep.subr.mxu0 0.0
    %5900 = vmatpush1.msra.mxu0 %v2895
    %5901 = vmatprep.subr.mxu0 0.0
    %5902 = vmatpush1.msra.mxu0 %v2896
    %5903 = vmatprep.subr.mxu0 0.0
    %5904 = vmatpush1.msra.mxu0 %v2897
    %5905 = vmatprep.subr.mxu0 0.0
    %5906 = vmatpush1.msra.mxu0 %v2898
    %5907 = vmatprep.subr.mxu0 0.0
    %5908 = vmatpush1.msra.mxu0 %v2899
    %5909 = vmatprep.subr.mxu0 0.0
    %5910 = vmatpush1.msra.mxu0 %v2900
    %5911 = vmatprep.mubr.f32.mxu0 %v3156
    %5912 = vmatmul.mubr.f32.gmra.mrb[0].mxu0 %v3155
    %v5913 = vpop.f32.mrb[0].mxu0
    %v5914 = vadd.f32 %v5769, %v5913
    %v5915 = vpop.f32.mrb[0].mxu0
    %5916 = vmatprep.mubr.f32.mxu0 %v3199
    %5917 = vmatmul.mubr.f32.gmra.mrb[0].mxu0 %v3198
    %v5918 = vpop.f32.mrb[0].mxu0
    %v5919 = vadd.f32 %v5774, %v5918
    %v5920 = vpop.f32.mrb[0].mxu0
    %5921 = vmatprep.mubr.f32.mxu0 %v3242
    %5922 = vmatmul.mubr.f32.gmra.mrb[0].mxu0 %v3241
    %v5923 = vpop.f32.mrb[0].mxu0
    %v5924 = vadd.f32 %v5779, %v5923
    %v5925 = vpop.f32.mrb[0].mxu0
    %5926 = vmatprep.mubr.f32.mxu0 %v3285
    %5927 = vmatmul.mubr.f32.gmra.mrb[0].mxu0 %v3284
    %v5928 = vpop.f32.mrb[0].mxu0
    %v5929 = vadd.f32 %v5784, %v5928
    %v5930 = vpop.f32.mrb[0].mxu0
    %5931 = vmatprep.mubr.f32.mxu0 %v3328
    %5932 = vmatmul.mubr.f32.gmra.mrb[0].mxu0 %v3327
    %v5933 = vpop.f32.mrb[0].mxu0
    %v5934 = vadd.f32 %v5789, %v5933
    %v5935 = vpop.f32.mrb[0].mxu0
    %5936 = vmatprep.mubr.f32.mxu0 %v3371
    %5937 = vmatmul.mubr.f32.gmra.mrb[0].mxu0 %v3370
    %v5938 = vpop.f32.mrb[0].mxu0
    %v5939 = vadd.f32 %v5794, %v5938
    %v5940 = vpop.f32.mrb[0].mxu0
    %5941 = vmatprep.mubr.f32.mxu0 %v3414
    %5942 = vmatmul.mubr.f32.gmra.mrb[0].mxu0 %v3413
    %v5943 = vpop.f32.mrb[0].mxu0
    %v5944 = vadd.f32 %v5799, %v5943
    %v5945 = vpop.f32.mrb[0].mxu0
    %5946 = vmatprep.mubr.f32.mxu0 %v3457
    %5947 = vmatmul.mubr.f32.gmra.mrb[0].mxu0 %v3456
    %v5948 = vpop.f32.mrb[0].mxu0
    %v5949 = vadd.f32 %v5804, %v5948
    %v5950 = vpop.f32.mrb[0].mxu0
    %5951 = vmatprep.mubr.f32.mxu0 %v3500
    %5952 = vmatmul.mubr.f32.gmra.mrb[0].mxu0 %v3499
    %v5953 = vpop.f32.mrb[0].mxu0
    %v5954 = vadd.f32 %v5809, %v5953
    %v5955 = vpop.f32.mrb[0].mxu0
    %5956 = vmatprep.mubr.f32.mxu0 %v3543
    %5957 = vmatmul.mubr.f32.gmra.mrb[0].mxu0 %v3542
    %v5958 = vpop.f32.mrb[0].mxu0
    %v5959 = vadd.f32 %v5814, %v5958
    %v5960 = vpop.f32.mrb[0].mxu0
    %5961 = vmatprep.mubr.f32.mxu0 %v3586
    %5962 = vmatmul.mubr.f32.gmra.mrb[0].mxu0 %v3585
    %v5963 = vpop.f32.mrb[0].mxu0
    %v5964 = vadd.f32 %v5819, %v5963
    %v5965 = vpop.f32.mrb[0].mxu0
    %5966 = vmatprep.mubr.f32.mxu0 %v3629
    %5967 = vmatmul.mubr.f32.gmra.mrb[0].mxu0 %v3628
    %v5968 = vpop.f32.mrb[0].mxu0
    %v5969 = vadd.f32 %v5824, %v5968
    %v5970 = vpop.f32.mrb[0].mxu0
    %5971 = vmatprep.mubr.f32.mxu0 %v3672
    %5972 = vmatmul.mubr.f32.gmra.mrb[0].mxu0 %v3671
    %v5973 = vpop.f32.mrb[0].mxu0
    %v5974 = vadd.f32 %v5829, %v5973
    %v5975 = vpop.f32.mrb[0].mxu0
    %5976 = vmatprep.mubr.f32.mxu0 %v3715
    %5977 = vmatmul.mubr.f32.gmra.mrb[0].mxu0 %v3714
    %v5978 = vpop.f32.mrb[0].mxu0
    %v5979 = vadd.f32 %v5834, %v5978
    %v5980 = vpop.f32.mrb[0].mxu0
    %5981 = vmatprep.mubr.f32.mxu0 %v3758
    %5982 = vmatmul.mubr.f32.gmra.mrb[0].mxu0 %v3757
    %v5983 = vpop.f32.mrb[0].mxu0
    %v5984 = vadd.f32 %v5839, %v5983
    %v5985 = vpop.f32.mrb[0].mxu0
    %5986 = vmatprep.mubr.f32.mxu0 %v3801
    %5987 = vmatmul.mubr.f32.gmra.mrb[0].mxu0 %v3800
    %v5988 = vpop.f32.mrb[0].mxu0
    %v5989 = vadd.f32 %v5844, %v5988
    %v5990 = vpop.f32.mrb[0].mxu0
    %5991 = vdwg.mxu0
    %5992 = vmatprep.subr.mxu0 0.0
    %5993 = vmatpush1.msra.mxu0 %v2901
    %5994 = vmatprep.subr.mxu0 0.0
    %5995 = vmatpush1.msra.mxu0 %v2902
    %5996 = vmatprep.subr.mxu0 0.0
    %5997 = vmatpush1.msra.mxu0 %v2903
    %5998 = vmatprep.subr.mxu0 0.0
    %5999 = vmatpush1.msra.mxu0 %v2904
    %6000 = vmatprep.subr.mxu0 0.0
    %6001 = vmatpush1.msra.mxu0 %v2905
    %6002 = vmatprep.subr.mxu0 0.0
    %6003 = vmatpush1.msra.mxu0 %v2906
    %6004 = vmatprep.subr.mxu0 0.0
    %6005 = vmatpush1.msra.mxu0 %v2907
    %6006 = vmatprep.subr.mxu0 0.0
    %6007 = vmatpush1.msra.mxu0 %v2908
    %6008 = vmatprep.subr.mxu0 0.0
    %6009 = vmatpush1.msra.mxu0 %v2909
    %6010 = vmatprep.subr.mxu0 0.0
    %6011 = vmatpush1.msra.mxu0 %v2910
    %6012 = vmatprep.subr.mxu0 0.0
    %6013 = vmatpush1.msra.mxu0 %v2911
    %6014 = vmatprep.subr.mxu0 0.0
    %6015 = vmatpush1.msra.mxu0 %v2912
    %6016 = vmatprep.subr.mxu0 0.0
    %6017 = vmatpush1.msra.mxu0 %v2913
    %6018 = vmatprep.subr.mxu0 0.0
    %6019 = vmatpush1.msra.mxu0 %v2914
    %6020 = vmatprep.subr.mxu0 0.0
    %6021 = vmatpush1.msra.mxu0 %v2915
    %6022 = vmatprep.subr.mxu0 0.0
    %6023 = vmatpush1.msra.mxu0 %v2916
    %6024 = vmatprep.subr.mxu0 0.0
    %6025 = vmatpush1.msra.mxu0 %v2917
    %6026 = vmatprep.subr.mxu0 0.0
    %6027 = vmatpush1.msra.mxu0 %v2918
    %6028 = vmatprep.subr.mxu0 0.0
    %6029 = vmatpush1.msra.mxu0 %v2919
    %6030 = vmatprep.subr.mxu0 0.0
    %6031 = vmatpush1.msra.mxu0 %v2920
    %6032 = vmatprep.subr.mxu0 0.0
    %6033 = vmatpush1.msra.mxu0 %v2921
    %6034 = vmatprep.subr.mxu0 0.0
    %6035 = vmatpush1.msra.mxu0 %v2922
    %6036 = vmatprep.subr.mxu0 0.0
    %6037 = vmatpush1.msra.mxu0 %v2923
    %6038 = vmatprep.subr.mxu0 0.0
    %6039 = vmatpush1.msra.mxu0 %v2924
    %6040 = vmatprep.subr.mxu0 0.0
    %6041 = vmatpush1.msra.mxu0 %v2925
    %6042 = vmatprep.subr.mxu0 0.0
    %6043 = vmatpush1.msra.mxu0 %v2926
    %6044 = vmatprep.subr.mxu0 0.0
    %6045 = vmatpush1.msra.mxu0 %v2927
    %6046 = vmatprep.subr.mxu0 0.0
    %6047 = vmatpush1.msra.mxu0 %v2928
    %6048 = vmatprep.subr.mxu0 0.0
    %6049 = vmatpush1.msra.mxu0 %v2929
    %6050 = vmatprep.subr.mxu0 0.0
    %6051 = vmatpush1.msra.mxu0 %v2930
    %6052 = vmatprep.subr.mxu0 0.0
    %6053 = vmatpush1.msra.mxu0 %v2931
    %6054 = vmatprep.subr.mxu0 0.0
    %6055 = vmatpush1.msra.mxu0 %v2932
    %6056 = vmatprep.mubr.f32.mxu0 %v3158
    %6057 = vmatmul.mubr.f32.gmra.mrb[0].mxu0 %v3157
    %v6058 = vpop.f32.mrb[0].mxu0
    %v6059 = vadd.f32 %v5914, %v6058
    %v6060 = vpop.f32.mrb[0].mxu0
    %6061 = vmatprep.mubr.f32.mxu0 %v3201
    %6062 = vmatmul.mubr.f32.gmra.mrb[0].mxu0 %v3200
    %v6063 = vpop.f32.mrb[0].mxu0
    %v6064 = vadd.f32 %v5919, %v6063
    %v6065 = vpop.f32.mrb[0].mxu0
    %6066 = vmatprep.mubr.f32.mxu0 %v3244
    %6067 = vmatmul.mubr.f32.gmra.mrb[0].mxu0 %v3243
    %v6068 = vpop.f32.mrb[0].mxu0
    %v6069 = vadd.f32 %v5924, %v6068
    %v6070 = vpop.f32.mrb[0].mxu0
    %6071 = vmatprep.mubr.f32.mxu0 %v3287
    %6072 = vmatmul.mubr.f32.gmra.mrb[0].mxu0 %v3286
    %v6073 = vpop.f32.mrb[0].mxu0
    %v6074 = vadd.f32 %v5929, %v6073
    %v6075 = vpop.f32.mrb[0].mxu0
    %6076 = vmatprep.mubr.f32.mxu0 %v3330
    %6077 = vmatmul.mubr.f32.gmra.mrb[0].mxu0 %v3329
    %v6078 = vpop.f32.mrb[0].mxu0
    %v6079 = vadd.f32 %v5934, %v6078
    %v6080 = vpop.f32.mrb[0].mxu0
    %6081 = vmatprep.mubr.f32.mxu0 %v3373
    %6082 = vmatmul.mubr.f32.gmra.mrb[0].mxu0 %v3372
    %v6083 = vpop.f32.mrb[0].mxu0
    %v6084 = vadd.f32 %v5939, %v6083
    %v6085 = vpop.f32.mrb[0].mxu0
    %6086 = vmatprep.mubr.f32.mxu0 %v3416
    %6087 = vmatmul.mubr.f32.gmra.mrb[0].mxu0 %v3415
    %v6088 = vpop.f32.mrb[0].mxu0
    %v6089 = vadd.f32 %v5944, %v6088
    %v6090 = vpop.f32.mrb[0].mxu0
    %6091 = vmatprep.mubr.f32.mxu0 %v3459
    %6092 = vmatmul.mubr.f32.gmra.mrb[0].mxu0 %v3458
    %v6093 = vpop.f32.mrb[0].mxu0
    %v6094 = vadd.f32 %v5949, %v6093
    %v6095 = vpop.f32.mrb[0].mxu0
    %6096 = vmatprep.mubr.f32.mxu0 %v3502
    %6097 = vmatmul.mubr.f32.gmra.mrb[0].mxu0 %v3501
    %v6098 = vpop.f32.mrb[0].mxu0
    %v6099 = vadd.f32 %v5954, %v6098
    %v6100 = vpop.f32.mrb[0].mxu0
    %6101 = vmatprep.mubr.f32.mxu0 %v3545
    %6102 = vmatmul.mubr.f32.gmra.mrb[0].mxu0 %v3544
    %v6103 = vpop.f32.mrb[0].mxu0
    %v6104 = vadd.f32 %v5959, %v6103
    %v6105 = vpop.f32.mrb[0].mxu0
    %6106 = vmatprep.mubr.f32.mxu0 %v3588
    %6107 = vmatmul.mubr.f32.gmra.mrb[0].mxu0 %v3587
    %v6108 = vpop.f32.mrb[0].mxu0
    %v6109 = vadd.f32 %v5964, %v6108
    %v6110 = vpop.f32.mrb[0].mxu0
    %6111 = vmatprep.mubr.f32.mxu0 %v3631
    %6112 = vmatmul.mubr.f32.gmra.mrb[0].mxu0 %v3630
    %v6113 = vpop.f32.mrb[0].mxu0
    %v6114 = vadd.f32 %v5969, %v6113
    %v6115 = vpop.f32.mrb[0].mxu0
    %6116 = vmatprep.mubr.f32.mxu0 %v3674
    %6117 = vmatmul.mubr.f32.gmra.mrb[0].mxu0 %v3673
    %v6118 = vpop.f32.mrb[0].mxu0
    %v6119 = vadd.f32 %v5974, %v6118
    %v6120 = vpop.f32.mrb[0].mxu0
    %6121 = vmatprep.mubr.f32.mxu0 %v3717
    %6122 = vmatmul.mubr.f32.gmra.mrb[0].mxu0 %v3716
    %v6123 = vpop.f32.mrb[0].mxu0
    %v6124 = vadd.f32 %v5979, %v6123
    %v6125 = vpop.f32.mrb[0].mxu0
    %6126 = vmatprep.mubr.f32.mxu0 %v3760
    %6127 = vmatmul.mubr.f32.gmra.mrb[0].mxu0 %v3759
    %v6128 = vpop.f32.mrb[0].mxu0
    %v6129 = vadd.f32 %v5984, %v6128
    %v6130 = vpop.f32.mrb[0].mxu0
    %6131 = vmatprep.mubr.f32.mxu0 %v3803
    %6132 = vmatmul.mubr.f32.gmra.mrb[0].mxu0 %v3802
    %v6133 = vpop.f32.mrb[0].mxu0
    %v6134 = vadd.f32 %v5989, %v6133
    %v6135 = vpop.f32.mrb[0].mxu0
    %6136 = vdwg.mxu0
    %6137 = vmatprep.subr.mxu0 0.0
    %6138 = vmatpush1.msra.mxu0 %v2933
    %6139 = vmatprep.subr.mxu0 0.0
    %6140 = vmatpush1.msra.mxu0 %v2934
    %6141 = vmatprep.subr.mxu0 0.0
    %6142 = vmatpush1.msra.mxu0 %v2935
    %6143 = vmatprep.subr.mxu0 0.0
    %6144 = vmatpush1.msra.mxu0 %v2936
    %6145 = vmatprep.subr.mxu0 0.0
    %6146 = vmatpush1.msra.mxu0 %v2937
    %6147 = vmatprep.subr.mxu0 0.0
    %6148 = vmatpush1.msra.mxu0 %v2938
    %6149 = vmatprep.subr.mxu0 0.0
    %6150 = vmatpush1.msra.mxu0 %v2939
    %6151 = vmatprep.subr.mxu0 0.0
    %6152 = vmatpush1.msra.mxu0 %v2940
    %6153 = vmatprep.subr.mxu0 0.0
    %6154 = vmatpush1.msra.mxu0 %v2941
    %6155 = vmatprep.subr.mxu0 0.0
    %6156 = vmatpush1.msra.mxu0 %v2942
    %6157 = vmatprep.subr.mxu0 0.0
    %6158 = vmatpush1.msra.mxu0 %v2943
    %6159 = vmatprep.subr.mxu0 0.0
    %6160 = vmatpush1.msra.mxu0 %v2944
    %6161 = vmatprep.subr.mxu0 0.0
    %6162 = vmatpush1.msra.mxu0 %v2945
    %6163 = vmatprep.subr.mxu0 0.0
    %6164 = vmatpush1.msra.mxu0 %v2946
    %6165 = vmatprep.subr.mxu0 0.0
    %6166 = vmatpush1.msra.mxu0 %v2947
    %6167 = vmatprep.subr.mxu0 0.0
    %6168 = vmatpush1.msra.mxu0 %v2948
    %6169 = vmatprep.subr.mxu0 0.0
    %6170 = vmatpush1.msra.mxu0 %v2949
    %6171 = vmatprep.subr.mxu0 0.0
    %6172 = vmatpush1.msra.mxu0 %v2950
    %6173 = vmatprep.subr.mxu0 0.0
    %6174 = vmatpush1.msra.mxu0 %v2951
    %6175 = vmatprep.subr.mxu0 0.0
    %6176 = vmatpush1.msra.mxu0 %v2952
    %6177 = vmatprep.subr.mxu0 0.0
    %6178 = vmatpush1.msra.mxu0 %v2953
    %6179 = vmatprep.subr.mxu0 0.0
    %6180 = vmatpush1.msra.mxu0 %v2954
    %6181 = vmatprep.subr.mxu0 0.0
    %6182 = vmatpush1.msra.mxu0 %v2955
    %6183 = vmatprep.subr.mxu0 0.0
    %6184 = vmatpush1.msra.mxu0 %v2956
    %6185 = vmatprep.subr.mxu0 0.0
    %6186 = vmatpush1.msra.mxu0 %v2957
    %6187 = vmatprep.subr.mxu0 0.0
    %6188 = vmatpush1.msra.mxu0 %v2958
    %6189 = vmatprep.subr.mxu0 0.0
    %6190 = vmatpush1.msra.mxu0 %v2959
    %6191 = vmatprep.subr.mxu0 0.0
    %6192 = vmatpush1.msra.mxu0 %v2960
    %6193 = vmatprep.subr.mxu0 0.0
    %6194 = vmatpush1.msra.mxu0 %v2961
    %6195 = vmatprep.subr.mxu0 0.0
    %6196 = vmatpush1.msra.mxu0 %v2962
    %6197 = vmatprep.subr.mxu0 0.0
    %6198 = vmatpush1.msra.mxu0 %v2963
    %6199 = vmatprep.subr.mxu0 0.0
    %6200 = vmatpush1.msra.mxu0 %v2964
    %6201 = vmatprep.mubr.f32.mxu0 %v3160
    %6202 = vmatmul.mubr.f32.gmra.mrb[0].mxu0 %v3159
    %v6203 = vpop.f32.mrb[0].mxu0
    %v6204 = vadd.f32 %v6059, %v6203
    %v6205 = vpop.f32.mrb[0].mxu0
    %6206 = vmatprep.mubr.f32.mxu0 %v3203
    %6207 = vmatmul.mubr.f32.gmra.mrb[0].mxu0 %v3202
    %v6208 = vpop.f32.mrb[0].mxu0
    %v6209 = vadd.f32 %v6064, %v6208
    %v6210 = vpop.f32.mrb[0].mxu0
    %6211 = vmatprep.mubr.f32.mxu0 %v3246
    %6212 = vmatmul.mubr.f32.gmra.mrb[0].mxu0 %v3245
    %v6213 = vpop.f32.mrb[0].mxu0
    %v6214 = vadd.f32 %v6069, %v6213
    %v6215 = vpop.f32.mrb[0].mxu0
    %6216 = vmatprep.mubr.f32.mxu0 %v3289
    %6217 = vmatmul.mubr.f32.gmra.mrb[0].mxu0 %v3288
    %v6218 = vpop.f32.mrb[0].mxu0
    %v6219 = vadd.f32 %v6074, %v6218
    %v6220 = vpop.f32.mrb[0].mxu0
    %6221 = vmatprep.mubr.f32.mxu0 %v3332
    %6222 = vmatmul.mubr.f32.gmra.mrb[0].mxu0 %v3331
    %v6223 = vpop.f32.mrb[0].mxu0
    %v6224 = vadd.f32 %v6079, %v6223
    %v6225 = vpop.f32.mrb[0].mxu0
    %6226 = vmatprep.mubr.f32.mxu0 %v3375
    %6227 = vmatmul.mubr.f32.gmra.mrb[0].mxu0 %v3374
    %v6228 = vpop.f32.mrb[0].mxu0
    %v6229 = vadd.f32 %v6084, %v6228
    %v6230 = vpop.f32.mrb[0].mxu0
    %6231 = vmatprep.mubr.f32.mxu0 %v3418
    %6232 = vmatmul.mubr.f32.gmra.mrb[0].mxu0 %v3417
    %v6233 = vpop.f32.mrb[0].mxu0
    %v6234 = vadd.f32 %v6089, %v6233
    %v6235 = vpop.f32.mrb[0].mxu0
    %6236 = vmatprep.mubr.f32.mxu0 %v3461
    %6237 = vmatmul.mubr.f32.gmra.mrb[0].mxu0 %v3460
    %v6238 = vpop.f32.mrb[0].mxu0
    %v6239 = vadd.f32 %v6094, %v6238
    %v6240 = vpop.f32.mrb[0].mxu0
    %6241 = vmatprep.mubr.f32.mxu0 %v3504
    %6242 = vmatmul.mubr.f32.gmra.mrb[0].mxu0 %v3503
    %v6243 = vpop.f32.mrb[0].mxu0
    %v6244 = vadd.f32 %v6099, %v6243
    %v6245 = vpop.f32.mrb[0].mxu0
    %6246 = vmatprep.mubr.f32.mxu0 %v3547
    %6247 = vmatmul.mubr.f32.gmra.mrb[0].mxu0 %v3546
    %v6248 = vpop.f32.mrb[0].mxu0
    %v6249 = vadd.f32 %v6104, %v6248
    %v6250 = vpop.f32.mrb[0].mxu0
    %6251 = vmatprep.mubr.f32.mxu0 %v3590
    %6252 = vmatmul.mubr.f32.gmra.mrb[0].mxu0 %v3589
    %v6253 = vpop.f32.mrb[0].mxu0
    %v6254 = vadd.f32 %v6109, %v6253
    %v6255 = vpop.f32.mrb[0].mxu0
    %6256 = vmatprep.mubr.f32.mxu0 %v3633
    %6257 = vmatmul.mubr.f32.gmra.mrb[0].mxu0 %v3632
    %v6258 = vpop.f32.mrb[0].mxu0
    %v6259 = vadd.f32 %v6114, %v6258
    %v6260 = vpop.f32.mrb[0].mxu0
    %6261 = vmatprep.mubr.f32.mxu0 %v3676
    %6262 = vmatmul.mubr.f32.gmra.mrb[0].mxu0 %v3675
    %v6263 = vpop.f32.mrb[0].mxu0
    %v6264 = vadd.f32 %v6119, %v6263
    %v6265 = vpop.f32.mrb[0].mxu0
    %6266 = vmatprep.mubr.f32.mxu0 %v3719
    %6267 = vmatmul.mubr.f32.gmra.mrb[0].mxu0 %v3718
    %v6268 = vpop.f32.mrb[0].mxu0
    %v6269 = vadd.f32 %v6124, %v6268
    %v6270 = vpop.f32.mrb[0].mxu0
    %6271 = vmatprep.mubr.f32.mxu0 %v3762
    %6272 = vmatmul.mubr.f32.gmra.mrb[0].mxu0 %v3761
    %v6273 = vpop.f32.mrb[0].mxu0
    %v6274 = vadd.f32 %v6129, %v6273
    %v6275 = vpop.f32.mrb[0].mxu0
    %6276 = vmatprep.mubr.f32.mxu0 %v3805
    %6277 = vmatmul.mubr.f32.gmra.mrb[0].mxu0 %v3804
    %v6278 = vpop.f32.mrb[0].mxu0
    %v6279 = vadd.f32 %v6134, %v6278
    %v6280 = vpop.f32.mrb[0].mxu0
    %6281 = vdwg.mxu0
    %6282 = vmatprep.subr.mxu0 0.0
    %6283 = vmatpush1.msra.mxu0 %v2965
    %6284 = vmatprep.subr.mxu0 0.0
    %6285 = vmatpush1.msra.mxu0 %v2966
    %6286 = vmatprep.subr.mxu0 0.0
    %6287 = vmatpush1.msra.mxu0 %v2967
    %6288 = vmatprep.subr.mxu0 0.0
    %6289 = vmatpush1.msra.mxu0 %v2968
    %6290 = vmatprep.subr.mxu0 0.0
    %6291 = vmatpush1.msra.mxu0 %v2969
    %6292 = vmatprep.subr.mxu0 0.0
    %6293 = vmatpush1.msra.mxu0 %v2970
    %6294 = vmatprep.subr.mxu0 0.0
    %6295 = vmatpush1.msra.mxu0 %v2971
    %6296 = vmatprep.subr.mxu0 0.0
    %6297 = vmatpush1.msra.mxu0 %v2972
    %6298 = vmatprep.subr.mxu0 0.0
    %6299 = vmatpush1.msra.mxu0 %v2973
    %6300 = vmatprep.subr.mxu0 0.0
    %6301 = vmatpush1.msra.mxu0 %v2974
    %6302 = vmatprep.subr.mxu0 0.0
    %6303 = vmatpush1.msra.mxu0 %v2975
    %6304 = vmatprep.subr.mxu0 0.0
    %6305 = vmatpush1.msra.mxu0 %v2976
    %6306 = vmatprep.subr.mxu0 0.0
    %6307 = vmatpush1.msra.mxu0 %v2977
    %6308 = vmatprep.subr.mxu0 0.0
    %6309 = vmatpush1.msra.mxu0 %v2978
    %6310 = vmatprep.subr.mxu0 0.0
    %6311 = vmatpush1.msra.mxu0 %v2979
    %6312 = vmatprep.subr.mxu0 0.0
    %6313 = vmatpush1.msra.mxu0 %v2980
    %6314 = vmatprep.subr.mxu0 0.0
    %6315 = vmatpush1.msra.mxu0 %v2981
    %6316 = vmatprep.subr.mxu0 0.0
    %6317 = vmatpush1.msra.mxu0 %v2982
    %6318 = vmatprep.subr.mxu0 0.0
    %6319 = vmatpush1.msra.mxu0 %v2983
    %6320 = vmatprep.subr.mxu0 0.0
    %6321 = vmatpush1.msra.mxu0 %v2984
    %6322 = vmatprep.subr.mxu0 0.0
    %6323 = vmatpush1.msra.mxu0 %v2985
    %6324 = vmatprep.subr.mxu0 0.0
    %6325 = vmatpush1.msra.mxu0 %v2986
    %6326 = vmatprep.subr.mxu0 0.0
    %6327 = vmatpush1.msra.mxu0 %v2987
    %6328 = vmatprep.subr.mxu0 0.0
    %6329 = vmatpush1.msra.mxu0 %v2988
    %6330 = vmatprep.subr.mxu0 0.0
    %6331 = vmatpush1.msra.mxu0 %v2989
    %6332 = vmatprep.subr.mxu0 0.0
    %6333 = vmatpush1.msra.mxu0 %v2990
    %6334 = vmatprep.subr.mxu0 0.0
    %6335 = vmatpush1.msra.mxu0 %v2991
    %6336 = vmatprep.subr.mxu0 0.0
    %6337 = vmatpush1.msra.mxu0 %v2992
    %6338 = vmatprep.subr.mxu0 0.0
    %6339 = vmatpush1.msra.mxu0 %v2993
    %6340 = vmatprep.subr.mxu0 0.0
    %6341 = vmatpush1.msra.mxu0 %v2994
    %6342 = vmatprep.subr.mxu0 0.0
    %6343 = vmatpush1.msra.mxu0 %v2995
    %6344 = vmatprep.subr.mxu0 0.0
    %6345 = vmatpush1.msra.mxu0 %v2996
    %6346 = vmatprep.mubr.f32.mxu0 %v3162
    %6347 = vmatmul.mubr.f32.gmra.mrb[0].mxu0 %v3161
    %v6348 = vpop.f32.mrb[0].mxu0
    %v6349 = vadd.f32 %v6204, %v6348
    %v6350 = vpop.f32.mrb[0].mxu0
    %6351 = vmatprep.mubr.f32.mxu0 %v3205
    %6352 = vmatmul.mubr.f32.gmra.mrb[0].mxu0 %v3204
    %v6353 = vpop.f32.mrb[0].mxu0
    %v6354 = vadd.f32 %v6209, %v6353
    %v6355 = vpop.f32.mrb[0].mxu0
    %6356 = vmatprep.mubr.f32.mxu0 %v3248
    %6357 = vmatmul.mubr.f32.gmra.mrb[0].mxu0 %v3247
    %v6358 = vpop.f32.mrb[0].mxu0
    %v6359 = vadd.f32 %v6214, %v6358
    %v6360 = vpop.f32.mrb[0].mxu0
    %6361 = vmatprep.mubr.f32.mxu0 %v3291
    %6362 = vmatmul.mubr.f32.gmra.mrb[0].mxu0 %v3290
    %v6363 = vpop.f32.mrb[0].mxu0
    %v6364 = vadd.f32 %v6219, %v6363
    %v6365 = vpop.f32.mrb[0].mxu0
    %6366 = vmatprep.mubr.f32.mxu0 %v3334
    %6367 = vmatmul.mubr.f32.gmra.mrb[0].mxu0 %v3333
    %v6368 = vpop.f32.mrb[0].mxu0
    %v6369 = vadd.f32 %v6224, %v6368
    %v6370 = vpop.f32.mrb[0].mxu0
    %6371 = vmatprep.mubr.f32.mxu0 %v3377
    %6372 = vmatmul.mubr.f32.gmra.mrb[0].mxu0 %v3376
    %v6373 = vpop.f32.mrb[0].mxu0
    %v6374 = vadd.f32 %v6229, %v6373
    %v6375 = vpop.f32.mrb[0].mxu0
    %6376 = vmatprep.mubr.f32.mxu0 %v3420
    %6377 = vmatmul.mubr.f32.gmra.mrb[0].mxu0 %v3419
    %v6378 = vpop.f32.mrb[0].mxu0
    %v6379 = vadd.f32 %v6234, %v6378
    %v6380 = vpop.f32.mrb[0].mxu0
    %6381 = vmatprep.mubr.f32.mxu0 %v3463
    %6382 = vmatmul.mubr.f32.gmra.mrb[0].mxu0 %v3462
    %v6383 = vpop.f32.mrb[0].mxu0
    %v6384 = vadd.f32 %v6239, %v6383
    %v6385 = vpop.f32.mrb[0].mxu0
    %6386 = vmatprep.mubr.f32.mxu0 %v3506
    %6387 = vmatmul.mubr.f32.gmra.mrb[0].mxu0 %v3505
    %v6388 = vpop.f32.mrb[0].mxu0
    %v6389 = vadd.f32 %v6244, %v6388
    %v6390 = vpop.f32.mrb[0].mxu0
    %6391 = vmatprep.mubr.f32.mxu0 %v3549
    %6392 = vmatmul.mubr.f32.gmra.mrb[0].mxu0 %v3548
    %v6393 = vpop.f32.mrb[0].mxu0
    %v6394 = vadd.f32 %v6249, %v6393
    %v6395 = vpop.f32.mrb[0].mxu0
    %6396 = vmatprep.mubr.f32.mxu0 %v3592
    %6397 = vmatmul.mubr.f32.gmra.mrb[0].mxu0 %v3591
    %v6398 = vpop.f32.mrb[0].mxu0
    %v6399 = vadd.f32 %v6254, %v6398
    %v6400 = vpop.f32.mrb[0].mxu0
    %6401 = vmatprep.mubr.f32.mxu0 %v3635
    %6402 = vmatmul.mubr.f32.gmra.mrb[0].mxu0 %v3634
    %v6403 = vpop.f32.mrb[0].mxu0
    %v6404 = vadd.f32 %v6259, %v6403
    %v6405 = vpop.f32.mrb[0].mxu0
    %6406 = vmatprep.mubr.f32.mxu0 %v3678
    %6407 = vmatmul.mubr.f32.gmra.mrb[0].mxu0 %v3677
    %v6408 = vpop.f32.mrb[0].mxu0
    %v6409 = vadd.f32 %v6264, %v6408
    %v6410 = vpop.f32.mrb[0].mxu0
    %6411 = vmatprep.mubr.f32.mxu0 %v3721
    %6412 = vmatmul.mubr.f32.gmra.mrb[0].mxu0 %v3720
    %v6413 = vpop.f32.mrb[0].mxu0
    %v6414 = vadd.f32 %v6269, %v6413
    %v6415 = vpop.f32.mrb[0].mxu0
    %6416 = vmatprep.mubr.f32.mxu0 %v3764
    %6417 = vmatmul.mubr.f32.gmra.mrb[0].mxu0 %v3763
    %v6418 = vpop.f32.mrb[0].mxu0
    %v6419 = vadd.f32 %v6274, %v6418
    %v6420 = vpop.f32.mrb[0].mxu0
    %6421 = vmatprep.mubr.f32.mxu0 %v3807
    %6422 = vmatmul.mubr.f32.gmra.mrb[0].mxu0 %v3806
    %v6423 = vpop.f32.mrb[0].mxu0
    %v6424 = vadd.f32 %v6279, %v6423
    %v6425 = vpop.f32.mrb[0].mxu0
    %6426 = vdwg.mxu0
    %6427 = vmatprep.subr.mxu0 0.0
    %6428 = vmatpush1.msra.mxu0 %v2997
    %6429 = vmatprep.subr.mxu0 0.0
    %6430 = vmatpush1.msra.mxu0 %v2998
    %6431 = vmatprep.subr.mxu0 0.0
    %6432 = vmatpush1.msra.mxu0 %v2999
    %6433 = vmatprep.subr.mxu0 0.0
    %6434 = vmatpush1.msra.mxu0 %v3000
    %6435 = vmatprep.subr.mxu0 0.0
    %6436 = vmatpush1.msra.mxu0 %v3001
    %6437 = vmatprep.subr.mxu0 0.0
    %6438 = vmatpush1.msra.mxu0 %v3002
    %6439 = vmatprep.subr.mxu0 0.0
    %6440 = vmatpush1.msra.mxu0 %v3003
    %6441 = vmatprep.subr.mxu0 0.0
    %6442 = vmatpush1.msra.mxu0 %v3004
    %6443 = vmatprep.subr.mxu0 0.0
    %6444 = vmatpush1.msra.mxu0 %v3005
    %6445 = vmatprep.subr.mxu0 0.0
    %6446 = vmatpush1.msra.mxu0 %v3006
    %6447 = vmatprep.subr.mxu0 0.0
    %6448 = vmatpush1.msra.mxu0 %v3007
    %6449 = vmatprep.subr.mxu0 0.0
    %6450 = vmatpush1.msra.mxu0 %v3008
    %6451 = vmatprep.subr.mxu0 0.0
    %6452 = vmatpush1.msra.mxu0 %v3009
    %6453 = vmatprep.subr.mxu0 0.0
    %6454 = vmatpush1.msra.mxu0 %v3010
    %6455 = vmatprep.subr.mxu0 0.0
    %6456 = vmatpush1.msra.mxu0 %v3011
    %6457 = vmatprep.subr.mxu0 0.0
    %6458 = vmatpush1.msra.mxu0 %v3012
    %6459 = vmatprep.subr.mxu0 0.0
    %6460 = vmatpush1.msra.mxu0 %v3013
    %6461 = vmatprep.subr.mxu0 0.0
    %6462 = vmatpush1.msra.mxu0 %v3014
    %6463 = vmatprep.subr.mxu0 0.0
    %6464 = vmatpush1.msra.mxu0 %v3015
    %6465 = vmatprep.subr.mxu0 0.0
    %6466 = vmatpush1.msra.mxu0 %v3016
    %6467 = vmatprep.subr.mxu0 0.0
    %6468 = vmatpush1.msra.mxu0 %v3017
    %6469 = vmatprep.subr.mxu0 0.0
    %6470 = vmatpush1.msra.mxu0 %v3018
    %6471 = vmatprep.subr.mxu0 0.0
    %6472 = vmatpush1.msra.mxu0 %v3019
    %6473 = vmatprep.subr.mxu0 0.0
    %6474 = vmatpush1.msra.mxu0 %v3020
    %6475 = vmatprep.subr.mxu0 0.0
    %6476 = vmatpush1.msra.mxu0 %v3021
    %6477 = vmatprep.subr.mxu0 0.0
    %6478 = vmatpush1.msra.mxu0 %v3022
    %6479 = vmatprep.subr.mxu0 0.0
    %6480 = vmatpush1.msra.mxu0 %v3023
    %6481 = vmatprep.subr.mxu0 0.0
    %6482 = vmatpush1.msra.mxu0 %v3024
    %6483 = vmatprep.subr.mxu0 0.0
    %6484 = vmatpush1.msra.mxu0 %v3025
    %6485 = vmatprep.subr.mxu0 0.0
    %6486 = vmatpush1.msra.mxu0 %v3026
    %6487 = vmatprep.subr.mxu0 0.0
    %6488 = vmatpush1.msra.mxu0 %v3027
    %6489 = vmatprep.subr.mxu0 0.0
    %6490 = vmatpush1.msra.mxu0 %v3028
    %6491 = vmatprep.mubr.f32.mxu0 %v3164
    %6492 = vmatmul.mubr.f32.gmra.mrb[0].mxu0 %v3163
    %v6493 = vpop.f32.mrb[0].mxu0
    %v6494 = vadd.f32 %v6349, %v6493
    %v6495 = vpop.f32.mrb[0].mxu0
    %6496 = vmatprep.mubr.f32.mxu0 %v3207
    %6497 = vmatmul.mubr.f32.gmra.mrb[0].mxu0 %v3206
    %v6498 = vpop.f32.mrb[0].mxu0
    %v6499 = vadd.f32 %v6354, %v6498
    %v6500 = vpop.f32.mrb[0].mxu0
    %6501 = vmatprep.mubr.f32.mxu0 %v3250
    %6502 = vmatmul.mubr.f32.gmra.mrb[0].mxu0 %v3249
    %v6503 = vpop.f32.mrb[0].mxu0
    %v6504 = vadd.f32 %v6359, %v6503
    %v6505 = vpop.f32.mrb[0].mxu0
    %6506 = vmatprep.mubr.f32.mxu0 %v3293
    %6507 = vmatmul.mubr.f32.gmra.mrb[0].mxu0 %v3292
    %v6508 = vpop.f32.mrb[0].mxu0
    %v6509 = vadd.f32 %v6364, %v6508
    %v6510 = vpop.f32.mrb[0].mxu0
    %6511 = vmatprep.mubr.f32.mxu0 %v3336
    %6512 = vmatmul.mubr.f32.gmra.mrb[0].mxu0 %v3335
    %v6513 = vpop.f32.mrb[0].mxu0
    %v6514 = vadd.f32 %v6369, %v6513
    %v6515 = vpop.f32.mrb[0].mxu0
    %6516 = vmatprep.mubr.f32.mxu0 %v3379
    %6517 = vmatmul.mubr.f32.gmra.mrb[0].mxu0 %v3378
    %v6518 = vpop.f32.mrb[0].mxu0
    %v6519 = vadd.f32 %v6374, %v6518
    %v6520 = vpop.f32.mrb[0].mxu0
    %6521 = vmatprep.mubr.f32.mxu0 %v3422
    %6522 = vmatmul.mubr.f32.gmra.mrb[0].mxu0 %v3421
    %v6523 = vpop.f32.mrb[0].mxu0
    %v6524 = vadd.f32 %v6379, %v6523
    %v6525 = vpop.f32.mrb[0].mxu0
    %6526 = vmatprep.mubr.f32.mxu0 %v3465
    %6527 = vmatmul.mubr.f32.gmra.mrb[0].mxu0 %v3464
    %v6528 = vpop.f32.mrb[0].mxu0
    %v6529 = vadd.f32 %v6384, %v6528
    %v6530 = vpop.f32.mrb[0].mxu0
    %6531 = vmatprep.mubr.f32.mxu0 %v3508
    %6532 = vmatmul.mubr.f32.gmra.mrb[0].mxu0 %v3507
    %v6533 = vpop.f32.mrb[0].mxu0
    %v6534 = vadd.f32 %v6389, %v6533
    %v6535 = vpop.f32.mrb[0].mxu0
    %6536 = vmatprep.mubr.f32.mxu0 %v3551
    %6537 = vmatmul.mubr.f32.gmra.mrb[0].mxu0 %v3550
    %v6538 = vpop.f32.mrb[0].mxu0
    %v6539 = vadd.f32 %v6394, %v6538
    %v6540 = vpop.f32.mrb[0].mxu0
    %6541 = vmatprep.mubr.f32.mxu0 %v3594
    %6542 = vmatmul.mubr.f32.gmra.mrb[0].mxu0 %v3593
    %v6543 = vpop.f32.mrb[0].mxu0
    %v6544 = vadd.f32 %v6399, %v6543
    %v6545 = vpop.f32.mrb[0].mxu0
    %6546 = vmatprep.mubr.f32.mxu0 %v3637
    %6547 = vmatmul.mubr.f32.gmra.mrb[0].mxu0 %v3636
    %v6548 = vpop.f32.mrb[0].mxu0
    %v6549 = vadd.f32 %v6404, %v6548
    %v6550 = vpop.f32.mrb[0].mxu0
    %6551 = vmatprep.mubr.f32.mxu0 %v3680
    %6552 = vmatmul.mubr.f32.gmra.mrb[0].mxu0 %v3679
    %v6553 = vpop.f32.mrb[0].mxu0
    %v6554 = vadd.f32 %v6409, %v6553
    %v6555 = vpop.f32.mrb[0].mxu0
    %6556 = vmatprep.mubr.f32.mxu0 %v3723
    %6557 = vmatmul.mubr.f32.gmra.mrb[0].mxu0 %v3722
    %v6558 = vpop.f32.mrb[0].mxu0
    %v6559 = vadd.f32 %v6414, %v6558
    %v6560 = vpop.f32.mrb[0].mxu0
    %6561 = vmatprep.mubr.f32.mxu0 %v3766
    %6562 = vmatmul.mubr.f32.gmra.mrb[0].mxu0 %v3765
    %v6563 = vpop.f32.mrb[0].mxu0
    %v6564 = vadd.f32 %v6419, %v6563
    %v6565 = vpop.f32.mrb[0].mxu0
    %6566 = vmatprep.mubr.f32.mxu0 %v3809
    %6567 = vmatmul.mubr.f32.gmra.mrb[0].mxu0 %v3808
    %v6568 = vpop.f32.mrb[0].mxu0
    %v6569 = vadd.f32 %v6424, %v6568
    %v6570 = vpop.f32.mrb[0].mxu0
    %6571 = vdwg.mxu0
    %6572 = vmatprep.subr.mxu0 0.0
    %6573 = vmatpush1.msra.mxu0 %v3029
    %6574 = vmatprep.subr.mxu0 0.0
    %6575 = vmatpush1.msra.mxu0 %v3030
    %6576 = vmatprep.subr.mxu0 0.0
    %6577 = vmatpush1.msra.mxu0 %v3031
    %6578 = vmatprep.subr.mxu0 0.0
    %6579 = vmatpush1.msra.mxu0 %v3032
    %6580 = vmatprep.subr.mxu0 0.0
    %6581 = vmatpush1.msra.mxu0 %v3033
    %6582 = vmatprep.subr.mxu0 0.0
    %6583 = vmatpush1.msra.mxu0 %v3034
    %6584 = vmatprep.subr.mxu0 0.0
    %6585 = vmatpush1.msra.mxu0 %v3035
    %6586 = vmatprep.subr.mxu0 0.0
    %6587 = vmatpush1.msra.mxu0 %v3036
    %6588 = vmatprep.subr.mxu0 0.0
    %6589 = vmatpush1.msra.mxu0 %v3037
    %6590 = vmatprep.subr.mxu0 0.0
    %6591 = vmatpush1.msra.mxu0 %v3038
    %6592 = vmatprep.subr.mxu0 0.0
    %6593 = vmatpush1.msra.mxu0 %v3039
    %6594 = vmatprep.subr.mxu0 0.0
    %6595 = vmatpush1.msra.mxu0 %v3040
    %6596 = vmatprep.subr.mxu0 0.0
    %6597 = vmatpush1.msra.mxu0 %v3041
    %6598 = vmatprep.subr.mxu0 0.0
    %6599 = vmatpush1.msra.mxu0 %v3042
    %6600 = vmatprep.subr.mxu0 0.0
    %6601 = vmatpush1.msra.mxu0 %v3043
    %6602 = vmatprep.subr.mxu0 0.0
    %6603 = vmatpush1.msra.mxu0 %v3044
    %6604 = vmatprep.subr.mxu0 0.0
    %6605 = vmatpush1.msra.mxu0 %v3045
    %6606 = vmatprep.subr.mxu0 0.0
    %6607 = vmatpush1.msra.mxu0 %v3046
    %6608 = vmatprep.subr.mxu0 0.0
    %6609 = vmatpush1.msra.mxu0 %v3047
    %6610 = vmatprep.subr.mxu0 0.0
    %6611 = vmatpush1.msra.mxu0 %v3048
    %6612 = vmatprep.subr.mxu0 0.0
    %6613 = vmatpush1.msra.mxu0 %v3049
    %6614 = vmatprep.subr.mxu0 0.0
    %6615 = vmatpush1.msra.mxu0 %v3050
    %6616 = vmatprep.subr.mxu0 0.0
    %6617 = vmatpush1.msra.mxu0 %v3051
    %6618 = vmatprep.subr.mxu0 0.0
    %6619 = vmatpush1.msra.mxu0 %v3052
    %6620 = vmatprep.subr.mxu0 0.0
    %6621 = vmatpush1.msra.mxu0 %v3053
    %6622 = vmatprep.subr.mxu0 0.0
    %6623 = vmatpush1.msra.mxu0 %v3054
    %6624 = vmatprep.subr.mxu0 0.0
    %6625 = vmatpush1.msra.mxu0 %v3055
    %6626 = vmatprep.subr.mxu0 0.0
    %6627 = vmatpush1.msra.mxu0 %v3056
    %6628 = vmatprep.subr.mxu0 0.0
    %6629 = vmatpush1.msra.mxu0 %v3057
    %6630 = vmatprep.subr.mxu0 0.0
    %6631 = vmatpush1.msra.mxu0 %v3058
    %6632 = vmatprep.subr.mxu0 0.0
    %6633 = vmatpush1.msra.mxu0 %v3059
    %6634 = vmatprep.subr.mxu0 0.0
    %6635 = vmatpush1.msra.mxu0 %v3060
    %6636 = vmatprep.mubr.f32.mxu0 %v3166
    %6637 = vmatmul.mubr.f32.gmra.mrb[0].mxu0 %v3165
    %v6638 = vpop.f32.mrb[0].mxu0
    %v6639 = vadd.f32 %v6494, %v6638
    %v6640 = vpop.f32.mrb[0].mxu0
    %6641 = vmatprep.mubr.f32.mxu0 %v3209
    %6642 = vmatmul.mubr.f32.gmra.mrb[0].mxu0 %v3208
    %v6643 = vpop.f32.mrb[0].mxu0
    %v6644 = vadd.f32 %v6499, %v6643
    %v6645 = vpop.f32.mrb[0].mxu0
    %6646 = vmatprep.mubr.f32.mxu0 %v3252
    %6647 = vmatmul.mubr.f32.gmra.mrb[0].mxu0 %v3251
    %v6648 = vpop.f32.mrb[0].mxu0
    %v6649 = vadd.f32 %v6504, %v6648
    %v6650 = vpop.f32.mrb[0].mxu0
    %6651 = vmatprep.mubr.f32.mxu0 %v3295
    %6652 = vmatmul.mubr.f32.gmra.mrb[0].mxu0 %v3294
    %v6653 = vpop.f32.mrb[0].mxu0
    %v6654 = vadd.f32 %v6509, %v6653
    %v6655 = vpop.f32.mrb[0].mxu0
    %6656 = vmatprep.mubr.f32.mxu0 %v3338
    %6657 = vmatmul.mubr.f32.gmra.mrb[0].mxu0 %v3337
    %v6658 = vpop.f32.mrb[0].mxu0
    %v6659 = vadd.f32 %v6514, %v6658
    %v6660 = vpop.f32.mrb[0].mxu0
    %6661 = vmatprep.mubr.f32.mxu0 %v3381
    %6662 = vmatmul.mubr.f32.gmra.mrb[0].mxu0 %v3380
    %v6663 = vpop.f32.mrb[0].mxu0
    %v6664 = vadd.f32 %v6519, %v6663
    %v6665 = vpop.f32.mrb[0].mxu0
    %6666 = vmatprep.mubr.f32.mxu0 %v3424
    %6667 = vmatmul.mubr.f32.gmra.mrb[0].mxu0 %v3423
    %v6668 = vpop.f32.mrb[0].mxu0
    %v6669 = vadd.f32 %v6524, %v6668
    %v6670 = vpop.f32.mrb[0].mxu0
    %6671 = vmatprep.mubr.f32.mxu0 %v3467
    %6672 = vmatmul.mubr.f32.gmra.mrb[0].mxu0 %v3466
    %v6673 = vpop.f32.mrb[0].mxu0
    %v6674 = vadd.f32 %v6529, %v6673
    %v6675 = vpop.f32.mrb[0].mxu0
    %6676 = vmatprep.mubr.f32.mxu0 %v3510
    %6677 = vmatmul.mubr.f32.gmra.mrb[0].mxu0 %v3509
    %v6678 = vpop.f32.mrb[0].mxu0
    %v6679 = vadd.f32 %v6534, %v6678
    %v6680 = vpop.f32.mrb[0].mxu0
    %6681 = vmatprep.mubr.f32.mxu0 %v3553
    %6682 = vmatmul.mubr.f32.gmra.mrb[0].mxu0 %v3552
    %v6683 = vpop.f32.mrb[0].mxu0
    %v6684 = vadd.f32 %v6539, %v6683
    %v6685 = vpop.f32.mrb[0].mxu0
    %6686 = vmatprep.mubr.f32.mxu0 %v3596
    %6687 = vmatmul.mubr.f32.gmra.mrb[0].mxu0 %v3595
    %v6688 = vpop.f32.mrb[0].mxu0
    %v6689 = vadd.f32 %v6544, %v6688
    %v6690 = vpop.f32.mrb[0].mxu0
    %6691 = vmatprep.mubr.f32.mxu0 %v3639
    %6692 = vmatmul.mubr.f32.gmra.mrb[0].mxu0 %v3638
    %v6693 = vpop.f32.mrb[0].mxu0
    %v6694 = vadd.f32 %v6549, %v6693
    %v6695 = vpop.f32.mrb[0].mxu0
    %6696 = vmatprep.mubr.f32.mxu0 %v3682
    %6697 = vmatmul.mubr.f32.gmra.mrb[0].mxu0 %v3681
    %v6698 = vpop.f32.mrb[0].mxu0
    %v6699 = vadd.f32 %v6554, %v6698
    %v6700 = vpop.f32.mrb[0].mxu0
    %6701 = vmatprep.mubr.f32.mxu0 %v3725
    %6702 = vmatmul.mubr.f32.gmra.mrb[0].mxu0 %v3724
    %v6703 = vpop.f32.mrb[0].mxu0
    %v6704 = vadd.f32 %v6559, %v6703
    %v6705 = vpop.f32.mrb[0].mxu0
    %6706 = vmatprep.mubr.f32.mxu0 %v3768
    %6707 = vmatmul.mubr.f32.gmra.mrb[0].mxu0 %v3767
    %v6708 = vpop.f32.mrb[0].mxu0
    %v6709 = vadd.f32 %v6564, %v6708
    %v6710 = vpop.f32.mrb[0].mxu0
    %6711 = vmatprep.mubr.f32.mxu0 %v3811
    %6712 = vmatmul.mubr.f32.gmra.mrb[0].mxu0 %v3810
    %v6713 = vpop.f32.mrb[0].mxu0
    %v6714 = vadd.f32 %v6569, %v6713
    %v6715 = vpop.f32.mrb[0].mxu0
    %6716 = vdwg.mxu0
    %6717 = vmatprep.subr.mxu0 0.0
    %6718 = vmatpush1.msra.mxu0 %v3061
    %6719 = vmatprep.subr.mxu0 0.0
    %6720 = vmatpush1.msra.mxu0 %v3062
    %6721 = vmatprep.subr.mxu0 0.0
    %6722 = vmatpush1.msra.mxu0 %v3063
    %6723 = vmatprep.subr.mxu0 0.0
    %6724 = vmatpush1.msra.mxu0 %v3064
    %6725 = vmatprep.subr.mxu0 0.0
    %6726 = vmatpush1.msra.mxu0 %v3065
    %6727 = vmatprep.subr.mxu0 0.0
    %6728 = vmatpush1.msra.mxu0 %v3066
    %6729 = vmatprep.subr.mxu0 0.0
    %6730 = vmatpush1.msra.mxu0 %v3067
    %6731 = vmatprep.subr.mxu0 0.0
    %6732 = vmatpush1.msra.mxu0 %v3068
    %6733 = vmatprep.subr.mxu0 0.0
    %6734 = vmatpush1.msra.mxu0 %v3069
    %6735 = vmatprep.subr.mxu0 0.0
    %6736 = vmatpush1.msra.mxu0 %v3070
    %6737 = vmatprep.subr.mxu0 0.0
    %6738 = vmatpush1.msra.mxu0 %v3071
    %6739 = vmatprep.subr.mxu0 0.0
    %6740 = vmatpush1.msra.mxu0 %v3072
    %6741 = vmatprep.subr.mxu0 0.0
    %6742 = vmatpush1.msra.mxu0 %v3073
    %6743 = vmatprep.subr.mxu0 0.0
    %6744 = vmatpush1.msra.mxu0 %v3074
    %6745 = vmatprep.subr.mxu0 0.0
    %6746 = vmatpush1.msra.mxu0 %v3075
    %6747 = vmatprep.subr.mxu0 0.0
    %6748 = vmatpush1.msra.mxu0 %v3076
    %6749 = vmatprep.subr.mxu0 0.0
    %6750 = vmatpush1.msra.mxu0 %v3077
    %6751 = vmatprep.subr.mxu0 0.0
    %6752 = vmatpush1.msra.mxu0 %v3078
    %6753 = vmatprep.subr.mxu0 0.0
    %6754 = vmatpush1.msra.mxu0 %v3079
    %6755 = vmatprep.subr.mxu0 0.0
    %6756 = vmatpush1.msra.mxu0 %v3080
    %6757 = vmatprep.subr.mxu0 0.0
    %6758 = vmatpush1.msra.mxu0 %v3081
    %6759 = vmatprep.subr.mxu0 0.0
    %6760 = vmatpush1.msra.mxu0 %v3082
    %6761 = vmatprep.subr.mxu0 0.0
    %6762 = vmatpush1.msra.mxu0 %v3083
    %6763 = vmatprep.subr.mxu0 0.0
    %6764 = vmatpush1.msra.mxu0 %v3084
    %6765 = vmatprep.subr.mxu0 0.0
    %6766 = vmatpush1.msra.mxu0 %v3085
    %6767 = vmatprep.subr.mxu0 0.0
    %6768 = vmatpush1.msra.mxu0 %v3086
    %6769 = vmatprep.subr.mxu0 0.0
    %6770 = vmatpush1.msra.mxu0 %v3087
    %6771 = vmatprep.subr.mxu0 0.0
    %6772 = vmatpush1.msra.mxu0 %v3088
    %6773 = vmatprep.subr.mxu0 0.0
    %6774 = vmatpush1.msra.mxu0 %v3089
    %6775 = vmatprep.subr.mxu0 0.0
    %6776 = vmatpush1.msra.mxu0 %v3090
    %6777 = vmatprep.subr.mxu0 0.0
    %6778 = vmatpush1.msra.mxu0 %v3091
    %6779 = vmatprep.subr.mxu0 0.0
    %6780 = vmatpush1.msra.mxu0 %v3092
    %6781 = vmatprep.mubr.f32.mxu0 %v3168
    %6782 = vmatmul.mubr.f32.gmra.mrb[0].mxu0 %v3167
    %v6783 = vpop.f32.mrb[0].mxu0
    %v6784 = vadd.f32 %v6639, %v6783
    %v6785 = vpop.f32.mrb[0].mxu0
    %6786 = vmatprep.mubr.f32.mxu0 %v3211
    %6787 = vmatmul.mubr.f32.gmra.mrb[0].mxu0 %v3210
    %v6788 = vpop.f32.mrb[0].mxu0
    %v6789 = vadd.f32 %v6644, %v6788
    %v6790 = vpop.f32.mrb[0].mxu0
    %6791 = vmatprep.mubr.f32.mxu0 %v3254
    %6792 = vmatmul.mubr.f32.gmra.mrb[0].mxu0 %v3253
    %v6793 = vpop.f32.mrb[0].mxu0
    %v6794 = vadd.f32 %v6649, %v6793
    %v6795 = vpop.f32.mrb[0].mxu0
    %6796 = vmatprep.mubr.f32.mxu0 %v3297
    %6797 = vmatmul.mubr.f32.gmra.mrb[0].mxu0 %v3296
    %v6798 = vpop.f32.mrb[0].mxu0
    %v6799 = vadd.f32 %v6654, %v6798
    %v6800 = vpop.f32.mrb[0].mxu0
    %6801 = vmatprep.mubr.f32.mxu0 %v3340
    %6802 = vmatmul.mubr.f32.gmra.mrb[0].mxu0 %v3339
    %v6803 = vpop.f32.mrb[0].mxu0
    %v6804 = vadd.f32 %v6659, %v6803
    %v6805 = vpop.f32.mrb[0].mxu0
    %6806 = vmatprep.mubr.f32.mxu0 %v3383
    %6807 = vmatmul.mubr.f32.gmra.mrb[0].mxu0 %v3382
    %v6808 = vpop.f32.mrb[0].mxu0
    %v6809 = vadd.f32 %v6664, %v6808
    %v6810 = vpop.f32.mrb[0].mxu0
    %6811 = vmatprep.mubr.f32.mxu0 %v3426
    %6812 = vmatmul.mubr.f32.gmra.mrb[0].mxu0 %v3425
    %v6813 = vpop.f32.mrb[0].mxu0
    %v6814 = vadd.f32 %v6669, %v6813
    %v6815 = vpop.f32.mrb[0].mxu0
    %6816 = vmatprep.mubr.f32.mxu0 %v3469
    %6817 = vmatmul.mubr.f32.gmra.mrb[0].mxu0 %v3468
    %v6818 = vpop.f32.mrb[0].mxu0
    %v6819 = vadd.f32 %v6674, %v6818
    %v6820 = vpop.f32.mrb[0].mxu0
    %6821 = vmatprep.mubr.f32.mxu0 %v3512
    %6822 = vmatmul.mubr.f32.gmra.mrb[0].mxu0 %v3511
    %v6823 = vpop.f32.mrb[0].mxu0
    %v6824 = vadd.f32 %v6679, %v6823
    %v6825 = vpop.f32.mrb[0].mxu0
    %6826 = vmatprep.mubr.f32.mxu0 %v3555
    %6827 = vmatmul.mubr.f32.gmra.mrb[0].mxu0 %v3554
    %v6828 = vpop.f32.mrb[0].mxu0
    %v6829 = vadd.f32 %v6684, %v6828
    %v6830 = vpop.f32.mrb[0].mxu0
    %6831 = vmatprep.mubr.f32.mxu0 %v3598
    %6832 = vmatmul.mubr.f32.gmra.mrb[0].mxu0 %v3597
    %v6833 = vpop.f32.mrb[0].mxu0
    %v6834 = vadd.f32 %v6689, %v6833
    %v6835 = vpop.f32.mrb[0].mxu0
    %6836 = vmatprep.mubr.f32.mxu0 %v3641
    %6837 = vmatmul.mubr.f32.gmra.mrb[0].mxu0 %v3640
    %v6838 = vpop.f32.mrb[0].mxu0
    %v6839 = vadd.f32 %v6694, %v6838
    %v6840 = vpop.f32.mrb[0].mxu0
    %6841 = vmatprep.mubr.f32.mxu0 %v3684
    %6842 = vmatmul.mubr.f32.gmra.mrb[0].mxu0 %v3683
    %v6843 = vpop.f32.mrb[0].mxu0
    %v6844 = vadd.f32 %v6699, %v6843
    %v6845 = vpop.f32.mrb[0].mxu0
    %6846 = vmatprep.mubr.f32.mxu0 %v3727
    %6847 = vmatmul.mubr.f32.gmra.mrb[0].mxu0 %v3726
    %v6848 = vpop.f32.mrb[0].mxu0
    %v6849 = vadd.f32 %v6704, %v6848
    %v6850 = vpop.f32.mrb[0].mxu0
    %6851 = vmatprep.mubr.f32.mxu0 %v3770
    %6852 = vmatmul.mubr.f32.gmra.mrb[0].mxu0 %v3769
    %v6853 = vpop.f32.mrb[0].mxu0
    %v6854 = vadd.f32 %v6709, %v6853
    %v6855 = vpop.f32.mrb[0].mxu0
    %6856 = vmatprep.mubr.f32.mxu0 %v3813
    %6857 = vmatmul.mubr.f32.gmra.mrb[0].mxu0 %v3812
    %v6858 = vpop.f32.mrb[0].mxu0
    %v6859 = vadd.f32 %v6714, %v6858
    %v6860 = vpop.f32.mrb[0].mxu0
    %6861 = vdwg.mxu0
    %6862 = vmatprep.subr.mxu0 0.0
    %6863 = vmatpush1.msra.mxu0 %v3093
    %6864 = vmatprep.subr.mxu0 0.0
    %6865 = vmatpush1.msra.mxu0 %v3094
    %6866 = vmatprep.subr.mxu0 0.0
    %6867 = vmatpush1.msra.mxu0 %v3095
    %6868 = vmatprep.subr.mxu0 0.0
    %6869 = vmatpush1.msra.mxu0 %v3096
    %6870 = vmatprep.subr.mxu0 0.0
    %6871 = vmatpush1.msra.mxu0 %v3097
    %6872 = vmatprep.subr.mxu0 0.0
    %6873 = vmatpush1.msra.mxu0 %v3098
    %6874 = vmatprep.subr.mxu0 0.0
    %6875 = vmatpush1.msra.mxu0 %v3099
    %6876 = vmatprep.subr.mxu0 0.0
    %6877 = vmatpush1.msra.mxu0 %v3100
    %6878 = vmatprep.subr.mxu0 0.0
    %6879 = vmatpush1.msra.mxu0 %v3101
    %6880 = vmatprep.subr.mxu0 0.0
    %6881 = vmatpush1.msra.mxu0 %v3102
    %6882 = vmatprep.subr.mxu0 0.0
    %6883 = vmatpush1.msra.mxu0 %v3103
    %6884 = vmatprep.subr.mxu0 0.0
    %6885 = vmatpush1.msra.mxu0 %v3104
    %6886 = vmatprep.subr.mxu0 0.0
    %6887 = vmatpush1.msra.mxu0 %v3105
    %6888 = vmatprep.subr.mxu0 0.0
    %6889 = vmatpush1.msra.mxu0 %v3106
    %6890 = vmatprep.subr.mxu0 0.0
    %6891 = vmatpush1.msra.mxu0 %v3107
    %6892 = vmatprep.subr.mxu0 0.0
    %6893 = vmatpush1.msra.mxu0 %v3108
    %6894 = vmatprep.subr.mxu0 0.0
    %6895 = vmatpush1.msra.mxu0 %v3109
    %6896 = vmatprep.subr.mxu0 0.0
    %6897 = vmatpush1.msra.mxu0 %v3110
    %6898 = vmatprep.subr.mxu0 0.0
    %6899 = vmatpush1.msra.mxu0 %v3111
    %6900 = vmatprep.subr.mxu0 0.0
    %6901 = vmatpush1.msra.mxu0 %v3112
    %6902 = vmatprep.subr.mxu0 0.0
    %6903 = vmatpush1.msra.mxu0 %v3113
    %6904 = vmatprep.subr.mxu0 0.0
    %6905 = vmatpush1.msra.mxu0 %v3114
    %6906 = vmatprep.subr.mxu0 0.0
    %6907 = vmatpush1.msra.mxu0 %v3115
    %6908 = vmatprep.subr.mxu0 0.0
    %6909 = vmatpush1.msra.mxu0 %v3116
    %6910 = vmatprep.subr.mxu0 0.0
    %6911 = vmatpush1.msra.mxu0 %v3117
    %6912 = vmatprep.subr.mxu0 0.0
    %6913 = vmatpush1.msra.mxu0 %v3118
    %6914 = vmatprep.subr.mxu0 0.0
    %6915 = vmatpush1.msra.mxu0 %v3119
    %6916 = vmatprep.subr.mxu0 0.0
    %6917 = vmatpush1.msra.mxu0 %v3120
    %6918 = vmatprep.subr.mxu0 0.0
    %6919 = vmatpush1.msra.mxu0 %v3121
    %6920 = vmatprep.subr.mxu0 0.0
    %6921 = vmatpush1.msra.mxu0 %v3122
    %6922 = vmatprep.subr.mxu0 0.0
    %6923 = vmatpush1.msra.mxu0 %v3123
    %6924 = vmatprep.subr.mxu0 0.0
    %6925 = vmatpush1.msra.mxu0 %v3124
    %6926 = vmatprep.mubr.f32.mxu0 %v3170
    %6927 = vmatmul.mubr.f32.gmra.mrb[0].mxu0 %v3169
    %v6928 = vpop.f32.mrb[0].mxu0
    %v6929 = vadd.f32 %v6784, %v6928
    %v6930 = vpop.f32.mrb[0].mxu0
    %6931 = vmatprep.mubr.f32.mxu0 %v3213
    %6932 = vmatmul.mubr.f32.gmra.mrb[0].mxu0 %v3212
    %v6933 = vpop.f32.mrb[0].mxu0
    %v6934 = vadd.f32 %v6789, %v6933
    %v6935 = vpop.f32.mrb[0].mxu0
    %6936 = vmatprep.mubr.f32.mxu0 %v3256
    %6937 = vmatmul.mubr.f32.gmra.mrb[0].mxu0 %v3255
    %v6938 = vpop.f32.mrb[0].mxu0
    %v6939 = vadd.f32 %v6794, %v6938
    %v6940 = vpop.f32.mrb[0].mxu0
    %6941 = vmatprep.mubr.f32.mxu0 %v3299
    %6942 = vmatmul.mubr.f32.gmra.mrb[0].mxu0 %v3298
    %v6943 = vpop.f32.mrb[0].mxu0
    %v6944 = vadd.f32 %v6799, %v6943
    %v6945 = vpop.f32.mrb[0].mxu0
    %6946 = vmatprep.mubr.f32.mxu0 %v3342
    %6947 = vmatmul.mubr.f32.gmra.mrb[0].mxu0 %v3341
    %v6948 = vpop.f32.mrb[0].mxu0
    %v6949 = vadd.f32 %v6804, %v6948
    %v6950 = vpop.f32.mrb[0].mxu0
    %6951 = vmatprep.mubr.f32.mxu0 %v3385
    %6952 = vmatmul.mubr.f32.gmra.mrb[0].mxu0 %v3384
    %v6953 = vpop.f32.mrb[0].mxu0
    %v6954 = vadd.f32 %v6809, %v6953
    %v6955 = vpop.f32.mrb[0].mxu0
    %6956 = vmatprep.mubr.f32.mxu0 %v3428
    %6957 = vmatmul.mubr.f32.gmra.mrb[0].mxu0 %v3427
    %v6958 = vpop.f32.mrb[0].mxu0
    %v6959 = vadd.f32 %v6814, %v6958
    %v6960 = vpop.f32.mrb[0].mxu0
    %6961 = vmatprep.mubr.f32.mxu0 %v3471
    %6962 = vmatmul.mubr.f32.gmra.mrb[0].mxu0 %v3470
    %v6963 = vpop.f32.mrb[0].mxu0
    %v6964 = vadd.f32 %v6819, %v6963
    %v6965 = vpop.f32.mrb[0].mxu0
    %6966 = vmatprep.mubr.f32.mxu0 %v3514
    %6967 = vmatmul.mubr.f32.gmra.mrb[0].mxu0 %v3513
    %v6968 = vpop.f32.mrb[0].mxu0
    %v6969 = vadd.f32 %v6824, %v6968
    %v6970 = vpop.f32.mrb[0].mxu0
    %6971 = vmatprep.mubr.f32.mxu0 %v3557
    %6972 = vmatmul.mubr.f32.gmra.mrb[0].mxu0 %v3556
    %v6973 = vpop.f32.mrb[0].mxu0
    %v6974 = vadd.f32 %v6829, %v6973
    %v6975 = vpop.f32.mrb[0].mxu0
    %6976 = vmatprep.mubr.f32.mxu0 %v3600
    %6977 = vmatmul.mubr.f32.gmra.mrb[0].mxu0 %v3599
    %v6978 = vpop.f32.mrb[0].mxu0
    %v6979 = vadd.f32 %v6834, %v6978
    %v6980 = vpop.f32.mrb[0].mxu0
    %6981 = vmatprep.mubr.f32.mxu0 %v3643
    %6982 = vmatmul.mubr.f32.gmra.mrb[0].mxu0 %v3642
    %v6983 = vpop.f32.mrb[0].mxu0
    %v6984 = vadd.f32 %v6839, %v6983
    %v6985 = vpop.f32.mrb[0].mxu0
    %6986 = vmatprep.mubr.f32.mxu0 %v3686
    %6987 = vmatmul.mubr.f32.gmra.mrb[0].mxu0 %v3685
    %v6988 = vpop.f32.mrb[0].mxu0
    %v6989 = vadd.f32 %v6844, %v6988
    %v6990 = vpop.f32.mrb[0].mxu0
    %6991 = vmatprep.mubr.f32.mxu0 %v3729
    %6992 = vmatmul.mubr.f32.gmra.mrb[0].mxu0 %v3728
    %v6993 = vpop.f32.mrb[0].mxu0
    %v6994 = vadd.f32 %v6849, %v6993
    %v6995 = vpop.f32.mrb[0].mxu0
    %6996 = vmatprep.mubr.f32.mxu0 %v3772
    %6997 = vmatmul.mubr.f32.gmra.mrb[0].mxu0 %v3771
    %v6998 = vpop.f32.mrb[0].mxu0
    %v6999 = vadd.f32 %v6854, %v6998
    %v7000 = vpop.f32.mrb[0].mxu0
    %7001 = vmatprep.mubr.f32.mxu0 %v3815
    %7002 = vmatmul.mubr.f32.gmra.mrb[0].mxu0 %v3814
    %v7003 = vpop.f32.mrb[0].mxu0
    %v7004 = vadd.f32 %v6859, %v7003
    %v7005 = vpop.f32.mrb[0].mxu0
    %7006 = vdwg.mxu0
    %7007 = vmatprep.subr.mxu0 0.0
    %7008 = vmatpush1.msra.mxu0 %v3125
    %7009 = vmatprep.subr.mxu0 0.0
    %7010 = vmatpush1.msra.mxu0 %v3126
    %7011 = vmatprep.subr.mxu0 0.0
    %7012 = vmatpush1.msra.mxu0 %v3127
    %7013 = vmatprep.subr.mxu0 0.0
    %7014 = vmatpush1.msra.mxu0 %v3128
    %7015 = vmatprep.subr.mxu0 0.0
    %7016 = vmatpush1.msra.mxu0 0.0
    %7017 = vmatprep.subr.mxu0 0.0
    %7018 = vmatpush1.msra.mxu0 0.0
    %7019 = vmatprep.subr.mxu0 0.0
    %7020 = vmatpush1.msra.mxu0 0.0
    %7021 = vmatprep.subr.mxu0 0.0
    %7022 = vmatpush1.msra.mxu0 0.0
    %7023 = vmatprep.subr.mxu0 0.0
    %7024 = vmatpush1.msra.mxu0 0.0
    %7025 = vmatprep.subr.mxu0 0.0
    %7026 = vmatpush1.msra.mxu0 0.0
    %7027 = vmatprep.subr.mxu0 0.0
    %7028 = vmatpush1.msra.mxu0 0.0
    %7029 = vmatprep.subr.mxu0 0.0
    %7030 = vmatpush1.msra.mxu0 0.0
    %7031 = vmatprep.subr.mxu0 0.0
    %7032 = vmatpush1.msra.mxu0 0.0
    %7033 = vmatprep.subr.mxu0 0.0
    %7034 = vmatpush1.msra.mxu0 0.0
    %7035 = vmatprep.subr.mxu0 0.0
    %7036 = vmatpush1.msra.mxu0 0.0
    %7037 = vmatprep.subr.mxu0 0.0
    %7038 = vmatpush1.msra.mxu0 0.0
    %7039 = vmatprep.subr.mxu0 0.0
    %7040 = vmatpush1.msra.mxu0 0.0
    %7041 = vmatprep.subr.mxu0 0.0
    %7042 = vmatpush1.msra.mxu0 0.0
    %7043 = vmatprep.subr.mxu0 0.0
    %7044 = vmatpush1.msra.mxu0 0.0
    %7045 = vmatprep.subr.mxu0 0.0
    %7046 = vmatpush1.msra.mxu0 0.0
    %7047 = vmatprep.subr.mxu0 0.0
    %7048 = vmatpush1.msra.mxu0 0.0
    %7049 = vmatprep.subr.mxu0 0.0
    %7050 = vmatpush1.msra.mxu0 0.0
    %7051 = vmatprep.subr.mxu0 0.0
    %7052 = vmatpush1.msra.mxu0 0.0
    %7053 = vmatprep.subr.mxu0 0.0
    %7054 = vmatpush1.msra.mxu0 0.0
    %7055 = vmatprep.subr.mxu0 0.0
    %7056 = vmatpush1.msra.mxu0 0.0
    %7057 = vmatprep.subr.mxu0 0.0
    %7058 = vmatpush1.msra.mxu0 0.0
    %7059 = vmatprep.subr.mxu0 0.0
    %7060 = vmatpush1.msra.mxu0 0.0
    %7061 = vmatprep.subr.mxu0 0.0
    %7062 = vmatpush1.msra.mxu0 0.0
    %7063 = vmatprep.subr.mxu0 0.0
    %7064 = vmatpush1.msra.mxu0 0.0
    %7065 = vmatprep.subr.mxu0 0.0
    %7066 = vmatpush1.msra.mxu0 0.0
    %7067 = vmatprep.subr.mxu0 0.0
    %7068 = vmatpush1.msra.mxu0 0.0
    %7069 = vmatprep.subr.mxu0 0.0
    %7070 = vmatpush1.msra.mxu0 0.0
    %7071 = vmatprep.mubr.f32.mxu0 0.0
    %7072 = vmatmul.mubr.f32.gmra.mrb[0].mxu0 %v3915
    %v7073 = vpop.f32.mrb[0].mxu0
    %v7074 = vadd.f32 %v6929, %v7073
    %v7075 = vpop.f32.mrb[0].mxu0
    %7076 = vmatprep.mubr.f32.mxu0 0.0
    %7077 = vmatmul.mubr.f32.gmra.mrb[0].mxu0 %v3918
    %v7078 = vpop.f32.mrb[0].mxu0
    %v7079 = vadd.f32 %v6934, %v7078
    %v7080 = vpop.f32.mrb[0].mxu0
    %7081 = vmatprep.mubr.f32.mxu0 0.0
    %7082 = vmatmul.mubr.f32.gmra.mrb[0].mxu0 %v3921
    %v7083 = vpop.f32.mrb[0].mxu0
    %v7084 = vadd.f32 %v6939, %v7083
    %v7085 = vpop.f32.mrb[0].mxu0
    %7086 = vmatprep.mubr.f32.mxu0 0.0
    %7087 = vmatmul.mubr.f32.gmra.mrb[0].mxu0 %v3924
    %v7088 = vpop.f32.mrb[0].mxu0
    %v7089 = vadd.f32 %v6944, %v7088
    %v7090 = vpop.f32.mrb[0].mxu0
    %7091 = vmatprep.mubr.f32.mxu0 0.0
    %7092 = vmatmul.mubr.f32.gmra.mrb[0].mxu0 %v3927
    %v7093 = vpop.f32.mrb[0].mxu0
    %v7094 = vadd.f32 %v6949, %v7093
    %v7095 = vpop.f32.mrb[0].mxu0
    %7096 = vmatprep.mubr.f32.mxu0 0.0
    %7097 = vmatmul.mubr.f32.gmra.mrb[0].mxu0 %v3930
    %v7098 = vpop.f32.mrb[0].mxu0
    %v7099 = vadd.f32 %v6954, %v7098
    %v7100 = vpop.f32.mrb[0].mxu0
    %7101 = vmatprep.mubr.f32.mxu0 0.0
    %7102 = vmatmul.mubr.f32.gmra.mrb[0].mxu0 %v3933
    %v7103 = vpop.f32.mrb[0].mxu0
    %v7104 = vadd.f32 %v6959, %v7103
    %v7105 = vpop.f32.mrb[0].mxu0
    %7106 = vmatprep.mubr.f32.mxu0 0.0
    %7107 = vmatmul.mubr.f32.gmra.mrb[0].mxu0 %v3936
    %v7108 = vpop.f32.mrb[0].mxu0
    %v7109 = vadd.f32 %v6964, %v7108
    %v7110 = vpop.f32.mrb[0].mxu0
    %7111 = vmatprep.mubr.f32.mxu0 0.0
    %7112 = vmatmul.mubr.f32.gmra.mrb[0].mxu0 %v3939
    %v7113 = vpop.f32.mrb[0].mxu0
    %v7114 = vadd.f32 %v6969, %v7113
    %v7115 = vpop.f32.mrb[0].mxu0
    %7116 = vmatprep.mubr.f32.mxu0 0.0
    %7117 = vmatmul.mubr.f32.gmra.mrb[0].mxu0 %v3942
    %v7118 = vpop.f32.mrb[0].mxu0
    %v7119 = vadd.f32 %v6974, %v7118
    %v7120 = vpop.f32.mrb[0].mxu0
    %7121 = vmatprep.mubr.f32.mxu0 0.0
    %7122 = vmatmul.mubr.f32.gmra.mrb[0].mxu0 %v3945
    %v7123 = vpop.f32.mrb[0].mxu0
    %v7124 = vadd.f32 %v6979, %v7123
    %v7125 = vpop.f32.mrb[0].mxu0
    %7126 = vmatprep.mubr.f32.mxu0 0.0
    %7127 = vmatmul.mubr.f32.gmra.mrb[0].mxu0 %v3948
    %v7128 = vpop.f32.mrb[0].mxu0
    %v7129 = vadd.f32 %v6984, %v7128
    %v7130 = vpop.f32.mrb[0].mxu0
    %7131 = vmatprep.mubr.f32.mxu0 0.0
    %7132 = vmatmul.mubr.f32.gmra.mrb[0].mxu0 %v3951
    %v7133 = vpop.f32.mrb[0].mxu0
    %v7134 = vadd.f32 %v6989, %v7133
    %v7135 = vpop.f32.mrb[0].mxu0
    %7136 = vmatprep.mubr.f32.mxu0 0.0
    %7137 = vmatmul.mubr.f32.gmra.mrb[0].mxu0 %v3954
    %v7138 = vpop.f32.mrb[0].mxu0
    %v7139 = vadd.f32 %v6994, %v7138
    %v7140 = vpop.f32.mrb[0].mxu0
    %7141 = vmatprep.mubr.f32.mxu0 0.0
    %7142 = vmatmul.mubr.f32.gmra.mrb[0].mxu0 %v3957
    %v7143 = vpop.f32.mrb[0].mxu0
    %v7144 = vadd.f32 %v6999, %v7143
    %v7145 = vpop.f32.mrb[0].mxu0
    %7146 = vmatprep.mubr.f32.mxu0 0.0
    %7147 = vmatmul.mubr.f32.gmra.mrb[0].mxu0 %v3960
    %v7148 = vpop.f32.mrb[0].mxu0
    %v7149 = vadd.f32 %v7004, %v7148
    %v7150 = vpop.f32.mrb[0].mxu0
    %7151 = vdwg.mxu0
    %7152 = vst [vmem:[%s5] sm:$0xff] %v7074
    %7153 = vst [vmem:[%s5 + $0x8] sm:$0xff] %v7079
    %7154 = vst [vmem:[%s5 + $0x10] sm:$0xff] %v7084
    %7155 = vst [vmem:[%s5 + $0x18] sm:$0xff] %v7089
    %7156 = vst [vmem:[%s5 + $0x20] sm:$0xff] %v7094
    %7157 = vst [vmem:[%s5 + $0x28] sm:$0xff] %v7099
    %7158 = vst [vmem:[%s5 + $0x30] sm:$0xff] %v7104
    %7159 = vst [vmem:[%s5 + $0x38] sm:$0xff] %v7109
    %7160 = vst [vmem:[%s5 + $0x40] sm:$0xff] %v7114
    %7161 = vst [vmem:[%s5 + $0x48] sm:$0xff] %v7119
    %7162 = vst [vmem:[%s5 + $0x50] sm:$0xff] %v7124
    %7163 = vst [vmem:[%s5 + $0x58] sm:$0xff] %v7129
    %7164 = vst [vmem:[%s5 + $0x60] sm:$0xff] %v7134
    %7165 = vst [vmem:[%s5 + $0x68] sm:$0xff] %v7139
    %7166 = vst [vmem:[%s5 + $0x70] sm:$0xff] %v7144
    %7167 = vst [vmem:[%s5 + $0x78] sm:$0xff] %v7149
    // Predicated region
    $region37: #{simple_cnn_forward.1} parent=1 // pred_check
      _
    $region38: #{simple_cnn_forward.1} parent=1 // pred_check_branch
      %7169 = sbr.rel (0) target = $region40
    $region39: #{simple_cnn_forward.1} parent=1 // pred_region
      _
    $region40: #{simple_cnn_forward.1} parent=1 // pred_fallthru
      _
    // Predicated region
    $region41: #{simple_cnn_forward.1} parent=1 // pred_check
      _
    $region42: #{simple_cnn_forward.1} parent=1 // pred_check_branch
      %7171 = sbr.rel (0) target = $region44
    $region43: #{simple_cnn_forward.1} parent=1 // pred_region
      _
    $region44: #{simple_cnn_forward.1} parent=1 // pred_fallthru
      _
    %7172 = vsyncpa [#allocation4], 1
    %7173 = vsyncpa [#allocation6], 1

</llo_original>
